<compile_context>
chip_gen: v7x
topology: tpu7x:2x2x1
jax: 0.10.0
libtpu: 0.0.40
codegen_flags: <defaults>
</compile_context>

<pallas_src>
import jax
import jax.numpy as jnp
import numpy as np
from jax.experimental import pallas as pl
from jax.experimental.pallas import tpu as pltpu

HID = 100            # logical GRU hidden / linear width
HID_PAD = 128        # lane-padded width
CONV1 = 1000         # lin_conv1 logical output width
CONV1_PAD = 1024     # lane-padded
AFFINE = 100         # 5 * 20 sampled resolution
POOL = 5             # AvgPool2d(5)
FEAT = 20 * 20 * 3   # 1200 flattened features after pooling


# ----------------------------------------------------------------------------
# Plain-JAX glue: exact separable replacement for
#   affine_grid (align_corners=True) + grid_sample (bilinear, zeros padding)
#   + AvgPool2d(5).
# theta = [[exp(zoom), 0, pos_x], [0, exp(zoom), pos_y]] is pure
# scale+translate, so the bilinear sample coordinates are separable in x/y and
# the whole sample+pool is two small dense matmuls (no gather).
# ----------------------------------------------------------------------------
def _separable_sample_pool(images, position, zoom):
    B, C, H, W = images.shape
    ez = jnp.exp(zoom[:, 0, 0])                       # (B,)
    px = position[:, 0, 0]                            # (B,)
    py = position[:, 1, 0]                            # (B,)

    base = jnp.linspace(-1.0, 1.0, AFFINE)            # align_corners=True base
    gx = ez[:, None] * base[None, :] + px[:, None]    # (B, 100)
    gy = ez[:, None] * base[None, :] + py[:, None]    # (B, 100)
    ix = (gx + 1.0) * 0.5 * (W - 1)                   # pixel coords
    iy = (gy + 1.0) * 0.5 * (H - 1)

    cols = jnp.arange(W, dtype=jnp.float32)
    rows = jnp.arange(H, dtype=jnp.float32)
    # Hat-function weights == bilinear kernel with zeros padding.
    kx = jnp.maximum(0.0, 1.0 - jnp.abs(ix[:, :, None] - cols[None, None, :]))  # (B,100,W)
    ky = jnp.maximum(0.0, 1.0 - jnp.abs(iy[:, :, None] - rows[None, None, :]))  # (B,100,H)
    # Fold the 5x5 average pooling into the interpolation matrices.
    Wx = kx.reshape(B, AFFINE // POOL, POOL, W).mean(axis=2)   # (B, 20, W)
    Wy = ky.reshape(B, AFFINE // POOL, POOL, H).mean(axis=2)   # (B, 20, H)

    tmp = jnp.einsum("byh,bchw->bcyw", Wy, images)             # (B, C, 20, W)
    pooled = jnp.einsum("bcyw,bxw->bcyx", tmp, Wx)             # (B, C, 20, 20)
    return pooled


# ----------------------------------------------------------------------------
# Pallas kernel: the full dense path (MLP + 3 GRU cells + output head +
# position/zoom update), all lane-dense at width 128 / 1024.
# ----------------------------------------------------------------------------
def _neuralnet_kernel(*refs):
    (xf_ref, pz_ref, h2_ref, h3_ref, h4_ref,
     wc1_ref, bc1_ref, wc2_ref, bc2_ref,
     wc3a_ref, wc3b_ref, bc3_ref,
     wl1a_ref, wl1b_ref, bl1_ref) = refs[0:15]
    g2 = refs[15:25]
    g3 = refs[25:35]
    g4 = refs[35:45]
    wl5a_ref, wl5b_ref, bl5_ref = refs[45:48]
    out_ref, h2o_ref, h3o_ref, h4o_ref = refs[48:52]

    sig = jax.nn.sigmoid
    f32 = jnp.float32
    bf16 = jnp.bfloat16

    def mm(x, w_ref):
        # bf16 x bf16 matmul with f32 accumulation on the MXU.
        return jnp.dot(x.astype(bf16), w_ref[...], preferred_element_type=f32)

    xf = xf_ref[...]            # (B, 1200) pooled & flattened sampled image
    pz = pz_ref[...]            # (B, 128): [pos_x, pos_y, zoom, 0...]

    # lin_conv1 / lin_conv2 / lin_conv3 (sigmoid MLP over pooled features).
    x_tmp = sig(mm(xf, wc1_ref) + bc1_ref[...])               # (B, 1024)
    x = sig(mm(x_tmp, wc2_ref) + bc2_ref[...])                # (B, 128)
    # lin_conv3 on [x, x_tmp[:, 0:100]]: split weights, lane-aligned slice;
    # wc3b rows 100..127 are zero so the extra real lanes contribute nothing.
    x = sig(mm(x, wc3a_ref) + mm(x_tmp[:, 0:HID_PAD], wc3b_ref) + bc3_ref[...])

    # lin1 on [features, position, zoom] (concat replaced by split weights).
    x_tmp1 = sig(mm(x, wl1a_ref) + mm(pz, wl1b_ref) + bl1_ref[...])   # (B, 128)

    def gru_cell(inp, h, params):
        (w_ir, w_iz, w_in, w_hr, w_hz, w_hn, b_r, b_z, b_in, b_hn) = params
        r = sig(mm(inp, w_ir) + mm(h, w_hr) + b_r[...])
        z = sig(mm(inp, w_iz) + mm(h, w_hz) + b_z[...])
        n = jnp.tanh(mm(inp, w_in) + b_in[...] + r * (mm(h, w_hn) + b_hn[...]))
        return (1.0 - z) * n + z * h

    # gru2 -> (dropout=identity) -> gru3 -> gru4 ; seq_len == 1 so out == new h
    h2n = gru_cell(x_tmp1, h2_ref[...], g2)
    h3n = gru_cell(h2n, h3_ref[...], g3)
    h4n = gru_cell(h3n, h4_ref[...], g4)

    # lin5 + tanh on [gru_out, x_tmp1]; output padded to 128 (cols 3+ are 0).
    out = jnp.tanh(mm(h4n, wl5a_ref) + mm(x_tmp1, wl5b_ref) + bl5_ref[...])  # (B,128)

    # position/zoom update, fully lane-dense, single merged output slab:
    #   cols 0:2 -> position + exp(zoom) * out[:, 0:2]
    #   col  2   -> zoom + out[:, 2]
    ez = jnp.exp(pz[:, 2:3])                                     # (B, 1)
    lane = jax.lax.broadcasted_iota(jnp.int32, out.shape, 1)
    scale = jnp.where(lane < 2, ez, 1.0)
    out_ref[...] = pz + scale * out
    h2o_ref[...] = h2n
    h3o_ref[...] = h3n
    h4o_ref[...] = h4n


def _run_dense_kernel(xf, pz_pad, h2, h3, h4, params):
    B = xf.shape[0]
    inputs = [xf, pz_pad, h2, h3, h4] + list(params)
    out_shape = tuple(jax.ShapeDtypeStruct((B, HID_PAD), jnp.float32)
                      for _ in range(4))              # merged pos/zoom, h2, h3, h4
    vmem = pl.BlockSpec(memory_space=pltpu.MemorySpace.VMEM)
    return pl.pallas_call(
        _neuralnet_kernel,
        out_shape=out_shape,
        in_specs=[vmem] * len(inputs),
        out_specs=tuple(pl.BlockSpec(memory_space=pltpu.MemorySpace.VMEM)
                        for _ in out_shape),
    )(*inputs)


# ----------------------------------------------------------------------------
# Full forward (mirrors NeuralNet.forward).
# ----------------------------------------------------------------------------
def neuralnet_forward(images, position, zoom, params, hidden=None):
    B = images.shape[0]
    if hidden is None:
        hidden = [jnp.zeros((1, B, HID), jnp.float32) for _ in range(3)]
    h_pad = [jnp.pad(h[0].astype(jnp.float32), ((0, 0), (0, HID_PAD - HID)))
             for h in hidden]

    pooled = _separable_sample_pool(images.astype(jnp.float32), position, zoom)
    xf = pooled.reshape(B, FEAT).astype(jnp.float32)             # (B, 1200), CHW order

    pz3 = jnp.concatenate([position[:, :, 0], zoom[:, :, 0]], axis=1)   # (B, 3)
    pz_pad = jnp.pad(pz3.astype(jnp.float32), ((0, 0), (0, HID_PAD - 3)))

    out, h2n, h3n, h4n = _run_dense_kernel(xf, pz_pad, *h_pad, params)
    position_new = out[:, 0:2, None]
    zoom_new = out[:, 2:3, None]
    hidden_new = [h[:, :HID][None] for h in (h2n, h3n, h4n)]
    return position_new, zoom_new, hidden_new


# ----------------------------------------------------------------------------
# Deterministic parameter construction (shapes from __init__). Weights are
# stored transposed as (in, out), split per concat-source / per GRU gate,
# zero-padded to lane-dense widths, and cast to bfloat16. Biases stay f32.
# ----------------------------------------------------------------------------
def _pad_to(x, shape):
    pads = [(0, t - s) for s, t in zip(x.shape, shape)]
    return jnp.pad(x, pads)


def make_params(key):
    ks = jax.random.split(key, 13)

    def uni(k, shape, bound):
        return jax.random.uniform(k, shape, jnp.float32, -bound, bound)

    def wpad(w, in_pad, out_pad):
        return _pad_to(w, (in_pad, out_pad)).astype(jnp.bfloat16)

    def bpad(b, out_pad):
        return _pad_to(b, (1, out_pad)).astype(jnp.float32)

    # lin_conv1: 1200 -> 1000 (output padded to 1024)
    bw = 1.0 / np.sqrt(FEAT)
    wc1 = wpad(uni(ks[0], (FEAT, CONV1), bw), FEAT, CONV1_PAD)
    bc1 = bpad(uni(ks[1], (1, CONV1), bw), CONV1_PAD)

    # lin_conv2: 1000 -> 100
    bw = 1.0 / np.sqrt(CONV1)
    wc2 = wpad(uni(ks[2], (CONV1, HID), bw), CONV1_PAD, HID_PAD)
    bc2 = bpad(uni(ks[3], (1, HID), bw), HID_PAD)

    # lin_conv3: 200 -> 100, split into the two concat sources
    bw = 1.0 / np.sqrt(200)
    wc3 = uni(ks[4], (200, HID), bw)
    wc3a = wpad(wc3[:HID], HID_PAD, HID_PAD)       # for lin_conv2 output
    wc3b = wpad(wc3[HID:], HID_PAD, HID_PAD)       # for x_tmp[:, 0:100]
    bc3 = bpad(uni(ks[5], (1, HID), bw), HID_PAD)

    # lin1: 103 -> 100, split into features / [pos, zoom]
    bw = 1.0 / np.sqrt(103)
    wl1 = uni(ks[6], (103, HID), bw)
    wl1a = wpad(wl1[:HID], HID_PAD, HID_PAD)
    wl1b = wpad(wl1[HID:], HID_PAD, HID_PAD)
    bl1 = bpad(uni(ks[7], (1, HID), bw), HID_PAD)

    # GRU cells: per-gate weight matrices (r, z, n), PyTorch GRU gate math.
    def gru(k):
        kk = jax.random.split(k, 12)
        bw = 1.0 / np.sqrt(HID)
        w_ir, w_iz, w_in, w_hr, w_hz, w_hn = [
            wpad(uni(kk[i], (HID, HID), bw), HID_PAD, HID_PAD) for i in range(6)]
        b_ir, b_iz, b_in_, b_hr, b_hz, b_hn = [
            uni(kk[6 + i], (1, HID), bw) for i in range(6)]
        return [w_ir, w_iz, w_in, w_hr, w_hz, w_hn,
                bpad(b_ir + b_hr, HID_PAD),   # r-gate biases combine
                bpad(b_iz + b_hz, HID_PAD),   # z-gate biases combine
                bpad(b_in_, HID_PAD),         # n-gate input bias (outside r*)
                bpad(b_hn, HID_PAD)]          # n-gate hidden bias (inside r*)

    g2 = gru(ks[8])
    g3 = gru(ks[9])
    g4 = gru(ks[10])

    # lin5: 200 -> 3, split into gru-out / x_tmp1, output padded to 128
    bw = 1.0 / np.sqrt(200)
    wl5 = uni(ks[11], (200, 3), bw)
    wl5a = wpad(wl5[:HID], HID_PAD, HID_PAD)
    wl5b = wpad(wl5[HID:], HID_PAD, HID_PAD)
    bl5 = bpad(uni(ks[12], (1, 3), bw), HID_PAD)

    return [wc1, bc1, wc2, bc2, wc3a, wc3b, bc3, wl1a, wl1b, bl1,
            *g2, *g3, *g4, wl5a, wl5b, bl5]


if __name__ == "__main__":
    key = jax.random.PRNGKey(0)
    k_img, k_pos, k_zoom, k_par = jax.random.split(key, 4)

    B = 2
    images = jax.random.normal(k_img, (B, 3, 32, 32), jnp.float32)
    position = jax.random.uniform(k_pos, (B, 2, 1), jnp.float32, -0.2, 0.2)
    zoom = jax.random.uniform(k_zoom, (B, 1, 1), jnp.float32, -0.1, 0.1)
    params = make_params(k_par)

    fwd = jax.jit(neuralnet_forward)
    pos_out, zoom_out, hidden_out = fwd(images, position, zoom, params)
    jax.block_until_ready((pos_out, zoom_out, hidden_out))

    assert pos_out.shape == (B, 2, 1)
    assert zoom_out.shape == (B, 1, 1)
    assert all(h.shape == (1, B, HID) for h in hidden_out)
    assert bool(jnp.all(jnp.isfinite(pos_out)))
    assert bool(jnp.all(jnp.isfinite(zoom_out)))
    print("KERNEL_OK")
</pallas_src>

<mosaic_0001>
module attributes {stable_mosaic.version = 11 : i64} {
  func.func @_neuralnet_kernel(%arg0: memref<2x1200xf32, #tpu.memory_space<vmem>>, %arg1: memref<2x128xf32, #tpu.memory_space<vmem>>, %arg2: memref<2x128xf32, #tpu.memory_space<vmem>>, %arg3: memref<2x128xf32, #tpu.memory_space<vmem>>, %arg4: memref<2x128xf32, #tpu.memory_space<vmem>>, %arg5: memref<1200x1024xbf16, #tpu.memory_space<vmem>>, %arg6: memref<1x1024xf32, #tpu.memory_space<vmem>>, %arg7: memref<1024x128xbf16, #tpu.memory_space<vmem>>, %arg8: memref<1x128xf32, #tpu.memory_space<vmem>>, %arg9: memref<128x128xbf16, #tpu.memory_space<vmem>>, %arg10: memref<128x128xbf16, #tpu.memory_space<vmem>>, %arg11: memref<1x128xf32, #tpu.memory_space<vmem>>, %arg12: memref<128x128xbf16, #tpu.memory_space<vmem>>, %arg13: memref<128x128xbf16, #tpu.memory_space<vmem>>, %arg14: memref<1x128xf32, #tpu.memory_space<vmem>>, %arg15: memref<128x128xbf16, #tpu.memory_space<vmem>>, %arg16: memref<128x128xbf16, #tpu.memory_space<vmem>>, %arg17: memref<128x128xbf16, #tpu.memory_space<vmem>>, %arg18: memref<128x128xbf16, #tpu.memory_space<vmem>>, %arg19: memref<128x128xbf16, #tpu.memory_space<vmem>>, %arg20: memref<128x128xbf16, #tpu.memory_space<vmem>>, %arg21: memref<1x128xf32, #tpu.memory_space<vmem>>, %arg22: memref<1x128xf32, #tpu.memory_space<vmem>>, %arg23: memref<1x128xf32, #tpu.memory_space<vmem>>, %arg24: memref<1x128xf32, #tpu.memory_space<vmem>>, %arg25: memref<128x128xbf16, #tpu.memory_space<vmem>>, %arg26: memref<128x128xbf16, #tpu.memory_space<vmem>>, %arg27: memref<128x128xbf16, #tpu.memory_space<vmem>>, %arg28: memref<128x128xbf16, #tpu.memory_space<vmem>>, %arg29: memref<128x128xbf16, #tpu.memory_space<vmem>>, %arg30: memref<128x128xbf16, #tpu.memory_space<vmem>>, %arg31: memref<1x128xf32, #tpu.memory_space<vmem>>, %arg32: memref<1x128xf32, #tpu.memory_space<vmem>>, %arg33: memref<1x128xf32, #tpu.memory_space<vmem>>, %arg34: memref<1x128xf32, #tpu.memory_space<vmem>>, %arg35: memref<128x128xbf16, #tpu.memory_space<vmem>>, %arg36: memref<128x128xbf16, #tpu.memory_space<vmem>>, %arg37: memref<128x128xbf16, #tpu.memory_space<vmem>>, %arg38: memref<128x128xbf16, #tpu.memory_space<vmem>>, %arg39: memref<128x128xbf16, #tpu.memory_space<vmem>>, %arg40: memref<128x128xbf16, #tpu.memory_space<vmem>>, %arg41: memref<1x128xf32, #tpu.memory_space<vmem>>, %arg42: memref<1x128xf32, #tpu.memory_space<vmem>>, %arg43: memref<1x128xf32, #tpu.memory_space<vmem>>, %arg44: memref<1x128xf32, #tpu.memory_space<vmem>>, %arg45: memref<128x128xbf16, #tpu.memory_space<vmem>>, %arg46: memref<128x128xbf16, #tpu.memory_space<vmem>>, %arg47: memref<1x128xf32, #tpu.memory_space<vmem>>, %arg48: memref<2x128xf32, #tpu.memory_space<vmem>>, %arg49: memref<2x128xf32, #tpu.memory_space<vmem>>, %arg50: memref<2x128xf32, #tpu.memory_space<vmem>>, %arg51: memref<2x128xf32, #tpu.memory_space<vmem>>) attributes {dimension_semantics = [], scalar_prefetch = 0 : i64, scratch_operands = 0 : i64, tpu.core_type = #tpu.core_type<tc>} {
    %c0 = arith.constant 0 : index
    %c0_0 = arith.constant 0 : index
    %0 = vector.load %arg0[%c0, %c0_0] : memref<2x1200xf32, #tpu.memory_space<vmem>>, vector<2x1200xf32>
    %c0_1 = arith.constant 0 : index
    %c0_2 = arith.constant 0 : index
    %1 = vector.load %arg1[%c0_1, %c0_2] : memref<2x128xf32, #tpu.memory_space<vmem>>, vector<2x128xf32>
    %2 = arith.truncf %0 : vector<2x1200xf32> to vector<2x1200xbf16>
    %c0_3 = arith.constant 0 : index
    %c0_4 = arith.constant 0 : index
    %3 = vector.load %arg5[%c0_3, %c0_4] : memref<1200x1024xbf16, #tpu.memory_space<vmem>>, vector<1200x1024xbf16>
    %cst = arith.constant dense<0.000000e+00> : vector<2x1024xf32>
    %4 = tpu.matmul %2, %3, %cst {dimension_numbers = #tpu.dot_dimension_numbers<[1], [0], [0], [1], [0, 0, 1, 1], [], []>} : vector<2x1200xbf16>, vector<1200x1024xbf16>, vector<2x1024xf32> -> vector<2x1024xf32>
    %c0_5 = arith.constant 0 : index
    %c0_6 = arith.constant 0 : index
    %5 = vector.load %arg6[%c0_5, %c0_6] : memref<1x1024xf32, #tpu.memory_space<vmem>>, vector<1x1024xf32>
    %6 = vector.broadcast %5 : vector<1x1024xf32> to vector<2x1024xf32>
    %7 = arith.addf %4, %6 : vector<2x1024xf32>
    %8 = arith.negf %7 : vector<2x1024xf32>
    %9 = math.exp %8 : vector<2x1024xf32>
    %cst_7 = arith.constant 1.000000e+00 : f32
    %10 = vector.broadcast %cst_7 : f32 to vector<2x1024xf32>
    %11 = arith.addf %10, %9 : vector<2x1024xf32>
    %12 = arith.divf %10, %11 : vector<2x1024xf32>
    %13 = arith.truncf %12 : vector<2x1024xf32> to vector<2x1024xbf16>
    %c0_8 = arith.constant 0 : index
    %c0_9 = arith.constant 0 : index
    %14 = vector.load %arg7[%c0_8, %c0_9] : memref<1024x128xbf16, #tpu.memory_space<vmem>>, vector<1024x128xbf16>
    %cst_10 = arith.constant dense<0.000000e+00> : vector<2x128xf32>
    %15 = tpu.matmul %13, %14, %cst_10 {dimension_numbers = #tpu.dot_dimension_numbers<[1], [0], [0], [1], [0, 0, 1, 1], [], []>} : vector<2x1024xbf16>, vector<1024x128xbf16>, vector<2x128xf32> -> vector<2x128xf32>
    %c0_11 = arith.constant 0 : index
    %c0_12 = arith.constant 0 : index
    %16 = vector.load %arg8[%c0_11, %c0_12] : memref<1x128xf32, #tpu.memory_space<vmem>>, vector<1x128xf32>
    %17 = vector.broadcast %16 : vector<1x128xf32> to vector<2x128xf32>
    %18 = arith.addf %15, %17 : vector<2x128xf32>
    %19 = arith.negf %18 : vector<2x128xf32>
    %20 = math.exp %19 : vector<2x128xf32>
    %cst_13 = arith.constant 1.000000e+00 : f32
    %21 = vector.broadcast %cst_13 : f32 to vector<2x128xf32>
    %22 = arith.addf %21, %20 : vector<2x128xf32>
    %23 = arith.divf %21, %22 : vector<2x128xf32>
    %24 = arith.truncf %23 : vector<2x128xf32> to vector<2x128xbf16>
    %c0_14 = arith.constant 0 : index
    %c0_15 = arith.constant 0 : index
    %25 = vector.load %arg9[%c0_14, %c0_15] : memref<128x128xbf16, #tpu.memory_space<vmem>>, vector<128x128xbf16>
    %cst_16 = arith.constant dense<0.000000e+00> : vector<2x128xf32>
    %26 = tpu.matmul %24, %25, %cst_16 {dimension_numbers = #tpu.dot_dimension_numbers<[1], [0], [0], [1], [0, 0, 1, 1], [], []>} : vector<2x128xbf16>, vector<128x128xbf16>, vector<2x128xf32> -> vector<2x128xf32>
    %27 = vector.extract_strided_slice %12 {offsets = [0, 0], sizes = [2, 128], strides = [1, 1]} : vector<2x1024xf32> to vector<2x128xf32>
    %28 = arith.truncf %27 : vector<2x128xf32> to vector<2x128xbf16>
    %c0_17 = arith.constant 0 : index
    %c0_18 = arith.constant 0 : index
    %29 = vector.load %arg10[%c0_17, %c0_18] : memref<128x128xbf16, #tpu.memory_space<vmem>>, vector<128x128xbf16>
    %cst_19 = arith.constant dense<0.000000e+00> : vector<2x128xf32>
    %30 = tpu.matmul %28, %29, %cst_19 {dimension_numbers = #tpu.dot_dimension_numbers<[1], [0], [0], [1], [0, 0, 1, 1], [], []>} : vector<2x128xbf16>, vector<128x128xbf16>, vector<2x128xf32> -> vector<2x128xf32>
    %31 = arith.addf %26, %30 : vector<2x128xf32>
    %c0_20 = arith.constant 0 : index
    %c0_21 = arith.constant 0 : index
    %32 = vector.load %arg11[%c0_20, %c0_21] : memref<1x128xf32, #tpu.memory_space<vmem>>, vector<1x128xf32>
    %33 = vector.broadcast %32 : vector<1x128xf32> to vector<2x128xf32>
    %34 = arith.addf %31, %33 : vector<2x128xf32>
    %35 = arith.negf %34 : vector<2x128xf32>
    %36 = math.exp %35 : vector<2x128xf32>
    %cst_22 = arith.constant 1.000000e+00 : f32
    %37 = vector.broadcast %cst_22 : f32 to vector<2x128xf32>
    %38 = arith.addf %37, %36 : vector<2x128xf32>
    %39 = arith.divf %37, %38 : vector<2x128xf32>
    %40 = arith.truncf %39 : vector<2x128xf32> to vector<2x128xbf16>
    %c0_23 = arith.constant 0 : index
    %c0_24 = arith.constant 0 : index
    %41 = vector.load %arg12[%c0_23, %c0_24] : memref<128x128xbf16, #tpu.memory_space<vmem>>, vector<128x128xbf16>
    %cst_25 = arith.constant dense<0.000000e+00> : vector<2x128xf32>
    %42 = tpu.matmul %40, %41, %cst_25 {dimension_numbers = #tpu.dot_dimension_numbers<[1], [0], [0], [1], [0, 0, 1, 1], [], []>} : vector<2x128xbf16>, vector<128x128xbf16>, vector<2x128xf32> -> vector<2x128xf32>
    %43 = arith.truncf %1 : vector<2x128xf32> to vector<2x128xbf16>
    %c0_26 = arith.constant 0 : index
    %c0_27 = arith.constant 0 : index
    %44 = vector.load %arg13[%c0_26, %c0_27] : memref<128x128xbf16, #tpu.memory_space<vmem>>, vector<128x128xbf16>
    %cst_28 = arith.constant dense<0.000000e+00> : vector<2x128xf32>
    %45 = tpu.matmul %43, %44, %cst_28 {dimension_numbers = #tpu.dot_dimension_numbers<[1], [0], [0], [1], [0, 0, 1, 1], [], []>} : vector<2x128xbf16>, vector<128x128xbf16>, vector<2x128xf32> -> vector<2x128xf32>
    %46 = arith.addf %42, %45 : vector<2x128xf32>
    %c0_29 = arith.constant 0 : index
    %c0_30 = arith.constant 0 : index
    %47 = vector.load %arg14[%c0_29, %c0_30] : memref<1x128xf32, #tpu.memory_space<vmem>>, vector<1x128xf32>
    %48 = vector.broadcast %47 : vector<1x128xf32> to vector<2x128xf32>
    %49 = arith.addf %46, %48 : vector<2x128xf32>
    %50 = arith.negf %49 : vector<2x128xf32>
    %51 = math.exp %50 : vector<2x128xf32>
    %cst_31 = arith.constant 1.000000e+00 : f32
    %52 = vector.broadcast %cst_31 : f32 to vector<2x128xf32>
    %53 = arith.addf %52, %51 : vector<2x128xf32>
    %54 = arith.divf %52, %53 : vector<2x128xf32>
    %c0_32 = arith.constant 0 : index
    %c0_33 = arith.constant 0 : index
    %55 = vector.load %arg2[%c0_32, %c0_33] : memref<2x128xf32, #tpu.memory_space<vmem>>, vector<2x128xf32>
    %56 = arith.truncf %54 : vector<2x128xf32> to vector<2x128xbf16>
    %c0_34 = arith.constant 0 : index
    %c0_35 = arith.constant 0 : index
    %57 = vector.load %arg15[%c0_34, %c0_35] : memref<128x128xbf16, #tpu.memory_space<vmem>>, vector<128x128xbf16>
    %cst_36 = arith.constant dense<0.000000e+00> : vector<2x128xf32>
    %58 = tpu.matmul %56, %57, %cst_36 {dimension_numbers = #tpu.dot_dimension_numbers<[1], [0], [0], [1], [0, 0, 1, 1], [], []>} : vector<2x128xbf16>, vector<128x128xbf16>, vector<2x128xf32> -> vector<2x128xf32>
    %59 = arith.truncf %55 : vector<2x128xf32> to vector<2x128xbf16>
    %c0_37 = arith.constant 0 : index
    %c0_38 = arith.constant 0 : index
    %60 = vector.load %arg18[%c0_37, %c0_38] : memref<128x128xbf16, #tpu.memory_space<vmem>>, vector<128x128xbf16>
    %cst_39 = arith.constant dense<0.000000e+00> : vector<2x128xf32>
    %61 = tpu.matmul %59, %60, %cst_39 {dimension_numbers = #tpu.dot_dimension_numbers<[1], [0], [0], [1], [0, 0, 1, 1], [], []>} : vector<2x128xbf16>, vector<128x128xbf16>, vector<2x128xf32> -> vector<2x128xf32>
    %62 = arith.addf %58, %61 : vector<2x128xf32>
    %c0_40 = arith.constant 0 : index
    %c0_41 = arith.constant 0 : index
    %63 = vector.load %arg21[%c0_40, %c0_41] : memref<1x128xf32, #tpu.memory_space<vmem>>, vector<1x128xf32>
    %64 = vector.broadcast %63 : vector<1x128xf32> to vector<2x128xf32>
    %65 = arith.addf %62, %64 : vector<2x128xf32>
    %66 = arith.negf %65 : vector<2x128xf32>
    %67 = math.exp %66 : vector<2x128xf32>
    %cst_42 = arith.constant 1.000000e+00 : f32
    %68 = vector.broadcast %cst_42 : f32 to vector<2x128xf32>
    %69 = arith.addf %68, %67 : vector<2x128xf32>
    %70 = arith.divf %68, %69 : vector<2x128xf32>
    %71 = arith.truncf %54 : vector<2x128xf32> to vector<2x128xbf16>
    %c0_43 = arith.constant 0 : index
    %c0_44 = arith.constant 0 : index
    %72 = vector.load %arg16[%c0_43, %c0_44] : memref<128x128xbf16, #tpu.memory_space<vmem>>, vector<128x128xbf16>
    %cst_45 = arith.constant dense<0.000000e+00> : vector<2x128xf32>
    %73 = tpu.matmul %71, %72, %cst_45 {dimension_numbers = #tpu.dot_dimension_numbers<[1], [0], [0], [1], [0, 0, 1, 1], [], []>} : vector<2x128xbf16>, vector<128x128xbf16>, vector<2x128xf32> -> vector<2x128xf32>
    %74 = arith.truncf %55 : vector<2x128xf32> to vector<2x128xbf16>
    %c0_46 = arith.constant 0 : index
    %c0_47 = arith.constant 0 : index
    %75 = vector.load %arg19[%c0_46, %c0_47] : memref<128x128xbf16, #tpu.memory_space<vmem>>, vector<128x128xbf16>
    %cst_48 = arith.constant dense<0.000000e+00> : vector<2x128xf32>
    %76 = tpu.matmul %74, %75, %cst_48 {dimension_numbers = #tpu.dot_dimension_numbers<[1], [0], [0], [1], [0, 0, 1, 1], [], []>} : vector<2x128xbf16>, vector<128x128xbf16>, vector<2x128xf32> -> vector<2x128xf32>
    %77 = arith.addf %73, %76 : vector<2x128xf32>
    %c0_49 = arith.constant 0 : index
    %c0_50 = arith.constant 0 : index
    %78 = vector.load %arg22[%c0_49, %c0_50] : memref<1x128xf32, #tpu.memory_space<vmem>>, vector<1x128xf32>
    %79 = vector.broadcast %78 : vector<1x128xf32> to vector<2x128xf32>
    %80 = arith.addf %77, %79 : vector<2x128xf32>
    %81 = arith.negf %80 : vector<2x128xf32>
    %82 = math.exp %81 : vector<2x128xf32>
    %cst_51 = arith.constant 1.000000e+00 : f32
    %83 = vector.broadcast %cst_51 : f32 to vector<2x128xf32>
    %84 = arith.addf %83, %82 : vector<2x128xf32>
    %85 = arith.divf %83, %84 : vector<2x128xf32>
    %86 = arith.truncf %54 : vector<2x128xf32> to vector<2x128xbf16>
    %c0_52 = arith.constant 0 : index
    %c0_53 = arith.constant 0 : index
    %87 = vector.load %arg17[%c0_52, %c0_53] : memref<128x128xbf16, #tpu.memory_space<vmem>>, vector<128x128xbf16>
    %cst_54 = arith.constant dense<0.000000e+00> : vector<2x128xf32>
    %88 = tpu.matmul %86, %87, %cst_54 {dimension_numbers = #tpu.dot_dimension_numbers<[1], [0], [0], [1], [0, 0, 1, 1], [], []>} : vector<2x128xbf16>, vector<128x128xbf16>, vector<2x128xf32> -> vector<2x128xf32>
    %c0_55 = arith.constant 0 : index
    %c0_56 = arith.constant 0 : index
    %89 = vector.load %arg23[%c0_55, %c0_56] : memref<1x128xf32, #tpu.memory_space<vmem>>, vector<1x128xf32>
    %90 = vector.broadcast %89 : vector<1x128xf32> to vector<2x128xf32>
    %91 = arith.addf %88, %90 : vector<2x128xf32>
    %92 = arith.truncf %55 : vector<2x128xf32> to vector<2x128xbf16>
    %c0_57 = arith.constant 0 : index
    %c0_58 = arith.constant 0 : index
    %93 = vector.load %arg20[%c0_57, %c0_58] : memref<128x128xbf16, #tpu.memory_space<vmem>>, vector<128x128xbf16>
    %cst_59 = arith.constant dense<0.000000e+00> : vector<2x128xf32>
    %94 = tpu.matmul %92, %93, %cst_59 {dimension_numbers = #tpu.dot_dimension_numbers<[1], [0], [0], [1], [0, 0, 1, 1], [], []>} : vector<2x128xbf16>, vector<128x128xbf16>, vector<2x128xf32> -> vector<2x128xf32>
    %c0_60 = arith.constant 0 : index
    %c0_61 = arith.constant 0 : index
    %95 = vector.load %arg24[%c0_60, %c0_61] : memref<1x128xf32, #tpu.memory_space<vmem>>, vector<1x128xf32>
    %96 = vector.broadcast %95 : vector<1x128xf32> to vector<2x128xf32>
    %97 = arith.addf %94, %96 : vector<2x128xf32>
    %98 = arith.mulf %70, %97 : vector<2x128xf32>
    %99 = arith.addf %91, %98 : vector<2x128xf32>
    %100 = math.tanh %99 : vector<2x128xf32>
    %cst_62 = arith.constant 1.000000e+00 : f32
    %101 = vector.broadcast %cst_62 : f32 to vector<2x128xf32>
    %102 = arith.subf %101, %85 : vector<2x128xf32>
    %103 = arith.mulf %102, %100 : vector<2x128xf32>
    %104 = arith.mulf %85, %55 : vector<2x128xf32>
    %105 = arith.addf %103, %104 : vector<2x128xf32>
    %c0_63 = arith.constant 0 : index
    %c0_64 = arith.constant 0 : index
    %106 = vector.load %arg3[%c0_63, %c0_64] : memref<2x128xf32, #tpu.memory_space<vmem>>, vector<2x128xf32>
    %107 = arith.truncf %105 : vector<2x128xf32> to vector<2x128xbf16>
    %c0_65 = arith.constant 0 : index
    %c0_66 = arith.constant 0 : index
    %108 = vector.load %arg25[%c0_65, %c0_66] : memref<128x128xbf16, #tpu.memory_space<vmem>>, vector<128x128xbf16>
    %cst_67 = arith.constant dense<0.000000e+00> : vector<2x128xf32>
    %109 = tpu.matmul %107, %108, %cst_67 {dimension_numbers = #tpu.dot_dimension_numbers<[1], [0], [0], [1], [0, 0, 1, 1], [], []>} : vector<2x128xbf16>, vector<128x128xbf16>, vector<2x128xf32> -> vector<2x128xf32>
    %110 = arith.truncf %106 : vector<2x128xf32> to vector<2x128xbf16>
    %c0_68 = arith.constant 0 : index
    %c0_69 = arith.constant 0 : index
    %111 = vector.load %arg28[%c0_68, %c0_69] : memref<128x128xbf16, #tpu.memory_space<vmem>>, vector<128x128xbf16>
    %cst_70 = arith.constant dense<0.000000e+00> : vector<2x128xf32>
    %112 = tpu.matmul %110, %111, %cst_70 {dimension_numbers = #tpu.dot_dimension_numbers<[1], [0], [0], [1], [0, 0, 1, 1], [], []>} : vector<2x128xbf16>, vector<128x128xbf16>, vector<2x128xf32> -> vector<2x128xf32>
    %113 = arith.addf %109, %112 : vector<2x128xf32>
    %c0_71 = arith.constant 0 : index
    %c0_72 = arith.constant 0 : index
    %114 = vector.load %arg31[%c0_71, %c0_72] : memref<1x128xf32, #tpu.memory_space<vmem>>, vector<1x128xf32>
    %115 = vector.broadcast %114 : vector<1x128xf32> to vector<2x128xf32>
    %116 = arith.addf %113, %115 : vector<2x128xf32>
    %117 = arith.negf %116 : vector<2x128xf32>
    %118 = math.exp %117 : vector<2x128xf32>
    %cst_73 = arith.constant 1.000000e+00 : f32
    %119 = vector.broadcast %cst_73 : f32 to vector<2x128xf32>
    %120 = arith.addf %119, %118 : vector<2x128xf32>
    %121 = arith.divf %119, %120 : vector<2x128xf32>
    %122 = arith.truncf %105 : vector<2x128xf32> to vector<2x128xbf16>
    %c0_74 = arith.constant 0 : index
    %c0_75 = arith.constant 0 : index
    %123 = vector.load %arg26[%c0_74, %c0_75] : memref<128x128xbf16, #tpu.memory_space<vmem>>, vector<128x128xbf16>
    %cst_76 = arith.constant dense<0.000000e+00> : vector<2x128xf32>
    %124 = tpu.matmul %122, %123, %cst_76 {dimension_numbers = #tpu.dot_dimension_numbers<[1], [0], [0], [1], [0, 0, 1, 1], [], []>} : vector<2x128xbf16>, vector<128x128xbf16>, vector<2x128xf32> -> vector<2x128xf32>
    %125 = arith.truncf %106 : vector<2x128xf32> to vector<2x128xbf16>
    %c0_77 = arith.constant 0 : index
    %c0_78 = arith.constant 0 : index
    %126 = vector.load %arg29[%c0_77, %c0_78] : memref<128x128xbf16, #tpu.memory_space<vmem>>, vector<128x128xbf16>
    %cst_79 = arith.constant dense<0.000000e+00> : vector<2x128xf32>
    %127 = tpu.matmul %125, %126, %cst_79 {dimension_numbers = #tpu.dot_dimension_numbers<[1], [0], [0], [1], [0, 0, 1, 1], [], []>} : vector<2x128xbf16>, vector<128x128xbf16>, vector<2x128xf32> -> vector<2x128xf32>
    %128 = arith.addf %124, %127 : vector<2x128xf32>
    %c0_80 = arith.constant 0 : index
    %c0_81 = arith.constant 0 : index
    %129 = vector.load %arg32[%c0_80, %c0_81] : memref<1x128xf32, #tpu.memory_space<vmem>>, vector<1x128xf32>
    %130 = vector.broadcast %129 : vector<1x128xf32> to vector<2x128xf32>
    %131 = arith.addf %128, %130 : vector<2x128xf32>
    %132 = arith.negf %131 : vector<2x128xf32>
    %133 = math.exp %132 : vector<2x128xf32>
    %cst_82 = arith.constant 1.000000e+00 : f32
    %134 = vector.broadcast %cst_82 : f32 to vector<2x128xf32>
    %135 = arith.addf %134, %133 : vector<2x128xf32>
    %136 = arith.divf %134, %135 : vector<2x128xf32>
    %137 = arith.truncf %105 : vector<2x128xf32> to vector<2x128xbf16>
    %c0_83 = arith.constant 0 : index
    %c0_84 = arith.constant 0 : index
    %138 = vector.load %arg27[%c0_83, %c0_84] : memref<128x128xbf16, #tpu.memory_space<vmem>>, vector<128x128xbf16>
    %cst_85 = arith.constant dense<0.000000e+00> : vector<2x128xf32>
    %139 = tpu.matmul %137, %138, %cst_85 {dimension_numbers = #tpu.dot_dimension_numbers<[1], [0], [0], [1], [0, 0, 1, 1], [], []>} : vector<2x128xbf16>, vector<128x128xbf16>, vector<2x128xf32> -> vector<2x128xf32>
    %c0_86 = arith.constant 0 : index
    %c0_87 = arith.constant 0 : index
    %140 = vector.load %arg33[%c0_86, %c0_87] : memref<1x128xf32, #tpu.memory_space<vmem>>, vector<1x128xf32>
    %141 = vector.broadcast %140 : vector<1x128xf32> to vector<2x128xf32>
    %142 = arith.addf %139, %141 : vector<2x128xf32>
    %143 = arith.truncf %106 : vector<2x128xf32> to vector<2x128xbf16>
    %c0_88 = arith.constant 0 : index
    %c0_89 = arith.constant 0 : index
    %144 = vector.load %arg30[%c0_88, %c0_89] : memref<128x128xbf16, #tpu.memory_space<vmem>>, vector<128x128xbf16>
    %cst_90 = arith.constant dense<0.000000e+00> : vector<2x128xf32>
    %145 = tpu.matmul %143, %144, %cst_90 {dimension_numbers = #tpu.dot_dimension_numbers<[1], [0], [0], [1], [0, 0, 1, 1], [], []>} : vector<2x128xbf16>, vector<128x128xbf16>, vector<2x128xf32> -> vector<2x128xf32>
    %c0_91 = arith.constant 0 : index
    %c0_92 = arith.constant 0 : index
    %146 = vector.load %arg34[%c0_91, %c0_92] : memref<1x128xf32, #tpu.memory_space<vmem>>, vector<1x128xf32>
    %147 = vector.broadcast %146 : vector<1x128xf32> to vector<2x128xf32>
    %148 = arith.addf %145, %147 : vector<2x128xf32>
    %149 = arith.mulf %121, %148 : vector<2x128xf32>
    %150 = arith.addf %142, %149 : vector<2x128xf32>
    %151 = math.tanh %150 : vector<2x128xf32>
    %cst_93 = arith.constant 1.000000e+00 : f32
    %152 = vector.broadcast %cst_93 : f32 to vector<2x128xf32>
    %153 = arith.subf %152, %136 : vector<2x128xf32>
    %154 = arith.mulf %153, %151 : vector<2x128xf32>
    %155 = arith.mulf %136, %106 : vector<2x128xf32>
    %156 = arith.addf %154, %155 : vector<2x128xf32>
    %c0_94 = arith.constant 0 : index
    %c0_95 = arith.constant 0 : index
    %157 = vector.load %arg4[%c0_94, %c0_95] : memref<2x128xf32, #tpu.memory_space<vmem>>, vector<2x128xf32>
    %158 = arith.truncf %156 : vector<2x128xf32> to vector<2x128xbf16>
    %c0_96 = arith.constant 0 : index
    %c0_97 = arith.constant 0 : index
    %159 = vector.load %arg35[%c0_96, %c0_97] : memref<128x128xbf16, #tpu.memory_space<vmem>>, vector<128x128xbf16>
    %cst_98 = arith.constant dense<0.000000e+00> : vector<2x128xf32>
    %160 = tpu.matmul %158, %159, %cst_98 {dimension_numbers = #tpu.dot_dimension_numbers<[1], [0], [0], [1], [0, 0, 1, 1], [], []>} : vector<2x128xbf16>, vector<128x128xbf16>, vector<2x128xf32> -> vector<2x128xf32>
    %161 = arith.truncf %157 : vector<2x128xf32> to vector<2x128xbf16>
    %c0_99 = arith.constant 0 : index
    %c0_100 = arith.constant 0 : index
    %162 = vector.load %arg38[%c0_99, %c0_100] : memref<128x128xbf16, #tpu.memory_space<vmem>>, vector<128x128xbf16>
    %cst_101 = arith.constant dense<0.000000e+00> : vector<2x128xf32>
    %163 = tpu.matmul %161, %162, %cst_101 {dimension_numbers = #tpu.dot_dimension_numbers<[1], [0], [0], [1], [0, 0, 1, 1], [], []>} : vector<2x128xbf16>, vector<128x128xbf16>, vector<2x128xf32> -> vector<2x128xf32>
    %164 = arith.addf %160, %163 : vector<2x128xf32>
    %c0_102 = arith.constant 0 : index
    %c0_103 = arith.constant 0 : index
    %165 = vector.load %arg41[%c0_102, %c0_103] : memref<1x128xf32, #tpu.memory_space<vmem>>, vector<1x128xf32>
    %166 = vector.broadcast %165 : vector<1x128xf32> to vector<2x128xf32>
    %167 = arith.addf %164, %166 : vector<2x128xf32>
    %168 = arith.negf %167 : vector<2x128xf32>
    %169 = math.exp %168 : vector<2x128xf32>
    %cst_104 = arith.constant 1.000000e+00 : f32
    %170 = vector.broadcast %cst_104 : f32 to vector<2x128xf32>
    %171 = arith.addf %170, %169 : vector<2x128xf32>
    %172 = arith.divf %170, %171 : vector<2x128xf32>
    %173 = arith.truncf %156 : vector<2x128xf32> to vector<2x128xbf16>
    %c0_105 = arith.constant 0 : index
    %c0_106 = arith.constant 0 : index
    %174 = vector.load %arg36[%c0_105, %c0_106] : memref<128x128xbf16, #tpu.memory_space<vmem>>, vector<128x128xbf16>
    %cst_107 = arith.constant dense<0.000000e+00> : vector<2x128xf32>
    %175 = tpu.matmul %173, %174, %cst_107 {dimension_numbers = #tpu.dot_dimension_numbers<[1], [0], [0], [1], [0, 0, 1, 1], [], []>} : vector<2x128xbf16>, vector<128x128xbf16>, vector<2x128xf32> -> vector<2x128xf32>
    %176 = arith.truncf %157 : vector<2x128xf32> to vector<2x128xbf16>
    %c0_108 = arith.constant 0 : index
    %c0_109 = arith.constant 0 : index
    %177 = vector.load %arg39[%c0_108, %c0_109] : memref<128x128xbf16, #tpu.memory_space<vmem>>, vector<128x128xbf16>
    %cst_110 = arith.constant dense<0.000000e+00> : vector<2x128xf32>
    %178 = tpu.matmul %176, %177, %cst_110 {dimension_numbers = #tpu.dot_dimension_numbers<[1], [0], [0], [1], [0, 0, 1, 1], [], []>} : vector<2x128xbf16>, vector<128x128xbf16>, vector<2x128xf32> -> vector<2x128xf32>
    %179 = arith.addf %175, %178 : vector<2x128xf32>
    %c0_111 = arith.constant 0 : index
    %c0_112 = arith.constant 0 : index
    %180 = vector.load %arg42[%c0_111, %c0_112] : memref<1x128xf32, #tpu.memory_space<vmem>>, vector<1x128xf32>
    %181 = vector.broadcast %180 : vector<1x128xf32> to vector<2x128xf32>
    %182 = arith.addf %179, %181 : vector<2x128xf32>
    %183 = arith.negf %182 : vector<2x128xf32>
    %184 = math.exp %183 : vector<2x128xf32>
    %cst_113 = arith.constant 1.000000e+00 : f32
    %185 = vector.broadcast %cst_113 : f32 to vector<2x128xf32>
    %186 = arith.addf %185, %184 : vector<2x128xf32>
    %187 = arith.divf %185, %186 : vector<2x128xf32>
    %188 = arith.truncf %156 : vector<2x128xf32> to vector<2x128xbf16>
    %c0_114 = arith.constant 0 : index
    %c0_115 = arith.constant 0 : index
    %189 = vector.load %arg37[%c0_114, %c0_115] : memref<128x128xbf16, #tpu.memory_space<vmem>>, vector<128x128xbf16>
    %cst_116 = arith.constant dense<0.000000e+00> : vector<2x128xf32>
    %190 = tpu.matmul %188, %189, %cst_116 {dimension_numbers = #tpu.dot_dimension_numbers<[1], [0], [0], [1], [0, 0, 1, 1], [], []>} : vector<2x128xbf16>, vector<128x128xbf16>, vector<2x128xf32> -> vector<2x128xf32>
    %c0_117 = arith.constant 0 : index
    %c0_118 = arith.constant 0 : index
    %191 = vector.load %arg43[%c0_117, %c0_118] : memref<1x128xf32, #tpu.memory_space<vmem>>, vector<1x128xf32>
    %192 = vector.broadcast %191 : vector<1x128xf32> to vector<2x128xf32>
    %193 = arith.addf %190, %192 : vector<2x128xf32>
    %194 = arith.truncf %157 : vector<2x128xf32> to vector<2x128xbf16>
    %c0_119 = arith.constant 0 : index
    %c0_120 = arith.constant 0 : index
    %195 = vector.load %arg40[%c0_119, %c0_120] : memref<128x128xbf16, #tpu.memory_space<vmem>>, vector<128x128xbf16>
    %cst_121 = arith.constant dense<0.000000e+00> : vector<2x128xf32>
    %196 = tpu.matmul %194, %195, %cst_121 {dimension_numbers = #tpu.dot_dimension_numbers<[1], [0], [0], [1], [0, 0, 1, 1], [], []>} : vector<2x128xbf16>, vector<128x128xbf16>, vector<2x128xf32> -> vector<2x128xf32>
    %c0_122 = arith.constant 0 : index
    %c0_123 = arith.constant 0 : index
    %197 = vector.load %arg44[%c0_122, %c0_123] : memref<1x128xf32, #tpu.memory_space<vmem>>, vector<1x128xf32>
    %198 = vector.broadcast %197 : vector<1x128xf32> to vector<2x128xf32>
    %199 = arith.addf %196, %198 : vector<2x128xf32>
    %200 = arith.mulf %172, %199 : vector<2x128xf32>
    %201 = arith.addf %193, %200 : vector<2x128xf32>
    %202 = math.tanh %201 : vector<2x128xf32>
    %cst_124 = arith.constant 1.000000e+00 : f32
    %203 = vector.broadcast %cst_124 : f32 to vector<2x128xf32>
    %204 = arith.subf %203, %187 : vector<2x128xf32>
    %205 = arith.mulf %204, %202 : vector<2x128xf32>
    %206 = arith.mulf %187, %157 : vector<2x128xf32>
    %207 = arith.addf %205, %206 : vector<2x128xf32>
    %208 = arith.truncf %207 : vector<2x128xf32> to vector<2x128xbf16>
    %c0_125 = arith.constant 0 : index
    %c0_126 = arith.constant 0 : index
    %209 = vector.load %arg45[%c0_125, %c0_126] : memref<128x128xbf16, #tpu.memory_space<vmem>>, vector<128x128xbf16>
    %cst_127 = arith.constant dense<0.000000e+00> : vector<2x128xf32>
    %210 = tpu.matmul %208, %209, %cst_127 {dimension_numbers = #tpu.dot_dimension_numbers<[1], [0], [0], [1], [0, 0, 1, 1], [], []>} : vector<2x128xbf16>, vector<128x128xbf16>, vector<2x128xf32> -> vector<2x128xf32>
    %211 = arith.truncf %54 : vector<2x128xf32> to vector<2x128xbf16>
    %c0_128 = arith.constant 0 : index
    %c0_129 = arith.constant 0 : index
    %212 = vector.load %arg46[%c0_128, %c0_129] : memref<128x128xbf16, #tpu.memory_space<vmem>>, vector<128x128xbf16>
    %cst_130 = arith.constant dense<0.000000e+00> : vector<2x128xf32>
    %213 = tpu.matmul %211, %212, %cst_130 {dimension_numbers = #tpu.dot_dimension_numbers<[1], [0], [0], [1], [0, 0, 1, 1], [], []>} : vector<2x128xbf16>, vector<128x128xbf16>, vector<2x128xf32> -> vector<2x128xf32>
    %214 = arith.addf %210, %213 : vector<2x128xf32>
    %c0_131 = arith.constant 0 : index
    %c0_132 = arith.constant 0 : index
    %215 = vector.load %arg47[%c0_131, %c0_132] : memref<1x128xf32, #tpu.memory_space<vmem>>, vector<1x128xf32>
    %216 = vector.broadcast %215 : vector<1x128xf32> to vector<2x128xf32>
    %217 = arith.addf %214, %216 : vector<2x128xf32>
    %218 = math.tanh %217 : vector<2x128xf32>
    %219 = vector.extract_strided_slice %1 {offsets = [0, 2], sizes = [2, 1], strides = [1, 1]} : vector<2x128xf32> to vector<2x1xf32>
    %220 = math.exp %219 : vector<2x1xf32>
    %221 = tpu.iota {dimensions = array<i32: 1>} : vector<2x128xi32>
    %c2_i32 = arith.constant 2 : i32
    %222 = vector.broadcast %c2_i32 : i32 to vector<2x128xi32>
    %223 = arith.cmpi slt, %221, %222 : vector<2x128xi32>
    %cst_133 = arith.constant 1.000000e+00 : f32
    %224 = vector.shape_cast %220 : vector<2x1xf32> to vector<2x1xf32>
    %225 = vector.broadcast %224 : vector<2x1xf32> to vector<2x128xf32>
    %226 = vector.broadcast %cst_133 : f32 to vector<2x128xf32>
    %227 = arith.select %223, %225, %226 : vector<2x128xi1>, vector<2x128xf32>
    %228 = arith.mulf %227, %218 : vector<2x128xf32>
    %229 = arith.addf %1, %228 : vector<2x128xf32>
    %c0_134 = arith.constant 0 : index
    %c0_135 = arith.constant 0 : index
    %230 = vector.load %arg48[%c0_134, %c0_135] : memref<2x128xf32, #tpu.memory_space<vmem>>, vector<2x128xf32>
    tpu.vector_store %arg48[%c0_134, %c0_135], %229 {strides = array<i32>} : memref<2x128xf32, #tpu.memory_space<vmem>>, vector<2x128xf32>,
    %c0_136 = arith.constant 0 : index
    %c0_137 = arith.constant 0 : index
    %231 = vector.load %arg49[%c0_136, %c0_137] : memref<2x128xf32, #tpu.memory_space<vmem>>, vector<2x128xf32>
    tpu.vector_store %arg49[%c0_136, %c0_137], %105 {strides = array<i32>} : memref<2x128xf32, #tpu.memory_space<vmem>>, vector<2x128xf32>,
    %c0_138 = arith.constant 0 : index
    %c0_139 = arith.constant 0 : index
    %232 = vector.load %arg50[%c0_138, %c0_139] : memref<2x128xf32, #tpu.memory_space<vmem>>, vector<2x128xf32>
    tpu.vector_store %arg50[%c0_138, %c0_139], %156 {strides = array<i32>} : memref<2x128xf32, #tpu.memory_space<vmem>>, vector<2x128xf32>,
    %c0_140 = arith.constant 0 : index
    %c0_141 = arith.constant 0 : index
    %233 = vector.load %arg51[%c0_140, %c0_141] : memref<2x128xf32, #tpu.memory_space<vmem>>, vector<2x128xf32>
    tpu.vector_store %arg51[%c0_140, %c0_141], %207 {strides = array<i32>} : memref<2x128xf32, #tpu.memory_space<vmem>>, vector<2x128xf32>,
    return
  }
}

</mosaic_0001>

<llo_original>
// kernel: neuralnet_forward.1
$region0: #{neuralnet_forward.1}
  #allocation0 [shape = 'u32[]', space=smem, size = 0x4, offset = 0x4, fixed_abs, tag = 'smem constant byte address 0x4 - core index']
  #allocation1 [shape = 'u32[144,128]{1,0:T(1,128)}', space=vmem, size = 0x12000, scoped, tag = 'internal scratch']
  %s0 = inlined_call_operand.smem [shape: u32[52], index: -1, kind: input, shape index: {}]
  %s1 = sld [smem:[%s0]]
  %s2 = scalar_lea.smem %s0, 1
  %s3 = sld [smem:[%s2]]
  %s4 = scalar_lea.smem %s0, 2
  %s5 = sld [smem:[%s4]]
  %s6 = scalar_lea.smem %s0, 3
  %s7 = sld [smem:[%s6]]
  %s8 = scalar_lea.smem %s0, 4
  %s9 = sld [smem:[%s8]]
  %s10 = scalar_lea.smem %s0, 5
  %s11 = sld [smem:[%s10]]
  %s12 = scalar_lea.smem %s0, 6
  %s13 = sld [smem:[%s12]]
  %s14 = scalar_lea.smem %s0, 7
  %s15 = sld [smem:[%s14]]
  %s16 = scalar_lea.smem %s0, 8
  %s17 = sld [smem:[%s16]]
  %s18 = scalar_lea.smem %s0, 9
  %s19 = sld [smem:[%s18]]
  %s20 = scalar_lea.smem %s0, 10
  %s21 = sld [smem:[%s20]]
  %s22 = scalar_lea.smem %s0, 11
  %s23 = sld [smem:[%s22]]
  %s24 = scalar_lea.smem %s0, 12
  %s25 = sld [smem:[%s24]]
  %s26 = scalar_lea.smem %s0, 13
  %s27 = sld [smem:[%s26]]
  %s28 = scalar_lea.smem %s0, 14
  %s29 = sld [smem:[%s28]]
  %s30 = scalar_lea.smem %s0, 15
  %s31 = sld [smem:[%s30]]
  %s32 = scalar_lea.smem %s0, 16
  %s33 = sld [smem:[%s32]]
  %s34 = scalar_lea.smem %s0, 17
  %s35 = sld [smem:[%s34]]
  %s36 = scalar_lea.smem %s0, 18
  %s37 = sld [smem:[%s36]]
  %s38 = scalar_lea.smem %s0, 19
  %s39 = sld [smem:[%s38]]
  %s40 = scalar_lea.smem %s0, 20
  %s41 = sld [smem:[%s40]]
  %s42 = scalar_lea.smem %s0, 21
  %s43 = sld [smem:[%s42]]
  %s44 = scalar_lea.smem %s0, 22
  %s45 = sld [smem:[%s44]]
  %s46 = scalar_lea.smem %s0, 23
  %s47 = sld [smem:[%s46]]
  %s48 = scalar_lea.smem %s0, 24
  %s49 = sld [smem:[%s48]]
  %s50 = scalar_lea.smem %s0, 25
  %s51 = sld [smem:[%s50]]
  %s52 = scalar_lea.smem %s0, 26
  %s53 = sld [smem:[%s52]]
  %s54 = scalar_lea.smem %s0, 27
  %s55 = sld [smem:[%s54]]
  %s56 = scalar_lea.smem %s0, 28
  %s57 = sld [smem:[%s56]]
  %s58 = scalar_lea.smem %s0, 29
  %s59 = sld [smem:[%s58]]
  %s60 = scalar_lea.smem %s0, 30
  %s61 = sld [smem:[%s60]]
  %s62 = scalar_lea.smem %s0, 31
  %s63 = sld [smem:[%s62]]
  %s64 = scalar_lea.smem %s0, 32
  %s65 = sld [smem:[%s64]]
  %s66 = scalar_lea.smem %s0, 33
  %s67 = sld [smem:[%s66]]
  %s68 = scalar_lea.smem %s0, 34
  %s69 = sld [smem:[%s68]]
  %s70 = scalar_lea.smem %s0, 35
  %s71 = sld [smem:[%s70]]
  %s72 = scalar_lea.smem %s0, 36
  %s73 = sld [smem:[%s72]]
  %s74 = scalar_lea.smem %s0, 37
  %s75 = sld [smem:[%s74]]
  %s76 = scalar_lea.smem %s0, 38
  %s77 = sld [smem:[%s76]]
  %s78 = scalar_lea.smem %s0, 39
  %s79 = sld [smem:[%s78]]
  %s80 = scalar_lea.smem %s0, 40
  %s81 = sld [smem:[%s80]]
  %s82 = scalar_lea.smem %s0, 41
  %s83 = sld [smem:[%s82]]
  %s84 = scalar_lea.smem %s0, 42
  %s85 = sld [smem:[%s84]]
  %s86 = scalar_lea.smem %s0, 43
  %s87 = sld [smem:[%s86]]
  %s88 = scalar_lea.smem %s0, 44
  %s89 = sld [smem:[%s88]]
  %s90 = scalar_lea.smem %s0, 45
  %s91 = sld [smem:[%s90]]
  %s92 = scalar_lea.smem %s0, 46
  %s93 = sld [smem:[%s92]]
  %s94 = scalar_lea.smem %s0, 47
  %s95 = sld [smem:[%s94]]
  %s96 = scalar_lea.smem %s0, 48
  %s97 = sld [smem:[%s96]]
  %s98 = scalar_lea.smem %s0, 49
  %s99 = sld [smem:[%s98]]
  %s100 = scalar_lea.smem %s0, 50
  %s101 = sld [smem:[%s100]]
  %s102 = scalar_lea.smem %s0, 51
  %s103 = sld [smem:[%s102]]
  %104 = xla_tuple %s97, %s99, %s101, %s103
  %s105 = sld [smem:[#allocation0]]
  $region398: #{neuralnet_forward.1} parent=0
    _
  %s107 = ssub.s32 1, %s105
  %s108 = scalar_select 0, %s107, %s105
  $region1: #{neuralnet_forward.1} parent=0
    #allocation2 [shape = 'u8[2457600]{0}', space=vmem, size = 0x258000, scoped, tag = 'input window, operand 5, single buffered']
    #allocation3 [shape = 's32[1]{0}', space=sflag, size = 0x4, scoped, tag = 'scoped memory for neuralnet_forward.1']
    #allocation4 [shape = 'u8[4096]{0}', space=vmem, size = 0x1000, scoped, tag = 'input window, operand 6, single buffered']
    #allocation5 [shape = 's32[1]{0}', space=sflag, size = 0x4, scoped, tag = 'scoped memory for neuralnet_forward.1']
    #allocation6 [shape = 'u8[262144]{0}', space=vmem, size = 0x40000, scoped, tag = 'input window, operand 7, single buffered']
    #allocation7 [shape = 'u8[512]{0}', space=vmem, size = 0x400, scoped, tag = 'input window, operand 8, single buffered']
    #allocation8 [shape = 's32[1]{0}', space=sflag, size = 0x4, scoped, tag = 'scoped memory for neuralnet_forward.1']
    #allocation9 [shape = 'u8[32768]{0}', space=vmem, size = 0x8000, scoped, tag = 'input window, operand 9, single buffered']
    #allocation10 [shape = 'u8[32768]{0}', space=vmem, size = 0x8000, scoped, tag = 'input window, operand 10, single buffered']
    #allocation11 [shape = 's32[1]{0}', space=sflag, size = 0x4, scoped, tag = 'scoped memory for neuralnet_forward.1']
    #allocation12 [shape = 'u8[512]{0}', space=vmem, size = 0x400, scoped, tag = 'input window, operand 11, single buffered']
    #allocation13 [shape = 'u8[32768]{0}', space=vmem, size = 0x8000, scoped, tag = 'input window, operand 12, single buffered']
    #allocation14 [shape = 's32[1]{0}', space=sflag, size = 0x4, scoped, tag = 'scoped memory for neuralnet_forward.1']
    #allocation15 [shape = 'u8[32768]{0}', space=vmem, size = 0x8000, scoped, tag = 'input window, operand 13, single buffered']
    #allocation16 [shape = 'u8[512]{0}', space=vmem, size = 0x400, scoped, tag = 'input window, operand 14, single buffered']
    #allocation17 [shape = 's32[1]{0}', space=sflag, size = 0x4, scoped, tag = 'scoped memory for neuralnet_forward.1']
    #allocation18 [shape = 'u8[32768]{0}', space=vmem, size = 0x8000, scoped, tag = 'input window, operand 15, single buffered']
    #allocation19 [shape = 'u8[32768]{0}', space=vmem, size = 0x8000, scoped, tag = 'input window, operand 16, single buffered']
    #allocation20 [shape = 's32[1]{0}', space=sflag, size = 0x4, scoped, tag = 'scoped memory for neuralnet_forward.1']
    #allocation21 [shape = 'u8[32768]{0}', space=vmem, size = 0x8000, scoped, tag = 'input window, operand 17, single buffered']
    #allocation22 [shape = 'u8[32768]{0}', space=vmem, size = 0x8000, scoped, tag = 'input window, operand 18, single buffered']
    #allocation23 [shape = 's32[1]{0}', space=sflag, size = 0x4, scoped, tag = 'scoped memory for neuralnet_forward.1']
    #allocation24 [shape = 'u8[32768]{0}', space=vmem, size = 0x8000, scoped, tag = 'input window, operand 19, single buffered']
    #allocation25 [shape = 'u8[32768]{0}', space=vmem, size = 0x8000, scoped, tag = 'input window, operand 20, single buffered']
    #allocation26 [shape = 's32[1]{0}', space=sflag, size = 0x4, scoped, tag = 'scoped memory for neuralnet_forward.1']
    #allocation27 [shape = 'u8[512]{0}', space=vmem, size = 0x400, scoped, tag = 'input window, operand 21, single buffered']
    #allocation28 [shape = 'u8[512]{0}', space=vmem, size = 0x400, scoped, tag = 'input window, operand 22, single buffered']
    #allocation29 [shape = 's32[1]{0}', space=sflag, size = 0x4, scoped, tag = 'scoped memory for neuralnet_forward.1']
    #allocation30 [shape = 'u8[512]{0}', space=vmem, size = 0x400, scoped, tag = 'input window, operand 23, single buffered']
    #allocation31 [shape = 'u8[512]{0}', space=vmem, size = 0x400, scoped, tag = 'input window, operand 24, single buffered']
    #allocation32 [shape = 's32[1]{0}', space=sflag, size = 0x4, scoped, tag = 'scoped memory for neuralnet_forward.1']
    #allocation33 [shape = 'u8[32768]{0}', space=vmem, size = 0x8000, scoped, tag = 'input window, operand 25, single buffered']
    #allocation34 [shape = 'u8[32768]{0}', space=vmem, size = 0x8000, scoped, tag = 'input window, operand 26, single buffered']
    #allocation35 [shape = 's32[1]{0}', space=sflag, size = 0x4, scoped, tag = 'scoped memory for neuralnet_forward.1']
    #allocation36 [shape = 'u8[32768]{0}', space=vmem, size = 0x8000, scoped, tag = 'input window, operand 27, single buffered']
    #allocation37 [shape = 'u8[32768]{0}', space=vmem, size = 0x8000, scoped, tag = 'input window, operand 28, single buffered']
    #allocation38 [shape = 's32[1]{0}', space=sflag, size = 0x4, scoped, tag = 'scoped memory for neuralnet_forward.1']
    #allocation39 [shape = 'u8[32768]{0}', space=vmem, size = 0x8000, scoped, tag = 'input window, operand 29, single buffered']
    #allocation40 [shape = 'u8[32768]{0}', space=vmem, size = 0x8000, scoped, tag = 'input window, operand 30, single buffered']
    #allocation41 [shape = 's32[1]{0}', space=sflag, size = 0x4, scoped, tag = 'scoped memory for neuralnet_forward.1']
    #allocation42 [shape = 'u8[512]{0}', space=vmem, size = 0x400, scoped, tag = 'input window, operand 31, single buffered']
    #allocation43 [shape = 'u8[512]{0}', space=vmem, size = 0x400, scoped, tag = 'input window, operand 32, single buffered']
    #allocation44 [shape = 's32[1]{0}', space=sflag, size = 0x4, scoped, tag = 'scoped memory for neuralnet_forward.1']
    #allocation45 [shape = 'u8[512]{0}', space=vmem, size = 0x400, scoped, tag = 'input window, operand 33, single buffered']
    #allocation46 [shape = 'u8[512]{0}', space=vmem, size = 0x400, scoped, tag = 'input window, operand 34, single buffered']
    #allocation47 [shape = 's32[1]{0}', space=sflag, size = 0x4, scoped, tag = 'scoped memory for neuralnet_forward.1']
    #allocation48 [shape = 'u8[32768]{0}', space=vmem, size = 0x8000, scoped, tag = 'input window, operand 35, single buffered']
    #allocation49 [shape = 'u8[32768]{0}', space=vmem, size = 0x8000, scoped, tag = 'input window, operand 36, single buffered']
    #allocation50 [shape = 's32[1]{0}', space=sflag, size = 0x4, scoped, tag = 'scoped memory for neuralnet_forward.1']
    #allocation51 [shape = 'u8[32768]{0}', space=vmem, size = 0x8000, scoped, tag = 'input window, operand 37, single buffered']
    #allocation52 [shape = 'u8[32768]{0}', space=vmem, size = 0x8000, scoped, tag = 'input window, operand 38, single buffered']
    #allocation53 [shape = 's32[1]{0}', space=sflag, size = 0x4, scoped, tag = 'scoped memory for neuralnet_forward.1']
    #allocation54 [shape = 'u8[32768]{0}', space=vmem, size = 0x8000, scoped, tag = 'input window, operand 39, single buffered']
    #allocation55 [shape = 'u8[32768]{0}', space=vmem, size = 0x8000, scoped, tag = 'input window, operand 40, single buffered']
    #allocation56 [shape = 's32[1]{0}', space=sflag, size = 0x4, scoped, tag = 'scoped memory for neuralnet_forward.1']
    #allocation57 [shape = 'u8[512]{0}', space=vmem, size = 0x400, scoped, tag = 'input window, operand 41, single buffered']
    #allocation58 [shape = 'u8[512]{0}', space=vmem, size = 0x400, scoped, tag = 'input window, operand 42, single buffered']
    #allocation59 [shape = 's32[1]{0}', space=sflag, size = 0x4, scoped, tag = 'scoped memory for neuralnet_forward.1']
    #allocation60 [shape = 'u8[512]{0}', space=vmem, size = 0x400, scoped, tag = 'input window, operand 43, single buffered']
    #allocation61 [shape = 'u8[512]{0}', space=vmem, size = 0x400, scoped, tag = 'input window, operand 44, single buffered']
    #allocation62 [shape = 's32[1]{0}', space=sflag, size = 0x4, scoped, tag = 'scoped memory for neuralnet_forward.1']
    #allocation63 [shape = 'u8[32768]{0}', space=vmem, size = 0x8000, scoped, tag = 'input window, operand 45, single buffered']
    #allocation64 [shape = 'u8[32768]{0}', space=vmem, size = 0x8000, scoped, tag = 'input window, operand 46, single buffered']
    #allocation65 [shape = 's32[1]{0}', space=sflag, size = 0x4, scoped, tag = 'scoped memory for neuralnet_forward.1']
    #allocation66 [shape = 'u8[512]{0}', space=vmem, size = 0x400, scoped, tag = 'input window, operand 47, single buffered']
    %109 = vsyncpa [#allocation3], 0
    %110 = vsyncpa [#allocation5], 0
    %111 = vsyncpa [#allocation8], 0
    %112 = vsyncpa [#allocation11], 0
    %113 = vsyncpa [#allocation14], 0
    %114 = vsyncpa [#allocation17], 0
    %115 = vsyncpa [#allocation20], 0
    %116 = vsyncpa [#allocation23], 0
    %117 = vsyncpa [#allocation26], 0
    %118 = vsyncpa [#allocation29], 0
    %119 = vsyncpa [#allocation32], 0
    %120 = vsyncpa [#allocation35], 0
    %121 = vsyncpa [#allocation38], 0
    %122 = vsyncpa [#allocation41], 0
    %123 = vsyncpa [#allocation44], 0
    %124 = vsyncpa [#allocation47], 0
    %125 = vsyncpa [#allocation50], 0
    %126 = vsyncpa [#allocation53], 0
    %127 = vsyncpa [#allocation56], 0
    %128 = vsyncpa [#allocation59], 0
    %129 = vsyncpa [#allocation62], 0
    %130 = vsyncpa [#allocation65], 0
    // Predicated region
    $region2: #{neuralnet_forward.1} parent=1 // pred_check
      _
    $region3: #{neuralnet_forward.1} parent=1 // pred_check_branch
      %132 = sbr.rel (0) target = $region5
    $region4: #{neuralnet_forward.1} parent=1 // pred_region
      _
    $region5: #{neuralnet_forward.1} parent=1 // pred_fallthru
      _
    // Predicated region
    $region6: #{neuralnet_forward.1} parent=1 // pred_check
      _
    $region7: #{neuralnet_forward.1} parent=1 // pred_check_branch
      %134 = sbr.rel (0) target = $region9
    $region8: #{neuralnet_forward.1} parent=1 // pred_region
      _
    $region9: #{neuralnet_forward.1} parent=1 // pred_fallthru
      _
    // Predicated region
    $region10: #{neuralnet_forward.1} parent=1 // pred_check
      _
    $region11: #{neuralnet_forward.1} parent=1 // pred_check_branch
      %136 = sbr.rel (0) target = $region13
    $region12: #{neuralnet_forward.1} parent=1 // pred_region
      _
    $region13: #{neuralnet_forward.1} parent=1 // pred_fallthru
      _
    // Predicated region
    $region14: #{neuralnet_forward.1} parent=1 // pred_check
      _
    $region15: #{neuralnet_forward.1} parent=1 // pred_check_branch
      %138 = sbr.rel (0) target = $region17
    $region16: #{neuralnet_forward.1} parent=1 // pred_region
      _
    $region17: #{neuralnet_forward.1} parent=1 // pred_fallthru
      _
    // Predicated region
    $region18: #{neuralnet_forward.1} parent=1 // pred_check
      _
    $region19: #{neuralnet_forward.1} parent=1 // pred_check_branch
      %140 = sbr.rel (0) target = $region21
    $region20: #{neuralnet_forward.1} parent=1 // pred_region
      _
    $region21: #{neuralnet_forward.1} parent=1 // pred_fallthru
      _
    // Predicated region
    $region22: #{neuralnet_forward.1} parent=1 // pred_check
      _
    $region23: #{neuralnet_forward.1} parent=1 // pred_check_branch
      %142 = sbr.rel (0) target = $region25
    $region24: #{neuralnet_forward.1} parent=1 // pred_region
      %s144 = ssub.s32 76800, 76800
      %145 = vsyncadd [#allocation3], %s144
      %s146 = sshll.u32 [#allocation2], 4
      %s147 = int_to_ptr.vmem [resolvable:$true] %s146
      %152 = dma.hbm_to_vmem [thread:$0]  %s11, 76800, %s147, [#allocation3], 512, 512, 32
    $region25: #{neuralnet_forward.1} parent=1 // pred_fallthru
      _
    // Predicated region
    $region26: #{neuralnet_forward.1} parent=1 // pred_check
      _
    $region27: #{neuralnet_forward.1} parent=1 // pred_check_branch
      %154 = sbr.rel (0) target = $region29
    $region28: #{neuralnet_forward.1} parent=1 // pred_region
      %s156 = ssub.s32 128, 128
      %157 = vsyncadd [#allocation5], %s156
      %s159 = sshll.u32 [#allocation4], 4
      %s160 = int_to_ptr.vmem [resolvable:$true] %s159
      %162 = dma.hbm_to_vmem [thread:$0]  %s13, 128, %s160, [#allocation5]
    $region29: #{neuralnet_forward.1} parent=1 // pred_fallthru
      _
    // Predicated region
    $region30: #{neuralnet_forward.1} parent=1 // pred_check
      _
    $region31: #{neuralnet_forward.1} parent=1 // pred_check_branch
      %164 = sbr.rel (0) target = $region33
    $region32: #{neuralnet_forward.1} parent=1 // pred_region
      %s166 = ssub.s32 8192, 8192
      %167 = vsyncadd [#allocation5], %s166
      %s168 = sshll.u32 [#allocation6], 4
      %s169 = int_to_ptr.vmem [resolvable:$true] %s168
      %174 = dma.hbm_to_vmem [thread:$0]  %s15, 8192, %s169, [#allocation5], 64, 64, 4
    $region33: #{neuralnet_forward.1} parent=1 // pred_fallthru
      _
    // Predicated region
    $region34: #{neuralnet_forward.1} parent=1 // pred_check
      _
    $region35: #{neuralnet_forward.1} parent=1 // pred_check_branch
      %176 = sbr.rel (0) target = $region37
    $region36: #{neuralnet_forward.1} parent=1 // pred_region
      %s178 = ssub.s32 16, 16
      %179 = vsyncadd [#allocation8], %s178
      %s181 = sshll.u32 [#allocation7], 4
      %s182 = int_to_ptr.vmem [resolvable:$true] %s181
      %184 = dma.hbm_to_vmem [thread:$0]  %s17, 16, %s182, [#allocation8]
    $region37: #{neuralnet_forward.1} parent=1 // pred_fallthru
      _
    // Predicated region
    $region38: #{neuralnet_forward.1} parent=1 // pred_check
      _
    $region39: #{neuralnet_forward.1} parent=1 // pred_check_branch
      %186 = sbr.rel (0) target = $region41
    $region40: #{neuralnet_forward.1} parent=1 // pred_region
      %s188 = ssub.s32 1024, 1024
      %189 = vsyncadd [#allocation8], %s188
      %s190 = sshll.u32 [#allocation9], 4
      %s191 = int_to_ptr.vmem [resolvable:$true] %s190
      %196 = dma.hbm_to_vmem [thread:$0]  %s19, 1024, %s191, [#allocation8], 64, 64, 4
    $region41: #{neuralnet_forward.1} parent=1 // pred_fallthru
      _
    // Predicated region
    $region42: #{neuralnet_forward.1} parent=1 // pred_check
      _
    $region43: #{neuralnet_forward.1} parent=1 // pred_check_branch
      %198 = sbr.rel (0) target = $region45
    $region44: #{neuralnet_forward.1} parent=1 // pred_region
      %s200 = ssub.s32 1024, 1024
      %201 = vsyncadd [#allocation11], %s200
      %s202 = sshll.u32 [#allocation10], 4
      %s203 = int_to_ptr.vmem [resolvable:$true] %s202
      %208 = dma.hbm_to_vmem [thread:$0]  %s21, 1024, %s203, [#allocation11], 64, 64, 4
    $region45: #{neuralnet_forward.1} parent=1 // pred_fallthru
      _
    // Predicated region
    $region46: #{neuralnet_forward.1} parent=1 // pred_check
      _
    $region47: #{neuralnet_forward.1} parent=1 // pred_check_branch
      %210 = sbr.rel (0) target = $region49
    $region48: #{neuralnet_forward.1} parent=1 // pred_region
      %s212 = ssub.s32 16, 16
      %213 = vsyncadd [#allocation11], %s212
      %s215 = sshll.u32 [#allocation12], 4
      %s216 = int_to_ptr.vmem [resolvable:$true] %s215
      %218 = dma.hbm_to_vmem [thread:$0]  %s23, 16, %s216, [#allocation11]
    $region49: #{neuralnet_forward.1} parent=1 // pred_fallthru
      _
    // Predicated region
    $region50: #{neuralnet_forward.1} parent=1 // pred_check
      _
    $region51: #{neuralnet_forward.1} parent=1 // pred_check_branch
      %220 = sbr.rel (0) target = $region53
    $region52: #{neuralnet_forward.1} parent=1 // pred_region
      %s222 = ssub.s32 1024, 1024
      %223 = vsyncadd [#allocation14], %s222
      %s224 = sshll.u32 [#allocation13], 4
      %s225 = int_to_ptr.vmem [resolvable:$true] %s224
      %230 = dma.hbm_to_vmem [thread:$0]  %s25, 1024, %s225, [#allocation14], 64, 64, 4
    $region53: #{neuralnet_forward.1} parent=1 // pred_fallthru
      _
    // Predicated region
    $region54: #{neuralnet_forward.1} parent=1 // pred_check
      _
    $region55: #{neuralnet_forward.1} parent=1 // pred_check_branch
      %232 = sbr.rel (0) target = $region57
    $region56: #{neuralnet_forward.1} parent=1 // pred_region
      %s234 = ssub.s32 1024, 1024
      %235 = vsyncadd [#allocation14], %s234
      %s236 = sshll.u32 [#allocation15], 4
      %s237 = int_to_ptr.vmem [resolvable:$true] %s236
      %242 = dma.hbm_to_vmem [thread:$0]  %s27, 1024, %s237, [#allocation14], 64, 64, 4
    $region57: #{neuralnet_forward.1} parent=1 // pred_fallthru
      _
    // Predicated region
    $region58: #{neuralnet_forward.1} parent=1 // pred_check
      _
    $region59: #{neuralnet_forward.1} parent=1 // pred_check_branch
      %244 = sbr.rel (0) target = $region61
    $region60: #{neuralnet_forward.1} parent=1 // pred_region
      %s246 = ssub.s32 16, 16
      %247 = vsyncadd [#allocation17], %s246
      %s249 = sshll.u32 [#allocation16], 4
      %s250 = int_to_ptr.vmem [resolvable:$true] %s249
      %252 = dma.hbm_to_vmem [thread:$0]  %s29, 16, %s250, [#allocation17]
    $region61: #{neuralnet_forward.1} parent=1 // pred_fallthru
      _
    // Predicated region
    $region62: #{neuralnet_forward.1} parent=1 // pred_check
      _
    $region63: #{neuralnet_forward.1} parent=1 // pred_check_branch
      %254 = sbr.rel (0) target = $region65
    $region64: #{neuralnet_forward.1} parent=1 // pred_region
      %s256 = ssub.s32 1024, 1024
      %257 = vsyncadd [#allocation17], %s256
      %s258 = sshll.u32 [#allocation18], 4
      %s259 = int_to_ptr.vmem [resolvable:$true] %s258
      %264 = dma.hbm_to_vmem [thread:$0]  %s31, 1024, %s259, [#allocation17], 64, 64, 4
    $region65: #{neuralnet_forward.1} parent=1 // pred_fallthru
      _
    // Predicated region
    $region66: #{neuralnet_forward.1} parent=1 // pred_check
      _
    $region67: #{neuralnet_forward.1} parent=1 // pred_check_branch
      %266 = sbr.rel (0) target = $region69
    $region68: #{neuralnet_forward.1} parent=1 // pred_region
      %s268 = ssub.s32 1024, 1024
      %269 = vsyncadd [#allocation20], %s268
      %s270 = sshll.u32 [#allocation19], 4
      %s271 = int_to_ptr.vmem [resolvable:$true] %s270
      %276 = dma.hbm_to_vmem [thread:$0]  %s33, 1024, %s271, [#allocation20], 64, 64, 4
    $region69: #{neuralnet_forward.1} parent=1 // pred_fallthru
      _
    // Predicated region
    $region70: #{neuralnet_forward.1} parent=1 // pred_check
      _
    $region71: #{neuralnet_forward.1} parent=1 // pred_check_branch
      %278 = sbr.rel (0) target = $region73
    $region72: #{neuralnet_forward.1} parent=1 // pred_region
      %s280 = ssub.s32 1024, 1024
      %281 = vsyncadd [#allocation20], %s280
      %s282 = sshll.u32 [#allocation21], 4
      %s283 = int_to_ptr.vmem [resolvable:$true] %s282
      %288 = dma.hbm_to_vmem [thread:$0]  %s35, 1024, %s283, [#allocation20], 64, 64, 4
    $region73: #{neuralnet_forward.1} parent=1 // pred_fallthru
      _
    // Predicated region
    $region74: #{neuralnet_forward.1} parent=1 // pred_check
      _
    $region75: #{neuralnet_forward.1} parent=1 // pred_check_branch
      %290 = sbr.rel (0) target = $region77
    $region76: #{neuralnet_forward.1} parent=1 // pred_region
      %s292 = ssub.s32 1024, 1024
      %293 = vsyncadd [#allocation23], %s292
      %s294 = sshll.u32 [#allocation22], 4
      %s295 = int_to_ptr.vmem [resolvable:$true] %s294
      %300 = dma.hbm_to_vmem [thread:$0]  %s37, 1024, %s295, [#allocation23], 64, 64, 4
    $region77: #{neuralnet_forward.1} parent=1 // pred_fallthru
      _
    // Predicated region
    $region78: #{neuralnet_forward.1} parent=1 // pred_check
      _
    $region79: #{neuralnet_forward.1} parent=1 // pred_check_branch
      %302 = sbr.rel (0) target = $region81
    $region80: #{neuralnet_forward.1} parent=1 // pred_region
      %s304 = ssub.s32 1024, 1024
      %305 = vsyncadd [#allocation23], %s304
      %s306 = sshll.u32 [#allocation24], 4
      %s307 = int_to_ptr.vmem [resolvable:$true] %s306
      %312 = dma.hbm_to_vmem [thread:$0]  %s39, 1024, %s307, [#allocation23], 64, 64, 4
    $region81: #{neuralnet_forward.1} parent=1 // pred_fallthru
      _
    // Predicated region
    $region82: #{neuralnet_forward.1} parent=1 // pred_check
      _
    $region83: #{neuralnet_forward.1} parent=1 // pred_check_branch
      %314 = sbr.rel (0) target = $region85
    $region84: #{neuralnet_forward.1} parent=1 // pred_region
      %s316 = ssub.s32 1024, 1024
      %317 = vsyncadd [#allocation26], %s316
      %s318 = sshll.u32 [#allocation25], 4
      %s319 = int_to_ptr.vmem [resolvable:$true] %s318
      %324 = dma.hbm_to_vmem [thread:$0]  %s41, 1024, %s319, [#allocation26], 64, 64, 4
    $region85: #{neuralnet_forward.1} parent=1 // pred_fallthru
      _
    // Predicated region
    $region86: #{neuralnet_forward.1} parent=1 // pred_check
      _
    $region87: #{neuralnet_forward.1} parent=1 // pred_check_branch
      %326 = sbr.rel (0) target = $region89
    $region88: #{neuralnet_forward.1} parent=1 // pred_region
      %s328 = ssub.s32 16, 16
      %329 = vsyncadd [#allocation26], %s328
      %s331 = sshll.u32 [#allocation27], 4
      %s332 = int_to_ptr.vmem [resolvable:$true] %s331
      %334 = dma.hbm_to_vmem [thread:$0]  %s43, 16, %s332, [#allocation26]
    $region89: #{neuralnet_forward.1} parent=1 // pred_fallthru
      _
    // Predicated region
    $region90: #{neuralnet_forward.1} parent=1 // pred_check
      _
    $region91: #{neuralnet_forward.1} parent=1 // pred_check_branch
      %336 = sbr.rel (0) target = $region93
    $region92: #{neuralnet_forward.1} parent=1 // pred_region
      %s338 = ssub.s32 16, 16
      %339 = vsyncadd [#allocation29], %s338
      %s341 = sshll.u32 [#allocation28], 4
      %s342 = int_to_ptr.vmem [resolvable:$true] %s341
      %344 = dma.hbm_to_vmem [thread:$0]  %s45, 16, %s342, [#allocation29]
    $region93: #{neuralnet_forward.1} parent=1 // pred_fallthru
      _
    // Predicated region
    $region94: #{neuralnet_forward.1} parent=1 // pred_check
      _
    $region95: #{neuralnet_forward.1} parent=1 // pred_check_branch
      %346 = sbr.rel (0) target = $region97
    $region96: #{neuralnet_forward.1} parent=1 // pred_region
      %s348 = ssub.s32 16, 16
      %349 = vsyncadd [#allocation29], %s348
      %s351 = sshll.u32 [#allocation30], 4
      %s352 = int_to_ptr.vmem [resolvable:$true] %s351
      %354 = dma.hbm_to_vmem [thread:$0]  %s47, 16, %s352, [#allocation29]
    $region97: #{neuralnet_forward.1} parent=1 // pred_fallthru
      _
    // Predicated region
    $region98: #{neuralnet_forward.1} parent=1 // pred_check
      _
    $region99: #{neuralnet_forward.1} parent=1 // pred_check_branch
      %356 = sbr.rel (0) target = $region101
    $region100: #{neuralnet_forward.1} parent=1 // pred_region
      %s358 = ssub.s32 16, 16
      %359 = vsyncadd [#allocation32], %s358
      %s361 = sshll.u32 [#allocation31], 4
      %s362 = int_to_ptr.vmem [resolvable:$true] %s361
      %364 = dma.hbm_to_vmem [thread:$0]  %s49, 16, %s362, [#allocation32]
    $region101: #{neuralnet_forward.1} parent=1 // pred_fallthru
      _
    // Predicated region
    $region102: #{neuralnet_forward.1} parent=1 // pred_check
      _
    $region103: #{neuralnet_forward.1} parent=1 // pred_check_branch
      %366 = sbr.rel (0) target = $region105
    $region104: #{neuralnet_forward.1} parent=1 // pred_region
      %s368 = ssub.s32 1024, 1024
      %369 = vsyncadd [#allocation32], %s368
      %s370 = sshll.u32 [#allocation33], 4
      %s371 = int_to_ptr.vmem [resolvable:$true] %s370
      %376 = dma.hbm_to_vmem [thread:$0]  %s51, 1024, %s371, [#allocation32], 64, 64, 4
    $region105: #{neuralnet_forward.1} parent=1 // pred_fallthru
      _
    // Predicated region
    $region106: #{neuralnet_forward.1} parent=1 // pred_check
      _
    $region107: #{neuralnet_forward.1} parent=1 // pred_check_branch
      %378 = sbr.rel (0) target = $region109
    $region108: #{neuralnet_forward.1} parent=1 // pred_region
      %s380 = ssub.s32 1024, 1024
      %381 = vsyncadd [#allocation35], %s380
      %s382 = sshll.u32 [#allocation34], 4
      %s383 = int_to_ptr.vmem [resolvable:$true] %s382
      %388 = dma.hbm_to_vmem [thread:$0]  %s53, 1024, %s383, [#allocation35], 64, 64, 4
    $region109: #{neuralnet_forward.1} parent=1 // pred_fallthru
      _
    // Predicated region
    $region110: #{neuralnet_forward.1} parent=1 // pred_check
      _
    $region111: #{neuralnet_forward.1} parent=1 // pred_check_branch
      %390 = sbr.rel (0) target = $region113
    $region112: #{neuralnet_forward.1} parent=1 // pred_region
      %s392 = ssub.s32 1024, 1024
      %393 = vsyncadd [#allocation35], %s392
      %s394 = sshll.u32 [#allocation36], 4
      %s395 = int_to_ptr.vmem [resolvable:$true] %s394
      %400 = dma.hbm_to_vmem [thread:$0]  %s55, 1024, %s395, [#allocation35], 64, 64, 4
    $region113: #{neuralnet_forward.1} parent=1 // pred_fallthru
      _
    // Predicated region
    $region114: #{neuralnet_forward.1} parent=1 // pred_check
      _
    $region115: #{neuralnet_forward.1} parent=1 // pred_check_branch
      %402 = sbr.rel (0) target = $region117
    $region116: #{neuralnet_forward.1} parent=1 // pred_region
      %s404 = ssub.s32 1024, 1024
      %405 = vsyncadd [#allocation38], %s404
      %s406 = sshll.u32 [#allocation37], 4
      %s407 = int_to_ptr.vmem [resolvable:$true] %s406
      %412 = dma.hbm_to_vmem [thread:$0]  %s57, 1024, %s407, [#allocation38], 64, 64, 4
    $region117: #{neuralnet_forward.1} parent=1 // pred_fallthru
      _
    // Predicated region
    $region118: #{neuralnet_forward.1} parent=1 // pred_check
      _
    $region119: #{neuralnet_forward.1} parent=1 // pred_check_branch
      %414 = sbr.rel (0) target = $region121
    $region120: #{neuralnet_forward.1} parent=1 // pred_region
      %s416 = ssub.s32 1024, 1024
      %417 = vsyncadd [#allocation38], %s416
      %s418 = sshll.u32 [#allocation39], 4
      %s419 = int_to_ptr.vmem [resolvable:$true] %s418
      %424 = dma.hbm_to_vmem [thread:$0]  %s59, 1024, %s419, [#allocation38], 64, 64, 4
    $region121: #{neuralnet_forward.1} parent=1 // pred_fallthru
      _
    // Predicated region
    $region122: #{neuralnet_forward.1} parent=1 // pred_check
      _
    $region123: #{neuralnet_forward.1} parent=1 // pred_check_branch
      %426 = sbr.rel (0) target = $region125
    $region124: #{neuralnet_forward.1} parent=1 // pred_region
      %s428 = ssub.s32 1024, 1024
      %429 = vsyncadd [#allocation41], %s428
      %s430 = sshll.u32 [#allocation40], 4
      %s431 = int_to_ptr.vmem [resolvable:$true] %s430
      %436 = dma.hbm_to_vmem [thread:$0]  %s61, 1024, %s431, [#allocation41], 64, 64, 4
    $region125: #{neuralnet_forward.1} parent=1 // pred_fallthru
      _
    // Predicated region
    $region126: #{neuralnet_forward.1} parent=1 // pred_check
      _
    $region127: #{neuralnet_forward.1} parent=1 // pred_check_branch
      %438 = sbr.rel (0) target = $region129
    $region128: #{neuralnet_forward.1} parent=1 // pred_region
      %s440 = ssub.s32 16, 16
      %441 = vsyncadd [#allocation41], %s440
      %s443 = sshll.u32 [#allocation42], 4
      %s444 = int_to_ptr.vmem [resolvable:$true] %s443
      %446 = dma.hbm_to_vmem [thread:$0]  %s63, 16, %s444, [#allocation41]
    $region129: #{neuralnet_forward.1} parent=1 // pred_fallthru
      _
    // Predicated region
    $region130: #{neuralnet_forward.1} parent=1 // pred_check
      _
    $region131: #{neuralnet_forward.1} parent=1 // pred_check_branch
      %448 = sbr.rel (0) target = $region133
    $region132: #{neuralnet_forward.1} parent=1 // pred_region
      %s450 = ssub.s32 16, 16
      %451 = vsyncadd [#allocation44], %s450
      %s453 = sshll.u32 [#allocation43], 4
      %s454 = int_to_ptr.vmem [resolvable:$true] %s453
      %456 = dma.hbm_to_vmem [thread:$0]  %s65, 16, %s454, [#allocation44]
    $region133: #{neuralnet_forward.1} parent=1 // pred_fallthru
      _
    // Predicated region
    $region134: #{neuralnet_forward.1} parent=1 // pred_check
      _
    $region135: #{neuralnet_forward.1} parent=1 // pred_check_branch
      %458 = sbr.rel (0) target = $region137
    $region136: #{neuralnet_forward.1} parent=1 // pred_region
      %s460 = ssub.s32 16, 16
      %461 = vsyncadd [#allocation44], %s460
      %s463 = sshll.u32 [#allocation45], 4
      %s464 = int_to_ptr.vmem [resolvable:$true] %s463
      %466 = dma.hbm_to_vmem [thread:$0]  %s67, 16, %s464, [#allocation44]
    $region137: #{neuralnet_forward.1} parent=1 // pred_fallthru
      _
    // Predicated region
    $region138: #{neuralnet_forward.1} parent=1 // pred_check
      _
    $region139: #{neuralnet_forward.1} parent=1 // pred_check_branch
      %468 = sbr.rel (0) target = $region141
    $region140: #{neuralnet_forward.1} parent=1 // pred_region
      %s470 = ssub.s32 16, 16
      %471 = vsyncadd [#allocation47], %s470
      %s473 = sshll.u32 [#allocation46], 4
      %s474 = int_to_ptr.vmem [resolvable:$true] %s473
      %476 = dma.hbm_to_vmem [thread:$0]  %s69, 16, %s474, [#allocation47]
    $region141: #{neuralnet_forward.1} parent=1 // pred_fallthru
      _
    // Predicated region
    $region142: #{neuralnet_forward.1} parent=1 // pred_check
      _
    $region143: #{neuralnet_forward.1} parent=1 // pred_check_branch
      %478 = sbr.rel (0) target = $region145
    $region144: #{neuralnet_forward.1} parent=1 // pred_region
      %s480 = ssub.s32 1024, 1024
      %481 = vsyncadd [#allocation47], %s480
      %s482 = sshll.u32 [#allocation48], 4
      %s483 = int_to_ptr.vmem [resolvable:$true] %s482
      %488 = dma.hbm_to_vmem [thread:$0]  %s71, 1024, %s483, [#allocation47], 64, 64, 4
    $region145: #{neuralnet_forward.1} parent=1 // pred_fallthru
      _
    // Predicated region
    $region146: #{neuralnet_forward.1} parent=1 // pred_check
      _
    $region147: #{neuralnet_forward.1} parent=1 // pred_check_branch
      %490 = sbr.rel (0) target = $region149
    $region148: #{neuralnet_forward.1} parent=1 // pred_region
      %s492 = ssub.s32 1024, 1024
      %493 = vsyncadd [#allocation50], %s492
      %s494 = sshll.u32 [#allocation49], 4
      %s495 = int_to_ptr.vmem [resolvable:$true] %s494
      %500 = dma.hbm_to_vmem [thread:$0]  %s73, 1024, %s495, [#allocation50], 64, 64, 4
    $region149: #{neuralnet_forward.1} parent=1 // pred_fallthru
      _
    // Predicated region
    $region150: #{neuralnet_forward.1} parent=1 // pred_check
      _
    $region151: #{neuralnet_forward.1} parent=1 // pred_check_branch
      %502 = sbr.rel (0) target = $region153
    $region152: #{neuralnet_forward.1} parent=1 // pred_region
      %s504 = ssub.s32 1024, 1024
      %505 = vsyncadd [#allocation50], %s504
      %s506 = sshll.u32 [#allocation51], 4
      %s507 = int_to_ptr.vmem [resolvable:$true] %s506
      %512 = dma.hbm_to_vmem [thread:$0]  %s75, 1024, %s507, [#allocation50], 64, 64, 4
    $region153: #{neuralnet_forward.1} parent=1 // pred_fallthru
      _
    // Predicated region
    $region154: #{neuralnet_forward.1} parent=1 // pred_check
      _
    $region155: #{neuralnet_forward.1} parent=1 // pred_check_branch
      %514 = sbr.rel (0) target = $region157
    $region156: #{neuralnet_forward.1} parent=1 // pred_region
      %s516 = ssub.s32 1024, 1024
      %517 = vsyncadd [#allocation53], %s516
      %s518 = sshll.u32 [#allocation52], 4
      %s519 = int_to_ptr.vmem [resolvable:$true] %s518
      %524 = dma.hbm_to_vmem [thread:$0]  %s77, 1024, %s519, [#allocation53], 64, 64, 4
    $region157: #{neuralnet_forward.1} parent=1 // pred_fallthru
      _
    // Predicated region
    $region158: #{neuralnet_forward.1} parent=1 // pred_check
      _
    $region159: #{neuralnet_forward.1} parent=1 // pred_check_branch
      %526 = sbr.rel (0) target = $region161
    $region160: #{neuralnet_forward.1} parent=1 // pred_region
      %s528 = ssub.s32 1024, 1024
      %529 = vsyncadd [#allocation53], %s528
      %s530 = sshll.u32 [#allocation54], 4
      %s531 = int_to_ptr.vmem [resolvable:$true] %s530
      %536 = dma.hbm_to_vmem [thread:$0]  %s79, 1024, %s531, [#allocation53], 64, 64, 4
    $region161: #{neuralnet_forward.1} parent=1 // pred_fallthru
      _
    // Predicated region
    $region162: #{neuralnet_forward.1} parent=1 // pred_check
      _
    $region163: #{neuralnet_forward.1} parent=1 // pred_check_branch
      %538 = sbr.rel (0) target = $region165
    $region164: #{neuralnet_forward.1} parent=1 // pred_region
      %s540 = ssub.s32 1024, 1024
      %541 = vsyncadd [#allocation56], %s540
      %s542 = sshll.u32 [#allocation55], 4
      %s543 = int_to_ptr.vmem [resolvable:$true] %s542
      %548 = dma.hbm_to_vmem [thread:$0]  %s81, 1024, %s543, [#allocation56], 64, 64, 4
    $region165: #{neuralnet_forward.1} parent=1 // pred_fallthru
      _
    // Predicated region
    $region166: #{neuralnet_forward.1} parent=1 // pred_check
      _
    $region167: #{neuralnet_forward.1} parent=1 // pred_check_branch
      %550 = sbr.rel (0) target = $region169
    $region168: #{neuralnet_forward.1} parent=1 // pred_region
      %s552 = ssub.s32 16, 16
      %553 = vsyncadd [#allocation56], %s552
      %s555 = sshll.u32 [#allocation57], 4
      %s556 = int_to_ptr.vmem [resolvable:$true] %s555
      %558 = dma.hbm_to_vmem [thread:$0]  %s83, 16, %s556, [#allocation56]
    $region169: #{neuralnet_forward.1} parent=1 // pred_fallthru
      _
    // Predicated region
    $region170: #{neuralnet_forward.1} parent=1 // pred_check
      _
    $region171: #{neuralnet_forward.1} parent=1 // pred_check_branch
      %560 = sbr.rel (0) target = $region173
    $region172: #{neuralnet_forward.1} parent=1 // pred_region
      %s562 = ssub.s32 16, 16
      %563 = vsyncadd [#allocation59], %s562
      %s565 = sshll.u32 [#allocation58], 4
      %s566 = int_to_ptr.vmem [resolvable:$true] %s565
      %568 = dma.hbm_to_vmem [thread:$0]  %s85, 16, %s566, [#allocation59]
    $region173: #{neuralnet_forward.1} parent=1 // pred_fallthru
      _
    // Predicated region
    $region174: #{neuralnet_forward.1} parent=1 // pred_check
      _
    $region175: #{neuralnet_forward.1} parent=1 // pred_check_branch
      %570 = sbr.rel (0) target = $region177
    $region176: #{neuralnet_forward.1} parent=1 // pred_region
      %s572 = ssub.s32 16, 16
      %573 = vsyncadd [#allocation59], %s572
      %s575 = sshll.u32 [#allocation60], 4
      %s576 = int_to_ptr.vmem [resolvable:$true] %s575
      %578 = dma.hbm_to_vmem [thread:$0]  %s87, 16, %s576, [#allocation59]
    $region177: #{neuralnet_forward.1} parent=1 // pred_fallthru
      _
    // Predicated region
    $region178: #{neuralnet_forward.1} parent=1 // pred_check
      _
    $region179: #{neuralnet_forward.1} parent=1 // pred_check_branch
      %580 = sbr.rel (0) target = $region181
    $region180: #{neuralnet_forward.1} parent=1 // pred_region
      %s582 = ssub.s32 16, 16
      %583 = vsyncadd [#allocation62], %s582
      %s585 = sshll.u32 [#allocation61], 4
      %s586 = int_to_ptr.vmem [resolvable:$true] %s585
      %588 = dma.hbm_to_vmem [thread:$0]  %s89, 16, %s586, [#allocation62]
    $region181: #{neuralnet_forward.1} parent=1 // pred_fallthru
      _
    // Predicated region
    $region182: #{neuralnet_forward.1} parent=1 // pred_check
      _
    $region183: #{neuralnet_forward.1} parent=1 // pred_check_branch
      %590 = sbr.rel (0) target = $region185
    $region184: #{neuralnet_forward.1} parent=1 // pred_region
      %s592 = ssub.s32 1024, 1024
      %593 = vsyncadd [#allocation62], %s592
      %s594 = sshll.u32 [#allocation63], 4
      %s595 = int_to_ptr.vmem [resolvable:$true] %s594
      %600 = dma.hbm_to_vmem [thread:$0]  %s91, 1024, %s595, [#allocation62], 64, 64, 4
    $region185: #{neuralnet_forward.1} parent=1 // pred_fallthru
      _
    // Predicated region
    $region186: #{neuralnet_forward.1} parent=1 // pred_check
      _
    $region187: #{neuralnet_forward.1} parent=1 // pred_check_branch
      %602 = sbr.rel (0) target = $region189
    $region188: #{neuralnet_forward.1} parent=1 // pred_region
      %s604 = ssub.s32 1024, 1024
      %605 = vsyncadd [#allocation65], %s604
      %s606 = sshll.u32 [#allocation64], 4
      %s607 = int_to_ptr.vmem [resolvable:$true] %s606
      %612 = dma.hbm_to_vmem [thread:$0]  %s93, 1024, %s607, [#allocation65], 64, 64, 4
    $region189: #{neuralnet_forward.1} parent=1 // pred_fallthru
      _
    // Predicated region
    $region190: #{neuralnet_forward.1} parent=1 // pred_check
      _
    $region191: #{neuralnet_forward.1} parent=1 // pred_check_branch
      %614 = sbr.rel (0) target = $region193
    $region192: #{neuralnet_forward.1} parent=1 // pred_region
      %s616 = ssub.s32 16, 16
      %617 = vsyncadd [#allocation65], %s616
      %s619 = sshll.u32 [#allocation66], 4
      %s620 = int_to_ptr.vmem [resolvable:$true] %s619
      %622 = dma.hbm_to_vmem [thread:$0]  %s95, 16, %s620, [#allocation65]
    $region193: #{neuralnet_forward.1} parent=1 // pred_fallthru
      _
    // Predicated region
    $region194: #{neuralnet_forward.1} parent=1 // pred_check
      _
    $region195: #{neuralnet_forward.1} parent=1 // pred_check_branch
      %624 = sbr.rel (0) target = $region197
    $region196: #{neuralnet_forward.1} parent=1 // pred_region
      %625 = dma.done [#allocation3], 76800
    $region197: #{neuralnet_forward.1} parent=1 // pred_fallthru
      _
    // Predicated region
    $region198: #{neuralnet_forward.1} parent=1 // pred_check
      _
    $region199: #{neuralnet_forward.1} parent=1 // pred_check_branch
      %627 = sbr.rel (0) target = $region201
    $region200: #{neuralnet_forward.1} parent=1 // pred_region
      %628 = dma.done [#allocation5], 128
    $region201: #{neuralnet_forward.1} parent=1 // pred_fallthru
      _
    // Predicated region
    $region202: #{neuralnet_forward.1} parent=1 // pred_check
      _
    $region203: #{neuralnet_forward.1} parent=1 // pred_check_branch
      %630 = sbr.rel (0) target = $region205
    $region204: #{neuralnet_forward.1} parent=1 // pred_region
      %631 = dma.done [#allocation5], 8192
    $region205: #{neuralnet_forward.1} parent=1 // pred_fallthru
      _
    // Predicated region
    $region206: #{neuralnet_forward.1} parent=1 // pred_check
      _
    $region207: #{neuralnet_forward.1} parent=1 // pred_check_branch
      %633 = sbr.rel (0) target = $region209
    $region208: #{neuralnet_forward.1} parent=1 // pred_region
      %634 = dma.done [#allocation8], 16
    $region209: #{neuralnet_forward.1} parent=1 // pred_fallthru
      _
    // Predicated region
    $region210: #{neuralnet_forward.1} parent=1 // pred_check
      _
    $region211: #{neuralnet_forward.1} parent=1 // pred_check_branch
      %636 = sbr.rel (0) target = $region213
    $region212: #{neuralnet_forward.1} parent=1 // pred_region
      %637 = dma.done [#allocation8], 1024
    $region213: #{neuralnet_forward.1} parent=1 // pred_fallthru
      _
    // Predicated region
    $region214: #{neuralnet_forward.1} parent=1 // pred_check
      _
    $region215: #{neuralnet_forward.1} parent=1 // pred_check_branch
      %639 = sbr.rel (0) target = $region217
    $region216: #{neuralnet_forward.1} parent=1 // pred_region
      %640 = dma.done [#allocation11], 1024
    $region217: #{neuralnet_forward.1} parent=1 // pred_fallthru
      _
    // Predicated region
    $region218: #{neuralnet_forward.1} parent=1 // pred_check
      _
    $region219: #{neuralnet_forward.1} parent=1 // pred_check_branch
      %642 = sbr.rel (0) target = $region221
    $region220: #{neuralnet_forward.1} parent=1 // pred_region
      %643 = dma.done [#allocation11], 16
    $region221: #{neuralnet_forward.1} parent=1 // pred_fallthru
      _
    // Predicated region
    $region222: #{neuralnet_forward.1} parent=1 // pred_check
      _
    $region223: #{neuralnet_forward.1} parent=1 // pred_check_branch
      %645 = sbr.rel (0) target = $region225
    $region224: #{neuralnet_forward.1} parent=1 // pred_region
      %646 = dma.done [#allocation14], 1024
    $region225: #{neuralnet_forward.1} parent=1 // pred_fallthru
      _
    // Predicated region
    $region226: #{neuralnet_forward.1} parent=1 // pred_check
      _
    $region227: #{neuralnet_forward.1} parent=1 // pred_check_branch
      %648 = sbr.rel (0) target = $region229
    $region228: #{neuralnet_forward.1} parent=1 // pred_region
      %649 = dma.done [#allocation14], 1024
    $region229: #{neuralnet_forward.1} parent=1 // pred_fallthru
      _
    // Predicated region
    $region230: #{neuralnet_forward.1} parent=1 // pred_check
      _
    $region231: #{neuralnet_forward.1} parent=1 // pred_check_branch
      %651 = sbr.rel (0) target = $region233
    $region232: #{neuralnet_forward.1} parent=1 // pred_region
      %652 = dma.done [#allocation17], 16
    $region233: #{neuralnet_forward.1} parent=1 // pred_fallthru
      _
    // Predicated region
    $region234: #{neuralnet_forward.1} parent=1 // pred_check
      _
    $region235: #{neuralnet_forward.1} parent=1 // pred_check_branch
      %654 = sbr.rel (0) target = $region237
    $region236: #{neuralnet_forward.1} parent=1 // pred_region
      %655 = dma.done [#allocation17], 1024
    $region237: #{neuralnet_forward.1} parent=1 // pred_fallthru
      _
    // Predicated region
    $region238: #{neuralnet_forward.1} parent=1 // pred_check
      _
    $region239: #{neuralnet_forward.1} parent=1 // pred_check_branch
      %657 = sbr.rel (0) target = $region241
    $region240: #{neuralnet_forward.1} parent=1 // pred_region
      %658 = dma.done [#allocation20], 1024
    $region241: #{neuralnet_forward.1} parent=1 // pred_fallthru
      _
    // Predicated region
    $region242: #{neuralnet_forward.1} parent=1 // pred_check
      _
    $region243: #{neuralnet_forward.1} parent=1 // pred_check_branch
      %660 = sbr.rel (0) target = $region245
    $region244: #{neuralnet_forward.1} parent=1 // pred_region
      %661 = dma.done [#allocation20], 1024
    $region245: #{neuralnet_forward.1} parent=1 // pred_fallthru
      _
    // Predicated region
    $region246: #{neuralnet_forward.1} parent=1 // pred_check
      _
    $region247: #{neuralnet_forward.1} parent=1 // pred_check_branch
      %663 = sbr.rel (0) target = $region249
    $region248: #{neuralnet_forward.1} parent=1 // pred_region
      %664 = dma.done [#allocation23], 1024
    $region249: #{neuralnet_forward.1} parent=1 // pred_fallthru
      _
    // Predicated region
    $region250: #{neuralnet_forward.1} parent=1 // pred_check
      _
    $region251: #{neuralnet_forward.1} parent=1 // pred_check_branch
      %666 = sbr.rel (0) target = $region253
    $region252: #{neuralnet_forward.1} parent=1 // pred_region
      %667 = dma.done [#allocation23], 1024
    $region253: #{neuralnet_forward.1} parent=1 // pred_fallthru
      _
    // Predicated region
    $region254: #{neuralnet_forward.1} parent=1 // pred_check
      _
    $region255: #{neuralnet_forward.1} parent=1 // pred_check_branch
      %669 = sbr.rel (0) target = $region257
    $region256: #{neuralnet_forward.1} parent=1 // pred_region
      %670 = dma.done [#allocation26], 1024
    $region257: #{neuralnet_forward.1} parent=1 // pred_fallthru
      _
    // Predicated region
    $region258: #{neuralnet_forward.1} parent=1 // pred_check
      _
    $region259: #{neuralnet_forward.1} parent=1 // pred_check_branch
      %672 = sbr.rel (0) target = $region261
    $region260: #{neuralnet_forward.1} parent=1 // pred_region
      %673 = dma.done [#allocation26], 16
    $region261: #{neuralnet_forward.1} parent=1 // pred_fallthru
      _
    // Predicated region
    $region262: #{neuralnet_forward.1} parent=1 // pred_check
      _
    $region263: #{neuralnet_forward.1} parent=1 // pred_check_branch
      %675 = sbr.rel (0) target = $region265
    $region264: #{neuralnet_forward.1} parent=1 // pred_region
      %676 = dma.done [#allocation29], 16
    $region265: #{neuralnet_forward.1} parent=1 // pred_fallthru
      _
    // Predicated region
    $region266: #{neuralnet_forward.1} parent=1 // pred_check
      _
    $region267: #{neuralnet_forward.1} parent=1 // pred_check_branch
      %678 = sbr.rel (0) target = $region269
    $region268: #{neuralnet_forward.1} parent=1 // pred_region
      %679 = dma.done [#allocation29], 16
    $region269: #{neuralnet_forward.1} parent=1 // pred_fallthru
      _
    // Predicated region
    $region270: #{neuralnet_forward.1} parent=1 // pred_check
      _
    $region271: #{neuralnet_forward.1} parent=1 // pred_check_branch
      %681 = sbr.rel (0) target = $region273
    $region272: #{neuralnet_forward.1} parent=1 // pred_region
      %682 = dma.done [#allocation32], 16
    $region273: #{neuralnet_forward.1} parent=1 // pred_fallthru
      _
    // Predicated region
    $region274: #{neuralnet_forward.1} parent=1 // pred_check
      _
    $region275: #{neuralnet_forward.1} parent=1 // pred_check_branch
      %684 = sbr.rel (0) target = $region277
    $region276: #{neuralnet_forward.1} parent=1 // pred_region
      %685 = dma.done [#allocation32], 1024
    $region277: #{neuralnet_forward.1} parent=1 // pred_fallthru
      _
    // Predicated region
    $region278: #{neuralnet_forward.1} parent=1 // pred_check
      _
    $region279: #{neuralnet_forward.1} parent=1 // pred_check_branch
      %687 = sbr.rel (0) target = $region281
    $region280: #{neuralnet_forward.1} parent=1 // pred_region
      %688 = dma.done [#allocation35], 1024
    $region281: #{neuralnet_forward.1} parent=1 // pred_fallthru
      _
    // Predicated region
    $region282: #{neuralnet_forward.1} parent=1 // pred_check
      _
    $region283: #{neuralnet_forward.1} parent=1 // pred_check_branch
      %690 = sbr.rel (0) target = $region285
    $region284: #{neuralnet_forward.1} parent=1 // pred_region
      %691 = dma.done [#allocation35], 1024
    $region285: #{neuralnet_forward.1} parent=1 // pred_fallthru
      _
    // Predicated region
    $region286: #{neuralnet_forward.1} parent=1 // pred_check
      _
    $region287: #{neuralnet_forward.1} parent=1 // pred_check_branch
      %693 = sbr.rel (0) target = $region289
    $region288: #{neuralnet_forward.1} parent=1 // pred_region
      %694 = dma.done [#allocation38], 1024
    $region289: #{neuralnet_forward.1} parent=1 // pred_fallthru
      _
    // Predicated region
    $region290: #{neuralnet_forward.1} parent=1 // pred_check
      _
    $region291: #{neuralnet_forward.1} parent=1 // pred_check_branch
      %696 = sbr.rel (0) target = $region293
    $region292: #{neuralnet_forward.1} parent=1 // pred_region
      %697 = dma.done [#allocation38], 1024
    $region293: #{neuralnet_forward.1} parent=1 // pred_fallthru
      _
    // Predicated region
    $region294: #{neuralnet_forward.1} parent=1 // pred_check
      _
    $region295: #{neuralnet_forward.1} parent=1 // pred_check_branch
      %699 = sbr.rel (0) target = $region297
    $region296: #{neuralnet_forward.1} parent=1 // pred_region
      %700 = dma.done [#allocation41], 1024
    $region297: #{neuralnet_forward.1} parent=1 // pred_fallthru
      _
    // Predicated region
    $region298: #{neuralnet_forward.1} parent=1 // pred_check
      _
    $region299: #{neuralnet_forward.1} parent=1 // pred_check_branch
      %702 = sbr.rel (0) target = $region301
    $region300: #{neuralnet_forward.1} parent=1 // pred_region
      %703 = dma.done [#allocation41], 16
    $region301: #{neuralnet_forward.1} parent=1 // pred_fallthru
      _
    // Predicated region
    $region302: #{neuralnet_forward.1} parent=1 // pred_check
      _
    $region303: #{neuralnet_forward.1} parent=1 // pred_check_branch
      %705 = sbr.rel (0) target = $region305
    $region304: #{neuralnet_forward.1} parent=1 // pred_region
      %706 = dma.done [#allocation44], 16
    $region305: #{neuralnet_forward.1} parent=1 // pred_fallthru
      _
    // Predicated region
    $region306: #{neuralnet_forward.1} parent=1 // pred_check
      _
    $region307: #{neuralnet_forward.1} parent=1 // pred_check_branch
      %708 = sbr.rel (0) target = $region309
    $region308: #{neuralnet_forward.1} parent=1 // pred_region
      %709 = dma.done [#allocation44], 16
    $region309: #{neuralnet_forward.1} parent=1 // pred_fallthru
      _
    // Predicated region
    $region310: #{neuralnet_forward.1} parent=1 // pred_check
      _
    $region311: #{neuralnet_forward.1} parent=1 // pred_check_branch
      %711 = sbr.rel (0) target = $region313
    $region312: #{neuralnet_forward.1} parent=1 // pred_region
      %712 = dma.done [#allocation47], 16
    $region313: #{neuralnet_forward.1} parent=1 // pred_fallthru
      _
    // Predicated region
    $region314: #{neuralnet_forward.1} parent=1 // pred_check
      _
    $region315: #{neuralnet_forward.1} parent=1 // pred_check_branch
      %714 = sbr.rel (0) target = $region317
    $region316: #{neuralnet_forward.1} parent=1 // pred_region
      %715 = dma.done [#allocation47], 1024
    $region317: #{neuralnet_forward.1} parent=1 // pred_fallthru
      _
    // Predicated region
    $region318: #{neuralnet_forward.1} parent=1 // pred_check
      _
    $region319: #{neuralnet_forward.1} parent=1 // pred_check_branch
      %717 = sbr.rel (0) target = $region321
    $region320: #{neuralnet_forward.1} parent=1 // pred_region
      %718 = dma.done [#allocation50], 1024
    $region321: #{neuralnet_forward.1} parent=1 // pred_fallthru
      _
    // Predicated region
    $region322: #{neuralnet_forward.1} parent=1 // pred_check
      _
    $region323: #{neuralnet_forward.1} parent=1 // pred_check_branch
      %720 = sbr.rel (0) target = $region325
    $region324: #{neuralnet_forward.1} parent=1 // pred_region
      %721 = dma.done [#allocation50], 1024
    $region325: #{neuralnet_forward.1} parent=1 // pred_fallthru
      _
    // Predicated region
    $region326: #{neuralnet_forward.1} parent=1 // pred_check
      _
    $region327: #{neuralnet_forward.1} parent=1 // pred_check_branch
      %723 = sbr.rel (0) target = $region329
    $region328: #{neuralnet_forward.1} parent=1 // pred_region
      %724 = dma.done [#allocation53], 1024
    $region329: #{neuralnet_forward.1} parent=1 // pred_fallthru
      _
    // Predicated region
    $region330: #{neuralnet_forward.1} parent=1 // pred_check
      _
    $region331: #{neuralnet_forward.1} parent=1 // pred_check_branch
      %726 = sbr.rel (0) target = $region333
    $region332: #{neuralnet_forward.1} parent=1 // pred_region
      %727 = dma.done [#allocation53], 1024
    $region333: #{neuralnet_forward.1} parent=1 // pred_fallthru
      _
    // Predicated region
    $region334: #{neuralnet_forward.1} parent=1 // pred_check
      _
    $region335: #{neuralnet_forward.1} parent=1 // pred_check_branch
      %729 = sbr.rel (0) target = $region337
    $region336: #{neuralnet_forward.1} parent=1 // pred_region
      %730 = dma.done [#allocation56], 1024
    $region337: #{neuralnet_forward.1} parent=1 // pred_fallthru
      _
    // Predicated region
    $region338: #{neuralnet_forward.1} parent=1 // pred_check
      _
    $region339: #{neuralnet_forward.1} parent=1 // pred_check_branch
      %732 = sbr.rel (0) target = $region341
    $region340: #{neuralnet_forward.1} parent=1 // pred_region
      %733 = dma.done [#allocation56], 16
    $region341: #{neuralnet_forward.1} parent=1 // pred_fallthru
      _
    // Predicated region
    $region342: #{neuralnet_forward.1} parent=1 // pred_check
      _
    $region343: #{neuralnet_forward.1} parent=1 // pred_check_branch
      %735 = sbr.rel (0) target = $region345
    $region344: #{neuralnet_forward.1} parent=1 // pred_region
      %736 = dma.done [#allocation59], 16
    $region345: #{neuralnet_forward.1} parent=1 // pred_fallthru
      _
    // Predicated region
    $region346: #{neuralnet_forward.1} parent=1 // pred_check
      _
    $region347: #{neuralnet_forward.1} parent=1 // pred_check_branch
      %738 = sbr.rel (0) target = $region349
    $region348: #{neuralnet_forward.1} parent=1 // pred_region
      %739 = dma.done [#allocation59], 16
    $region349: #{neuralnet_forward.1} parent=1 // pred_fallthru
      _
    // Predicated region
    $region350: #{neuralnet_forward.1} parent=1 // pred_check
      _
    $region351: #{neuralnet_forward.1} parent=1 // pred_check_branch
      %741 = sbr.rel (0) target = $region353
    $region352: #{neuralnet_forward.1} parent=1 // pred_region
      %742 = dma.done [#allocation62], 16
    $region353: #{neuralnet_forward.1} parent=1 // pred_fallthru
      _
    // Predicated region
    $region354: #{neuralnet_forward.1} parent=1 // pred_check
      _
    $region355: #{neuralnet_forward.1} parent=1 // pred_check_branch
      %744 = sbr.rel (0) target = $region357
    $region356: #{neuralnet_forward.1} parent=1 // pred_region
      %745 = dma.done [#allocation62], 1024
    $region357: #{neuralnet_forward.1} parent=1 // pred_fallthru
      _
    // Predicated region
    $region358: #{neuralnet_forward.1} parent=1 // pred_check
      _
    $region359: #{neuralnet_forward.1} parent=1 // pred_check_branch
      %747 = sbr.rel (0) target = $region361
    $region360: #{neuralnet_forward.1} parent=1 // pred_region
      %748 = dma.done [#allocation65], 1024
    $region361: #{neuralnet_forward.1} parent=1 // pred_fallthru
      _
    // Predicated region
    $region362: #{neuralnet_forward.1} parent=1 // pred_check
      _
    $region363: #{neuralnet_forward.1} parent=1 // pred_check_branch
      %750 = sbr.rel (0) target = $region365
    $region364: #{neuralnet_forward.1} parent=1 // pred_region
      %751 = dma.done [#allocation65], 16
    $region365: #{neuralnet_forward.1} parent=1 // pred_fallthru
      _
    %v753 = vld [vmem:[%s1] sm:$0xff]
    %v754 = vld [vmem:[%s1 + $0x8] sm:$0xff]
    %v755 = vld [vmem:[%s1 + $0x10] sm:$0xf]
    %v756 = vld [vmem:[%s3] sm:$0x3]
    %v760 = vcombine.high %v753, %v753
    %v762 = vunpack.c.l.s4 1983009808
    %v763 = vunpack.c.0.s8 %v762
    %v764 = vlaneseq
    %v765 = vshrl.u32 %v764, 7
    %v766 = vsub.s32 %v763, %v765
    %v767 = vrot.slane %v753, %v766
    %v769 = vunpack.c.l.s4 1983009808
    %v770 = vunpack.c.0.s8 %v769
    %v771 = vlaneseq
    %v772 = vshrl.u32 %v771, 7
    %v773 = vsub.s32 %v770, %v772
    %v774 = vrot.slane %v760, %v773
    %v775 = vcombine.high %v767, %v767
    %v776 = vcombine.high %v774, %v774
    %v777 = vcombine.high %v754, %v754
    %v779 = vunpack.c.l.s4 1983009808
    %v780 = vunpack.c.0.s8 %v779
    %v781 = vlaneseq
    %v782 = vshrl.u32 %v781, 7
    %v783 = vsub.s32 %v780, %v782
    %v784 = vrot.slane %v754, %v783
    %v786 = vunpack.c.l.s4 1983009808
    %v787 = vunpack.c.0.s8 %v786
    %v788 = vlaneseq
    %v789 = vshrl.u32 %v788, 7
    %v790 = vsub.s32 %v787, %v789
    %v791 = vrot.slane %v777, %v790
    %v792 = vcombine.high %v784, %v784
    %v793 = vcombine.high %v791, %v791
    %v795 = vunpack.c.l.s4 1983009808
    %v796 = vunpack.c.0.s8 %v795
    %v797 = vlaneseq
    %v798 = vshrl.u32 %v797, 7
    %v799 = vsub.s32 %v796, %v798
    %v800 = vrot.slane %v755, %v799
    %v801 = vcombine.high %v800, %v800
    %v812 = vpack.c.bf16 %v767, %v767
    %v813 = vpack.c.bf16 %v775, %v775
    %v814 = vpack.c.bf16 %v774, %v774
    %v815 = vpack.c.bf16 %v776, %v776
    %v816 = vpack.c.bf16 %v784, %v784
    %v817 = vpack.c.bf16 %v792, %v792
    %v818 = vpack.c.bf16 %v791, %v791
    %v819 = vpack.c.bf16 %v793, %v793
    %v820 = vpack.c.bf16 %v800, %v800
    %v821 = vpack.c.bf16 %v801, %v801
    %v822 = vld [vmem:[#allocation2] sm:$0xff]
    %v823 = vld [vmem:[#allocation2 + $0x8] sm:$0xff]
    %v824 = vld [vmem:[#allocation2 + $0x10] sm:$0xff]
    %v825 = vld [vmem:[#allocation2 + $0x18] sm:$0xff]
    %v826 = vld [vmem:[#allocation2 + $0x20] sm:$0xff]
    %v827 = vld [vmem:[#allocation2 + $0x28] sm:$0xff]
    %v828 = vld [vmem:[#allocation2 + $0x30] sm:$0xff]
    %v829 = vld [vmem:[#allocation2 + $0x38] sm:$0xff]
    %v830 = vld [vmem:[#allocation2 + $0x40] sm:$0xff]
    %v831 = vld [vmem:[#allocation2 + $0x48] sm:$0xff]
    %v832 = vld [vmem:[#allocation2 + $0x50] sm:$0xff]
    %v833 = vld [vmem:[#allocation2 + $0x58] sm:$0xff]
    %v834 = vld [vmem:[#allocation2 + $0x60] sm:$0xff]
    %v835 = vld [vmem:[#allocation2 + $0x68] sm:$0xff]
    %v836 = vld [vmem:[#allocation2 + $0x70] sm:$0xff]
    %v837 = vld [vmem:[#allocation2 + $0x78] sm:$0xff]
    %v838 = vld [vmem:[#allocation2 + $0x80] sm:$0xff]
    %v839 = vld [vmem:[#allocation2 + $0x88] sm:$0xff]
    %v840 = vld [vmem:[#allocation2 + $0x90] sm:$0xff]
    %v841 = vld [vmem:[#allocation2 + $0x98] sm:$0xff]
    %v842 = vld [vmem:[#allocation2 + $0xa0] sm:$0xff]
    %v843 = vld [vmem:[#allocation2 + $0xa8] sm:$0xff]
    %v844 = vld [vmem:[#allocation2 + $0xb0] sm:$0xff]
    %v845 = vld [vmem:[#allocation2 + $0xb8] sm:$0xff]
    %v846 = vld [vmem:[#allocation2 + $0xc0] sm:$0xff]
    %v847 = vld [vmem:[#allocation2 + $0xc8] sm:$0xff]
    %v848 = vld [vmem:[#allocation2 + $0xd0] sm:$0xff]
    %v849 = vld [vmem:[#allocation2 + $0xd8] sm:$0xff]
    %v850 = vld [vmem:[#allocation2 + $0xe0] sm:$0xff]
    %v851 = vld [vmem:[#allocation2 + $0xe8] sm:$0xff]
    %v852 = vld [vmem:[#allocation2 + $0xf0] sm:$0xff]
    %v853 = vld [vmem:[#allocation2 + $0xf8] sm:$0xff]
    %v854 = vld [vmem:[#allocation2 + $0x100] sm:$0xff]
    %v855 = vld [vmem:[#allocation2 + $0x108] sm:$0xff]
    %v856 = vld [vmem:[#allocation2 + $0x110] sm:$0xff]
    %v857 = vld [vmem:[#allocation2 + $0x118] sm:$0xff]
    %v858 = vld [vmem:[#allocation2 + $0x120] sm:$0xff]
    %v859 = vld [vmem:[#allocation2 + $0x128] sm:$0xff]
    %v860 = vld [vmem:[#allocation2 + $0x130] sm:$0xff]
    %v861 = vld [vmem:[#allocation2 + $0x138] sm:$0xff]
    %v862 = vld [vmem:[#allocation2 + $0x140] sm:$0xff]
    %v863 = vld [vmem:[#allocation2 + $0x148] sm:$0xff]
    %v864 = vld [vmem:[#allocation2 + $0x150] sm:$0xff]
    %v865 = vld [vmem:[#allocation2 + $0x158] sm:$0xff]
    %v866 = vld [vmem:[#allocation2 + $0x160] sm:$0xff]
    %v867 = vld [vmem:[#allocation2 + $0x168] sm:$0xff]
    %v868 = vld [vmem:[#allocation2 + $0x170] sm:$0xff]
    %v869 = vld [vmem:[#allocation2 + $0x178] sm:$0xff]
    %v870 = vld [vmem:[#allocation2 + $0x180] sm:$0xff]
    %v871 = vld [vmem:[#allocation2 + $0x188] sm:$0xff]
    %v872 = vld [vmem:[#allocation2 + $0x190] sm:$0xff]
    %v873 = vld [vmem:[#allocation2 + $0x198] sm:$0xff]
    %v874 = vld [vmem:[#allocation2 + $0x1a0] sm:$0xff]
    %v875 = vld [vmem:[#allocation2 + $0x1a8] sm:$0xff]
    %v876 = vld [vmem:[#allocation2 + $0x1b0] sm:$0xff]
    %v877 = vld [vmem:[#allocation2 + $0x1b8] sm:$0xff]
    %v878 = vld [vmem:[#allocation2 + $0x1c0] sm:$0xff]
    %v879 = vld [vmem:[#allocation2 + $0x1c8] sm:$0xff]
    %v880 = vld [vmem:[#allocation2 + $0x1d0] sm:$0xff]
    %v881 = vld [vmem:[#allocation2 + $0x1d8] sm:$0xff]
    %v882 = vld [vmem:[#allocation2 + $0x1e0] sm:$0xff]
    %v883 = vld [vmem:[#allocation2 + $0x1e8] sm:$0xff]
    %v884 = vld [vmem:[#allocation2 + $0x1f0] sm:$0xff]
    %v885 = vld [vmem:[#allocation2 + $0x1f8] sm:$0xff]
    %v886 = vld [vmem:[#allocation2 + $0x200] sm:$0xff]
    %v887 = vld [vmem:[#allocation2 + $0x208] sm:$0xff]
    %v888 = vld [vmem:[#allocation2 + $0x210] sm:$0xff]
    %v889 = vld [vmem:[#allocation2 + $0x218] sm:$0xff]
    %v890 = vld [vmem:[#allocation2 + $0x220] sm:$0xff]
    %v891 = vld [vmem:[#allocation2 + $0x228] sm:$0xff]
    %v892 = vld [vmem:[#allocation2 + $0x230] sm:$0xff]
    %v893 = vld [vmem:[#allocation2 + $0x238] sm:$0xff]
    %v894 = vld [vmem:[#allocation2 + $0x240] sm:$0xff]
    %v895 = vld [vmem:[#allocation2 + $0x248] sm:$0xff]
    %v896 = vld [vmem:[#allocation2 + $0x250] sm:$0xff]
    %v897 = vld [vmem:[#allocation2 + $0x258] sm:$0xff]
    %v898 = vld [vmem:[#allocation2 + $0x260] sm:$0xff]
    %v899 = vld [vmem:[#allocation2 + $0x268] sm:$0xff]
    %v900 = vld [vmem:[#allocation2 + $0x270] sm:$0xff]
    %v901 = vld [vmem:[#allocation2 + $0x278] sm:$0xff]
    %v902 = vld [vmem:[#allocation2 + $0x280] sm:$0xff]
    %v903 = vld [vmem:[#allocation2 + $0x288] sm:$0xff]
    %v904 = vld [vmem:[#allocation2 + $0x290] sm:$0xff]
    %v905 = vld [vmem:[#allocation2 + $0x298] sm:$0xff]
    %v906 = vld [vmem:[#allocation2 + $0x2a0] sm:$0xff]
    %v907 = vld [vmem:[#allocation2 + $0x2a8] sm:$0xff]
    %v908 = vld [vmem:[#allocation2 + $0x2b0] sm:$0xff]
    %v909 = vld [vmem:[#allocation2 + $0x2b8] sm:$0xff]
    %v910 = vld [vmem:[#allocation2 + $0x2c0] sm:$0xff]
    %v911 = vld [vmem:[#allocation2 + $0x2c8] sm:$0xff]
    %v912 = vld [vmem:[#allocation2 + $0x2d0] sm:$0xff]
    %v913 = vld [vmem:[#allocation2 + $0x2d8] sm:$0xff]
    %v914 = vld [vmem:[#allocation2 + $0x2e0] sm:$0xff]
    %v915 = vld [vmem:[#allocation2 + $0x2e8] sm:$0xff]
    %v916 = vld [vmem:[#allocation2 + $0x2f0] sm:$0xff]
    %v917 = vld [vmem:[#allocation2 + $0x2f8] sm:$0xff]
    %v918 = vld [vmem:[#allocation2 + $0x300] sm:$0xff]
    %v919 = vld [vmem:[#allocation2 + $0x308] sm:$0xff]
    %v920 = vld [vmem:[#allocation2 + $0x310] sm:$0xff]
    %v921 = vld [vmem:[#allocation2 + $0x318] sm:$0xff]
    %v922 = vld [vmem:[#allocation2 + $0x320] sm:$0xff]
    %v923 = vld [vmem:[#allocation2 + $0x328] sm:$0xff]
    %v924 = vld [vmem:[#allocation2 + $0x330] sm:$0xff]
    %v925 = vld [vmem:[#allocation2 + $0x338] sm:$0xff]
    %v926 = vld [vmem:[#allocation2 + $0x340] sm:$0xff]
    %v927 = vld [vmem:[#allocation2 + $0x348] sm:$0xff]
    %v928 = vld [vmem:[#allocation2 + $0x350] sm:$0xff]
    %v929 = vld [vmem:[#allocation2 + $0x358] sm:$0xff]
    %v930 = vld [vmem:[#allocation2 + $0x360] sm:$0xff]
    %v931 = vld [vmem:[#allocation2 + $0x368] sm:$0xff]
    %v932 = vld [vmem:[#allocation2 + $0x370] sm:$0xff]
    %v933 = vld [vmem:[#allocation2 + $0x378] sm:$0xff]
    %v934 = vld [vmem:[#allocation2 + $0x380] sm:$0xff]
    %v935 = vld [vmem:[#allocation2 + $0x388] sm:$0xff]
    %v936 = vld [vmem:[#allocation2 + $0x390] sm:$0xff]
    %v937 = vld [vmem:[#allocation2 + $0x398] sm:$0xff]
    %v938 = vld [vmem:[#allocation2 + $0x3a0] sm:$0xff]
    %v939 = vld [vmem:[#allocation2 + $0x3a8] sm:$0xff]
    %v940 = vld [vmem:[#allocation2 + $0x3b0] sm:$0xff]
    %v941 = vld [vmem:[#allocation2 + $0x3b8] sm:$0xff]
    %v942 = vld [vmem:[#allocation2 + $0x3c0] sm:$0xff]
    %v943 = vld [vmem:[#allocation2 + $0x3c8] sm:$0xff]
    %v944 = vld [vmem:[#allocation2 + $0x3d0] sm:$0xff]
    %v945 = vld [vmem:[#allocation2 + $0x3d8] sm:$0xff]
    %v946 = vld [vmem:[#allocation2 + $0x3e0] sm:$0xff]
    %v947 = vld [vmem:[#allocation2 + $0x3e8] sm:$0xff]
    %v948 = vld [vmem:[#allocation2 + $0x3f0] sm:$0xff]
    %v949 = vld [vmem:[#allocation2 + $0x3f8] sm:$0xff]
    %v950 = vld [vmem:[#allocation2 + $0x400] sm:$0xff]
    %v951 = vld [vmem:[#allocation2 + $0x408] sm:$0xff]
    %v952 = vld [vmem:[#allocation2 + $0x410] sm:$0xff]
    %v953 = vld [vmem:[#allocation2 + $0x418] sm:$0xff]
    %v954 = vld [vmem:[#allocation2 + $0x420] sm:$0xff]
    %v955 = vld [vmem:[#allocation2 + $0x428] sm:$0xff]
    %v956 = vld [vmem:[#allocation2 + $0x430] sm:$0xff]
    %v957 = vld [vmem:[#allocation2 + $0x438] sm:$0xff]
    %v958 = vld [vmem:[#allocation2 + $0x440] sm:$0xff]
    %v959 = vld [vmem:[#allocation2 + $0x448] sm:$0xff]
    %v960 = vld [vmem:[#allocation2 + $0x450] sm:$0xff]
    %v961 = vld [vmem:[#allocation2 + $0x458] sm:$0xff]
    %v962 = vld [vmem:[#allocation2 + $0x460] sm:$0xff]
    %v963 = vld [vmem:[#allocation2 + $0x468] sm:$0xff]
    %v964 = vld [vmem:[#allocation2 + $0x470] sm:$0xff]
    %v965 = vld [vmem:[#allocation2 + $0x478] sm:$0xff]
    %v966 = vld [vmem:[#allocation2 + $0x480] sm:$0xff]
    %v967 = vld [vmem:[#allocation2 + $0x488] sm:$0xff]
    %v968 = vld [vmem:[#allocation2 + $0x490] sm:$0xff]
    %v969 = vld [vmem:[#allocation2 + $0x498] sm:$0xff]
    %v970 = vld [vmem:[#allocation2 + $0x4a0] sm:$0xff]
    %v971 = vld [vmem:[#allocation2 + $0x4a8] sm:$0xff]
    %v972 = vld [vmem:[#allocation2 + $0x4b0] sm:$0xff]
    %v973 = vld [vmem:[#allocation2 + $0x4b8] sm:$0xff]
    %v974 = vld [vmem:[#allocation2 + $0x4c0] sm:$0xff]
    %v975 = vld [vmem:[#allocation2 + $0x4c8] sm:$0xff]
    %v976 = vld [vmem:[#allocation2 + $0x4d0] sm:$0xff]
    %v977 = vld [vmem:[#allocation2 + $0x4d8] sm:$0xff]
    %v978 = vld [vmem:[#allocation2 + $0x4e0] sm:$0xff]
    %v979 = vld [vmem:[#allocation2 + $0x4e8] sm:$0xff]
    %v980 = vld [vmem:[#allocation2 + $0x4f0] sm:$0xff]
    %v981 = vld [vmem:[#allocation2 + $0x4f8] sm:$0xff]
    %v982 = vld [vmem:[#allocation2 + $0x500] sm:$0xff]
    %v983 = vld [vmem:[#allocation2 + $0x508] sm:$0xff]
    %v984 = vld [vmem:[#allocation2 + $0x510] sm:$0xff]
    %v985 = vld [vmem:[#allocation2 + $0x518] sm:$0xff]
    %v986 = vld [vmem:[#allocation2 + $0x520] sm:$0xff]
    %v987 = vld [vmem:[#allocation2 + $0x528] sm:$0xff]
    %v988 = vld [vmem:[#allocation2 + $0x530] sm:$0xff]
    %v989 = vld [vmem:[#allocation2 + $0x538] sm:$0xff]
    %v990 = vld [vmem:[#allocation2 + $0x540] sm:$0xff]
    %v991 = vld [vmem:[#allocation2 + $0x548] sm:$0xff]
    %v992 = vld [vmem:[#allocation2 + $0x550] sm:$0xff]
    %v993 = vld [vmem:[#allocation2 + $0x558] sm:$0xff]
    %v994 = vld [vmem:[#allocation2 + $0x560] sm:$0xff]
    %v995 = vld [vmem:[#allocation2 + $0x568] sm:$0xff]
    %v996 = vld [vmem:[#allocation2 + $0x570] sm:$0xff]
    %v997 = vld [vmem:[#allocation2 + $0x578] sm:$0xff]
    %v998 = vld [vmem:[#allocation2 + $0x580] sm:$0xff]
    %v999 = vld [vmem:[#allocation2 + $0x588] sm:$0xff]
    %v1000 = vld [vmem:[#allocation2 + $0x590] sm:$0xff]
    %v1001 = vld [vmem:[#allocation2 + $0x598] sm:$0xff]
    %v1002 = vld [vmem:[#allocation2 + $0x5a0] sm:$0xff]
    %v1003 = vld [vmem:[#allocation2 + $0x5a8] sm:$0xff]
    %v1004 = vld [vmem:[#allocation2 + $0x5b0] sm:$0xff]
    %v1005 = vld [vmem:[#allocation2 + $0x5b8] sm:$0xff]
    %v1006 = vld [vmem:[#allocation2 + $0x5c0] sm:$0xff]
    %v1007 = vld [vmem:[#allocation2 + $0x5c8] sm:$0xff]
    %v1008 = vld [vmem:[#allocation2 + $0x5d0] sm:$0xff]
    %v1009 = vld [vmem:[#allocation2 + $0x5d8] sm:$0xff]
    %v1010 = vld [vmem:[#allocation2 + $0x5e0] sm:$0xff]
    %v1011 = vld [vmem:[#allocation2 + $0x5e8] sm:$0xff]
    %v1012 = vld [vmem:[#allocation2 + $0x5f0] sm:$0xff]
    %v1013 = vld [vmem:[#allocation2 + $0x5f8] sm:$0xff]
    %v1014 = vld [vmem:[#allocation2 + $0x600] sm:$0xff]
    %v1015 = vld [vmem:[#allocation2 + $0x608] sm:$0xff]
    %v1016 = vld [vmem:[#allocation2 + $0x610] sm:$0xff]
    %v1017 = vld [vmem:[#allocation2 + $0x618] sm:$0xff]
    %v1018 = vld [vmem:[#allocation2 + $0x620] sm:$0xff]
    %v1019 = vld [vmem:[#allocation2 + $0x628] sm:$0xff]
    %v1020 = vld [vmem:[#allocation2 + $0x630] sm:$0xff]
    %v1021 = vld [vmem:[#allocation2 + $0x638] sm:$0xff]
    %v1022 = vld [vmem:[#allocation2 + $0x640] sm:$0xff]
    %v1023 = vld [vmem:[#allocation2 + $0x648] sm:$0xff]
    %v1024 = vld [vmem:[#allocation2 + $0x650] sm:$0xff]
    %v1025 = vld [vmem:[#allocation2 + $0x658] sm:$0xff]
    %v1026 = vld [vmem:[#allocation2 + $0x660] sm:$0xff]
    %v1027 = vld [vmem:[#allocation2 + $0x668] sm:$0xff]
    %v1028 = vld [vmem:[#allocation2 + $0x670] sm:$0xff]
    %v1029 = vld [vmem:[#allocation2 + $0x678] sm:$0xff]
    %v1030 = vld [vmem:[#allocation2 + $0x680] sm:$0xff]
    %v1031 = vld [vmem:[#allocation2 + $0x688] sm:$0xff]
    %v1032 = vld [vmem:[#allocation2 + $0x690] sm:$0xff]
    %v1033 = vld [vmem:[#allocation2 + $0x698] sm:$0xff]
    %v1034 = vld [vmem:[#allocation2 + $0x6a0] sm:$0xff]
    %v1035 = vld [vmem:[#allocation2 + $0x6a8] sm:$0xff]
    %v1036 = vld [vmem:[#allocation2 + $0x6b0] sm:$0xff]
    %v1037 = vld [vmem:[#allocation2 + $0x6b8] sm:$0xff]
    %v1038 = vld [vmem:[#allocation2 + $0x6c0] sm:$0xff]
    %v1039 = vld [vmem:[#allocation2 + $0x6c8] sm:$0xff]
    %v1040 = vld [vmem:[#allocation2 + $0x6d0] sm:$0xff]
    %v1041 = vld [vmem:[#allocation2 + $0x6d8] sm:$0xff]
    %v1042 = vld [vmem:[#allocation2 + $0x6e0] sm:$0xff]
    %v1043 = vld [vmem:[#allocation2 + $0x6e8] sm:$0xff]
    %v1044 = vld [vmem:[#allocation2 + $0x6f0] sm:$0xff]
    %v1045 = vld [vmem:[#allocation2 + $0x6f8] sm:$0xff]
    %v1046 = vld [vmem:[#allocation2 + $0x700] sm:$0xff]
    %v1047 = vld [vmem:[#allocation2 + $0x708] sm:$0xff]
    %v1048 = vld [vmem:[#allocation2 + $0x710] sm:$0xff]
    %v1049 = vld [vmem:[#allocation2 + $0x718] sm:$0xff]
    %v1050 = vld [vmem:[#allocation2 + $0x720] sm:$0xff]
    %v1051 = vld [vmem:[#allocation2 + $0x728] sm:$0xff]
    %v1052 = vld [vmem:[#allocation2 + $0x730] sm:$0xff]
    %v1053 = vld [vmem:[#allocation2 + $0x738] sm:$0xff]
    %v1054 = vld [vmem:[#allocation2 + $0x740] sm:$0xff]
    %v1055 = vld [vmem:[#allocation2 + $0x748] sm:$0xff]
    %v1056 = vld [vmem:[#allocation2 + $0x750] sm:$0xff]
    %v1057 = vld [vmem:[#allocation2 + $0x758] sm:$0xff]
    %v1058 = vld [vmem:[#allocation2 + $0x760] sm:$0xff]
    %v1059 = vld [vmem:[#allocation2 + $0x768] sm:$0xff]
    %v1060 = vld [vmem:[#allocation2 + $0x770] sm:$0xff]
    %v1061 = vld [vmem:[#allocation2 + $0x778] sm:$0xff]
    %v1062 = vld [vmem:[#allocation2 + $0x780] sm:$0xff]
    %v1063 = vld [vmem:[#allocation2 + $0x788] sm:$0xff]
    %v1064 = vld [vmem:[#allocation2 + $0x790] sm:$0xff]
    %v1065 = vld [vmem:[#allocation2 + $0x798] sm:$0xff]
    %v1066 = vld [vmem:[#allocation2 + $0x7a0] sm:$0xff]
    %v1067 = vld [vmem:[#allocation2 + $0x7a8] sm:$0xff]
    %v1068 = vld [vmem:[#allocation2 + $0x7b0] sm:$0xff]
    %v1069 = vld [vmem:[#allocation2 + $0x7b8] sm:$0xff]
    %v1070 = vld [vmem:[#allocation2 + $0x7c0] sm:$0xff]
    %v1071 = vld [vmem:[#allocation2 + $0x7c8] sm:$0xff]
    %v1072 = vld [vmem:[#allocation2 + $0x7d0] sm:$0xff]
    %v1073 = vld [vmem:[#allocation2 + $0x7d8] sm:$0xff]
    %v1074 = vld [vmem:[#allocation2 + $0x7e0] sm:$0xff]
    %v1075 = vld [vmem:[#allocation2 + $0x7e8] sm:$0xff]
    %v1076 = vld [vmem:[#allocation2 + $0x7f0] sm:$0xff]
    %v1077 = vld [vmem:[#allocation2 + $0x7f8] sm:$0xff]
    %v1078 = vld [vmem:[#allocation2 + $0x800] sm:$0xff]
    %v1079 = vld [vmem:[#allocation2 + $0x808] sm:$0xff]
    %v1080 = vld [vmem:[#allocation2 + $0x810] sm:$0xff]
    %v1081 = vld [vmem:[#allocation2 + $0x818] sm:$0xff]
    %v1082 = vld [vmem:[#allocation2 + $0x820] sm:$0xff]
    %v1083 = vld [vmem:[#allocation2 + $0x828] sm:$0xff]
    %v1084 = vld [vmem:[#allocation2 + $0x830] sm:$0xff]
    %v1085 = vld [vmem:[#allocation2 + $0x838] sm:$0xff]
    %v1086 = vld [vmem:[#allocation2 + $0x840] sm:$0xff]
    %v1087 = vld [vmem:[#allocation2 + $0x848] sm:$0xff]
    %v1088 = vld [vmem:[#allocation2 + $0x850] sm:$0xff]
    %v1089 = vld [vmem:[#allocation2 + $0x858] sm:$0xff]
    %v1090 = vld [vmem:[#allocation2 + $0x860] sm:$0xff]
    %v1091 = vld [vmem:[#allocation2 + $0x868] sm:$0xff]
    %v1092 = vld [vmem:[#allocation2 + $0x870] sm:$0xff]
    %v1093 = vld [vmem:[#allocation2 + $0x878] sm:$0xff]
    %v1094 = vld [vmem:[#allocation2 + $0x880] sm:$0xff]
    %v1095 = vld [vmem:[#allocation2 + $0x888] sm:$0xff]
    %v1096 = vld [vmem:[#allocation2 + $0x890] sm:$0xff]
    %v1097 = vld [vmem:[#allocation2 + $0x898] sm:$0xff]
    %v1098 = vld [vmem:[#allocation2 + $0x8a0] sm:$0xff]
    %v1099 = vld [vmem:[#allocation2 + $0x8a8] sm:$0xff]
    %v1100 = vld [vmem:[#allocation2 + $0x8b0] sm:$0xff]
    %v1101 = vld [vmem:[#allocation2 + $0x8b8] sm:$0xff]
    %v1102 = vld [vmem:[#allocation2 + $0x8c0] sm:$0xff]
    %v1103 = vld [vmem:[#allocation2 + $0x8c8] sm:$0xff]
    %v1104 = vld [vmem:[#allocation2 + $0x8d0] sm:$0xff]
    %v1105 = vld [vmem:[#allocation2 + $0x8d8] sm:$0xff]
    %v1106 = vld [vmem:[#allocation2 + $0x8e0] sm:$0xff]
    %v1107 = vld [vmem:[#allocation2 + $0x8e8] sm:$0xff]
    %v1108 = vld [vmem:[#allocation2 + $0x8f0] sm:$0xff]
    %v1109 = vld [vmem:[#allocation2 + $0x8f8] sm:$0xff]
    %v1110 = vld [vmem:[#allocation2 + $0x900] sm:$0xff]
    %v1111 = vld [vmem:[#allocation2 + $0x908] sm:$0xff]
    %v1112 = vld [vmem:[#allocation2 + $0x910] sm:$0xff]
    %v1113 = vld [vmem:[#allocation2 + $0x918] sm:$0xff]
    %v1114 = vld [vmem:[#allocation2 + $0x920] sm:$0xff]
    %v1115 = vld [vmem:[#allocation2 + $0x928] sm:$0xff]
    %v1116 = vld [vmem:[#allocation2 + $0x930] sm:$0xff]
    %v1117 = vld [vmem:[#allocation2 + $0x938] sm:$0xff]
    %v1118 = vld [vmem:[#allocation2 + $0x940] sm:$0xff]
    %v1119 = vld [vmem:[#allocation2 + $0x948] sm:$0xff]
    %v1120 = vld [vmem:[#allocation2 + $0x950] sm:$0xff]
    %v1121 = vld [vmem:[#allocation2 + $0x958] sm:$0xff]
    %v1122 = vld [vmem:[#allocation2 + $0x960] sm:$0xff]
    %v1123 = vld [vmem:[#allocation2 + $0x968] sm:$0xff]
    %v1124 = vld [vmem:[#allocation2 + $0x970] sm:$0xff]
    %v1125 = vld [vmem:[#allocation2 + $0x978] sm:$0xff]
    %v1126 = vld [vmem:[#allocation2 + $0x980] sm:$0xff]
    %v1127 = vld [vmem:[#allocation2 + $0x988] sm:$0xff]
    %v1128 = vld [vmem:[#allocation2 + $0x990] sm:$0xff]
    %v1129 = vld [vmem:[#allocation2 + $0x998] sm:$0xff]
    %v1130 = vld [vmem:[#allocation2 + $0x9a0] sm:$0xff]
    %v1131 = vld [vmem:[#allocation2 + $0x9a8] sm:$0xff]
    %v1132 = vld [vmem:[#allocation2 + $0x9b0] sm:$0xff]
    %v1133 = vld [vmem:[#allocation2 + $0x9b8] sm:$0xff]
    %v1134 = vld [vmem:[#allocation2 + $0x9c0] sm:$0xff]
    %v1135 = vld [vmem:[#allocation2 + $0x9c8] sm:$0xff]
    %v1136 = vld [vmem:[#allocation2 + $0x9d0] sm:$0xff]
    %v1137 = vld [vmem:[#allocation2 + $0x9d8] sm:$0xff]
    %v1138 = vld [vmem:[#allocation2 + $0x9e0] sm:$0xff]
    %v1139 = vld [vmem:[#allocation2 + $0x9e8] sm:$0xff]
    %v1140 = vld [vmem:[#allocation2 + $0x9f0] sm:$0xff]
    %v1141 = vld [vmem:[#allocation2 + $0x9f8] sm:$0xff]
    %v1142 = vld [vmem:[#allocation2 + $0xa00] sm:$0xff]
    %v1143 = vld [vmem:[#allocation2 + $0xa08] sm:$0xff]
    %v1144 = vld [vmem:[#allocation2 + $0xa10] sm:$0xff]
    %v1145 = vld [vmem:[#allocation2 + $0xa18] sm:$0xff]
    %v1146 = vld [vmem:[#allocation2 + $0xa20] sm:$0xff]
    %v1147 = vld [vmem:[#allocation2 + $0xa28] sm:$0xff]
    %v1148 = vld [vmem:[#allocation2 + $0xa30] sm:$0xff]
    %v1149 = vld [vmem:[#allocation2 + $0xa38] sm:$0xff]
    %v1150 = vld [vmem:[#allocation2 + $0xa40] sm:$0xff]
    %v1151 = vld [vmem:[#allocation2 + $0xa48] sm:$0xff]
    %v1152 = vld [vmem:[#allocation2 + $0xa50] sm:$0xff]
    %v1153 = vld [vmem:[#allocation2 + $0xa58] sm:$0xff]
    %v1154 = vld [vmem:[#allocation2 + $0xa60] sm:$0xff]
    %v1155 = vld [vmem:[#allocation2 + $0xa68] sm:$0xff]
    %v1156 = vld [vmem:[#allocation2 + $0xa70] sm:$0xff]
    %v1157 = vld [vmem:[#allocation2 + $0xa78] sm:$0xff]
    %v1158 = vld [vmem:[#allocation2 + $0xa80] sm:$0xff]
    %v1159 = vld [vmem:[#allocation2 + $0xa88] sm:$0xff]
    %v1160 = vld [vmem:[#allocation2 + $0xa90] sm:$0xff]
    %v1161 = vld [vmem:[#allocation2 + $0xa98] sm:$0xff]
    %v1162 = vld [vmem:[#allocation2 + $0xaa0] sm:$0xff]
    %v1163 = vld [vmem:[#allocation2 + $0xaa8] sm:$0xff]
    %v1164 = vld [vmem:[#allocation2 + $0xab0] sm:$0xff]
    %v1165 = vld [vmem:[#allocation2 + $0xab8] sm:$0xff]
    %v1166 = vld [vmem:[#allocation2 + $0xac0] sm:$0xff]
    %v1167 = vld [vmem:[#allocation2 + $0xac8] sm:$0xff]
    %v1168 = vld [vmem:[#allocation2 + $0xad0] sm:$0xff]
    %v1169 = vld [vmem:[#allocation2 + $0xad8] sm:$0xff]
    %v1170 = vld [vmem:[#allocation2 + $0xae0] sm:$0xff]
    %v1171 = vld [vmem:[#allocation2 + $0xae8] sm:$0xff]
    %v1172 = vld [vmem:[#allocation2 + $0xaf0] sm:$0xff]
    %v1173 = vld [vmem:[#allocation2 + $0xaf8] sm:$0xff]
    %v1174 = vld [vmem:[#allocation2 + $0xb00] sm:$0xff]
    %v1175 = vld [vmem:[#allocation2 + $0xb08] sm:$0xff]
    %v1176 = vld [vmem:[#allocation2 + $0xb10] sm:$0xff]
    %v1177 = vld [vmem:[#allocation2 + $0xb18] sm:$0xff]
    %v1178 = vld [vmem:[#allocation2 + $0xb20] sm:$0xff]
    %v1179 = vld [vmem:[#allocation2 + $0xb28] sm:$0xff]
    %v1180 = vld [vmem:[#allocation2 + $0xb30] sm:$0xff]
    %v1181 = vld [vmem:[#allocation2 + $0xb38] sm:$0xff]
    %v1182 = vld [vmem:[#allocation2 + $0xb40] sm:$0xff]
    %v1183 = vld [vmem:[#allocation2 + $0xb48] sm:$0xff]
    %v1184 = vld [vmem:[#allocation2 + $0xb50] sm:$0xff]
    %v1185 = vld [vmem:[#allocation2 + $0xb58] sm:$0xff]
    %v1186 = vld [vmem:[#allocation2 + $0xb60] sm:$0xff]
    %v1187 = vld [vmem:[#allocation2 + $0xb68] sm:$0xff]
    %v1188 = vld [vmem:[#allocation2 + $0xb70] sm:$0xff]
    %v1189 = vld [vmem:[#allocation2 + $0xb78] sm:$0xff]
    %v1190 = vld [vmem:[#allocation2 + $0xb80] sm:$0xff]
    %v1191 = vld [vmem:[#allocation2 + $0xb88] sm:$0xff]
    %v1192 = vld [vmem:[#allocation2 + $0xb90] sm:$0xff]
    %v1193 = vld [vmem:[#allocation2 + $0xb98] sm:$0xff]
    %v1194 = vld [vmem:[#allocation2 + $0xba0] sm:$0xff]
    %v1195 = vld [vmem:[#allocation2 + $0xba8] sm:$0xff]
    %v1196 = vld [vmem:[#allocation2 + $0xbb0] sm:$0xff]
    %v1197 = vld [vmem:[#allocation2 + $0xbb8] sm:$0xff]
    %v1198 = vld [vmem:[#allocation2 + $0xbc0] sm:$0xff]
    %v1199 = vld [vmem:[#allocation2 + $0xbc8] sm:$0xff]
    %v1200 = vld [vmem:[#allocation2 + $0xbd0] sm:$0xff]
    %v1201 = vld [vmem:[#allocation2 + $0xbd8] sm:$0xff]
    %v1202 = vld [vmem:[#allocation2 + $0xbe0] sm:$0xff]
    %v1203 = vld [vmem:[#allocation2 + $0xbe8] sm:$0xff]
    %v1204 = vld [vmem:[#allocation2 + $0xbf0] sm:$0xff]
    %v1205 = vld [vmem:[#allocation2 + $0xbf8] sm:$0xff]
    %v1206 = vld [vmem:[#allocation2 + $0xc00] sm:$0xff]
    %v1207 = vld [vmem:[#allocation2 + $0xc08] sm:$0xff]
    %v1208 = vld [vmem:[#allocation2 + $0xc10] sm:$0xff]
    %v1209 = vld [vmem:[#allocation2 + $0xc18] sm:$0xff]
    %v1210 = vld [vmem:[#allocation2 + $0xc20] sm:$0xff]
    %v1211 = vld [vmem:[#allocation2 + $0xc28] sm:$0xff]
    %v1212 = vld [vmem:[#allocation2 + $0xc30] sm:$0xff]
    %v1213 = vld [vmem:[#allocation2 + $0xc38] sm:$0xff]
    %v1214 = vld [vmem:[#allocation2 + $0xc40] sm:$0xff]
    %v1215 = vld [vmem:[#allocation2 + $0xc48] sm:$0xff]
    %v1216 = vld [vmem:[#allocation2 + $0xc50] sm:$0xff]
    %v1217 = vld [vmem:[#allocation2 + $0xc58] sm:$0xff]
    %v1218 = vld [vmem:[#allocation2 + $0xc60] sm:$0xff]
    %v1219 = vld [vmem:[#allocation2 + $0xc68] sm:$0xff]
    %v1220 = vld [vmem:[#allocation2 + $0xc70] sm:$0xff]
    %v1221 = vld [vmem:[#allocation2 + $0xc78] sm:$0xff]
    %v1222 = vld [vmem:[#allocation2 + $0xc80] sm:$0xff]
    %v1223 = vld [vmem:[#allocation2 + $0xc88] sm:$0xff]
    %v1224 = vld [vmem:[#allocation2 + $0xc90] sm:$0xff]
    %v1225 = vld [vmem:[#allocation2 + $0xc98] sm:$0xff]
    %v1226 = vld [vmem:[#allocation2 + $0xca0] sm:$0xff]
    %v1227 = vld [vmem:[#allocation2 + $0xca8] sm:$0xff]
    %v1228 = vld [vmem:[#allocation2 + $0xcb0] sm:$0xff]
    %v1229 = vld [vmem:[#allocation2 + $0xcb8] sm:$0xff]
    %v1230 = vld [vmem:[#allocation2 + $0xcc0] sm:$0xff]
    %v1231 = vld [vmem:[#allocation2 + $0xcc8] sm:$0xff]
    %v1232 = vld [vmem:[#allocation2 + $0xcd0] sm:$0xff]
    %v1233 = vld [vmem:[#allocation2 + $0xcd8] sm:$0xff]
    %v1234 = vld [vmem:[#allocation2 + $0xce0] sm:$0xff]
    %v1235 = vld [vmem:[#allocation2 + $0xce8] sm:$0xff]
    %v1236 = vld [vmem:[#allocation2 + $0xcf0] sm:$0xff]
    %v1237 = vld [vmem:[#allocation2 + $0xcf8] sm:$0xff]
    %v1238 = vld [vmem:[#allocation2 + $0xd00] sm:$0xff]
    %v1239 = vld [vmem:[#allocation2 + $0xd08] sm:$0xff]
    %v1240 = vld [vmem:[#allocation2 + $0xd10] sm:$0xff]
    %v1241 = vld [vmem:[#allocation2 + $0xd18] sm:$0xff]
    %v1242 = vld [vmem:[#allocation2 + $0xd20] sm:$0xff]
    %v1243 = vld [vmem:[#allocation2 + $0xd28] sm:$0xff]
    %v1244 = vld [vmem:[#allocation2 + $0xd30] sm:$0xff]
    %v1245 = vld [vmem:[#allocation2 + $0xd38] sm:$0xff]
    %v1246 = vld [vmem:[#allocation2 + $0xd40] sm:$0xff]
    %v1247 = vld [vmem:[#allocation2 + $0xd48] sm:$0xff]
    %v1248 = vld [vmem:[#allocation2 + $0xd50] sm:$0xff]
    %v1249 = vld [vmem:[#allocation2 + $0xd58] sm:$0xff]
    %v1250 = vld [vmem:[#allocation2 + $0xd60] sm:$0xff]
    %v1251 = vld [vmem:[#allocation2 + $0xd68] sm:$0xff]
    %v1252 = vld [vmem:[#allocation2 + $0xd70] sm:$0xff]
    %v1253 = vld [vmem:[#allocation2 + $0xd78] sm:$0xff]
    %v1254 = vld [vmem:[#allocation2 + $0xd80] sm:$0xff]
    %v1255 = vld [vmem:[#allocation2 + $0xd88] sm:$0xff]
    %v1256 = vld [vmem:[#allocation2 + $0xd90] sm:$0xff]
    %v1257 = vld [vmem:[#allocation2 + $0xd98] sm:$0xff]
    %v1258 = vld [vmem:[#allocation2 + $0xda0] sm:$0xff]
    %v1259 = vld [vmem:[#allocation2 + $0xda8] sm:$0xff]
    %v1260 = vld [vmem:[#allocation2 + $0xdb0] sm:$0xff]
    %v1261 = vld [vmem:[#allocation2 + $0xdb8] sm:$0xff]
    %v1262 = vld [vmem:[#allocation2 + $0xdc0] sm:$0xff]
    %v1263 = vld [vmem:[#allocation2 + $0xdc8] sm:$0xff]
    %v1264 = vld [vmem:[#allocation2 + $0xdd0] sm:$0xff]
    %v1265 = vld [vmem:[#allocation2 + $0xdd8] sm:$0xff]
    %v1266 = vld [vmem:[#allocation2 + $0xde0] sm:$0xff]
    %v1267 = vld [vmem:[#allocation2 + $0xde8] sm:$0xff]
    %v1268 = vld [vmem:[#allocation2 + $0xdf0] sm:$0xff]
    %v1269 = vld [vmem:[#allocation2 + $0xdf8] sm:$0xff]
    %v1270 = vld [vmem:[#allocation2 + $0xe00] sm:$0xff]
    %v1271 = vld [vmem:[#allocation2 + $0xe08] sm:$0xff]
    %v1272 = vld [vmem:[#allocation2 + $0xe10] sm:$0xff]
    %v1273 = vld [vmem:[#allocation2 + $0xe18] sm:$0xff]
    %v1274 = vld [vmem:[#allocation2 + $0xe20] sm:$0xff]
    %v1275 = vld [vmem:[#allocation2 + $0xe28] sm:$0xff]
    %v1276 = vld [vmem:[#allocation2 + $0xe30] sm:$0xff]
    %v1277 = vld [vmem:[#allocation2 + $0xe38] sm:$0xff]
    %v1278 = vld [vmem:[#allocation2 + $0xe40] sm:$0xff]
    %v1279 = vld [vmem:[#allocation2 + $0xe48] sm:$0xff]
    %v1280 = vld [vmem:[#allocation2 + $0xe50] sm:$0xff]
    %v1281 = vld [vmem:[#allocation2 + $0xe58] sm:$0xff]
    %v1282 = vld [vmem:[#allocation2 + $0xe60] sm:$0xff]
    %v1283 = vld [vmem:[#allocation2 + $0xe68] sm:$0xff]
    %v1284 = vld [vmem:[#allocation2 + $0xe70] sm:$0xff]
    %v1285 = vld [vmem:[#allocation2 + $0xe78] sm:$0xff]
    %v1286 = vld [vmem:[#allocation2 + $0xe80] sm:$0xff]
    %v1287 = vld [vmem:[#allocation2 + $0xe88] sm:$0xff]
    %v1288 = vld [vmem:[#allocation2 + $0xe90] sm:$0xff]
    %v1289 = vld [vmem:[#allocation2 + $0xe98] sm:$0xff]
    %v1290 = vld [vmem:[#allocation2 + $0xea0] sm:$0xff]
    %v1291 = vld [vmem:[#allocation2 + $0xea8] sm:$0xff]
    %v1292 = vld [vmem:[#allocation2 + $0xeb0] sm:$0xff]
    %v1293 = vld [vmem:[#allocation2 + $0xeb8] sm:$0xff]
    %v1294 = vld [vmem:[#allocation2 + $0xec0] sm:$0xff]
    %v1295 = vld [vmem:[#allocation2 + $0xec8] sm:$0xff]
    %v1296 = vld [vmem:[#allocation2 + $0xed0] sm:$0xff]
    %v1297 = vld [vmem:[#allocation2 + $0xed8] sm:$0xff]
    %v1298 = vld [vmem:[#allocation2 + $0xee0] sm:$0xff]
    %v1299 = vld [vmem:[#allocation2 + $0xee8] sm:$0xff]
    %v1300 = vld [vmem:[#allocation2 + $0xef0] sm:$0xff]
    %v1301 = vld [vmem:[#allocation2 + $0xef8] sm:$0xff]
    %v1302 = vld [vmem:[#allocation2 + $0xf00] sm:$0xff]
    %v1303 = vld [vmem:[#allocation2 + $0xf08] sm:$0xff]
    %v1304 = vld [vmem:[#allocation2 + $0xf10] sm:$0xff]
    %v1305 = vld [vmem:[#allocation2 + $0xf18] sm:$0xff]
    %v1306 = vld [vmem:[#allocation2 + $0xf20] sm:$0xff]
    %v1307 = vld [vmem:[#allocation2 + $0xf28] sm:$0xff]
    %v1308 = vld [vmem:[#allocation2 + $0xf30] sm:$0xff]
    %v1309 = vld [vmem:[#allocation2 + $0xf38] sm:$0xff]
    %v1310 = vld [vmem:[#allocation2 + $0xf40] sm:$0xff]
    %v1311 = vld [vmem:[#allocation2 + $0xf48] sm:$0xff]
    %v1312 = vld [vmem:[#allocation2 + $0xf50] sm:$0xff]
    %v1313 = vld [vmem:[#allocation2 + $0xf58] sm:$0xff]
    %v1314 = vld [vmem:[#allocation2 + $0xf60] sm:$0xff]
    %v1315 = vld [vmem:[#allocation2 + $0xf68] sm:$0xff]
    %v1316 = vld [vmem:[#allocation2 + $0xf70] sm:$0xff]
    %v1317 = vld [vmem:[#allocation2 + $0xf78] sm:$0xff]
    %v1318 = vld [vmem:[#allocation2 + $0xf80] sm:$0xff]
    %v1319 = vld [vmem:[#allocation2 + $0xf88] sm:$0xff]
    %v1320 = vld [vmem:[#allocation2 + $0xf90] sm:$0xff]
    %v1321 = vld [vmem:[#allocation2 + $0xf98] sm:$0xff]
    %v1322 = vld [vmem:[#allocation2 + $0xfa0] sm:$0xff]
    %v1323 = vld [vmem:[#allocation2 + $0xfa8] sm:$0xff]
    %v1324 = vld [vmem:[#allocation2 + $0xfb0] sm:$0xff]
    %v1325 = vld [vmem:[#allocation2 + $0xfb8] sm:$0xff]
    %v1326 = vld [vmem:[#allocation2 + $0xfc0] sm:$0xff]
    %v1327 = vld [vmem:[#allocation2 + $0xfc8] sm:$0xff]
    %v1328 = vld [vmem:[#allocation2 + $0xfd0] sm:$0xff]
    %v1329 = vld [vmem:[#allocation2 + $0xfd8] sm:$0xff]
    %v1330 = vld [vmem:[#allocation2 + $0xfe0] sm:$0xff]
    %v1331 = vld [vmem:[#allocation2 + $0xfe8] sm:$0xff]
    %v1332 = vld [vmem:[#allocation2 + $0xff0] sm:$0xff]
    %v1333 = vld [vmem:[#allocation2 + $0xff8] sm:$0xff]
    %v1334 = vld [vmem:[#allocation2 + $0x1000] sm:$0xff]
    %v1335 = vld [vmem:[#allocation2 + $0x1008] sm:$0xff]
    %v1336 = vld [vmem:[#allocation2 + $0x1010] sm:$0xff]
    %v1337 = vld [vmem:[#allocation2 + $0x1018] sm:$0xff]
    %v1338 = vld [vmem:[#allocation2 + $0x1020] sm:$0xff]
    %v1339 = vld [vmem:[#allocation2 + $0x1028] sm:$0xff]
    %v1340 = vld [vmem:[#allocation2 + $0x1030] sm:$0xff]
    %v1341 = vld [vmem:[#allocation2 + $0x1038] sm:$0xff]
    %v1342 = vld [vmem:[#allocation2 + $0x1040] sm:$0xff]
    %v1343 = vld [vmem:[#allocation2 + $0x1048] sm:$0xff]
    %v1344 = vld [vmem:[#allocation2 + $0x1050] sm:$0xff]
    %v1345 = vld [vmem:[#allocation2 + $0x1058] sm:$0xff]
    %v1346 = vld [vmem:[#allocation2 + $0x1060] sm:$0xff]
    %v1347 = vld [vmem:[#allocation2 + $0x1068] sm:$0xff]
    %v1348 = vld [vmem:[#allocation2 + $0x1070] sm:$0xff]
    %v1349 = vld [vmem:[#allocation2 + $0x1078] sm:$0xff]
    %v1350 = vld [vmem:[#allocation2 + $0x1080] sm:$0xff]
    %v1351 = vld [vmem:[#allocation2 + $0x1088] sm:$0xff]
    %v1352 = vld [vmem:[#allocation2 + $0x1090] sm:$0xff]
    %v1353 = vld [vmem:[#allocation2 + $0x1098] sm:$0xff]
    %v1354 = vld [vmem:[#allocation2 + $0x10a0] sm:$0xff]
    %v1355 = vld [vmem:[#allocation2 + $0x10a8] sm:$0xff]
    %v1356 = vld [vmem:[#allocation2 + $0x10b0] sm:$0xff]
    %v1357 = vld [vmem:[#allocation2 + $0x10b8] sm:$0xff]
    %v1358 = vld [vmem:[#allocation2 + $0x10c0] sm:$0xff]
    %v1359 = vld [vmem:[#allocation2 + $0x10c8] sm:$0xff]
    %v1360 = vld [vmem:[#allocation2 + $0x10d0] sm:$0xff]
    %v1361 = vld [vmem:[#allocation2 + $0x10d8] sm:$0xff]
    %v1362 = vld [vmem:[#allocation2 + $0x10e0] sm:$0xff]
    %v1363 = vld [vmem:[#allocation2 + $0x10e8] sm:$0xff]
    %v1364 = vld [vmem:[#allocation2 + $0x10f0] sm:$0xff]
    %v1365 = vld [vmem:[#allocation2 + $0x10f8] sm:$0xff]
    %v1366 = vld [vmem:[#allocation2 + $0x1100] sm:$0xff]
    %v1367 = vld [vmem:[#allocation2 + $0x1108] sm:$0xff]
    %v1368 = vld [vmem:[#allocation2 + $0x1110] sm:$0xff]
    %v1369 = vld [vmem:[#allocation2 + $0x1118] sm:$0xff]
    %v1370 = vld [vmem:[#allocation2 + $0x1120] sm:$0xff]
    %v1371 = vld [vmem:[#allocation2 + $0x1128] sm:$0xff]
    %v1372 = vld [vmem:[#allocation2 + $0x1130] sm:$0xff]
    %v1373 = vld [vmem:[#allocation2 + $0x1138] sm:$0xff]
    %v1374 = vld [vmem:[#allocation2 + $0x1140] sm:$0xff]
    %v1375 = vld [vmem:[#allocation2 + $0x1148] sm:$0xff]
    %v1376 = vld [vmem:[#allocation2 + $0x1150] sm:$0xff]
    %v1377 = vld [vmem:[#allocation2 + $0x1158] sm:$0xff]
    %v1378 = vld [vmem:[#allocation2 + $0x1160] sm:$0xff]
    %v1379 = vld [vmem:[#allocation2 + $0x1168] sm:$0xff]
    %v1380 = vld [vmem:[#allocation2 + $0x1170] sm:$0xff]
    %v1381 = vld [vmem:[#allocation2 + $0x1178] sm:$0xff]
    %v1382 = vld [vmem:[#allocation2 + $0x1180] sm:$0xff]
    %v1383 = vld [vmem:[#allocation2 + $0x1188] sm:$0xff]
    %v1384 = vld [vmem:[#allocation2 + $0x1190] sm:$0xff]
    %v1385 = vld [vmem:[#allocation2 + $0x1198] sm:$0xff]
    %v1386 = vld [vmem:[#allocation2 + $0x11a0] sm:$0xff]
    %v1387 = vld [vmem:[#allocation2 + $0x11a8] sm:$0xff]
    %v1388 = vld [vmem:[#allocation2 + $0x11b0] sm:$0xff]
    %v1389 = vld [vmem:[#allocation2 + $0x11b8] sm:$0xff]
    %v1390 = vld [vmem:[#allocation2 + $0x11c0] sm:$0xff]
    %v1391 = vld [vmem:[#allocation2 + $0x11c8] sm:$0xff]
    %v1392 = vld [vmem:[#allocation2 + $0x11d0] sm:$0xff]
    %v1393 = vld [vmem:[#allocation2 + $0x11d8] sm:$0xff]
    %v1394 = vld [vmem:[#allocation2 + $0x11e0] sm:$0xff]
    %v1395 = vld [vmem:[#allocation2 + $0x11e8] sm:$0xff]
    %v1396 = vld [vmem:[#allocation2 + $0x11f0] sm:$0xff]
    %v1397 = vld [vmem:[#allocation2 + $0x11f8] sm:$0xff]
    %v1398 = vld [vmem:[#allocation2 + $0x1200] sm:$0xff]
    %v1399 = vld [vmem:[#allocation2 + $0x1208] sm:$0xff]
    %v1400 = vld [vmem:[#allocation2 + $0x1210] sm:$0xff]
    %v1401 = vld [vmem:[#allocation2 + $0x1218] sm:$0xff]
    %v1402 = vld [vmem:[#allocation2 + $0x1220] sm:$0xff]
    %v1403 = vld [vmem:[#allocation2 + $0x1228] sm:$0xff]
    %v1404 = vld [vmem:[#allocation2 + $0x1230] sm:$0xff]
    %v1405 = vld [vmem:[#allocation2 + $0x1238] sm:$0xff]
    %v1406 = vld [vmem:[#allocation2 + $0x1240] sm:$0xff]
    %v1407 = vld [vmem:[#allocation2 + $0x1248] sm:$0xff]
    %v1408 = vld [vmem:[#allocation2 + $0x1250] sm:$0xff]
    %v1409 = vld [vmem:[#allocation2 + $0x1258] sm:$0xff]
    %v1410 = vld [vmem:[#allocation2 + $0x1260] sm:$0xff]
    %v1411 = vld [vmem:[#allocation2 + $0x1268] sm:$0xff]
    %v1412 = vld [vmem:[#allocation2 + $0x1270] sm:$0xff]
    %v1413 = vld [vmem:[#allocation2 + $0x1278] sm:$0xff]
    %v1414 = vld [vmem:[#allocation2 + $0x1280] sm:$0xff]
    %v1415 = vld [vmem:[#allocation2 + $0x1288] sm:$0xff]
    %v1416 = vld [vmem:[#allocation2 + $0x1290] sm:$0xff]
    %v1417 = vld [vmem:[#allocation2 + $0x1298] sm:$0xff]
    %v1418 = vld [vmem:[#allocation2 + $0x12a0] sm:$0xff]
    %v1419 = vld [vmem:[#allocation2 + $0x12a8] sm:$0xff]
    %v1420 = vld [vmem:[#allocation2 + $0x12b0] sm:$0xff]
    %v1421 = vld [vmem:[#allocation2 + $0x12b8] sm:$0xff]
    %v1422 = vld [vmem:[#allocation4] sm:$0xff]
    %v1424 = vlaneseq
    %v1425 = vshrl.u32 %v1424, 7
    %v1426 = vsub.s32 0, %v1425
    %v1427 = vrot.slane %v1422, %v1426
    %v1428 = vlaneseq
    %v1429 = vshrl.u32 %v1428, 7
    %v1430 = vsub.s32 1, %v1429
    %v1431 = vrot.slane %v1422, %v1430
    %v1432 = vlaneseq
    %v1433 = vshrl.u32 %v1432, 7
    %v1434 = vsub.s32 2, %v1433
    %v1435 = vrot.slane %v1422, %v1434
    %v1436 = vlaneseq
    %v1437 = vshrl.u32 %v1436, 7
    %v1438 = vsub.s32 3, %v1437
    %v1439 = vrot.slane %v1422, %v1438
    %v1440 = vlaneseq
    %v1441 = vshrl.u32 %v1440, 7
    %v1442 = vsub.s32 4, %v1441
    %v1443 = vrot.slane %v1422, %v1442
    %v1444 = vlaneseq
    %v1445 = vshrl.u32 %v1444, 7
    %v1446 = vsub.s32 5, %v1445
    %v1447 = vrot.slane %v1422, %v1446
    %v1448 = vlaneseq
    %v1449 = vshrl.u32 %v1448, 7
    %v1450 = vsub.s32 6, %v1449
    %v1451 = vrot.slane %v1422, %v1450
    %v1452 = vlaneseq
    %v1453 = vshrl.u32 %v1452, 7
    %v1454 = vsub.s32 7, %v1453
    %v1455 = vrot.slane %v1422, %v1454
    %v2064 = vunpack.c.l.b16 %v822
    %v2065 = vunpack.c.h.b16 %v822
    %v2066 = vunpack.c.l.b16 %v823
    %v2067 = vunpack.c.h.b16 %v823
    %v2068 = vunpack.c.l.b16 %v824
    %v2069 = vunpack.c.h.b16 %v824
    %v2070 = vunpack.c.l.b16 %v825
    %v2071 = vunpack.c.h.b16 %v825
    %v2072 = vunpack.c.l.b16 %v826
    %v2073 = vunpack.c.h.b16 %v826
    %v2074 = vunpack.c.l.b16 %v827
    %v2075 = vunpack.c.h.b16 %v827
    %v2076 = vunpack.c.l.b16 %v828
    %v2077 = vunpack.c.h.b16 %v828
    %v2078 = vunpack.c.l.b16 %v829
    %v2079 = vunpack.c.h.b16 %v829
    %v2080 = vunpack.c.l.b16 %v830
    %v2081 = vunpack.c.h.b16 %v830
    %v2082 = vunpack.c.l.b16 %v831
    %v2083 = vunpack.c.h.b16 %v831
    %v2084 = vunpack.c.l.b16 %v832
    %v2085 = vunpack.c.h.b16 %v832
    %v2086 = vunpack.c.l.b16 %v833
    %v2087 = vunpack.c.h.b16 %v833
    %v2088 = vunpack.c.l.b16 %v834
    %v2089 = vunpack.c.h.b16 %v834
    %v2090 = vunpack.c.l.b16 %v835
    %v2091 = vunpack.c.h.b16 %v835
    %v2092 = vunpack.c.l.b16 %v836
    %v2093 = vunpack.c.h.b16 %v836
    %v2094 = vunpack.c.l.b16 %v837
    %v2095 = vunpack.c.h.b16 %v837
    %v2096 = vunpack.c.l.b16 %v838
    %v2097 = vunpack.c.h.b16 %v838
    %v2098 = vunpack.c.l.b16 %v839
    %v2099 = vunpack.c.h.b16 %v839
    %v2100 = vunpack.c.l.b16 %v840
    %v2101 = vunpack.c.h.b16 %v840
    %v2102 = vunpack.c.l.b16 %v841
    %v2103 = vunpack.c.h.b16 %v841
    %v2104 = vunpack.c.l.b16 %v842
    %v2105 = vunpack.c.h.b16 %v842
    %v2106 = vunpack.c.l.b16 %v843
    %v2107 = vunpack.c.h.b16 %v843
    %v2108 = vunpack.c.l.b16 %v844
    %v2109 = vunpack.c.h.b16 %v844
    %v2110 = vunpack.c.l.b16 %v845
    %v2111 = vunpack.c.h.b16 %v845
    %v2112 = vunpack.c.l.b16 %v846
    %v2113 = vunpack.c.h.b16 %v846
    %v2114 = vunpack.c.l.b16 %v847
    %v2115 = vunpack.c.h.b16 %v847
    %v2116 = vunpack.c.l.b16 %v848
    %v2117 = vunpack.c.h.b16 %v848
    %v2118 = vunpack.c.l.b16 %v849
    %v2119 = vunpack.c.h.b16 %v849
    %v2120 = vunpack.c.l.b16 %v850
    %v2121 = vunpack.c.h.b16 %v850
    %v2122 = vunpack.c.l.b16 %v851
    %v2123 = vunpack.c.h.b16 %v851
    %v2124 = vunpack.c.l.b16 %v852
    %v2125 = vunpack.c.h.b16 %v852
    %v2126 = vunpack.c.l.b16 %v853
    %v2127 = vunpack.c.h.b16 %v853
    %v2128 = vunpack.c.l.b16 %v854
    %v2129 = vunpack.c.h.b16 %v854
    %v2130 = vunpack.c.l.b16 %v855
    %v2131 = vunpack.c.h.b16 %v855
    %v2132 = vunpack.c.l.b16 %v856
    %v2133 = vunpack.c.h.b16 %v856
    %v2134 = vunpack.c.l.b16 %v857
    %v2135 = vunpack.c.h.b16 %v857
    %v2136 = vunpack.c.l.b16 %v858
    %v2137 = vunpack.c.h.b16 %v858
    %v2138 = vunpack.c.l.b16 %v859
    %v2139 = vunpack.c.h.b16 %v859
    %v2140 = vunpack.c.l.b16 %v860
    %v2141 = vunpack.c.h.b16 %v860
    %v2142 = vunpack.c.l.b16 %v861
    %v2143 = vunpack.c.h.b16 %v861
    %v2144 = vunpack.c.l.b16 %v862
    %v2145 = vunpack.c.h.b16 %v862
    %v2146 = vunpack.c.l.b16 %v863
    %v2147 = vunpack.c.h.b16 %v863
    %v2148 = vunpack.c.l.b16 %v864
    %v2149 = vunpack.c.h.b16 %v864
    %v2150 = vunpack.c.l.b16 %v865
    %v2151 = vunpack.c.h.b16 %v865
    %v2152 = vunpack.c.l.b16 %v866
    %v2153 = vunpack.c.h.b16 %v866
    %v2154 = vunpack.c.l.b16 %v867
    %v2155 = vunpack.c.h.b16 %v867
    %v2156 = vunpack.c.l.b16 %v868
    %v2157 = vunpack.c.h.b16 %v868
    %v2158 = vunpack.c.l.b16 %v869
    %v2159 = vunpack.c.h.b16 %v869
    %v2160 = vunpack.c.l.b16 %v870
    %v2161 = vunpack.c.h.b16 %v870
    %v2162 = vunpack.c.l.b16 %v871
    %v2163 = vunpack.c.h.b16 %v871
    %v2164 = vunpack.c.l.b16 %v872
    %v2165 = vunpack.c.h.b16 %v872
    %v2166 = vunpack.c.l.b16 %v873
    %v2167 = vunpack.c.h.b16 %v873
    %v2168 = vunpack.c.l.b16 %v874
    %v2169 = vunpack.c.h.b16 %v874
    %v2170 = vunpack.c.l.b16 %v875
    %v2171 = vunpack.c.h.b16 %v875
    %v2172 = vunpack.c.l.b16 %v876
    %v2173 = vunpack.c.h.b16 %v876
    %v2174 = vunpack.c.l.b16 %v877
    %v2175 = vunpack.c.h.b16 %v877
    %v2176 = vunpack.c.l.b16 %v878
    %v2177 = vunpack.c.h.b16 %v878
    %v2178 = vunpack.c.l.b16 %v879
    %v2179 = vunpack.c.h.b16 %v879
    %v2180 = vunpack.c.l.b16 %v880
    %v2181 = vunpack.c.h.b16 %v880
    %v2182 = vunpack.c.l.b16 %v881
    %v2183 = vunpack.c.h.b16 %v881
    %v2184 = vunpack.c.l.b16 %v882
    %v2185 = vunpack.c.h.b16 %v882
    %v2186 = vunpack.c.l.b16 %v883
    %v2187 = vunpack.c.h.b16 %v883
    %v2188 = vunpack.c.l.b16 %v884
    %v2189 = vunpack.c.h.b16 %v884
    %v2190 = vunpack.c.l.b16 %v885
    %v2191 = vunpack.c.h.b16 %v885
    %v2192 = vunpack.c.l.b16 %v886
    %v2193 = vunpack.c.h.b16 %v886
    %v2194 = vunpack.c.l.b16 %v887
    %v2195 = vunpack.c.h.b16 %v887
    %v2196 = vunpack.c.l.b16 %v888
    %v2197 = vunpack.c.h.b16 %v888
    %v2198 = vunpack.c.l.b16 %v889
    %v2199 = vunpack.c.h.b16 %v889
    %v2200 = vunpack.c.l.b16 %v890
    %v2201 = vunpack.c.h.b16 %v890
    %v2202 = vunpack.c.l.b16 %v891
    %v2203 = vunpack.c.h.b16 %v891
    %v2204 = vunpack.c.l.b16 %v892
    %v2205 = vunpack.c.h.b16 %v892
    %v2206 = vunpack.c.l.b16 %v893
    %v2207 = vunpack.c.h.b16 %v893
    %v2208 = vunpack.c.l.b16 %v894
    %v2209 = vunpack.c.h.b16 %v894
    %v2210 = vunpack.c.l.b16 %v895
    %v2211 = vunpack.c.h.b16 %v895
    %v2212 = vunpack.c.l.b16 %v896
    %v2213 = vunpack.c.h.b16 %v896
    %v2214 = vunpack.c.l.b16 %v897
    %v2215 = vunpack.c.h.b16 %v897
    %v2216 = vunpack.c.l.b16 %v898
    %v2217 = vunpack.c.h.b16 %v898
    %v2218 = vunpack.c.l.b16 %v899
    %v2219 = vunpack.c.h.b16 %v899
    %v2220 = vunpack.c.l.b16 %v900
    %v2221 = vunpack.c.h.b16 %v900
    %v2222 = vunpack.c.l.b16 %v901
    %v2223 = vunpack.c.h.b16 %v901
    %v2224 = vunpack.c.l.b16 %v902
    %v2225 = vunpack.c.h.b16 %v902
    %v2226 = vunpack.c.l.b16 %v903
    %v2227 = vunpack.c.h.b16 %v903
    %v2228 = vunpack.c.l.b16 %v904
    %v2229 = vunpack.c.h.b16 %v904
    %v2230 = vunpack.c.l.b16 %v905
    %v2231 = vunpack.c.h.b16 %v905
    %v2232 = vunpack.c.l.b16 %v906
    %v2233 = vunpack.c.h.b16 %v906
    %v2234 = vunpack.c.l.b16 %v907
    %v2235 = vunpack.c.h.b16 %v907
    %v2236 = vunpack.c.l.b16 %v908
    %v2237 = vunpack.c.h.b16 %v908
    %v2238 = vunpack.c.l.b16 %v909
    %v2239 = vunpack.c.h.b16 %v909
    %v2240 = vunpack.c.l.b16 %v910
    %v2241 = vunpack.c.h.b16 %v910
    %v2242 = vunpack.c.l.b16 %v911
    %v2243 = vunpack.c.h.b16 %v911
    %v2244 = vunpack.c.l.b16 %v912
    %v2245 = vunpack.c.h.b16 %v912
    %v2246 = vunpack.c.l.b16 %v913
    %v2247 = vunpack.c.h.b16 %v913
    %v2248 = vunpack.c.l.b16 %v914
    %v2249 = vunpack.c.h.b16 %v914
    %v2250 = vunpack.c.l.b16 %v915
    %v2251 = vunpack.c.h.b16 %v915
    %v2252 = vunpack.c.l.b16 %v916
    %v2253 = vunpack.c.h.b16 %v916
    %v2254 = vunpack.c.l.b16 %v917
    %v2255 = vunpack.c.h.b16 %v917
    %v2256 = vunpack.c.l.b16 %v918
    %v2257 = vunpack.c.h.b16 %v918
    %v2258 = vunpack.c.l.b16 %v919
    %v2259 = vunpack.c.h.b16 %v919
    %v2260 = vunpack.c.l.b16 %v920
    %v2261 = vunpack.c.h.b16 %v920
    %v2262 = vunpack.c.l.b16 %v921
    %v2263 = vunpack.c.h.b16 %v921
    %v2264 = vunpack.c.l.b16 %v922
    %v2265 = vunpack.c.h.b16 %v922
    %v2266 = vunpack.c.l.b16 %v923
    %v2267 = vunpack.c.h.b16 %v923
    %v2268 = vunpack.c.l.b16 %v924
    %v2269 = vunpack.c.h.b16 %v924
    %v2270 = vunpack.c.l.b16 %v925
    %v2271 = vunpack.c.h.b16 %v925
    %v2272 = vunpack.c.l.b16 %v926
    %v2273 = vunpack.c.h.b16 %v926
    %v2274 = vunpack.c.l.b16 %v927
    %v2275 = vunpack.c.h.b16 %v927
    %v2276 = vunpack.c.l.b16 %v928
    %v2277 = vunpack.c.h.b16 %v928
    %v2278 = vunpack.c.l.b16 %v929
    %v2279 = vunpack.c.h.b16 %v929
    %v2280 = vunpack.c.l.b16 %v930
    %v2281 = vunpack.c.h.b16 %v930
    %v2282 = vunpack.c.l.b16 %v931
    %v2283 = vunpack.c.h.b16 %v931
    %v2284 = vunpack.c.l.b16 %v932
    %v2285 = vunpack.c.h.b16 %v932
    %v2286 = vunpack.c.l.b16 %v933
    %v2287 = vunpack.c.h.b16 %v933
    %v2288 = vunpack.c.l.b16 %v934
    %v2289 = vunpack.c.h.b16 %v934
    %v2290 = vunpack.c.l.b16 %v935
    %v2291 = vunpack.c.h.b16 %v935
    %v2292 = vunpack.c.l.b16 %v936
    %v2293 = vunpack.c.h.b16 %v936
    %v2294 = vunpack.c.l.b16 %v937
    %v2295 = vunpack.c.h.b16 %v937
    %v2296 = vunpack.c.l.b16 %v938
    %v2297 = vunpack.c.h.b16 %v938
    %v2298 = vunpack.c.l.b16 %v939
    %v2299 = vunpack.c.h.b16 %v939
    %v2300 = vunpack.c.l.b16 %v940
    %v2301 = vunpack.c.h.b16 %v940
    %v2302 = vunpack.c.l.b16 %v941
    %v2303 = vunpack.c.h.b16 %v941
    %v2304 = vunpack.c.l.b16 %v942
    %v2305 = vunpack.c.h.b16 %v942
    %v2306 = vunpack.c.l.b16 %v943
    %v2307 = vunpack.c.h.b16 %v943
    %v2308 = vunpack.c.l.b16 %v944
    %v2309 = vunpack.c.h.b16 %v944
    %v2310 = vunpack.c.l.b16 %v945
    %v2311 = vunpack.c.h.b16 %v945
    %v2312 = vunpack.c.l.b16 %v946
    %v2313 = vunpack.c.h.b16 %v946
    %v2314 = vunpack.c.l.b16 %v947
    %v2315 = vunpack.c.h.b16 %v947
    %v2316 = vunpack.c.l.b16 %v948
    %v2317 = vunpack.c.h.b16 %v948
    %v2318 = vunpack.c.l.b16 %v949
    %v2319 = vunpack.c.h.b16 %v949
    %v2320 = vunpack.c.l.b16 %v950
    %v2321 = vunpack.c.h.b16 %v950
    %v2322 = vunpack.c.l.b16 %v951
    %v2323 = vunpack.c.h.b16 %v951
    %v2324 = vunpack.c.l.b16 %v952
    %v2325 = vunpack.c.h.b16 %v952
    %v2326 = vunpack.c.l.b16 %v953
    %v2327 = vunpack.c.h.b16 %v953
    %v2328 = vunpack.c.l.b16 %v954
    %v2329 = vunpack.c.h.b16 %v954
    %v2330 = vunpack.c.l.b16 %v955
    %v2331 = vunpack.c.h.b16 %v955
    %v2332 = vunpack.c.l.b16 %v956
    %v2333 = vunpack.c.h.b16 %v956
    %v2334 = vunpack.c.l.b16 %v957
    %v2335 = vunpack.c.h.b16 %v957
    %v2336 = vunpack.c.l.b16 %v958
    %v2337 = vunpack.c.h.b16 %v958
    %v2338 = vunpack.c.l.b16 %v959
    %v2339 = vunpack.c.h.b16 %v959
    %v2340 = vunpack.c.l.b16 %v960
    %v2341 = vunpack.c.h.b16 %v960
    %v2342 = vunpack.c.l.b16 %v961
    %v2343 = vunpack.c.h.b16 %v961
    %v2344 = vunpack.c.l.b16 %v962
    %v2345 = vunpack.c.h.b16 %v962
    %v2346 = vunpack.c.l.b16 %v963
    %v2347 = vunpack.c.h.b16 %v963
    %v2348 = vunpack.c.l.b16 %v964
    %v2349 = vunpack.c.h.b16 %v964
    %v2350 = vunpack.c.l.b16 %v965
    %v2351 = vunpack.c.h.b16 %v965
    %v2352 = vunpack.c.l.b16 %v966
    %v2353 = vunpack.c.h.b16 %v966
    %v2354 = vunpack.c.l.b16 %v967
    %v2355 = vunpack.c.h.b16 %v967
    %v2356 = vunpack.c.l.b16 %v968
    %v2357 = vunpack.c.h.b16 %v968
    %v2358 = vunpack.c.l.b16 %v969
    %v2359 = vunpack.c.h.b16 %v969
    %v2360 = vunpack.c.l.b16 %v970
    %v2361 = vunpack.c.h.b16 %v970
    %v2362 = vunpack.c.l.b16 %v971
    %v2363 = vunpack.c.h.b16 %v971
    %v2364 = vunpack.c.l.b16 %v972
    %v2365 = vunpack.c.h.b16 %v972
    %v2366 = vunpack.c.l.b16 %v973
    %v2367 = vunpack.c.h.b16 %v973
    %v2368 = vunpack.c.l.b16 %v974
    %v2369 = vunpack.c.h.b16 %v974
    %v2370 = vunpack.c.l.b16 %v975
    %v2371 = vunpack.c.h.b16 %v975
    %v2372 = vunpack.c.l.b16 %v976
    %v2373 = vunpack.c.h.b16 %v976
    %v2374 = vunpack.c.l.b16 %v977
    %v2375 = vunpack.c.h.b16 %v977
    %v2376 = vunpack.c.l.b16 %v978
    %v2377 = vunpack.c.h.b16 %v978
    %v2378 = vunpack.c.l.b16 %v979
    %v2379 = vunpack.c.h.b16 %v979
    %v2380 = vunpack.c.l.b16 %v980
    %v2381 = vunpack.c.h.b16 %v980
    %v2382 = vunpack.c.l.b16 %v981
    %v2383 = vunpack.c.h.b16 %v981
    %v2384 = vunpack.c.l.b16 %v982
    %v2385 = vunpack.c.h.b16 %v982
    %v2386 = vunpack.c.l.b16 %v983
    %v2387 = vunpack.c.h.b16 %v983
    %v2388 = vunpack.c.l.b16 %v984
    %v2389 = vunpack.c.h.b16 %v984
    %v2390 = vunpack.c.l.b16 %v985
    %v2391 = vunpack.c.h.b16 %v985
    %v2392 = vunpack.c.l.b16 %v986
    %v2393 = vunpack.c.h.b16 %v986
    %v2394 = vunpack.c.l.b16 %v987
    %v2395 = vunpack.c.h.b16 %v987
    %v2396 = vunpack.c.l.b16 %v988
    %v2397 = vunpack.c.h.b16 %v988
    %v2398 = vunpack.c.l.b16 %v989
    %v2399 = vunpack.c.h.b16 %v989
    %v2400 = vunpack.c.l.b16 %v990
    %v2401 = vunpack.c.h.b16 %v990
    %v2402 = vunpack.c.l.b16 %v991
    %v2403 = vunpack.c.h.b16 %v991
    %v2404 = vunpack.c.l.b16 %v992
    %v2405 = vunpack.c.h.b16 %v992
    %v2406 = vunpack.c.l.b16 %v993
    %v2407 = vunpack.c.h.b16 %v993
    %v2408 = vunpack.c.l.b16 %v994
    %v2409 = vunpack.c.h.b16 %v994
    %v2410 = vunpack.c.l.b16 %v995
    %v2411 = vunpack.c.h.b16 %v995
    %v2412 = vunpack.c.l.b16 %v996
    %v2413 = vunpack.c.h.b16 %v996
    %v2414 = vunpack.c.l.b16 %v997
    %v2415 = vunpack.c.h.b16 %v997
    %v2416 = vunpack.c.l.b16 %v998
    %v2417 = vunpack.c.h.b16 %v998
    %v2418 = vunpack.c.l.b16 %v999
    %v2419 = vunpack.c.h.b16 %v999
    %v2420 = vunpack.c.l.b16 %v1000
    %v2421 = vunpack.c.h.b16 %v1000
    %v2422 = vunpack.c.l.b16 %v1001
    %v2423 = vunpack.c.h.b16 %v1001
    %v2424 = vunpack.c.l.b16 %v1002
    %v2425 = vunpack.c.h.b16 %v1002
    %v2426 = vunpack.c.l.b16 %v1003
    %v2427 = vunpack.c.h.b16 %v1003
    %v2428 = vunpack.c.l.b16 %v1004
    %v2429 = vunpack.c.h.b16 %v1004
    %v2430 = vunpack.c.l.b16 %v1005
    %v2431 = vunpack.c.h.b16 %v1005
    %v2432 = vunpack.c.l.b16 %v1006
    %v2433 = vunpack.c.h.b16 %v1006
    %v2434 = vunpack.c.l.b16 %v1007
    %v2435 = vunpack.c.h.b16 %v1007
    %v2436 = vunpack.c.l.b16 %v1008
    %v2437 = vunpack.c.h.b16 %v1008
    %v2438 = vunpack.c.l.b16 %v1009
    %v2439 = vunpack.c.h.b16 %v1009
    %v2440 = vunpack.c.l.b16 %v1010
    %v2441 = vunpack.c.h.b16 %v1010
    %v2442 = vunpack.c.l.b16 %v1011
    %v2443 = vunpack.c.h.b16 %v1011
    %v2444 = vunpack.c.l.b16 %v1012
    %v2445 = vunpack.c.h.b16 %v1012
    %v2446 = vunpack.c.l.b16 %v1013
    %v2447 = vunpack.c.h.b16 %v1013
    %v2448 = vunpack.c.l.b16 %v1014
    %v2449 = vunpack.c.h.b16 %v1014
    %v2450 = vunpack.c.l.b16 %v1015
    %v2451 = vunpack.c.h.b16 %v1015
    %v2452 = vunpack.c.l.b16 %v1016
    %v2453 = vunpack.c.h.b16 %v1016
    %v2454 = vunpack.c.l.b16 %v1017
    %v2455 = vunpack.c.h.b16 %v1017
    %v2456 = vunpack.c.l.b16 %v1018
    %v2457 = vunpack.c.h.b16 %v1018
    %v2458 = vunpack.c.l.b16 %v1019
    %v2459 = vunpack.c.h.b16 %v1019
    %v2460 = vunpack.c.l.b16 %v1020
    %v2461 = vunpack.c.h.b16 %v1020
    %v2462 = vunpack.c.l.b16 %v1021
    %v2463 = vunpack.c.h.b16 %v1021
    %v2464 = vunpack.c.l.b16 %v1022
    %v2465 = vunpack.c.h.b16 %v1022
    %v2466 = vunpack.c.l.b16 %v1023
    %v2467 = vunpack.c.h.b16 %v1023
    %v2468 = vunpack.c.l.b16 %v1024
    %v2469 = vunpack.c.h.b16 %v1024
    %v2470 = vunpack.c.l.b16 %v1025
    %v2471 = vunpack.c.h.b16 %v1025
    %v2472 = vunpack.c.l.b16 %v1026
    %v2473 = vunpack.c.h.b16 %v1026
    %v2474 = vunpack.c.l.b16 %v1027
    %v2475 = vunpack.c.h.b16 %v1027
    %v2476 = vunpack.c.l.b16 %v1028
    %v2477 = vunpack.c.h.b16 %v1028
    %v2478 = vunpack.c.l.b16 %v1029
    %v2479 = vunpack.c.h.b16 %v1029
    %v2480 = vunpack.c.l.b16 %v1030
    %v2481 = vunpack.c.h.b16 %v1030
    %v2482 = vunpack.c.l.b16 %v1031
    %v2483 = vunpack.c.h.b16 %v1031
    %v2484 = vunpack.c.l.b16 %v1032
    %v2485 = vunpack.c.h.b16 %v1032
    %v2486 = vunpack.c.l.b16 %v1033
    %v2487 = vunpack.c.h.b16 %v1033
    %v2488 = vunpack.c.l.b16 %v1034
    %v2489 = vunpack.c.h.b16 %v1034
    %v2490 = vunpack.c.l.b16 %v1035
    %v2491 = vunpack.c.h.b16 %v1035
    %v2492 = vunpack.c.l.b16 %v1036
    %v2493 = vunpack.c.h.b16 %v1036
    %v2494 = vunpack.c.l.b16 %v1037
    %v2495 = vunpack.c.h.b16 %v1037
    %v2496 = vunpack.c.l.b16 %v1038
    %v2497 = vunpack.c.h.b16 %v1038
    %v2498 = vunpack.c.l.b16 %v1039
    %v2499 = vunpack.c.h.b16 %v1039
    %v2500 = vunpack.c.l.b16 %v1040
    %v2501 = vunpack.c.h.b16 %v1040
    %v2502 = vunpack.c.l.b16 %v1041
    %v2503 = vunpack.c.h.b16 %v1041
    %v2504 = vunpack.c.l.b16 %v1042
    %v2505 = vunpack.c.h.b16 %v1042
    %v2506 = vunpack.c.l.b16 %v1043
    %v2507 = vunpack.c.h.b16 %v1043
    %v2508 = vunpack.c.l.b16 %v1044
    %v2509 = vunpack.c.h.b16 %v1044
    %v2510 = vunpack.c.l.b16 %v1045
    %v2511 = vunpack.c.h.b16 %v1045
    %v2512 = vunpack.c.l.b16 %v1046
    %v2513 = vunpack.c.h.b16 %v1046
    %v2514 = vunpack.c.l.b16 %v1047
    %v2515 = vunpack.c.h.b16 %v1047
    %v2516 = vunpack.c.l.b16 %v1048
    %v2517 = vunpack.c.h.b16 %v1048
    %v2518 = vunpack.c.l.b16 %v1049
    %v2519 = vunpack.c.h.b16 %v1049
    %v2520 = vunpack.c.l.b16 %v1050
    %v2521 = vunpack.c.h.b16 %v1050
    %v2522 = vunpack.c.l.b16 %v1051
    %v2523 = vunpack.c.h.b16 %v1051
    %v2524 = vunpack.c.l.b16 %v1052
    %v2525 = vunpack.c.h.b16 %v1052
    %v2526 = vunpack.c.l.b16 %v1053
    %v2527 = vunpack.c.h.b16 %v1053
    %v2528 = vunpack.c.l.b16 %v1054
    %v2529 = vunpack.c.h.b16 %v1054
    %v2530 = vunpack.c.l.b16 %v1055
    %v2531 = vunpack.c.h.b16 %v1055
    %v2532 = vunpack.c.l.b16 %v1056
    %v2533 = vunpack.c.h.b16 %v1056
    %v2534 = vunpack.c.l.b16 %v1057
    %v2535 = vunpack.c.h.b16 %v1057
    %v2536 = vunpack.c.l.b16 %v1058
    %v2537 = vunpack.c.h.b16 %v1058
    %v2538 = vunpack.c.l.b16 %v1059
    %v2539 = vunpack.c.h.b16 %v1059
    %v2540 = vunpack.c.l.b16 %v1060
    %v2541 = vunpack.c.h.b16 %v1060
    %v2542 = vunpack.c.l.b16 %v1061
    %v2543 = vunpack.c.h.b16 %v1061
    %v2544 = vunpack.c.l.b16 %v1062
    %v2545 = vunpack.c.h.b16 %v1062
    %v2546 = vunpack.c.l.b16 %v1063
    %v2547 = vunpack.c.h.b16 %v1063
    %v2548 = vunpack.c.l.b16 %v1064
    %v2549 = vunpack.c.h.b16 %v1064
    %v2550 = vunpack.c.l.b16 %v1065
    %v2551 = vunpack.c.h.b16 %v1065
    %v2552 = vunpack.c.l.b16 %v1066
    %v2553 = vunpack.c.h.b16 %v1066
    %v2554 = vunpack.c.l.b16 %v1067
    %v2555 = vunpack.c.h.b16 %v1067
    %v2556 = vunpack.c.l.b16 %v1068
    %v2557 = vunpack.c.h.b16 %v1068
    %v2558 = vunpack.c.l.b16 %v1069
    %v2559 = vunpack.c.h.b16 %v1069
    %v2560 = vunpack.c.l.b16 %v1070
    %v2561 = vunpack.c.h.b16 %v1070
    %v2562 = vunpack.c.l.b16 %v1071
    %v2563 = vunpack.c.h.b16 %v1071
    %v2564 = vunpack.c.l.b16 %v1072
    %v2565 = vunpack.c.h.b16 %v1072
    %v2566 = vunpack.c.l.b16 %v1073
    %v2567 = vunpack.c.h.b16 %v1073
    %v2568 = vunpack.c.l.b16 %v1074
    %v2569 = vunpack.c.h.b16 %v1074
    %v2570 = vunpack.c.l.b16 %v1075
    %v2571 = vunpack.c.h.b16 %v1075
    %v2572 = vunpack.c.l.b16 %v1076
    %v2573 = vunpack.c.h.b16 %v1076
    %v2574 = vunpack.c.l.b16 %v1077
    %v2575 = vunpack.c.h.b16 %v1077
    %v2576 = vunpack.c.l.b16 %v1078
    %v2577 = vunpack.c.h.b16 %v1078
    %v2578 = vunpack.c.l.b16 %v1079
    %v2579 = vunpack.c.h.b16 %v1079
    %v2580 = vunpack.c.l.b16 %v1080
    %v2581 = vunpack.c.h.b16 %v1080
    %v2582 = vunpack.c.l.b16 %v1081
    %v2583 = vunpack.c.h.b16 %v1081
    %v2584 = vunpack.c.l.b16 %v1082
    %v2585 = vunpack.c.h.b16 %v1082
    %v2586 = vunpack.c.l.b16 %v1083
    %v2587 = vunpack.c.h.b16 %v1083
    %v2588 = vunpack.c.l.b16 %v1084
    %v2589 = vunpack.c.h.b16 %v1084
    %v2590 = vunpack.c.l.b16 %v1085
    %v2591 = vunpack.c.h.b16 %v1085
    %v2592 = vunpack.c.l.b16 %v1086
    %v2593 = vunpack.c.h.b16 %v1086
    %v2594 = vunpack.c.l.b16 %v1087
    %v2595 = vunpack.c.h.b16 %v1087
    %v2596 = vunpack.c.l.b16 %v1088
    %v2597 = vunpack.c.h.b16 %v1088
    %v2598 = vunpack.c.l.b16 %v1089
    %v2599 = vunpack.c.h.b16 %v1089
    %v2600 = vunpack.c.l.b16 %v1090
    %v2601 = vunpack.c.h.b16 %v1090
    %v2602 = vunpack.c.l.b16 %v1091
    %v2603 = vunpack.c.h.b16 %v1091
    %v2604 = vunpack.c.l.b16 %v1092
    %v2605 = vunpack.c.h.b16 %v1092
    %v2606 = vunpack.c.l.b16 %v1093
    %v2607 = vunpack.c.h.b16 %v1093
    %v2608 = vunpack.c.l.b16 %v1094
    %v2609 = vunpack.c.h.b16 %v1094
    %v2610 = vunpack.c.l.b16 %v1095
    %v2611 = vunpack.c.h.b16 %v1095
    %v2612 = vunpack.c.l.b16 %v1096
    %v2613 = vunpack.c.h.b16 %v1096
    %v2614 = vunpack.c.l.b16 %v1097
    %v2615 = vunpack.c.h.b16 %v1097
    %v2616 = vunpack.c.l.b16 %v1098
    %v2617 = vunpack.c.h.b16 %v1098
    %v2618 = vunpack.c.l.b16 %v1099
    %v2619 = vunpack.c.h.b16 %v1099
    %v2620 = vunpack.c.l.b16 %v1100
    %v2621 = vunpack.c.h.b16 %v1100
    %v2622 = vunpack.c.l.b16 %v1101
    %v2623 = vunpack.c.h.b16 %v1101
    %v2624 = vunpack.c.l.b16 %v1102
    %v2625 = vunpack.c.h.b16 %v1102
    %v2626 = vunpack.c.l.b16 %v1103
    %v2627 = vunpack.c.h.b16 %v1103
    %v2628 = vunpack.c.l.b16 %v1104
    %v2629 = vunpack.c.h.b16 %v1104
    %v2630 = vunpack.c.l.b16 %v1105
    %v2631 = vunpack.c.h.b16 %v1105
    %v2632 = vunpack.c.l.b16 %v1106
    %v2633 = vunpack.c.h.b16 %v1106
    %v2634 = vunpack.c.l.b16 %v1107
    %v2635 = vunpack.c.h.b16 %v1107
    %v2636 = vunpack.c.l.b16 %v1108
    %v2637 = vunpack.c.h.b16 %v1108
    %v2638 = vunpack.c.l.b16 %v1109
    %v2639 = vunpack.c.h.b16 %v1109
    %v2640 = vunpack.c.l.b16 %v1110
    %v2641 = vunpack.c.h.b16 %v1110
    %v2642 = vunpack.c.l.b16 %v1111
    %v2643 = vunpack.c.h.b16 %v1111
    %v2644 = vunpack.c.l.b16 %v1112
    %v2645 = vunpack.c.h.b16 %v1112
    %v2646 = vunpack.c.l.b16 %v1113
    %v2647 = vunpack.c.h.b16 %v1113
    %v2648 = vunpack.c.l.b16 %v1114
    %v2649 = vunpack.c.h.b16 %v1114
    %v2650 = vunpack.c.l.b16 %v1115
    %v2651 = vunpack.c.h.b16 %v1115
    %v2652 = vunpack.c.l.b16 %v1116
    %v2653 = vunpack.c.h.b16 %v1116
    %v2654 = vunpack.c.l.b16 %v1117
    %v2655 = vunpack.c.h.b16 %v1117
    %v2656 = vunpack.c.l.b16 %v1118
    %v2657 = vunpack.c.h.b16 %v1118
    %v2658 = vunpack.c.l.b16 %v1119
    %v2659 = vunpack.c.h.b16 %v1119
    %v2660 = vunpack.c.l.b16 %v1120
    %v2661 = vunpack.c.h.b16 %v1120
    %v2662 = vunpack.c.l.b16 %v1121
    %v2663 = vunpack.c.h.b16 %v1121
    %v2664 = vunpack.c.l.b16 %v1122
    %v2665 = vunpack.c.h.b16 %v1122
    %v2666 = vunpack.c.l.b16 %v1123
    %v2667 = vunpack.c.h.b16 %v1123
    %v2668 = vunpack.c.l.b16 %v1124
    %v2669 = vunpack.c.h.b16 %v1124
    %v2670 = vunpack.c.l.b16 %v1125
    %v2671 = vunpack.c.h.b16 %v1125
    %v2672 = vunpack.c.l.b16 %v1126
    %v2673 = vunpack.c.h.b16 %v1126
    %v2674 = vunpack.c.l.b16 %v1127
    %v2675 = vunpack.c.h.b16 %v1127
    %v2676 = vunpack.c.l.b16 %v1128
    %v2677 = vunpack.c.h.b16 %v1128
    %v2678 = vunpack.c.l.b16 %v1129
    %v2679 = vunpack.c.h.b16 %v1129
    %v2680 = vunpack.c.l.b16 %v1130
    %v2681 = vunpack.c.h.b16 %v1130
    %v2682 = vunpack.c.l.b16 %v1131
    %v2683 = vunpack.c.h.b16 %v1131
    %v2684 = vunpack.c.l.b16 %v1132
    %v2685 = vunpack.c.h.b16 %v1132
    %v2686 = vunpack.c.l.b16 %v1133
    %v2687 = vunpack.c.h.b16 %v1133
    %v2688 = vunpack.c.l.b16 %v1134
    %v2689 = vunpack.c.h.b16 %v1134
    %v2690 = vunpack.c.l.b16 %v1135
    %v2691 = vunpack.c.h.b16 %v1135
    %v2692 = vunpack.c.l.b16 %v1136
    %v2693 = vunpack.c.h.b16 %v1136
    %v2694 = vunpack.c.l.b16 %v1137
    %v2695 = vunpack.c.h.b16 %v1137
    %v2696 = vunpack.c.l.b16 %v1138
    %v2697 = vunpack.c.h.b16 %v1138
    %v2698 = vunpack.c.l.b16 %v1139
    %v2699 = vunpack.c.h.b16 %v1139
    %v2700 = vunpack.c.l.b16 %v1140
    %v2701 = vunpack.c.h.b16 %v1140
    %v2702 = vunpack.c.l.b16 %v1141
    %v2703 = vunpack.c.h.b16 %v1141
    %v2704 = vunpack.c.l.b16 %v1142
    %v2705 = vunpack.c.h.b16 %v1142
    %v2706 = vunpack.c.l.b16 %v1143
    %v2707 = vunpack.c.h.b16 %v1143
    %v2708 = vunpack.c.l.b16 %v1144
    %v2709 = vunpack.c.h.b16 %v1144
    %v2710 = vunpack.c.l.b16 %v1145
    %v2711 = vunpack.c.h.b16 %v1145
    %v2712 = vunpack.c.l.b16 %v1146
    %v2713 = vunpack.c.h.b16 %v1146
    %v2714 = vunpack.c.l.b16 %v1147
    %v2715 = vunpack.c.h.b16 %v1147
    %v2716 = vunpack.c.l.b16 %v1148
    %v2717 = vunpack.c.h.b16 %v1148
    %v2718 = vunpack.c.l.b16 %v1149
    %v2719 = vunpack.c.h.b16 %v1149
    %v2720 = vunpack.c.l.b16 %v1150
    %v2721 = vunpack.c.h.b16 %v1150
    %v2722 = vunpack.c.l.b16 %v1151
    %v2723 = vunpack.c.h.b16 %v1151
    %v2724 = vunpack.c.l.b16 %v1152
    %v2725 = vunpack.c.h.b16 %v1152
    %v2726 = vunpack.c.l.b16 %v1153
    %v2727 = vunpack.c.h.b16 %v1153
    %v2728 = vunpack.c.l.b16 %v1154
    %v2729 = vunpack.c.h.b16 %v1154
    %v2730 = vunpack.c.l.b16 %v1155
    %v2731 = vunpack.c.h.b16 %v1155
    %v2732 = vunpack.c.l.b16 %v1156
    %v2733 = vunpack.c.h.b16 %v1156
    %v2734 = vunpack.c.l.b16 %v1157
    %v2735 = vunpack.c.h.b16 %v1157
    %v2736 = vunpack.c.l.b16 %v1158
    %v2737 = vunpack.c.h.b16 %v1158
    %v2738 = vunpack.c.l.b16 %v1159
    %v2739 = vunpack.c.h.b16 %v1159
    %v2740 = vunpack.c.l.b16 %v1160
    %v2741 = vunpack.c.h.b16 %v1160
    %v2742 = vunpack.c.l.b16 %v1161
    %v2743 = vunpack.c.h.b16 %v1161
    %v2744 = vunpack.c.l.b16 %v1162
    %v2745 = vunpack.c.h.b16 %v1162
    %v2746 = vunpack.c.l.b16 %v1163
    %v2747 = vunpack.c.h.b16 %v1163
    %v2748 = vunpack.c.l.b16 %v1164
    %v2749 = vunpack.c.h.b16 %v1164
    %v2750 = vunpack.c.l.b16 %v1165
    %v2751 = vunpack.c.h.b16 %v1165
    %v2752 = vunpack.c.l.b16 %v1166
    %v2753 = vunpack.c.h.b16 %v1166
    %v2754 = vunpack.c.l.b16 %v1167
    %v2755 = vunpack.c.h.b16 %v1167
    %v2756 = vunpack.c.l.b16 %v1168
    %v2757 = vunpack.c.h.b16 %v1168
    %v2758 = vunpack.c.l.b16 %v1169
    %v2759 = vunpack.c.h.b16 %v1169
    %v2760 = vunpack.c.l.b16 %v1170
    %v2761 = vunpack.c.h.b16 %v1170
    %v2762 = vunpack.c.l.b16 %v1171
    %v2763 = vunpack.c.h.b16 %v1171
    %v2764 = vunpack.c.l.b16 %v1172
    %v2765 = vunpack.c.h.b16 %v1172
    %v2766 = vunpack.c.l.b16 %v1173
    %v2767 = vunpack.c.h.b16 %v1173
    %v2768 = vunpack.c.l.b16 %v1174
    %v2769 = vunpack.c.h.b16 %v1174
    %v2770 = vunpack.c.l.b16 %v1175
    %v2771 = vunpack.c.h.b16 %v1175
    %v2772 = vunpack.c.l.b16 %v1176
    %v2773 = vunpack.c.h.b16 %v1176
    %v2774 = vunpack.c.l.b16 %v1177
    %v2775 = vunpack.c.h.b16 %v1177
    %v2776 = vunpack.c.l.b16 %v1178
    %v2777 = vunpack.c.h.b16 %v1178
    %v2778 = vunpack.c.l.b16 %v1179
    %v2779 = vunpack.c.h.b16 %v1179
    %v2780 = vunpack.c.l.b16 %v1180
    %v2781 = vunpack.c.h.b16 %v1180
    %v2782 = vunpack.c.l.b16 %v1181
    %v2783 = vunpack.c.h.b16 %v1181
    %v2784 = vunpack.c.l.b16 %v1182
    %v2785 = vunpack.c.h.b16 %v1182
    %v2786 = vunpack.c.l.b16 %v1183
    %v2787 = vunpack.c.h.b16 %v1183
    %v2788 = vunpack.c.l.b16 %v1184
    %v2789 = vunpack.c.h.b16 %v1184
    %v2790 = vunpack.c.l.b16 %v1185
    %v2791 = vunpack.c.h.b16 %v1185
    %v2792 = vunpack.c.l.b16 %v1186
    %v2793 = vunpack.c.h.b16 %v1186
    %v2794 = vunpack.c.l.b16 %v1187
    %v2795 = vunpack.c.h.b16 %v1187
    %v2796 = vunpack.c.l.b16 %v1188
    %v2797 = vunpack.c.h.b16 %v1188
    %v2798 = vunpack.c.l.b16 %v1189
    %v2799 = vunpack.c.h.b16 %v1189
    %v2800 = vunpack.c.l.b16 %v1190
    %v2801 = vunpack.c.h.b16 %v1190
    %v2802 = vunpack.c.l.b16 %v1191
    %v2803 = vunpack.c.h.b16 %v1191
    %v2804 = vunpack.c.l.b16 %v1192
    %v2805 = vunpack.c.h.b16 %v1192
    %v2806 = vunpack.c.l.b16 %v1193
    %v2807 = vunpack.c.h.b16 %v1193
    %v2808 = vunpack.c.l.b16 %v1194
    %v2809 = vunpack.c.h.b16 %v1194
    %v2810 = vunpack.c.l.b16 %v1195
    %v2811 = vunpack.c.h.b16 %v1195
    %v2812 = vunpack.c.l.b16 %v1196
    %v2813 = vunpack.c.h.b16 %v1196
    %v2814 = vunpack.c.l.b16 %v1197
    %v2815 = vunpack.c.h.b16 %v1197
    %v2816 = vunpack.c.l.b16 %v1198
    %v2817 = vunpack.c.h.b16 %v1198
    %v2818 = vunpack.c.l.b16 %v1199
    %v2819 = vunpack.c.h.b16 %v1199
    %v2820 = vunpack.c.l.b16 %v1200
    %v2821 = vunpack.c.h.b16 %v1200
    %v2822 = vunpack.c.l.b16 %v1201
    %v2823 = vunpack.c.h.b16 %v1201
    %v2824 = vunpack.c.l.b16 %v1202
    %v2825 = vunpack.c.h.b16 %v1202
    %v2826 = vunpack.c.l.b16 %v1203
    %v2827 = vunpack.c.h.b16 %v1203
    %v2828 = vunpack.c.l.b16 %v1204
    %v2829 = vunpack.c.h.b16 %v1204
    %v2830 = vunpack.c.l.b16 %v1205
    %v2831 = vunpack.c.h.b16 %v1205
    %v2832 = vunpack.c.l.b16 %v1206
    %v2833 = vunpack.c.h.b16 %v1206
    %v2834 = vunpack.c.l.b16 %v1207
    %v2835 = vunpack.c.h.b16 %v1207
    %v2836 = vunpack.c.l.b16 %v1208
    %v2837 = vunpack.c.h.b16 %v1208
    %v2838 = vunpack.c.l.b16 %v1209
    %v2839 = vunpack.c.h.b16 %v1209
    %v2840 = vunpack.c.l.b16 %v1210
    %v2841 = vunpack.c.h.b16 %v1210
    %v2842 = vunpack.c.l.b16 %v1211
    %v2843 = vunpack.c.h.b16 %v1211
    %v2844 = vunpack.c.l.b16 %v1212
    %v2845 = vunpack.c.h.b16 %v1212
    %v2846 = vunpack.c.l.b16 %v1213
    %v2847 = vunpack.c.h.b16 %v1213
    %v2848 = vunpack.c.l.b16 %v1214
    %v2849 = vunpack.c.h.b16 %v1214
    %v2850 = vunpack.c.l.b16 %v1215
    %v2851 = vunpack.c.h.b16 %v1215
    %v2852 = vunpack.c.l.b16 %v1216
    %v2853 = vunpack.c.h.b16 %v1216
    %v2854 = vunpack.c.l.b16 %v1217
    %v2855 = vunpack.c.h.b16 %v1217
    %v2856 = vunpack.c.l.b16 %v1218
    %v2857 = vunpack.c.h.b16 %v1218
    %v2858 = vunpack.c.l.b16 %v1219
    %v2859 = vunpack.c.h.b16 %v1219
    %v2860 = vunpack.c.l.b16 %v1220
    %v2861 = vunpack.c.h.b16 %v1220
    %v2862 = vunpack.c.l.b16 %v1221
    %v2863 = vunpack.c.h.b16 %v1221
    %v2864 = vunpack.c.l.b16 %v1222
    %v2865 = vunpack.c.h.b16 %v1222
    %v2866 = vunpack.c.l.b16 %v1223
    %v2867 = vunpack.c.h.b16 %v1223
    %v2868 = vunpack.c.l.b16 %v1224
    %v2869 = vunpack.c.h.b16 %v1224
    %v2870 = vunpack.c.l.b16 %v1225
    %v2871 = vunpack.c.h.b16 %v1225
    %v2872 = vunpack.c.l.b16 %v1226
    %v2873 = vunpack.c.h.b16 %v1226
    %v2874 = vunpack.c.l.b16 %v1227
    %v2875 = vunpack.c.h.b16 %v1227
    %v2876 = vunpack.c.l.b16 %v1228
    %v2877 = vunpack.c.h.b16 %v1228
    %v2878 = vunpack.c.l.b16 %v1229
    %v2879 = vunpack.c.h.b16 %v1229
    %v2880 = vunpack.c.l.b16 %v1230
    %v2881 = vunpack.c.h.b16 %v1230
    %v2882 = vunpack.c.l.b16 %v1231
    %v2883 = vunpack.c.h.b16 %v1231
    %v2884 = vunpack.c.l.b16 %v1232
    %v2885 = vunpack.c.h.b16 %v1232
    %v2886 = vunpack.c.l.b16 %v1233
    %v2887 = vunpack.c.h.b16 %v1233
    %v2888 = vunpack.c.l.b16 %v1234
    %v2889 = vunpack.c.h.b16 %v1234
    %v2890 = vunpack.c.l.b16 %v1235
    %v2891 = vunpack.c.h.b16 %v1235
    %v2892 = vunpack.c.l.b16 %v1236
    %v2893 = vunpack.c.h.b16 %v1236
    %v2894 = vunpack.c.l.b16 %v1237
    %v2895 = vunpack.c.h.b16 %v1237
    %v2896 = vunpack.c.l.b16 %v1238
    %v2897 = vunpack.c.h.b16 %v1238
    %v2898 = vunpack.c.l.b16 %v1239
    %v2899 = vunpack.c.h.b16 %v1239
    %v2900 = vunpack.c.l.b16 %v1240
    %v2901 = vunpack.c.h.b16 %v1240
    %v2902 = vunpack.c.l.b16 %v1241
    %v2903 = vunpack.c.h.b16 %v1241
    %v2904 = vunpack.c.l.b16 %v1242
    %v2905 = vunpack.c.h.b16 %v1242
    %v2906 = vunpack.c.l.b16 %v1243
    %v2907 = vunpack.c.h.b16 %v1243
    %v2908 = vunpack.c.l.b16 %v1244
    %v2909 = vunpack.c.h.b16 %v1244
    %v2910 = vunpack.c.l.b16 %v1245
    %v2911 = vunpack.c.h.b16 %v1245
    %v2912 = vunpack.c.l.b16 %v1246
    %v2913 = vunpack.c.h.b16 %v1246
    %v2914 = vunpack.c.l.b16 %v1247
    %v2915 = vunpack.c.h.b16 %v1247
    %v2916 = vunpack.c.l.b16 %v1248
    %v2917 = vunpack.c.h.b16 %v1248
    %v2918 = vunpack.c.l.b16 %v1249
    %v2919 = vunpack.c.h.b16 %v1249
    %v2920 = vunpack.c.l.b16 %v1250
    %v2921 = vunpack.c.h.b16 %v1250
    %v2922 = vunpack.c.l.b16 %v1251
    %v2923 = vunpack.c.h.b16 %v1251
    %v2924 = vunpack.c.l.b16 %v1252
    %v2925 = vunpack.c.h.b16 %v1252
    %v2926 = vunpack.c.l.b16 %v1253
    %v2927 = vunpack.c.h.b16 %v1253
    %v2928 = vunpack.c.l.b16 %v1254
    %v2929 = vunpack.c.h.b16 %v1254
    %v2930 = vunpack.c.l.b16 %v1255
    %v2931 = vunpack.c.h.b16 %v1255
    %v2932 = vunpack.c.l.b16 %v1256
    %v2933 = vunpack.c.h.b16 %v1256
    %v2934 = vunpack.c.l.b16 %v1257
    %v2935 = vunpack.c.h.b16 %v1257
    %v2936 = vunpack.c.l.b16 %v1258
    %v2937 = vunpack.c.h.b16 %v1258
    %v2938 = vunpack.c.l.b16 %v1259
    %v2939 = vunpack.c.h.b16 %v1259
    %v2940 = vunpack.c.l.b16 %v1260
    %v2941 = vunpack.c.h.b16 %v1260
    %v2942 = vunpack.c.l.b16 %v1261
    %v2943 = vunpack.c.h.b16 %v1261
    %v2944 = vunpack.c.l.b16 %v1262
    %v2945 = vunpack.c.h.b16 %v1262
    %v2946 = vunpack.c.l.b16 %v1263
    %v2947 = vunpack.c.h.b16 %v1263
    %v2948 = vunpack.c.l.b16 %v1264
    %v2949 = vunpack.c.h.b16 %v1264
    %v2950 = vunpack.c.l.b16 %v1265
    %v2951 = vunpack.c.h.b16 %v1265
    %v2952 = vunpack.c.l.b16 %v1266
    %v2953 = vunpack.c.h.b16 %v1266
    %v2954 = vunpack.c.l.b16 %v1267
    %v2955 = vunpack.c.h.b16 %v1267
    %v2956 = vunpack.c.l.b16 %v1268
    %v2957 = vunpack.c.h.b16 %v1268
    %v2958 = vunpack.c.l.b16 %v1269
    %v2959 = vunpack.c.h.b16 %v1269
    %v2960 = vunpack.c.l.b16 %v1270
    %v2961 = vunpack.c.h.b16 %v1270
    %v2962 = vunpack.c.l.b16 %v1271
    %v2963 = vunpack.c.h.b16 %v1271
    %v2964 = vunpack.c.l.b16 %v1272
    %v2965 = vunpack.c.h.b16 %v1272
    %v2966 = vunpack.c.l.b16 %v1273
    %v2967 = vunpack.c.h.b16 %v1273
    %v2968 = vunpack.c.l.b16 %v1274
    %v2969 = vunpack.c.h.b16 %v1274
    %v2970 = vunpack.c.l.b16 %v1275
    %v2971 = vunpack.c.h.b16 %v1275
    %v2972 = vunpack.c.l.b16 %v1276
    %v2973 = vunpack.c.h.b16 %v1276
    %v2974 = vunpack.c.l.b16 %v1277
    %v2975 = vunpack.c.h.b16 %v1277
    %v2976 = vunpack.c.l.b16 %v1278
    %v2977 = vunpack.c.h.b16 %v1278
    %v2978 = vunpack.c.l.b16 %v1279
    %v2979 = vunpack.c.h.b16 %v1279
    %v2980 = vunpack.c.l.b16 %v1280
    %v2981 = vunpack.c.h.b16 %v1280
    %v2982 = vunpack.c.l.b16 %v1281
    %v2983 = vunpack.c.h.b16 %v1281
    %v2984 = vunpack.c.l.b16 %v1282
    %v2985 = vunpack.c.h.b16 %v1282
    %v2986 = vunpack.c.l.b16 %v1283
    %v2987 = vunpack.c.h.b16 %v1283
    %v2988 = vunpack.c.l.b16 %v1284
    %v2989 = vunpack.c.h.b16 %v1284
    %v2990 = vunpack.c.l.b16 %v1285
    %v2991 = vunpack.c.h.b16 %v1285
    %v2992 = vunpack.c.l.b16 %v1286
    %v2993 = vunpack.c.h.b16 %v1286
    %v2994 = vunpack.c.l.b16 %v1287
    %v2995 = vunpack.c.h.b16 %v1287
    %v2996 = vunpack.c.l.b16 %v1288
    %v2997 = vunpack.c.h.b16 %v1288
    %v2998 = vunpack.c.l.b16 %v1289
    %v2999 = vunpack.c.h.b16 %v1289
    %v3000 = vunpack.c.l.b16 %v1290
    %v3001 = vunpack.c.h.b16 %v1290
    %v3002 = vunpack.c.l.b16 %v1291
    %v3003 = vunpack.c.h.b16 %v1291
    %v3004 = vunpack.c.l.b16 %v1292
    %v3005 = vunpack.c.h.b16 %v1292
    %v3006 = vunpack.c.l.b16 %v1293
    %v3007 = vunpack.c.h.b16 %v1293
    %v3008 = vunpack.c.l.b16 %v1294
    %v3009 = vunpack.c.h.b16 %v1294
    %v3010 = vunpack.c.l.b16 %v1295
    %v3011 = vunpack.c.h.b16 %v1295
    %v3012 = vunpack.c.l.b16 %v1296
    %v3013 = vunpack.c.h.b16 %v1296
    %v3014 = vunpack.c.l.b16 %v1297
    %v3015 = vunpack.c.h.b16 %v1297
    %v3016 = vunpack.c.l.b16 %v1298
    %v3017 = vunpack.c.h.b16 %v1298
    %v3018 = vunpack.c.l.b16 %v1299
    %v3019 = vunpack.c.h.b16 %v1299
    %v3020 = vunpack.c.l.b16 %v1300
    %v3021 = vunpack.c.h.b16 %v1300
    %v3022 = vunpack.c.l.b16 %v1301
    %v3023 = vunpack.c.h.b16 %v1301
    %v3024 = vunpack.c.l.b16 %v1302
    %v3025 = vunpack.c.h.b16 %v1302
    %v3026 = vunpack.c.l.b16 %v1303
    %v3027 = vunpack.c.h.b16 %v1303
    %v3028 = vunpack.c.l.b16 %v1304
    %v3029 = vunpack.c.h.b16 %v1304
    %v3030 = vunpack.c.l.b16 %v1305
    %v3031 = vunpack.c.h.b16 %v1305
    %v3032 = vunpack.c.l.b16 %v1306
    %v3033 = vunpack.c.h.b16 %v1306
    %v3034 = vunpack.c.l.b16 %v1307
    %v3035 = vunpack.c.h.b16 %v1307
    %v3036 = vunpack.c.l.b16 %v1308
    %v3037 = vunpack.c.h.b16 %v1308
    %v3038 = vunpack.c.l.b16 %v1309
    %v3039 = vunpack.c.h.b16 %v1309
    %v3040 = vunpack.c.l.b16 %v1310
    %v3041 = vunpack.c.h.b16 %v1310
    %v3042 = vunpack.c.l.b16 %v1311
    %v3043 = vunpack.c.h.b16 %v1311
    %v3044 = vunpack.c.l.b16 %v1312
    %v3045 = vunpack.c.h.b16 %v1312
    %v3046 = vunpack.c.l.b16 %v1313
    %v3047 = vunpack.c.h.b16 %v1313
    %v3048 = vunpack.c.l.b16 %v1314
    %v3049 = vunpack.c.h.b16 %v1314
    %v3050 = vunpack.c.l.b16 %v1315
    %v3051 = vunpack.c.h.b16 %v1315
    %v3052 = vunpack.c.l.b16 %v1316
    %v3053 = vunpack.c.h.b16 %v1316
    %v3054 = vunpack.c.l.b16 %v1317
    %v3055 = vunpack.c.h.b16 %v1317
    %v3056 = vunpack.c.l.b16 %v1318
    %v3057 = vunpack.c.h.b16 %v1318
    %v3058 = vunpack.c.l.b16 %v1319
    %v3059 = vunpack.c.h.b16 %v1319
    %v3060 = vunpack.c.l.b16 %v1320
    %v3061 = vunpack.c.h.b16 %v1320
    %v3062 = vunpack.c.l.b16 %v1321
    %v3063 = vunpack.c.h.b16 %v1321
    %v3064 = vunpack.c.l.b16 %v1322
    %v3065 = vunpack.c.h.b16 %v1322
    %v3066 = vunpack.c.l.b16 %v1323
    %v3067 = vunpack.c.h.b16 %v1323
    %v3068 = vunpack.c.l.b16 %v1324
    %v3069 = vunpack.c.h.b16 %v1324
    %v3070 = vunpack.c.l.b16 %v1325
    %v3071 = vunpack.c.h.b16 %v1325
    %v3072 = vunpack.c.l.b16 %v1326
    %v3073 = vunpack.c.h.b16 %v1326
    %v3074 = vunpack.c.l.b16 %v1327
    %v3075 = vunpack.c.h.b16 %v1327
    %v3076 = vunpack.c.l.b16 %v1328
    %v3077 = vunpack.c.h.b16 %v1328
    %v3078 = vunpack.c.l.b16 %v1329
    %v3079 = vunpack.c.h.b16 %v1329
    %v3080 = vunpack.c.l.b16 %v1330
    %v3081 = vunpack.c.h.b16 %v1330
    %v3082 = vunpack.c.l.b16 %v1331
    %v3083 = vunpack.c.h.b16 %v1331
    %v3084 = vunpack.c.l.b16 %v1332
    %v3085 = vunpack.c.h.b16 %v1332
    %v3086 = vunpack.c.l.b16 %v1333
    %v3087 = vunpack.c.h.b16 %v1333
    %v3088 = vunpack.c.l.b16 %v1334
    %v3089 = vunpack.c.h.b16 %v1334
    %v3090 = vunpack.c.l.b16 %v1335
    %v3091 = vunpack.c.h.b16 %v1335
    %v3092 = vunpack.c.l.b16 %v1336
    %v3093 = vunpack.c.h.b16 %v1336
    %v3094 = vunpack.c.l.b16 %v1337
    %v3095 = vunpack.c.h.b16 %v1337
    %v3096 = vunpack.c.l.b16 %v1338
    %v3097 = vunpack.c.h.b16 %v1338
    %v3098 = vunpack.c.l.b16 %v1339
    %v3099 = vunpack.c.h.b16 %v1339
    %v3100 = vunpack.c.l.b16 %v1340
    %v3101 = vunpack.c.h.b16 %v1340
    %v3102 = vunpack.c.l.b16 %v1341
    %v3103 = vunpack.c.h.b16 %v1341
    %v3104 = vunpack.c.l.b16 %v1342
    %v3105 = vunpack.c.h.b16 %v1342
    %v3106 = vunpack.c.l.b16 %v1343
    %v3107 = vunpack.c.h.b16 %v1343
    %v3108 = vunpack.c.l.b16 %v1344
    %v3109 = vunpack.c.h.b16 %v1344
    %v3110 = vunpack.c.l.b16 %v1345
    %v3111 = vunpack.c.h.b16 %v1345
    %v3112 = vunpack.c.l.b16 %v1346
    %v3113 = vunpack.c.h.b16 %v1346
    %v3114 = vunpack.c.l.b16 %v1347
    %v3115 = vunpack.c.h.b16 %v1347
    %v3116 = vunpack.c.l.b16 %v1348
    %v3117 = vunpack.c.h.b16 %v1348
    %v3118 = vunpack.c.l.b16 %v1349
    %v3119 = vunpack.c.h.b16 %v1349
    %v3120 = vunpack.c.l.b16 %v1350
    %v3121 = vunpack.c.h.b16 %v1350
    %v3122 = vunpack.c.l.b16 %v1351
    %v3123 = vunpack.c.h.b16 %v1351
    %v3124 = vunpack.c.l.b16 %v1352
    %v3125 = vunpack.c.h.b16 %v1352
    %v3126 = vunpack.c.l.b16 %v1353
    %v3127 = vunpack.c.h.b16 %v1353
    %v3128 = vunpack.c.l.b16 %v1354
    %v3129 = vunpack.c.h.b16 %v1354
    %v3130 = vunpack.c.l.b16 %v1355
    %v3131 = vunpack.c.h.b16 %v1355
    %v3132 = vunpack.c.l.b16 %v1356
    %v3133 = vunpack.c.h.b16 %v1356
    %v3134 = vunpack.c.l.b16 %v1357
    %v3135 = vunpack.c.h.b16 %v1357
    %v3136 = vunpack.c.l.b16 %v1358
    %v3137 = vunpack.c.h.b16 %v1358
    %v3138 = vunpack.c.l.b16 %v1359
    %v3139 = vunpack.c.h.b16 %v1359
    %v3140 = vunpack.c.l.b16 %v1360
    %v3141 = vunpack.c.h.b16 %v1360
    %v3142 = vunpack.c.l.b16 %v1361
    %v3143 = vunpack.c.h.b16 %v1361
    %v3144 = vunpack.c.l.b16 %v1362
    %v3145 = vunpack.c.h.b16 %v1362
    %v3146 = vunpack.c.l.b16 %v1363
    %v3147 = vunpack.c.h.b16 %v1363
    %v3148 = vunpack.c.l.b16 %v1364
    %v3149 = vunpack.c.h.b16 %v1364
    %v3150 = vunpack.c.l.b16 %v1365
    %v3151 = vunpack.c.h.b16 %v1365
    %v3152 = vunpack.c.l.b16 %v1366
    %v3153 = vunpack.c.h.b16 %v1366
    %v3154 = vunpack.c.l.b16 %v1367
    %v3155 = vunpack.c.h.b16 %v1367
    %v3156 = vunpack.c.l.b16 %v1368
    %v3157 = vunpack.c.h.b16 %v1368
    %v3158 = vunpack.c.l.b16 %v1369
    %v3159 = vunpack.c.h.b16 %v1369
    %v3160 = vunpack.c.l.b16 %v1370
    %v3161 = vunpack.c.h.b16 %v1370
    %v3162 = vunpack.c.l.b16 %v1371
    %v3163 = vunpack.c.h.b16 %v1371
    %v3164 = vunpack.c.l.b16 %v1372
    %v3165 = vunpack.c.h.b16 %v1372
    %v3166 = vunpack.c.l.b16 %v1373
    %v3167 = vunpack.c.h.b16 %v1373
    %v3168 = vunpack.c.l.b16 %v1374
    %v3169 = vunpack.c.h.b16 %v1374
    %v3170 = vunpack.c.l.b16 %v1375
    %v3171 = vunpack.c.h.b16 %v1375
    %v3172 = vunpack.c.l.b16 %v1376
    %v3173 = vunpack.c.h.b16 %v1376
    %v3174 = vunpack.c.l.b16 %v1377
    %v3175 = vunpack.c.h.b16 %v1377
    %v3176 = vunpack.c.l.b16 %v1378
    %v3177 = vunpack.c.h.b16 %v1378
    %v3178 = vunpack.c.l.b16 %v1379
    %v3179 = vunpack.c.h.b16 %v1379
    %v3180 = vunpack.c.l.b16 %v1380
    %v3181 = vunpack.c.h.b16 %v1380
    %v3182 = vunpack.c.l.b16 %v1381
    %v3183 = vunpack.c.h.b16 %v1381
    %v3184 = vunpack.c.l.b16 %v1382
    %v3185 = vunpack.c.h.b16 %v1382
    %v3186 = vunpack.c.l.b16 %v1383
    %v3187 = vunpack.c.h.b16 %v1383
    %v3188 = vunpack.c.l.b16 %v1384
    %v3189 = vunpack.c.h.b16 %v1384
    %v3190 = vunpack.c.l.b16 %v1385
    %v3191 = vunpack.c.h.b16 %v1385
    %v3192 = vunpack.c.l.b16 %v1386
    %v3193 = vunpack.c.h.b16 %v1386
    %v3194 = vunpack.c.l.b16 %v1387
    %v3195 = vunpack.c.h.b16 %v1387
    %v3196 = vunpack.c.l.b16 %v1388
    %v3197 = vunpack.c.h.b16 %v1388
    %v3198 = vunpack.c.l.b16 %v1389
    %v3199 = vunpack.c.h.b16 %v1389
    %v3200 = vunpack.c.l.b16 %v1390
    %v3201 = vunpack.c.h.b16 %v1390
    %v3202 = vunpack.c.l.b16 %v1391
    %v3203 = vunpack.c.h.b16 %v1391
    %v3204 = vunpack.c.l.b16 %v1392
    %v3205 = vunpack.c.h.b16 %v1392
    %v3206 = vunpack.c.l.b16 %v1393
    %v3207 = vunpack.c.h.b16 %v1393
    %v3208 = vunpack.c.l.b16 %v1394
    %v3209 = vunpack.c.h.b16 %v1394
    %v3210 = vunpack.c.l.b16 %v1395
    %v3211 = vunpack.c.h.b16 %v1395
    %v3212 = vunpack.c.l.b16 %v1396
    %v3213 = vunpack.c.h.b16 %v1396
    %v3214 = vunpack.c.l.b16 %v1397
    %v3215 = vunpack.c.h.b16 %v1397
    %v3216 = vunpack.c.l.b16 %v1398
    %v3217 = vunpack.c.h.b16 %v1398
    %v3218 = vunpack.c.l.b16 %v1399
    %v3219 = vunpack.c.h.b16 %v1399
    %v3220 = vunpack.c.l.b16 %v1400
    %v3221 = vunpack.c.h.b16 %v1400
    %v3222 = vunpack.c.l.b16 %v1401
    %v3223 = vunpack.c.h.b16 %v1401
    %v3224 = vunpack.c.l.b16 %v1402
    %v3225 = vunpack.c.h.b16 %v1402
    %v3226 = vunpack.c.l.b16 %v1403
    %v3227 = vunpack.c.h.b16 %v1403
    %v3228 = vunpack.c.l.b16 %v1404
    %v3229 = vunpack.c.h.b16 %v1404
    %v3230 = vunpack.c.l.b16 %v1405
    %v3231 = vunpack.c.h.b16 %v1405
    %v3232 = vunpack.c.l.b16 %v1406
    %v3233 = vunpack.c.h.b16 %v1406
    %v3234 = vunpack.c.l.b16 %v1407
    %v3235 = vunpack.c.h.b16 %v1407
    %v3236 = vunpack.c.l.b16 %v1408
    %v3237 = vunpack.c.h.b16 %v1408
    %v3238 = vunpack.c.l.b16 %v1409
    %v3239 = vunpack.c.h.b16 %v1409
    %v3240 = vunpack.c.l.b16 %v1410
    %v3241 = vunpack.c.h.b16 %v1410
    %v3242 = vunpack.c.l.b16 %v1411
    %v3243 = vunpack.c.h.b16 %v1411
    %v3244 = vunpack.c.l.b16 %v1412
    %v3245 = vunpack.c.h.b16 %v1412
    %v3246 = vunpack.c.l.b16 %v1413
    %v3247 = vunpack.c.h.b16 %v1413
    %v3248 = vunpack.c.l.b16 %v1414
    %v3249 = vunpack.c.h.b16 %v1414
    %v3250 = vunpack.c.l.b16 %v1415
    %v3251 = vunpack.c.h.b16 %v1415
    %v3252 = vunpack.c.l.b16 %v1416
    %v3253 = vunpack.c.h.b16 %v1416
    %v3254 = vunpack.c.l.b16 %v1417
    %v3255 = vunpack.c.h.b16 %v1417
    %v3256 = vunpack.c.l.b16 %v1418
    %v3257 = vunpack.c.h.b16 %v1418
    %v3258 = vunpack.c.l.b16 %v1419
    %v3259 = vunpack.c.h.b16 %v1419
    %v3260 = vunpack.c.l.b16 %v1420
    %v3261 = vunpack.c.h.b16 %v1420
    %v3262 = vunpack.c.l.b16 %v1421
    %v3263 = vunpack.c.h.b16 %v1421
    %v3264 = vpack.c.b16 %v2072, %v2064
    %v3265 = vpack.c.b16 %v2073, %v2065
    %v3266 = vpack.c.b16 %v2074, %v2066
    %v3267 = vpack.c.b16 %v2075, %v2067
    %v3268 = vpack.c.b16 %v2076, %v2068
    %v3269 = vpack.c.b16 %v2077, %v2069
    %v3270 = vpack.c.b16 %v2078, %v2070
    %v3271 = vpack.c.b16 %v2079, %v2071
    %v3272 = vpack.c.b16 %v2088, %v2080
    %v3273 = vpack.c.b16 %v2089, %v2081
    %v3274 = vpack.c.b16 %v2090, %v2082
    %v3275 = vpack.c.b16 %v2091, %v2083
    %v3276 = vpack.c.b16 %v2092, %v2084
    %v3277 = vpack.c.b16 %v2093, %v2085
    %v3278 = vpack.c.b16 %v2094, %v2086
    %v3279 = vpack.c.b16 %v2095, %v2087
    %v3280 = vpack.c.b16 %v2104, %v2096
    %v3281 = vpack.c.b16 %v2105, %v2097
    %v3282 = vpack.c.b16 %v2106, %v2098
    %v3283 = vpack.c.b16 %v2107, %v2099
    %v3284 = vpack.c.b16 %v2108, %v2100
    %v3285 = vpack.c.b16 %v2109, %v2101
    %v3286 = vpack.c.b16 %v2110, %v2102
    %v3287 = vpack.c.b16 %v2111, %v2103
    %v3288 = vpack.c.b16 %v2120, %v2112
    %v3289 = vpack.c.b16 %v2121, %v2113
    %v3290 = vpack.c.b16 %v2122, %v2114
    %v3291 = vpack.c.b16 %v2123, %v2115
    %v3292 = vpack.c.b16 %v2124, %v2116
    %v3293 = vpack.c.b16 %v2125, %v2117
    %v3294 = vpack.c.b16 %v2126, %v2118
    %v3295 = vpack.c.b16 %v2127, %v2119
    %v3296 = vpack.c.b16 %v2136, %v2128
    %v3297 = vpack.c.b16 %v2137, %v2129
    %v3298 = vpack.c.b16 %v2138, %v2130
    %v3299 = vpack.c.b16 %v2139, %v2131
    %v3300 = vpack.c.b16 %v2140, %v2132
    %v3301 = vpack.c.b16 %v2141, %v2133
    %v3302 = vpack.c.b16 %v2142, %v2134
    %v3303 = vpack.c.b16 %v2143, %v2135
    %v3304 = vpack.c.b16 %v2152, %v2144
    %v3305 = vpack.c.b16 %v2153, %v2145
    %v3306 = vpack.c.b16 %v2154, %v2146
    %v3307 = vpack.c.b16 %v2155, %v2147
    %v3308 = vpack.c.b16 %v2156, %v2148
    %v3309 = vpack.c.b16 %v2157, %v2149
    %v3310 = vpack.c.b16 %v2158, %v2150
    %v3311 = vpack.c.b16 %v2159, %v2151
    %v3312 = vpack.c.b16 %v2168, %v2160
    %v3313 = vpack.c.b16 %v2169, %v2161
    %v3314 = vpack.c.b16 %v2170, %v2162
    %v3315 = vpack.c.b16 %v2171, %v2163
    %v3316 = vpack.c.b16 %v2172, %v2164
    %v3317 = vpack.c.b16 %v2173, %v2165
    %v3318 = vpack.c.b16 %v2174, %v2166
    %v3319 = vpack.c.b16 %v2175, %v2167
    %v3320 = vpack.c.b16 %v2184, %v2176
    %v3321 = vpack.c.b16 %v2185, %v2177
    %v3322 = vpack.c.b16 %v2186, %v2178
    %v3323 = vpack.c.b16 %v2187, %v2179
    %v3324 = vpack.c.b16 %v2188, %v2180
    %v3325 = vpack.c.b16 %v2189, %v2181
    %v3326 = vpack.c.b16 %v2190, %v2182
    %v3327 = vpack.c.b16 %v2191, %v2183
    %v3328 = vpack.c.b16 %v2200, %v2192
    %v3329 = vpack.c.b16 %v2201, %v2193
    %v3330 = vpack.c.b16 %v2202, %v2194
    %v3331 = vpack.c.b16 %v2203, %v2195
    %v3332 = vpack.c.b16 %v2204, %v2196
    %v3333 = vpack.c.b16 %v2205, %v2197
    %v3334 = vpack.c.b16 %v2206, %v2198
    %v3335 = vpack.c.b16 %v2207, %v2199
    %v3336 = vpack.c.b16 %v2216, %v2208
    %v3337 = vpack.c.b16 %v2217, %v2209
    %v3338 = vpack.c.b16 %v2218, %v2210
    %v3339 = vpack.c.b16 %v2219, %v2211
    %v3340 = vpack.c.b16 %v2220, %v2212
    %v3341 = vpack.c.b16 %v2221, %v2213
    %v3342 = vpack.c.b16 %v2222, %v2214
    %v3343 = vpack.c.b16 %v2223, %v2215
    %v3344 = vpack.c.b16 %v2232, %v2224
    %v3345 = vpack.c.b16 %v2233, %v2225
    %v3346 = vpack.c.b16 %v2234, %v2226
    %v3347 = vpack.c.b16 %v2235, %v2227
    %v3348 = vpack.c.b16 %v2236, %v2228
    %v3349 = vpack.c.b16 %v2237, %v2229
    %v3350 = vpack.c.b16 %v2238, %v2230
    %v3351 = vpack.c.b16 %v2239, %v2231
    %v3352 = vpack.c.b16 %v2248, %v2240
    %v3353 = vpack.c.b16 %v2249, %v2241
    %v3354 = vpack.c.b16 %v2250, %v2242
    %v3355 = vpack.c.b16 %v2251, %v2243
    %v3356 = vpack.c.b16 %v2252, %v2244
    %v3357 = vpack.c.b16 %v2253, %v2245
    %v3358 = vpack.c.b16 %v2254, %v2246
    %v3359 = vpack.c.b16 %v2255, %v2247
    %v3360 = vpack.c.b16 %v2264, %v2256
    %v3361 = vpack.c.b16 %v2265, %v2257
    %v3362 = vpack.c.b16 %v2266, %v2258
    %v3363 = vpack.c.b16 %v2267, %v2259
    %v3364 = vpack.c.b16 %v2268, %v2260
    %v3365 = vpack.c.b16 %v2269, %v2261
    %v3366 = vpack.c.b16 %v2270, %v2262
    %v3367 = vpack.c.b16 %v2271, %v2263
    %v3368 = vpack.c.b16 %v2280, %v2272
    %v3369 = vpack.c.b16 %v2281, %v2273
    %v3370 = vpack.c.b16 %v2282, %v2274
    %v3371 = vpack.c.b16 %v2283, %v2275
    %v3372 = vpack.c.b16 %v2284, %v2276
    %v3373 = vpack.c.b16 %v2285, %v2277
    %v3374 = vpack.c.b16 %v2286, %v2278
    %v3375 = vpack.c.b16 %v2287, %v2279
    %v3376 = vpack.c.b16 %v2296, %v2288
    %v3377 = vpack.c.b16 %v2297, %v2289
    %v3378 = vpack.c.b16 %v2298, %v2290
    %v3379 = vpack.c.b16 %v2299, %v2291
    %v3380 = vpack.c.b16 %v2300, %v2292
    %v3381 = vpack.c.b16 %v2301, %v2293
    %v3382 = vpack.c.b16 %v2302, %v2294
    %v3383 = vpack.c.b16 %v2303, %v2295
    %v3384 = vpack.c.b16 %v2312, %v2304
    %v3385 = vpack.c.b16 %v2313, %v2305
    %v3386 = vpack.c.b16 %v2314, %v2306
    %v3387 = vpack.c.b16 %v2315, %v2307
    %v3388 = vpack.c.b16 %v2316, %v2308
    %v3389 = vpack.c.b16 %v2317, %v2309
    %v3390 = vpack.c.b16 %v2318, %v2310
    %v3391 = vpack.c.b16 %v2319, %v2311
    %v3392 = vpack.c.b16 %v2328, %v2320
    %v3393 = vpack.c.b16 %v2329, %v2321
    %v3394 = vpack.c.b16 %v2330, %v2322
    %v3395 = vpack.c.b16 %v2331, %v2323
    %v3396 = vpack.c.b16 %v2332, %v2324
    %v3397 = vpack.c.b16 %v2333, %v2325
    %v3398 = vpack.c.b16 %v2334, %v2326
    %v3399 = vpack.c.b16 %v2335, %v2327
    %v3400 = vpack.c.b16 %v2344, %v2336
    %v3401 = vpack.c.b16 %v2345, %v2337
    %v3402 = vpack.c.b16 %v2346, %v2338
    %v3403 = vpack.c.b16 %v2347, %v2339
    %v3404 = vpack.c.b16 %v2348, %v2340
    %v3405 = vpack.c.b16 %v2349, %v2341
    %v3406 = vpack.c.b16 %v2350, %v2342
    %v3407 = vpack.c.b16 %v2351, %v2343
    %v3408 = vpack.c.b16 %v2360, %v2352
    %v3409 = vpack.c.b16 %v2361, %v2353
    %v3410 = vpack.c.b16 %v2362, %v2354
    %v3411 = vpack.c.b16 %v2363, %v2355
    %v3412 = vpack.c.b16 %v2364, %v2356
    %v3413 = vpack.c.b16 %v2365, %v2357
    %v3414 = vpack.c.b16 %v2366, %v2358
    %v3415 = vpack.c.b16 %v2367, %v2359
    %v3416 = vpack.c.b16 %v2376, %v2368
    %v3417 = vpack.c.b16 %v2377, %v2369
    %v3418 = vpack.c.b16 %v2378, %v2370
    %v3419 = vpack.c.b16 %v2379, %v2371
    %v3420 = vpack.c.b16 %v2380, %v2372
    %v3421 = vpack.c.b16 %v2381, %v2373
    %v3422 = vpack.c.b16 %v2382, %v2374
    %v3423 = vpack.c.b16 %v2383, %v2375
    %v3424 = vpack.c.b16 %v2392, %v2384
    %v3425 = vpack.c.b16 %v2393, %v2385
    %v3426 = vpack.c.b16 %v2394, %v2386
    %v3427 = vpack.c.b16 %v2395, %v2387
    %v3428 = vpack.c.b16 %v2396, %v2388
    %v3429 = vpack.c.b16 %v2397, %v2389
    %v3430 = vpack.c.b16 %v2398, %v2390
    %v3431 = vpack.c.b16 %v2399, %v2391
    %v3432 = vpack.c.b16 %v2408, %v2400
    %v3433 = vpack.c.b16 %v2409, %v2401
    %v3434 = vpack.c.b16 %v2410, %v2402
    %v3435 = vpack.c.b16 %v2411, %v2403
    %v3436 = vpack.c.b16 %v2412, %v2404
    %v3437 = vpack.c.b16 %v2413, %v2405
    %v3438 = vpack.c.b16 %v2414, %v2406
    %v3439 = vpack.c.b16 %v2415, %v2407
    %v3440 = vpack.c.b16 %v2424, %v2416
    %v3441 = vpack.c.b16 %v2425, %v2417
    %v3442 = vpack.c.b16 %v2426, %v2418
    %v3443 = vpack.c.b16 %v2427, %v2419
    %v3444 = vpack.c.b16 %v2428, %v2420
    %v3445 = vpack.c.b16 %v2429, %v2421
    %v3446 = vpack.c.b16 %v2430, %v2422
    %v3447 = vpack.c.b16 %v2431, %v2423
    %v3448 = vpack.c.b16 %v2440, %v2432
    %v3449 = vpack.c.b16 %v2441, %v2433
    %v3450 = vpack.c.b16 %v2442, %v2434
    %v3451 = vpack.c.b16 %v2443, %v2435
    %v3452 = vpack.c.b16 %v2444, %v2436
    %v3453 = vpack.c.b16 %v2445, %v2437
    %v3454 = vpack.c.b16 %v2446, %v2438
    %v3455 = vpack.c.b16 %v2447, %v2439
    %v3456 = vpack.c.b16 %v2456, %v2448
    %v3457 = vpack.c.b16 %v2457, %v2449
    %v3458 = vpack.c.b16 %v2458, %v2450
    %v3459 = vpack.c.b16 %v2459, %v2451
    %v3460 = vpack.c.b16 %v2460, %v2452
    %v3461 = vpack.c.b16 %v2461, %v2453
    %v3462 = vpack.c.b16 %v2462, %v2454
    %v3463 = vpack.c.b16 %v2463, %v2455
    %v3464 = vpack.c.b16 %v2472, %v2464
    %v3465 = vpack.c.b16 %v2473, %v2465
    %v3466 = vpack.c.b16 %v2474, %v2466
    %v3467 = vpack.c.b16 %v2475, %v2467
    %v3468 = vpack.c.b16 %v2476, %v2468
    %v3469 = vpack.c.b16 %v2477, %v2469
    %v3470 = vpack.c.b16 %v2478, %v2470
    %v3471 = vpack.c.b16 %v2479, %v2471
    %v3472 = vpack.c.b16 %v2488, %v2480
    %v3473 = vpack.c.b16 %v2489, %v2481
    %v3474 = vpack.c.b16 %v2490, %v2482
    %v3475 = vpack.c.b16 %v2491, %v2483
    %v3476 = vpack.c.b16 %v2492, %v2484
    %v3477 = vpack.c.b16 %v2493, %v2485
    %v3478 = vpack.c.b16 %v2494, %v2486
    %v3479 = vpack.c.b16 %v2495, %v2487
    %v3480 = vpack.c.b16 %v2504, %v2496
    %v3481 = vpack.c.b16 %v2505, %v2497
    %v3482 = vpack.c.b16 %v2506, %v2498
    %v3483 = vpack.c.b16 %v2507, %v2499
    %v3484 = vpack.c.b16 %v2508, %v2500
    %v3485 = vpack.c.b16 %v2509, %v2501
    %v3486 = vpack.c.b16 %v2510, %v2502
    %v3487 = vpack.c.b16 %v2511, %v2503
    %v3488 = vpack.c.b16 %v2520, %v2512
    %v3489 = vpack.c.b16 %v2521, %v2513
    %v3490 = vpack.c.b16 %v2522, %v2514
    %v3491 = vpack.c.b16 %v2523, %v2515
    %v3492 = vpack.c.b16 %v2524, %v2516
    %v3493 = vpack.c.b16 %v2525, %v2517
    %v3494 = vpack.c.b16 %v2526, %v2518
    %v3495 = vpack.c.b16 %v2527, %v2519
    %v3496 = vpack.c.b16 %v2536, %v2528
    %v3497 = vpack.c.b16 %v2537, %v2529
    %v3498 = vpack.c.b16 %v2538, %v2530
    %v3499 = vpack.c.b16 %v2539, %v2531
    %v3500 = vpack.c.b16 %v2540, %v2532
    %v3501 = vpack.c.b16 %v2541, %v2533
    %v3502 = vpack.c.b16 %v2542, %v2534
    %v3503 = vpack.c.b16 %v2543, %v2535
    %v3504 = vpack.c.b16 %v2552, %v2544
    %v3505 = vpack.c.b16 %v2553, %v2545
    %v3506 = vpack.c.b16 %v2554, %v2546
    %v3507 = vpack.c.b16 %v2555, %v2547
    %v3508 = vpack.c.b16 %v2556, %v2548
    %v3509 = vpack.c.b16 %v2557, %v2549
    %v3510 = vpack.c.b16 %v2558, %v2550
    %v3511 = vpack.c.b16 %v2559, %v2551
    %v3512 = vpack.c.b16 %v2568, %v2560
    %v3513 = vpack.c.b16 %v2569, %v2561
    %v3514 = vpack.c.b16 %v2570, %v2562
    %v3515 = vpack.c.b16 %v2571, %v2563
    %v3516 = vpack.c.b16 %v2572, %v2564
    %v3517 = vpack.c.b16 %v2573, %v2565
    %v3518 = vpack.c.b16 %v2574, %v2566
    %v3519 = vpack.c.b16 %v2575, %v2567
    %v3520 = vpack.c.b16 %v2584, %v2576
    %v3521 = vpack.c.b16 %v2585, %v2577
    %v3522 = vpack.c.b16 %v2586, %v2578
    %v3523 = vpack.c.b16 %v2587, %v2579
    %v3524 = vpack.c.b16 %v2588, %v2580
    %v3525 = vpack.c.b16 %v2589, %v2581
    %v3526 = vpack.c.b16 %v2590, %v2582
    %v3527 = vpack.c.b16 %v2591, %v2583
    %v3528 = vpack.c.b16 %v2600, %v2592
    %v3529 = vpack.c.b16 %v2601, %v2593
    %v3530 = vpack.c.b16 %v2602, %v2594
    %v3531 = vpack.c.b16 %v2603, %v2595
    %v3532 = vpack.c.b16 %v2604, %v2596
    %v3533 = vpack.c.b16 %v2605, %v2597
    %v3534 = vpack.c.b16 %v2606, %v2598
    %v3535 = vpack.c.b16 %v2607, %v2599
    %v3536 = vpack.c.b16 %v2616, %v2608
    %v3537 = vpack.c.b16 %v2617, %v2609
    %v3538 = vpack.c.b16 %v2618, %v2610
    %v3539 = vpack.c.b16 %v2619, %v2611
    %v3540 = vpack.c.b16 %v2620, %v2612
    %v3541 = vpack.c.b16 %v2621, %v2613
    %v3542 = vpack.c.b16 %v2622, %v2614
    %v3543 = vpack.c.b16 %v2623, %v2615
    %v3544 = vpack.c.b16 %v2632, %v2624
    %v3545 = vpack.c.b16 %v2633, %v2625
    %v3546 = vpack.c.b16 %v2634, %v2626
    %v3547 = vpack.c.b16 %v2635, %v2627
    %v3548 = vpack.c.b16 %v2636, %v2628
    %v3549 = vpack.c.b16 %v2637, %v2629
    %v3550 = vpack.c.b16 %v2638, %v2630
    %v3551 = vpack.c.b16 %v2639, %v2631
    %v3552 = vpack.c.b16 %v2648, %v2640
    %v3553 = vpack.c.b16 %v2649, %v2641
    %v3554 = vpack.c.b16 %v2650, %v2642
    %v3555 = vpack.c.b16 %v2651, %v2643
    %v3556 = vpack.c.b16 %v2652, %v2644
    %v3557 = vpack.c.b16 %v2653, %v2645
    %v3558 = vpack.c.b16 %v2654, %v2646
    %v3559 = vpack.c.b16 %v2655, %v2647
    %v3560 = vpack.c.b16 %v2664, %v2656
    %v3561 = vpack.c.b16 %v2665, %v2657
    %v3562 = vpack.c.b16 %v2666, %v2658
    %v3563 = vpack.c.b16 %v2667, %v2659
    %v3564 = vpack.c.b16 %v2668, %v2660
    %v3565 = vpack.c.b16 %v2669, %v2661
    %v3566 = vpack.c.b16 %v2670, %v2662
    %v3567 = vpack.c.b16 %v2671, %v2663
    %v3568 = vpack.c.b16 %v2680, %v2672
    %v3569 = vpack.c.b16 %v2681, %v2673
    %v3570 = vpack.c.b16 %v2682, %v2674
    %v3571 = vpack.c.b16 %v2683, %v2675
    %v3572 = vpack.c.b16 %v2684, %v2676
    %v3573 = vpack.c.b16 %v2685, %v2677
    %v3574 = vpack.c.b16 %v2686, %v2678
    %v3575 = vpack.c.b16 %v2687, %v2679
    %v3576 = vpack.c.b16 %v2696, %v2688
    %v3577 = vpack.c.b16 %v2697, %v2689
    %v3578 = vpack.c.b16 %v2698, %v2690
    %v3579 = vpack.c.b16 %v2699, %v2691
    %v3580 = vpack.c.b16 %v2700, %v2692
    %v3581 = vpack.c.b16 %v2701, %v2693
    %v3582 = vpack.c.b16 %v2702, %v2694
    %v3583 = vpack.c.b16 %v2703, %v2695
    %v3584 = vpack.c.b16 %v2712, %v2704
    %v3585 = vpack.c.b16 %v2713, %v2705
    %v3586 = vpack.c.b16 %v2714, %v2706
    %v3587 = vpack.c.b16 %v2715, %v2707
    %v3588 = vpack.c.b16 %v2716, %v2708
    %v3589 = vpack.c.b16 %v2717, %v2709
    %v3590 = vpack.c.b16 %v2718, %v2710
    %v3591 = vpack.c.b16 %v2719, %v2711
    %v3592 = vpack.c.b16 %v2728, %v2720
    %v3593 = vpack.c.b16 %v2729, %v2721
    %v3594 = vpack.c.b16 %v2730, %v2722
    %v3595 = vpack.c.b16 %v2731, %v2723
    %v3596 = vpack.c.b16 %v2732, %v2724
    %v3597 = vpack.c.b16 %v2733, %v2725
    %v3598 = vpack.c.b16 %v2734, %v2726
    %v3599 = vpack.c.b16 %v2735, %v2727
    %v3600 = vpack.c.b16 %v2744, %v2736
    %v3601 = vpack.c.b16 %v2745, %v2737
    %v3602 = vpack.c.b16 %v2746, %v2738
    %v3603 = vpack.c.b16 %v2747, %v2739
    %v3604 = vpack.c.b16 %v2748, %v2740
    %v3605 = vpack.c.b16 %v2749, %v2741
    %v3606 = vpack.c.b16 %v2750, %v2742
    %v3607 = vpack.c.b16 %v2751, %v2743
    %v3608 = vpack.c.b16 %v2760, %v2752
    %v3609 = vpack.c.b16 %v2761, %v2753
    %v3610 = vpack.c.b16 %v2762, %v2754
    %v3611 = vpack.c.b16 %v2763, %v2755
    %v3612 = vpack.c.b16 %v2764, %v2756
    %v3613 = vpack.c.b16 %v2765, %v2757
    %v3614 = vpack.c.b16 %v2766, %v2758
    %v3615 = vpack.c.b16 %v2767, %v2759
    %v3616 = vpack.c.b16 %v2776, %v2768
    %v3617 = vpack.c.b16 %v2777, %v2769
    %v3618 = vpack.c.b16 %v2778, %v2770
    %v3619 = vpack.c.b16 %v2779, %v2771
    %v3620 = vpack.c.b16 %v2780, %v2772
    %v3621 = vpack.c.b16 %v2781, %v2773
    %v3622 = vpack.c.b16 %v2782, %v2774
    %v3623 = vpack.c.b16 %v2783, %v2775
    %v3624 = vpack.c.b16 %v2792, %v2784
    %v3625 = vpack.c.b16 %v2793, %v2785
    %v3626 = vpack.c.b16 %v2794, %v2786
    %v3627 = vpack.c.b16 %v2795, %v2787
    %v3628 = vpack.c.b16 %v2796, %v2788
    %v3629 = vpack.c.b16 %v2797, %v2789
    %v3630 = vpack.c.b16 %v2798, %v2790
    %v3631 = vpack.c.b16 %v2799, %v2791
    %v3632 = vpack.c.b16 %v2808, %v2800
    %v3633 = vpack.c.b16 %v2809, %v2801
    %v3634 = vpack.c.b16 %v2810, %v2802
    %v3635 = vpack.c.b16 %v2811, %v2803
    %v3636 = vpack.c.b16 %v2812, %v2804
    %v3637 = vpack.c.b16 %v2813, %v2805
    %v3638 = vpack.c.b16 %v2814, %v2806
    %v3639 = vpack.c.b16 %v2815, %v2807
    %v3640 = vpack.c.b16 %v2824, %v2816
    %v3641 = vpack.c.b16 %v2825, %v2817
    %v3642 = vpack.c.b16 %v2826, %v2818
    %v3643 = vpack.c.b16 %v2827, %v2819
    %v3644 = vpack.c.b16 %v2828, %v2820
    %v3645 = vpack.c.b16 %v2829, %v2821
    %v3646 = vpack.c.b16 %v2830, %v2822
    %v3647 = vpack.c.b16 %v2831, %v2823
    %v3648 = vpack.c.b16 %v2840, %v2832
    %v3649 = vpack.c.b16 %v2841, %v2833
    %v3650 = vpack.c.b16 %v2842, %v2834
    %v3651 = vpack.c.b16 %v2843, %v2835
    %v3652 = vpack.c.b16 %v2844, %v2836
    %v3653 = vpack.c.b16 %v2845, %v2837
    %v3654 = vpack.c.b16 %v2846, %v2838
    %v3655 = vpack.c.b16 %v2847, %v2839
    %v3656 = vpack.c.b16 %v2856, %v2848
    %v3657 = vpack.c.b16 %v2857, %v2849
    %v3658 = vpack.c.b16 %v2858, %v2850
    %v3659 = vpack.c.b16 %v2859, %v2851
    %v3660 = vpack.c.b16 %v2860, %v2852
    %v3661 = vpack.c.b16 %v2861, %v2853
    %v3662 = vpack.c.b16 %v2862, %v2854
    %v3663 = vpack.c.b16 %v2863, %v2855
    %v3664 = vpack.c.b16 %v2872, %v2864
    %v3665 = vpack.c.b16 %v2873, %v2865
    %v3666 = vpack.c.b16 %v2874, %v2866
    %v3667 = vpack.c.b16 %v2875, %v2867
    %v3668 = vpack.c.b16 %v2876, %v2868
    %v3669 = vpack.c.b16 %v2877, %v2869
    %v3670 = vpack.c.b16 %v2878, %v2870
    %v3671 = vpack.c.b16 %v2879, %v2871
    %v3672 = vpack.c.b16 %v2888, %v2880
    %v3673 = vpack.c.b16 %v2889, %v2881
    %v3674 = vpack.c.b16 %v2890, %v2882
    %v3675 = vpack.c.b16 %v2891, %v2883
    %v3676 = vpack.c.b16 %v2892, %v2884
    %v3677 = vpack.c.b16 %v2893, %v2885
    %v3678 = vpack.c.b16 %v2894, %v2886
    %v3679 = vpack.c.b16 %v2895, %v2887
    %v3680 = vpack.c.b16 %v2904, %v2896
    %v3681 = vpack.c.b16 %v2905, %v2897
    %v3682 = vpack.c.b16 %v2906, %v2898
    %v3683 = vpack.c.b16 %v2907, %v2899
    %v3684 = vpack.c.b16 %v2908, %v2900
    %v3685 = vpack.c.b16 %v2909, %v2901
    %v3686 = vpack.c.b16 %v2910, %v2902
    %v3687 = vpack.c.b16 %v2911, %v2903
    %v3688 = vpack.c.b16 %v2920, %v2912
    %v3689 = vpack.c.b16 %v2921, %v2913
    %v3690 = vpack.c.b16 %v2922, %v2914
    %v3691 = vpack.c.b16 %v2923, %v2915
    %v3692 = vpack.c.b16 %v2924, %v2916
    %v3693 = vpack.c.b16 %v2925, %v2917
    %v3694 = vpack.c.b16 %v2926, %v2918
    %v3695 = vpack.c.b16 %v2927, %v2919
    %v3696 = vpack.c.b16 %v2936, %v2928
    %v3697 = vpack.c.b16 %v2937, %v2929
    %v3698 = vpack.c.b16 %v2938, %v2930
    %v3699 = vpack.c.b16 %v2939, %v2931
    %v3700 = vpack.c.b16 %v2940, %v2932
    %v3701 = vpack.c.b16 %v2941, %v2933
    %v3702 = vpack.c.b16 %v2942, %v2934
    %v3703 = vpack.c.b16 %v2943, %v2935
    %v3704 = vpack.c.b16 %v2952, %v2944
    %v3705 = vpack.c.b16 %v2953, %v2945
    %v3706 = vpack.c.b16 %v2954, %v2946
    %v3707 = vpack.c.b16 %v2955, %v2947
    %v3708 = vpack.c.b16 %v2956, %v2948
    %v3709 = vpack.c.b16 %v2957, %v2949
    %v3710 = vpack.c.b16 %v2958, %v2950
    %v3711 = vpack.c.b16 %v2959, %v2951
    %v3712 = vpack.c.b16 %v2968, %v2960
    %v3713 = vpack.c.b16 %v2969, %v2961
    %v3714 = vpack.c.b16 %v2970, %v2962
    %v3715 = vpack.c.b16 %v2971, %v2963
    %v3716 = vpack.c.b16 %v2972, %v2964
    %v3717 = vpack.c.b16 %v2973, %v2965
    %v3718 = vpack.c.b16 %v2974, %v2966
    %v3719 = vpack.c.b16 %v2975, %v2967
    %v3720 = vpack.c.b16 %v2984, %v2976
    %v3721 = vpack.c.b16 %v2985, %v2977
    %v3722 = vpack.c.b16 %v2986, %v2978
    %v3723 = vpack.c.b16 %v2987, %v2979
    %v3724 = vpack.c.b16 %v2988, %v2980
    %v3725 = vpack.c.b16 %v2989, %v2981
    %v3726 = vpack.c.b16 %v2990, %v2982
    %v3727 = vpack.c.b16 %v2991, %v2983
    %v3728 = vpack.c.b16 %v3000, %v2992
    %v3729 = vpack.c.b16 %v3001, %v2993
    %v3730 = vpack.c.b16 %v3002, %v2994
    %v3731 = vpack.c.b16 %v3003, %v2995
    %v3732 = vpack.c.b16 %v3004, %v2996
    %v3733 = vpack.c.b16 %v3005, %v2997
    %v3734 = vpack.c.b16 %v3006, %v2998
    %v3735 = vpack.c.b16 %v3007, %v2999
    %v3736 = vpack.c.b16 %v3016, %v3008
    %v3737 = vpack.c.b16 %v3017, %v3009
    %v3738 = vpack.c.b16 %v3018, %v3010
    %v3739 = vpack.c.b16 %v3019, %v3011
    %v3740 = vpack.c.b16 %v3020, %v3012
    %v3741 = vpack.c.b16 %v3021, %v3013
    %v3742 = vpack.c.b16 %v3022, %v3014
    %v3743 = vpack.c.b16 %v3023, %v3015
    %v3744 = vpack.c.b16 %v3032, %v3024
    %v3745 = vpack.c.b16 %v3033, %v3025
    %v3746 = vpack.c.b16 %v3034, %v3026
    %v3747 = vpack.c.b16 %v3035, %v3027
    %v3748 = vpack.c.b16 %v3036, %v3028
    %v3749 = vpack.c.b16 %v3037, %v3029
    %v3750 = vpack.c.b16 %v3038, %v3030
    %v3751 = vpack.c.b16 %v3039, %v3031
    %v3752 = vpack.c.b16 %v3048, %v3040
    %v3753 = vpack.c.b16 %v3049, %v3041
    %v3754 = vpack.c.b16 %v3050, %v3042
    %v3755 = vpack.c.b16 %v3051, %v3043
    %v3756 = vpack.c.b16 %v3052, %v3044
    %v3757 = vpack.c.b16 %v3053, %v3045
    %v3758 = vpack.c.b16 %v3054, %v3046
    %v3759 = vpack.c.b16 %v3055, %v3047
    %v3760 = vpack.c.b16 %v3064, %v3056
    %v3761 = vpack.c.b16 %v3065, %v3057
    %v3762 = vpack.c.b16 %v3066, %v3058
    %v3763 = vpack.c.b16 %v3067, %v3059
    %v3764 = vpack.c.b16 %v3068, %v3060
    %v3765 = vpack.c.b16 %v3069, %v3061
    %v3766 = vpack.c.b16 %v3070, %v3062
    %v3767 = vpack.c.b16 %v3071, %v3063
    %v3768 = vpack.c.b16 %v3080, %v3072
    %v3769 = vpack.c.b16 %v3081, %v3073
    %v3770 = vpack.c.b16 %v3082, %v3074
    %v3771 = vpack.c.b16 %v3083, %v3075
    %v3772 = vpack.c.b16 %v3084, %v3076
    %v3773 = vpack.c.b16 %v3085, %v3077
    %v3774 = vpack.c.b16 %v3086, %v3078
    %v3775 = vpack.c.b16 %v3087, %v3079
    %v3776 = vpack.c.b16 %v3096, %v3088
    %v3777 = vpack.c.b16 %v3097, %v3089
    %v3778 = vpack.c.b16 %v3098, %v3090
    %v3779 = vpack.c.b16 %v3099, %v3091
    %v3780 = vpack.c.b16 %v3100, %v3092
    %v3781 = vpack.c.b16 %v3101, %v3093
    %v3782 = vpack.c.b16 %v3102, %v3094
    %v3783 = vpack.c.b16 %v3103, %v3095
    %v3784 = vpack.c.b16 %v3112, %v3104
    %v3785 = vpack.c.b16 %v3113, %v3105
    %v3786 = vpack.c.b16 %v3114, %v3106
    %v3787 = vpack.c.b16 %v3115, %v3107
    %v3788 = vpack.c.b16 %v3116, %v3108
    %v3789 = vpack.c.b16 %v3117, %v3109
    %v3790 = vpack.c.b16 %v3118, %v3110
    %v3791 = vpack.c.b16 %v3119, %v3111
    %v3792 = vpack.c.b16 %v3128, %v3120
    %v3793 = vpack.c.b16 %v3129, %v3121
    %v3794 = vpack.c.b16 %v3130, %v3122
    %v3795 = vpack.c.b16 %v3131, %v3123
    %v3796 = vpack.c.b16 %v3132, %v3124
    %v3797 = vpack.c.b16 %v3133, %v3125
    %v3798 = vpack.c.b16 %v3134, %v3126
    %v3799 = vpack.c.b16 %v3135, %v3127
    %v3800 = vpack.c.b16 %v3144, %v3136
    %v3801 = vpack.c.b16 %v3145, %v3137
    %v3802 = vpack.c.b16 %v3146, %v3138
    %v3803 = vpack.c.b16 %v3147, %v3139
    %v3804 = vpack.c.b16 %v3148, %v3140
    %v3805 = vpack.c.b16 %v3149, %v3141
    %v3806 = vpack.c.b16 %v3150, %v3142
    %v3807 = vpack.c.b16 %v3151, %v3143
    %v3808 = vpack.c.b16 %v3160, %v3152
    %v3809 = vpack.c.b16 %v3161, %v3153
    %v3810 = vpack.c.b16 %v3162, %v3154
    %v3811 = vpack.c.b16 %v3163, %v3155
    %v3812 = vpack.c.b16 %v3164, %v3156
    %v3813 = vpack.c.b16 %v3165, %v3157
    %v3814 = vpack.c.b16 %v3166, %v3158
    %v3815 = vpack.c.b16 %v3167, %v3159
    %v3816 = vpack.c.b16 %v3176, %v3168
    %v3817 = vpack.c.b16 %v3177, %v3169
    %v3818 = vpack.c.b16 %v3178, %v3170
    %v3819 = vpack.c.b16 %v3179, %v3171
    %v3820 = vpack.c.b16 %v3180, %v3172
    %v3821 = vpack.c.b16 %v3181, %v3173
    %v3822 = vpack.c.b16 %v3182, %v3174
    %v3823 = vpack.c.b16 %v3183, %v3175
    %v3824 = vpack.c.b16 %v3192, %v3184
    %v3825 = vpack.c.b16 %v3193, %v3185
    %v3826 = vpack.c.b16 %v3194, %v3186
    %v3827 = vpack.c.b16 %v3195, %v3187
    %v3828 = vpack.c.b16 %v3196, %v3188
    %v3829 = vpack.c.b16 %v3197, %v3189
    %v3830 = vpack.c.b16 %v3198, %v3190
    %v3831 = vpack.c.b16 %v3199, %v3191
    %v3832 = vpack.c.b16 %v3208, %v3200
    %v3833 = vpack.c.b16 %v3209, %v3201
    %v3834 = vpack.c.b16 %v3210, %v3202
    %v3835 = vpack.c.b16 %v3211, %v3203
    %v3836 = vpack.c.b16 %v3212, %v3204
    %v3837 = vpack.c.b16 %v3213, %v3205
    %v3838 = vpack.c.b16 %v3214, %v3206
    %v3839 = vpack.c.b16 %v3215, %v3207
    %v3840 = vpack.c.b16 %v3224, %v3216
    %v3841 = vpack.c.b16 %v3225, %v3217
    %v3842 = vpack.c.b16 %v3226, %v3218
    %v3843 = vpack.c.b16 %v3227, %v3219
    %v3844 = vpack.c.b16 %v3228, %v3220
    %v3845 = vpack.c.b16 %v3229, %v3221
    %v3846 = vpack.c.b16 %v3230, %v3222
    %v3847 = vpack.c.b16 %v3231, %v3223
    %v3848 = vpack.c.b16 %v3240, %v3232
    %v3849 = vpack.c.b16 %v3241, %v3233
    %v3850 = vpack.c.b16 %v3242, %v3234
    %v3851 = vpack.c.b16 %v3243, %v3235
    %v3852 = vpack.c.b16 %v3244, %v3236
    %v3853 = vpack.c.b16 %v3245, %v3237
    %v3854 = vpack.c.b16 %v3246, %v3238
    %v3855 = vpack.c.b16 %v3247, %v3239
    %v3856 = vpack.c.b16 %v3256, %v3248
    %v3857 = vpack.c.b16 %v3257, %v3249
    %v3858 = vpack.c.b16 %v3258, %v3250
    %v3859 = vpack.c.b16 %v3259, %v3251
    %v3860 = vpack.c.b16 %v3260, %v3252
    %v3861 = vpack.c.b16 %v3261, %v3253
    %v3862 = vpack.c.b16 %v3262, %v3254
    %v3863 = vpack.c.b16 %v3263, %v3255
    %vm4464 = vcmask 392192
    %v4466 = vsel %vm4464, %v821, 0
    %4468 = vmatprep.subr.bf16.mxu0 %v3265
    %4469 = vmatpush1.bf16.msra.mxu0 %v3264
    %4470 = vmatprep.subr.bf16.mxu0 %v3273
    %4471 = vmatpush1.bf16.msra.mxu0 %v3272
    %4472 = vmatprep.subr.bf16.mxu0 %v3281
    %4473 = vmatpush1.bf16.msra.mxu0 %v3280
    %4474 = vmatprep.subr.bf16.mxu0 %v3289
    %4475 = vmatpush1.bf16.msra.mxu0 %v3288
    %4476 = vmatprep.subr.bf16.mxu0 %v3297
    %4477 = vmatpush1.bf16.msra.mxu0 %v3296
    %4478 = vmatprep.subr.bf16.mxu0 %v3305
    %4479 = vmatpush1.bf16.msra.mxu0 %v3304
    %4480 = vmatprep.subr.bf16.mxu0 %v3313
    %4481 = vmatpush1.bf16.msra.mxu0 %v3312
    %4482 = vmatprep.subr.bf16.mxu0 %v3321
    %4483 = vmatpush1.bf16.msra.mxu0 %v3320
    %4484 = vmatprep.subr.bf16.mxu0 %v3329
    %4485 = vmatpush1.bf16.msra.mxu0 %v3328
    %4486 = vmatprep.subr.bf16.mxu0 %v3337
    %4487 = vmatpush1.bf16.msra.mxu0 %v3336
    %4488 = vmatprep.subr.bf16.mxu0 %v3345
    %4489 = vmatpush1.bf16.msra.mxu0 %v3344
    %4490 = vmatprep.subr.bf16.mxu0 %v3353
    %4491 = vmatpush1.bf16.msra.mxu0 %v3352
    %4492 = vmatprep.subr.bf16.mxu0 %v3361
    %4493 = vmatpush1.bf16.msra.mxu0 %v3360
    %4494 = vmatprep.subr.bf16.mxu0 %v3369
    %4495 = vmatpush1.bf16.msra.mxu0 %v3368
    %4496 = vmatprep.subr.bf16.mxu0 %v3377
    %4497 = vmatpush1.bf16.msra.mxu0 %v3376
    %4498 = vmatprep.subr.bf16.mxu0 %v3385
    %4499 = vmatpush1.bf16.msra.mxu0 %v3384
    %4500 = vmatprep.mubr.bf16.mxu0 %v813
    %4501 = vmatmul.mubr.bf16.gmra.mrb[0].mxu0 %v812
    %v4502 = vpop.f32.mrb[0].mxu0
    %v4503 = vadd.f32 %v1427, %v4502
    %v4504 = vpop.f32.mrb[0].mxu0
    %v4505 = vadd.f32 %v1431, %v4504
    %v4506 = vpop.f32.mrb[0].mxu0
    %v4507 = vpop.f32.mrb[0].mxu0
    %4508 = vdwg.mxu0
    %4509 = vmatprep.subr.bf16.mxu0 %v3393
    %4510 = vmatpush1.bf16.msra.mxu0 %v3392
    %4511 = vmatprep.subr.bf16.mxu0 %v3401
    %4512 = vmatpush1.bf16.msra.mxu0 %v3400
    %4513 = vmatprep.subr.bf16.mxu0 %v3409
    %4514 = vmatpush1.bf16.msra.mxu0 %v3408
    %4515 = vmatprep.subr.bf16.mxu0 %v3417
    %4516 = vmatpush1.bf16.msra.mxu0 %v3416
    %4517 = vmatprep.subr.bf16.mxu0 %v3425
    %4518 = vmatpush1.bf16.msra.mxu0 %v3424
    %4519 = vmatprep.subr.bf16.mxu0 %v3433
    %4520 = vmatpush1.bf16.msra.mxu0 %v3432
    %4521 = vmatprep.subr.bf16.mxu0 %v3441
    %4522 = vmatpush1.bf16.msra.mxu0 %v3440
    %4523 = vmatprep.subr.bf16.mxu0 %v3449
    %4524 = vmatpush1.bf16.msra.mxu0 %v3448
    %4525 = vmatprep.subr.bf16.mxu0 %v3457
    %4526 = vmatpush1.bf16.msra.mxu0 %v3456
    %4527 = vmatprep.subr.bf16.mxu0 %v3465
    %4528 = vmatpush1.bf16.msra.mxu0 %v3464
    %4529 = vmatprep.subr.bf16.mxu0 %v3473
    %4530 = vmatpush1.bf16.msra.mxu0 %v3472
    %4531 = vmatprep.subr.bf16.mxu0 %v3481
    %4532 = vmatpush1.bf16.msra.mxu0 %v3480
    %4533 = vmatprep.subr.bf16.mxu0 %v3489
    %4534 = vmatpush1.bf16.msra.mxu0 %v3488
    %4535 = vmatprep.subr.bf16.mxu0 %v3497
    %4536 = vmatpush1.bf16.msra.mxu0 %v3496
    %4537 = vmatprep.subr.bf16.mxu0 %v3505
    %4538 = vmatpush1.bf16.msra.mxu0 %v3504
    %4539 = vmatprep.subr.bf16.mxu0 %v3513
    %4540 = vmatpush1.bf16.msra.mxu0 %v3512
    %4541 = vmatprep.mubr.bf16.mxu0 %v815
    %4542 = vmatmul.mubr.bf16.gmra.mrb[0].mxu0 %v814
    %v4543 = vpop.f32.mrb[0].mxu0
    %v4544 = vadd.f32 %v4503, %v4543
    %v4545 = vpop.f32.mrb[0].mxu0
    %v4546 = vadd.f32 %v4505, %v4545
    %v4547 = vpop.f32.mrb[0].mxu0
    %v4548 = vpop.f32.mrb[0].mxu0
    %4549 = vdwg.mxu0
    %4550 = vmatprep.subr.bf16.mxu0 %v3521
    %4551 = vmatpush1.bf16.msra.mxu0 %v3520
    %4552 = vmatprep.subr.bf16.mxu0 %v3529
    %4553 = vmatpush1.bf16.msra.mxu0 %v3528
    %4554 = vmatprep.subr.bf16.mxu0 %v3537
    %4555 = vmatpush1.bf16.msra.mxu0 %v3536
    %4556 = vmatprep.subr.bf16.mxu0 %v3545
    %4557 = vmatpush1.bf16.msra.mxu0 %v3544
    %4558 = vmatprep.subr.bf16.mxu0 %v3553
    %4559 = vmatpush1.bf16.msra.mxu0 %v3552
    %4560 = vmatprep.subr.bf16.mxu0 %v3561
    %4561 = vmatpush1.bf16.msra.mxu0 %v3560
    %4562 = vmatprep.subr.bf16.mxu0 %v3569
    %4563 = vmatpush1.bf16.msra.mxu0 %v3568
    %4564 = vmatprep.subr.bf16.mxu0 %v3577
    %4565 = vmatpush1.bf16.msra.mxu0 %v3576
    %4566 = vmatprep.subr.bf16.mxu0 %v3585
    %4567 = vmatpush1.bf16.msra.mxu0 %v3584
    %4568 = vmatprep.subr.bf16.mxu0 %v3593
    %4569 = vmatpush1.bf16.msra.mxu0 %v3592
    %4570 = vmatprep.subr.bf16.mxu0 %v3601
    %4571 = vmatpush1.bf16.msra.mxu0 %v3600
    %4572 = vmatprep.subr.bf16.mxu0 %v3609
    %4573 = vmatpush1.bf16.msra.mxu0 %v3608
    %4574 = vmatprep.subr.bf16.mxu0 %v3617
    %4575 = vmatpush1.bf16.msra.mxu0 %v3616
    %4576 = vmatprep.subr.bf16.mxu0 %v3625
    %4577 = vmatpush1.bf16.msra.mxu0 %v3624
    %4578 = vmatprep.subr.bf16.mxu0 %v3633
    %4579 = vmatpush1.bf16.msra.mxu0 %v3632
    %4580 = vmatprep.subr.bf16.mxu0 %v3641
    %4581 = vmatpush1.bf16.msra.mxu0 %v3640
    %4582 = vmatprep.mubr.bf16.mxu0 %v817
    %4583 = vmatmul.mubr.bf16.gmra.mrb[0].mxu0 %v816
    %v4584 = vpop.f32.mrb[0].mxu0
    %v4585 = vadd.f32 %v4544, %v4584
    %v4586 = vpop.f32.mrb[0].mxu0
    %v4587 = vadd.f32 %v4546, %v4586
    %v4588 = vpop.f32.mrb[0].mxu0
    %v4589 = vpop.f32.mrb[0].mxu0
    %4590 = vdwg.mxu0
    %4591 = vmatprep.subr.bf16.mxu0 %v3649
    %4592 = vmatpush1.bf16.msra.mxu0 %v3648
    %4593 = vmatprep.subr.bf16.mxu0 %v3657
    %4594 = vmatpush1.bf16.msra.mxu0 %v3656
    %4595 = vmatprep.subr.bf16.mxu0 %v3665
    %4596 = vmatpush1.bf16.msra.mxu0 %v3664
    %4597 = vmatprep.subr.bf16.mxu0 %v3673
    %4598 = vmatpush1.bf16.msra.mxu0 %v3672
    %4599 = vmatprep.subr.bf16.mxu0 %v3681
    %4600 = vmatpush1.bf16.msra.mxu0 %v3680
    %4601 = vmatprep.subr.bf16.mxu0 %v3689
    %4602 = vmatpush1.bf16.msra.mxu0 %v3688
    %4603 = vmatprep.subr.bf16.mxu0 %v3697
    %4604 = vmatpush1.bf16.msra.mxu0 %v3696
    %4605 = vmatprep.subr.bf16.mxu0 %v3705
    %4606 = vmatpush1.bf16.msra.mxu0 %v3704
    %4607 = vmatprep.subr.bf16.mxu0 %v3713
    %4608 = vmatpush1.bf16.msra.mxu0 %v3712
    %4609 = vmatprep.subr.bf16.mxu0 %v3721
    %4610 = vmatpush1.bf16.msra.mxu0 %v3720
    %4611 = vmatprep.subr.bf16.mxu0 %v3729
    %4612 = vmatpush1.bf16.msra.mxu0 %v3728
    %4613 = vmatprep.subr.bf16.mxu0 %v3737
    %4614 = vmatpush1.bf16.msra.mxu0 %v3736
    %4615 = vmatprep.subr.bf16.mxu0 %v3745
    %4616 = vmatpush1.bf16.msra.mxu0 %v3744
    %4617 = vmatprep.subr.bf16.mxu0 %v3753
    %4618 = vmatpush1.bf16.msra.mxu0 %v3752
    %4619 = vmatprep.subr.bf16.mxu0 %v3761
    %4620 = vmatpush1.bf16.msra.mxu0 %v3760
    %4621 = vmatprep.subr.bf16.mxu0 %v3769
    %4622 = vmatpush1.bf16.msra.mxu0 %v3768
    %4623 = vmatprep.mubr.bf16.mxu0 %v819
    %4624 = vmatmul.mubr.bf16.gmra.mrb[0].mxu0 %v818
    %v4625 = vpop.f32.mrb[0].mxu0
    %v4626 = vadd.f32 %v4585, %v4625
    %v4627 = vpop.f32.mrb[0].mxu0
    %v4628 = vadd.f32 %v4587, %v4627
    %v4629 = vpop.f32.mrb[0].mxu0
    %v4630 = vpop.f32.mrb[0].mxu0
    %4631 = vdwg.mxu0
    %4632 = vmatprep.subr.bf16.mxu0 %v3777
    %4633 = vmatpush1.bf16.msra.mxu0 %v3776
    %4634 = vmatprep.subr.bf16.mxu0 %v3785
    %4635 = vmatpush1.bf16.msra.mxu0 %v3784
    %4636 = vmatprep.subr.bf16.mxu0 %v3793
    %4637 = vmatpush1.bf16.msra.mxu0 %v3792
    %4638 = vmatprep.subr.bf16.mxu0 %v3801
    %4639 = vmatpush1.bf16.msra.mxu0 %v3800
    %4640 = vmatprep.subr.bf16.mxu0 %v3809
    %4641 = vmatpush1.bf16.msra.mxu0 %v3808
    %4642 = vmatprep.subr.bf16.mxu0 %v3817
    %4643 = vmatpush1.bf16.msra.mxu0 %v3816
    %4644 = vmatprep.subr.bf16.mxu0 %v3825
    %4645 = vmatpush1.bf16.msra.mxu0 %v3824
    %4646 = vmatprep.subr.bf16.mxu0 %v3833
    %4647 = vmatpush1.bf16.msra.mxu0 %v3832
    %4648 = vmatprep.subr.bf16.mxu0 %v3841
    %4649 = vmatpush1.bf16.msra.mxu0 %v3840
    %4650 = vmatprep.subr.bf16.mxu0 %v3849
    %4651 = vmatpush1.bf16.msra.mxu0 %v3848
    %4652 = vmatprep.subr.bf16.mxu0 %v3857
    %4653 = vmatpush1.bf16.msra.mxu0 %v3856
    %4654 = vmatprep.subr.bf16.mxu0 0
    %4655 = vmatpush1.bf16.msra.mxu0 0
    %4656 = vmatprep.subr.bf16.mxu0 0
    %4657 = vmatpush1.bf16.msra.mxu0 0
    %4658 = vmatprep.subr.bf16.mxu0 0
    %4659 = vmatpush1.bf16.msra.mxu0 0
    %4660 = vmatprep.subr.bf16.mxu0 0
    %4661 = vmatpush1.bf16.msra.mxu0 0
    %4662 = vmatprep.subr.bf16.mxu0 0
    %4663 = vmatpush1.bf16.msra.mxu0 0
    %4664 = vmatprep.mubr.bf16.mxu0 %v4466
    %4665 = vmatmul.mubr.bf16.gmra.mrb[0].mxu0 %v820
    %v4666 = vpop.f32.mrb[0].mxu0
    %v4667 = vadd.f32 %v4626, %v4666
    %v4668 = vpop.f32.mrb[0].mxu0
    %v4669 = vadd.f32 %v4628, %v4668
    %v4670 = vpop.f32.mrb[0].mxu0
    %v4671 = vpop.f32.mrb[0].mxu0
    %4672 = vdwg.mxu0
    %4673 = vmatprep.subr.bf16.mxu0 %v3267
    %4674 = vmatpush1.bf16.msra.mxu0 %v3266
    %4675 = vmatprep.subr.bf16.mxu0 %v3275
    %4676 = vmatpush1.bf16.msra.mxu0 %v3274
    %4677 = vmatprep.subr.bf16.mxu0 %v3283
    %4678 = vmatpush1.bf16.msra.mxu0 %v3282
    %4679 = vmatprep.subr.bf16.mxu0 %v3291
    %4680 = vmatpush1.bf16.msra.mxu0 %v3290
    %4681 = vmatprep.subr.bf16.mxu0 %v3299
    %4682 = vmatpush1.bf16.msra.mxu0 %v3298
    %4683 = vmatprep.subr.bf16.mxu0 %v3307
    %4684 = vmatpush1.bf16.msra.mxu0 %v3306
    %4685 = vmatprep.subr.bf16.mxu0 %v3315
    %4686 = vmatpush1.bf16.msra.mxu0 %v3314
    %4687 = vmatprep.subr.bf16.mxu0 %v3323
    %4688 = vmatpush1.bf16.msra.mxu0 %v3322
    %4689 = vmatprep.subr.bf16.mxu0 %v3331
    %4690 = vmatpush1.bf16.msra.mxu0 %v3330
    %4691 = vmatprep.subr.bf16.mxu0 %v3339
    %4692 = vmatpush1.bf16.msra.mxu0 %v3338
    %4693 = vmatprep.subr.bf16.mxu0 %v3347
    %4694 = vmatpush1.bf16.msra.mxu0 %v3346
    %4695 = vmatprep.subr.bf16.mxu0 %v3355
    %4696 = vmatpush1.bf16.msra.mxu0 %v3354
    %4697 = vmatprep.subr.bf16.mxu0 %v3363
    %4698 = vmatpush1.bf16.msra.mxu0 %v3362
    %4699 = vmatprep.subr.bf16.mxu0 %v3371
    %4700 = vmatpush1.bf16.msra.mxu0 %v3370
    %4701 = vmatprep.subr.bf16.mxu0 %v3379
    %4702 = vmatpush1.bf16.msra.mxu0 %v3378
    %4703 = vmatprep.subr.bf16.mxu0 %v3387
    %4704 = vmatpush1.bf16.msra.mxu0 %v3386
    %4705 = vmatprep.mubr.bf16.mxu0 %v813
    %4706 = vmatmul.mubr.bf16.gmra.mrb[0].mxu0 %v812
    %v4707 = vpop.f32.mrb[0].mxu0
    %v4708 = vadd.f32 %v1435, %v4707
    %v4709 = vpop.f32.mrb[0].mxu0
    %v4710 = vadd.f32 %v1439, %v4709
    %v4711 = vpop.f32.mrb[0].mxu0
    %v4712 = vpop.f32.mrb[0].mxu0
    %4713 = vdwg.mxu0
    %4714 = vmatprep.subr.bf16.mxu0 %v3395
    %4715 = vmatpush1.bf16.msra.mxu0 %v3394
    %4716 = vmatprep.subr.bf16.mxu0 %v3403
    %4717 = vmatpush1.bf16.msra.mxu0 %v3402
    %4718 = vmatprep.subr.bf16.mxu0 %v3411
    %4719 = vmatpush1.bf16.msra.mxu0 %v3410
    %4720 = vmatprep.subr.bf16.mxu0 %v3419
    %4721 = vmatpush1.bf16.msra.mxu0 %v3418
    %4722 = vmatprep.subr.bf16.mxu0 %v3427
    %4723 = vmatpush1.bf16.msra.mxu0 %v3426
    %4724 = vmatprep.subr.bf16.mxu0 %v3435
    %4725 = vmatpush1.bf16.msra.mxu0 %v3434
    %4726 = vmatprep.subr.bf16.mxu0 %v3443
    %4727 = vmatpush1.bf16.msra.mxu0 %v3442
    %4728 = vmatprep.subr.bf16.mxu0 %v3451
    %4729 = vmatpush1.bf16.msra.mxu0 %v3450
    %4730 = vmatprep.subr.bf16.mxu0 %v3459
    %4731 = vmatpush1.bf16.msra.mxu0 %v3458
    %4732 = vmatprep.subr.bf16.mxu0 %v3467
    %4733 = vmatpush1.bf16.msra.mxu0 %v3466
    %4734 = vmatprep.subr.bf16.mxu0 %v3475
    %4735 = vmatpush1.bf16.msra.mxu0 %v3474
    %4736 = vmatprep.subr.bf16.mxu0 %v3483
    %4737 = vmatpush1.bf16.msra.mxu0 %v3482
    %4738 = vmatprep.subr.bf16.mxu0 %v3491
    %4739 = vmatpush1.bf16.msra.mxu0 %v3490
    %4740 = vmatprep.subr.bf16.mxu0 %v3499
    %4741 = vmatpush1.bf16.msra.mxu0 %v3498
    %4742 = vmatprep.subr.bf16.mxu0 %v3507
    %4743 = vmatpush1.bf16.msra.mxu0 %v3506
    %4744 = vmatprep.subr.bf16.mxu0 %v3515
    %4745 = vmatpush1.bf16.msra.mxu0 %v3514
    %4746 = vmatprep.mubr.bf16.mxu0 %v815
    %4747 = vmatmul.mubr.bf16.gmra.mrb[0].mxu0 %v814
    %v4748 = vpop.f32.mrb[0].mxu0
    %v4749 = vadd.f32 %v4708, %v4748
    %v4750 = vpop.f32.mrb[0].mxu0
    %v4751 = vadd.f32 %v4710, %v4750
    %v4752 = vpop.f32.mrb[0].mxu0
    %v4753 = vpop.f32.mrb[0].mxu0
    %4754 = vdwg.mxu0
    %4755 = vmatprep.subr.bf16.mxu0 %v3523
    %4756 = vmatpush1.bf16.msra.mxu0 %v3522
    %4757 = vmatprep.subr.bf16.mxu0 %v3531
    %4758 = vmatpush1.bf16.msra.mxu0 %v3530
    %4759 = vmatprep.subr.bf16.mxu0 %v3539
    %4760 = vmatpush1.bf16.msra.mxu0 %v3538
    %4761 = vmatprep.subr.bf16.mxu0 %v3547
    %4762 = vmatpush1.bf16.msra.mxu0 %v3546
    %4763 = vmatprep.subr.bf16.mxu0 %v3555
    %4764 = vmatpush1.bf16.msra.mxu0 %v3554
    %4765 = vmatprep.subr.bf16.mxu0 %v3563
    %4766 = vmatpush1.bf16.msra.mxu0 %v3562
    %4767 = vmatprep.subr.bf16.mxu0 %v3571
    %4768 = vmatpush1.bf16.msra.mxu0 %v3570
    %4769 = vmatprep.subr.bf16.mxu0 %v3579
    %4770 = vmatpush1.bf16.msra.mxu0 %v3578
    %4771 = vmatprep.subr.bf16.mxu0 %v3587
    %4772 = vmatpush1.bf16.msra.mxu0 %v3586
    %4773 = vmatprep.subr.bf16.mxu0 %v3595
    %4774 = vmatpush1.bf16.msra.mxu0 %v3594
    %4775 = vmatprep.subr.bf16.mxu0 %v3603
    %4776 = vmatpush1.bf16.msra.mxu0 %v3602
    %4777 = vmatprep.subr.bf16.mxu0 %v3611
    %4778 = vmatpush1.bf16.msra.mxu0 %v3610
    %4779 = vmatprep.subr.bf16.mxu0 %v3619
    %4780 = vmatpush1.bf16.msra.mxu0 %v3618
    %4781 = vmatprep.subr.bf16.mxu0 %v3627
    %4782 = vmatpush1.bf16.msra.mxu0 %v3626
    %4783 = vmatprep.subr.bf16.mxu0 %v3635
    %4784 = vmatpush1.bf16.msra.mxu0 %v3634
    %4785 = vmatprep.subr.bf16.mxu0 %v3643
    %4786 = vmatpush1.bf16.msra.mxu0 %v3642
    %4787 = vmatprep.mubr.bf16.mxu0 %v817
    %4788 = vmatmul.mubr.bf16.gmra.mrb[0].mxu0 %v816
    %v4789 = vpop.f32.mrb[0].mxu0
    %v4790 = vadd.f32 %v4749, %v4789
    %v4791 = vpop.f32.mrb[0].mxu0
    %v4792 = vadd.f32 %v4751, %v4791
    %v4793 = vpop.f32.mrb[0].mxu0
    %v4794 = vpop.f32.mrb[0].mxu0
    %4795 = vdwg.mxu0
    %4796 = vmatprep.subr.bf16.mxu0 %v3651
    %4797 = vmatpush1.bf16.msra.mxu0 %v3650
    %4798 = vmatprep.subr.bf16.mxu0 %v3659
    %4799 = vmatpush1.bf16.msra.mxu0 %v3658
    %4800 = vmatprep.subr.bf16.mxu0 %v3667
    %4801 = vmatpush1.bf16.msra.mxu0 %v3666
    %4802 = vmatprep.subr.bf16.mxu0 %v3675
    %4803 = vmatpush1.bf16.msra.mxu0 %v3674
    %4804 = vmatprep.subr.bf16.mxu0 %v3683
    %4805 = vmatpush1.bf16.msra.mxu0 %v3682
    %4806 = vmatprep.subr.bf16.mxu0 %v3691
    %4807 = vmatpush1.bf16.msra.mxu0 %v3690
    %4808 = vmatprep.subr.bf16.mxu0 %v3699
    %4809 = vmatpush1.bf16.msra.mxu0 %v3698
    %4810 = vmatprep.subr.bf16.mxu0 %v3707
    %4811 = vmatpush1.bf16.msra.mxu0 %v3706
    %4812 = vmatprep.subr.bf16.mxu0 %v3715
    %4813 = vmatpush1.bf16.msra.mxu0 %v3714
    %4814 = vmatprep.subr.bf16.mxu0 %v3723
    %4815 = vmatpush1.bf16.msra.mxu0 %v3722
    %4816 = vmatprep.subr.bf16.mxu0 %v3731
    %4817 = vmatpush1.bf16.msra.mxu0 %v3730
    %4818 = vmatprep.subr.bf16.mxu0 %v3739
    %4819 = vmatpush1.bf16.msra.mxu0 %v3738
    %4820 = vmatprep.subr.bf16.mxu0 %v3747
    %4821 = vmatpush1.bf16.msra.mxu0 %v3746
    %4822 = vmatprep.subr.bf16.mxu0 %v3755
    %4823 = vmatpush1.bf16.msra.mxu0 %v3754
    %4824 = vmatprep.subr.bf16.mxu0 %v3763
    %4825 = vmatpush1.bf16.msra.mxu0 %v3762
    %4826 = vmatprep.subr.bf16.mxu0 %v3771
    %4827 = vmatpush1.bf16.msra.mxu0 %v3770
    %4828 = vmatprep.mubr.bf16.mxu0 %v819
    %4829 = vmatmul.mubr.bf16.gmra.mrb[0].mxu0 %v818
    %v4830 = vpop.f32.mrb[0].mxu0
    %v4831 = vadd.f32 %v4790, %v4830
    %v4832 = vpop.f32.mrb[0].mxu0
    %v4833 = vadd.f32 %v4792, %v4832
    %v4834 = vpop.f32.mrb[0].mxu0
    %v4835 = vpop.f32.mrb[0].mxu0
    %4836 = vdwg.mxu0
    %4837 = vmatprep.subr.bf16.mxu0 %v3779
    %4838 = vmatpush1.bf16.msra.mxu0 %v3778
    %4839 = vmatprep.subr.bf16.mxu0 %v3787
    %4840 = vmatpush1.bf16.msra.mxu0 %v3786
    %4841 = vmatprep.subr.bf16.mxu0 %v3795
    %4842 = vmatpush1.bf16.msra.mxu0 %v3794
    %4843 = vmatprep.subr.bf16.mxu0 %v3803
    %4844 = vmatpush1.bf16.msra.mxu0 %v3802
    %4845 = vmatprep.subr.bf16.mxu0 %v3811
    %4846 = vmatpush1.bf16.msra.mxu0 %v3810
    %4847 = vmatprep.subr.bf16.mxu0 %v3819
    %4848 = vmatpush1.bf16.msra.mxu0 %v3818
    %4849 = vmatprep.subr.bf16.mxu0 %v3827
    %4850 = vmatpush1.bf16.msra.mxu0 %v3826
    %4851 = vmatprep.subr.bf16.mxu0 %v3835
    %4852 = vmatpush1.bf16.msra.mxu0 %v3834
    %4853 = vmatprep.subr.bf16.mxu0 %v3843
    %4854 = vmatpush1.bf16.msra.mxu0 %v3842
    %4855 = vmatprep.subr.bf16.mxu0 %v3851
    %4856 = vmatpush1.bf16.msra.mxu0 %v3850
    %4857 = vmatprep.subr.bf16.mxu0 %v3859
    %4858 = vmatpush1.bf16.msra.mxu0 %v3858
    %4859 = vmatprep.subr.bf16.mxu0 0
    %4860 = vmatpush1.bf16.msra.mxu0 0
    %4861 = vmatprep.subr.bf16.mxu0 0
    %4862 = vmatpush1.bf16.msra.mxu0 0
    %4863 = vmatprep.subr.bf16.mxu0 0
    %4864 = vmatpush1.bf16.msra.mxu0 0
    %4865 = vmatprep.subr.bf16.mxu0 0
    %4866 = vmatpush1.bf16.msra.mxu0 0
    %4867 = vmatprep.subr.bf16.mxu0 0
    %4868 = vmatpush1.bf16.msra.mxu0 0
    %4869 = vmatprep.mubr.bf16.mxu0 %v4466
    %4870 = vmatmul.mubr.bf16.gmra.mrb[0].mxu0 %v820
    %v4871 = vpop.f32.mrb[0].mxu0
    %v4872 = vadd.f32 %v4831, %v4871
    %v4873 = vpop.f32.mrb[0].mxu0
    %v4874 = vadd.f32 %v4833, %v4873
    %v4875 = vpop.f32.mrb[0].mxu0
    %v4876 = vpop.f32.mrb[0].mxu0
    %4877 = vdwg.mxu0
    %4878 = vmatprep.subr.bf16.mxu0 %v3269
    %4879 = vmatpush1.bf16.msra.mxu0 %v3268
    %4880 = vmatprep.subr.bf16.mxu0 %v3277
    %4881 = vmatpush1.bf16.msra.mxu0 %v3276
    %4882 = vmatprep.subr.bf16.mxu0 %v3285
    %4883 = vmatpush1.bf16.msra.mxu0 %v3284
    %4884 = vmatprep.subr.bf16.mxu0 %v3293
    %4885 = vmatpush1.bf16.msra.mxu0 %v3292
    %4886 = vmatprep.subr.bf16.mxu0 %v3301
    %4887 = vmatpush1.bf16.msra.mxu0 %v3300
    %4888 = vmatprep.subr.bf16.mxu0 %v3309
    %4889 = vmatpush1.bf16.msra.mxu0 %v3308
    %4890 = vmatprep.subr.bf16.mxu0 %v3317
    %4891 = vmatpush1.bf16.msra.mxu0 %v3316
    %4892 = vmatprep.subr.bf16.mxu0 %v3325
    %4893 = vmatpush1.bf16.msra.mxu0 %v3324
    %4894 = vmatprep.subr.bf16.mxu0 %v3333
    %4895 = vmatpush1.bf16.msra.mxu0 %v3332
    %4896 = vmatprep.subr.bf16.mxu0 %v3341
    %4897 = vmatpush1.bf16.msra.mxu0 %v3340
    %4898 = vmatprep.subr.bf16.mxu0 %v3349
    %4899 = vmatpush1.bf16.msra.mxu0 %v3348
    %4900 = vmatprep.subr.bf16.mxu0 %v3357
    %4901 = vmatpush1.bf16.msra.mxu0 %v3356
    %4902 = vmatprep.subr.bf16.mxu0 %v3365
    %4903 = vmatpush1.bf16.msra.mxu0 %v3364
    %4904 = vmatprep.subr.bf16.mxu0 %v3373
    %4905 = vmatpush1.bf16.msra.mxu0 %v3372
    %4906 = vmatprep.subr.bf16.mxu0 %v3381
    %4907 = vmatpush1.bf16.msra.mxu0 %v3380
    %4908 = vmatprep.subr.bf16.mxu0 %v3389
    %4909 = vmatpush1.bf16.msra.mxu0 %v3388
    %4910 = vmatprep.mubr.bf16.mxu0 %v813
    %4911 = vmatmul.mubr.bf16.gmra.mrb[0].mxu0 %v812
    %v4912 = vpop.f32.mrb[0].mxu0
    %v4913 = vadd.f32 %v1443, %v4912
    %v4914 = vpop.f32.mrb[0].mxu0
    %v4915 = vadd.f32 %v1447, %v4914
    %v4916 = vpop.f32.mrb[0].mxu0
    %v4917 = vpop.f32.mrb[0].mxu0
    %4918 = vdwg.mxu0
    %4919 = vmatprep.subr.bf16.mxu0 %v3397
    %4920 = vmatpush1.bf16.msra.mxu0 %v3396
    %4921 = vmatprep.subr.bf16.mxu0 %v3405
    %4922 = vmatpush1.bf16.msra.mxu0 %v3404
    %4923 = vmatprep.subr.bf16.mxu0 %v3413
    %4924 = vmatpush1.bf16.msra.mxu0 %v3412
    %4925 = vmatprep.subr.bf16.mxu0 %v3421
    %4926 = vmatpush1.bf16.msra.mxu0 %v3420
    %4927 = vmatprep.subr.bf16.mxu0 %v3429
    %4928 = vmatpush1.bf16.msra.mxu0 %v3428
    %4929 = vmatprep.subr.bf16.mxu0 %v3437
    %4930 = vmatpush1.bf16.msra.mxu0 %v3436
    %4931 = vmatprep.subr.bf16.mxu0 %v3445
    %4932 = vmatpush1.bf16.msra.mxu0 %v3444
    %4933 = vmatprep.subr.bf16.mxu0 %v3453
    %4934 = vmatpush1.bf16.msra.mxu0 %v3452
    %4935 = vmatprep.subr.bf16.mxu0 %v3461
    %4936 = vmatpush1.bf16.msra.mxu0 %v3460
    %4937 = vmatprep.subr.bf16.mxu0 %v3469
    %4938 = vmatpush1.bf16.msra.mxu0 %v3468
    %4939 = vmatprep.subr.bf16.mxu0 %v3477
    %4940 = vmatpush1.bf16.msra.mxu0 %v3476
    %4941 = vmatprep.subr.bf16.mxu0 %v3485
    %4942 = vmatpush1.bf16.msra.mxu0 %v3484
    %4943 = vmatprep.subr.bf16.mxu0 %v3493
    %4944 = vmatpush1.bf16.msra.mxu0 %v3492
    %4945 = vmatprep.subr.bf16.mxu0 %v3501
    %4946 = vmatpush1.bf16.msra.mxu0 %v3500
    %4947 = vmatprep.subr.bf16.mxu0 %v3509
    %4948 = vmatpush1.bf16.msra.mxu0 %v3508
    %4949 = vmatprep.subr.bf16.mxu0 %v3517
    %4950 = vmatpush1.bf16.msra.mxu0 %v3516
    %4951 = vmatprep.mubr.bf16.mxu0 %v815
    %4952 = vmatmul.mubr.bf16.gmra.mrb[0].mxu0 %v814
    %v4953 = vpop.f32.mrb[0].mxu0
    %v4954 = vadd.f32 %v4913, %v4953
    %v4955 = vpop.f32.mrb[0].mxu0
    %v4956 = vadd.f32 %v4915, %v4955
    %v4957 = vpop.f32.mrb[0].mxu0
    %v4958 = vpop.f32.mrb[0].mxu0
    %4959 = vdwg.mxu0
    %4960 = vmatprep.subr.bf16.mxu0 %v3525
    %4961 = vmatpush1.bf16.msra.mxu0 %v3524
    %4962 = vmatprep.subr.bf16.mxu0 %v3533
    %4963 = vmatpush1.bf16.msra.mxu0 %v3532
    %4964 = vmatprep.subr.bf16.mxu0 %v3541
    %4965 = vmatpush1.bf16.msra.mxu0 %v3540
    %4966 = vmatprep.subr.bf16.mxu0 %v3549
    %4967 = vmatpush1.bf16.msra.mxu0 %v3548
    %4968 = vmatprep.subr.bf16.mxu0 %v3557
    %4969 = vmatpush1.bf16.msra.mxu0 %v3556
    %4970 = vmatprep.subr.bf16.mxu0 %v3565
    %4971 = vmatpush1.bf16.msra.mxu0 %v3564
    %4972 = vmatprep.subr.bf16.mxu0 %v3573
    %4973 = vmatpush1.bf16.msra.mxu0 %v3572
    %4974 = vmatprep.subr.bf16.mxu0 %v3581
    %4975 = vmatpush1.bf16.msra.mxu0 %v3580
    %4976 = vmatprep.subr.bf16.mxu0 %v3589
    %4977 = vmatpush1.bf16.msra.mxu0 %v3588
    %4978 = vmatprep.subr.bf16.mxu0 %v3597
    %4979 = vmatpush1.bf16.msra.mxu0 %v3596
    %4980 = vmatprep.subr.bf16.mxu0 %v3605
    %4981 = vmatpush1.bf16.msra.mxu0 %v3604
    %4982 = vmatprep.subr.bf16.mxu0 %v3613
    %4983 = vmatpush1.bf16.msra.mxu0 %v3612
    %4984 = vmatprep.subr.bf16.mxu0 %v3621
    %4985 = vmatpush1.bf16.msra.mxu0 %v3620
    %4986 = vmatprep.subr.bf16.mxu0 %v3629
    %4987 = vmatpush1.bf16.msra.mxu0 %v3628
    %4988 = vmatprep.subr.bf16.mxu0 %v3637
    %4989 = vmatpush1.bf16.msra.mxu0 %v3636
    %4990 = vmatprep.subr.bf16.mxu0 %v3645
    %4991 = vmatpush1.bf16.msra.mxu0 %v3644
    %4992 = vmatprep.mubr.bf16.mxu0 %v817
    %4993 = vmatmul.mubr.bf16.gmra.mrb[0].mxu0 %v816
    %v4994 = vpop.f32.mrb[0].mxu0
    %v4995 = vadd.f32 %v4954, %v4994
    %v4996 = vpop.f32.mrb[0].mxu0
    %v4997 = vadd.f32 %v4956, %v4996
    %v4998 = vpop.f32.mrb[0].mxu0
    %v4999 = vpop.f32.mrb[0].mxu0
    %5000 = vdwg.mxu0
    %5001 = vmatprep.subr.bf16.mxu0 %v3653
    %5002 = vmatpush1.bf16.msra.mxu0 %v3652
    %5003 = vmatprep.subr.bf16.mxu0 %v3661
    %5004 = vmatpush1.bf16.msra.mxu0 %v3660
    %5005 = vmatprep.subr.bf16.mxu0 %v3669
    %5006 = vmatpush1.bf16.msra.mxu0 %v3668
    %5007 = vmatprep.subr.bf16.mxu0 %v3677
    %5008 = vmatpush1.bf16.msra.mxu0 %v3676
    %5009 = vmatprep.subr.bf16.mxu0 %v3685
    %5010 = vmatpush1.bf16.msra.mxu0 %v3684
    %5011 = vmatprep.subr.bf16.mxu0 %v3693
    %5012 = vmatpush1.bf16.msra.mxu0 %v3692
    %5013 = vmatprep.subr.bf16.mxu0 %v3701
    %5014 = vmatpush1.bf16.msra.mxu0 %v3700
    %5015 = vmatprep.subr.bf16.mxu0 %v3709
    %5016 = vmatpush1.bf16.msra.mxu0 %v3708
    %5017 = vmatprep.subr.bf16.mxu0 %v3717
    %5018 = vmatpush1.bf16.msra.mxu0 %v3716
    %5019 = vmatprep.subr.bf16.mxu0 %v3725
    %5020 = vmatpush1.bf16.msra.mxu0 %v3724
    %5021 = vmatprep.subr.bf16.mxu0 %v3733
    %5022 = vmatpush1.bf16.msra.mxu0 %v3732
    %5023 = vmatprep.subr.bf16.mxu0 %v3741
    %5024 = vmatpush1.bf16.msra.mxu0 %v3740
    %5025 = vmatprep.subr.bf16.mxu0 %v3749
    %5026 = vmatpush1.bf16.msra.mxu0 %v3748
    %5027 = vmatprep.subr.bf16.mxu0 %v3757
    %5028 = vmatpush1.bf16.msra.mxu0 %v3756
    %5029 = vmatprep.subr.bf16.mxu0 %v3765
    %5030 = vmatpush1.bf16.msra.mxu0 %v3764
    %5031 = vmatprep.subr.bf16.mxu0 %v3773
    %5032 = vmatpush1.bf16.msra.mxu0 %v3772
    %5033 = vmatprep.mubr.bf16.mxu0 %v819
    %5034 = vmatmul.mubr.bf16.gmra.mrb[0].mxu0 %v818
    %v5035 = vpop.f32.mrb[0].mxu0
    %v5036 = vadd.f32 %v4995, %v5035
    %v5037 = vpop.f32.mrb[0].mxu0
    %v5038 = vadd.f32 %v4997, %v5037
    %v5039 = vpop.f32.mrb[0].mxu0
    %v5040 = vpop.f32.mrb[0].mxu0
    %5041 = vdwg.mxu0
    %5042 = vmatprep.subr.bf16.mxu0 %v3781
    %5043 = vmatpush1.bf16.msra.mxu0 %v3780
    %5044 = vmatprep.subr.bf16.mxu0 %v3789
    %5045 = vmatpush1.bf16.msra.mxu0 %v3788
    %5046 = vmatprep.subr.bf16.mxu0 %v3797
    %5047 = vmatpush1.bf16.msra.mxu0 %v3796
    %5048 = vmatprep.subr.bf16.mxu0 %v3805
    %5049 = vmatpush1.bf16.msra.mxu0 %v3804
    %5050 = vmatprep.subr.bf16.mxu0 %v3813
    %5051 = vmatpush1.bf16.msra.mxu0 %v3812
    %5052 = vmatprep.subr.bf16.mxu0 %v3821
    %5053 = vmatpush1.bf16.msra.mxu0 %v3820
    %5054 = vmatprep.subr.bf16.mxu0 %v3829
    %5055 = vmatpush1.bf16.msra.mxu0 %v3828
    %5056 = vmatprep.subr.bf16.mxu0 %v3837
    %5057 = vmatpush1.bf16.msra.mxu0 %v3836
    %5058 = vmatprep.subr.bf16.mxu0 %v3845
    %5059 = vmatpush1.bf16.msra.mxu0 %v3844
    %5060 = vmatprep.subr.bf16.mxu0 %v3853
    %5061 = vmatpush1.bf16.msra.mxu0 %v3852
    %5062 = vmatprep.subr.bf16.mxu0 %v3861
    %5063 = vmatpush1.bf16.msra.mxu0 %v3860
    %5064 = vmatprep.subr.bf16.mxu0 0
    %5065 = vmatpush1.bf16.msra.mxu0 0
    %5066 = vmatprep.subr.bf16.mxu0 0
    %5067 = vmatpush1.bf16.msra.mxu0 0
    %5068 = vmatprep.subr.bf16.mxu0 0
    %5069 = vmatpush1.bf16.msra.mxu0 0
    %5070 = vmatprep.subr.bf16.mxu0 0
    %5071 = vmatpush1.bf16.msra.mxu0 0
    %5072 = vmatprep.subr.bf16.mxu0 0
    %5073 = vmatpush1.bf16.msra.mxu0 0
    %5074 = vmatprep.mubr.bf16.mxu0 %v4466
    %5075 = vmatmul.mubr.bf16.gmra.mrb[0].mxu0 %v820
    %v5076 = vpop.f32.mrb[0].mxu0
    %v5077 = vadd.f32 %v5036, %v5076
    %v5078 = vpop.f32.mrb[0].mxu0
    %v5079 = vadd.f32 %v5038, %v5078
    %v5080 = vpop.f32.mrb[0].mxu0
    %v5081 = vpop.f32.mrb[0].mxu0
    %5082 = vdwg.mxu0
    %5083 = vmatprep.subr.bf16.mxu0 %v3271
    %5084 = vmatpush1.bf16.msra.mxu0 %v3270
    %5085 = vmatprep.subr.bf16.mxu0 %v3279
    %5086 = vmatpush1.bf16.msra.mxu0 %v3278
    %5087 = vmatprep.subr.bf16.mxu0 %v3287
    %5088 = vmatpush1.bf16.msra.mxu0 %v3286
    %5089 = vmatprep.subr.bf16.mxu0 %v3295
    %5090 = vmatpush1.bf16.msra.mxu0 %v3294
    %5091 = vmatprep.subr.bf16.mxu0 %v3303
    %5092 = vmatpush1.bf16.msra.mxu0 %v3302
    %5093 = vmatprep.subr.bf16.mxu0 %v3311
    %5094 = vmatpush1.bf16.msra.mxu0 %v3310
    %5095 = vmatprep.subr.bf16.mxu0 %v3319
    %5096 = vmatpush1.bf16.msra.mxu0 %v3318
    %5097 = vmatprep.subr.bf16.mxu0 %v3327
    %5098 = vmatpush1.bf16.msra.mxu0 %v3326
    %5099 = vmatprep.subr.bf16.mxu0 %v3335
    %5100 = vmatpush1.bf16.msra.mxu0 %v3334
    %5101 = vmatprep.subr.bf16.mxu0 %v3343
    %5102 = vmatpush1.bf16.msra.mxu0 %v3342
    %5103 = vmatprep.subr.bf16.mxu0 %v3351
    %5104 = vmatpush1.bf16.msra.mxu0 %v3350
    %5105 = vmatprep.subr.bf16.mxu0 %v3359
    %5106 = vmatpush1.bf16.msra.mxu0 %v3358
    %5107 = vmatprep.subr.bf16.mxu0 %v3367
    %5108 = vmatpush1.bf16.msra.mxu0 %v3366
    %5109 = vmatprep.subr.bf16.mxu0 %v3375
    %5110 = vmatpush1.bf16.msra.mxu0 %v3374
    %5111 = vmatprep.subr.bf16.mxu0 %v3383
    %5112 = vmatpush1.bf16.msra.mxu0 %v3382
    %5113 = vmatprep.subr.bf16.mxu0 %v3391
    %5114 = vmatpush1.bf16.msra.mxu0 %v3390
    %5115 = vmatprep.mubr.bf16.mxu0 %v813
    %5116 = vmatmul.mubr.bf16.gmra.mrb[0].mxu0 %v812
    %v5117 = vpop.f32.mrb[0].mxu0
    %v5118 = vadd.f32 %v1451, %v5117
    %v5119 = vpop.f32.mrb[0].mxu0
    %v5120 = vadd.f32 %v1455, %v5119
    %v5121 = vpop.f32.mrb[0].mxu0
    %v5122 = vpop.f32.mrb[0].mxu0
    %5123 = vdwg.mxu0
    %5124 = vmatprep.subr.bf16.mxu0 %v3399
    %5125 = vmatpush1.bf16.msra.mxu0 %v3398
    %5126 = vmatprep.subr.bf16.mxu0 %v3407
    %5127 = vmatpush1.bf16.msra.mxu0 %v3406
    %5128 = vmatprep.subr.bf16.mxu0 %v3415
    %5129 = vmatpush1.bf16.msra.mxu0 %v3414
    %5130 = vmatprep.subr.bf16.mxu0 %v3423
    %5131 = vmatpush1.bf16.msra.mxu0 %v3422
    %5132 = vmatprep.subr.bf16.mxu0 %v3431
    %5133 = vmatpush1.bf16.msra.mxu0 %v3430
    %5134 = vmatprep.subr.bf16.mxu0 %v3439
    %5135 = vmatpush1.bf16.msra.mxu0 %v3438
    %5136 = vmatprep.subr.bf16.mxu0 %v3447
    %5137 = vmatpush1.bf16.msra.mxu0 %v3446
    %5138 = vmatprep.subr.bf16.mxu0 %v3455
    %5139 = vmatpush1.bf16.msra.mxu0 %v3454
    %5140 = vmatprep.subr.bf16.mxu0 %v3463
    %5141 = vmatpush1.bf16.msra.mxu0 %v3462
    %5142 = vmatprep.subr.bf16.mxu0 %v3471
    %5143 = vmatpush1.bf16.msra.mxu0 %v3470
    %5144 = vmatprep.subr.bf16.mxu0 %v3479
    %5145 = vmatpush1.bf16.msra.mxu0 %v3478
    %5146 = vmatprep.subr.bf16.mxu0 %v3487
    %5147 = vmatpush1.bf16.msra.mxu0 %v3486
    %5148 = vmatprep.subr.bf16.mxu0 %v3495
    %5149 = vmatpush1.bf16.msra.mxu0 %v3494
    %5150 = vmatprep.subr.bf16.mxu0 %v3503
    %5151 = vmatpush1.bf16.msra.mxu0 %v3502
    %5152 = vmatprep.subr.bf16.mxu0 %v3511
    %5153 = vmatpush1.bf16.msra.mxu0 %v3510
    %5154 = vmatprep.subr.bf16.mxu0 %v3519
    %5155 = vmatpush1.bf16.msra.mxu0 %v3518
    %5156 = vmatprep.mubr.bf16.mxu0 %v815
    %5157 = vmatmul.mubr.bf16.gmra.mrb[0].mxu0 %v814
    %v5158 = vpop.f32.mrb[0].mxu0
    %v5159 = vadd.f32 %v5118, %v5158
    %v5160 = vpop.f32.mrb[0].mxu0
    %v5161 = vadd.f32 %v5120, %v5160
    %v5162 = vpop.f32.mrb[0].mxu0
    %v5163 = vpop.f32.mrb[0].mxu0
    %5164 = vdwg.mxu0
    %5165 = vmatprep.subr.bf16.mxu0 %v3527
    %5166 = vmatpush1.bf16.msra.mxu0 %v3526
    %5167 = vmatprep.subr.bf16.mxu0 %v3535
    %5168 = vmatpush1.bf16.msra.mxu0 %v3534
    %5169 = vmatprep.subr.bf16.mxu0 %v3543
    %5170 = vmatpush1.bf16.msra.mxu0 %v3542
    %5171 = vmatprep.subr.bf16.mxu0 %v3551
    %5172 = vmatpush1.bf16.msra.mxu0 %v3550
    %5173 = vmatprep.subr.bf16.mxu0 %v3559
    %5174 = vmatpush1.bf16.msra.mxu0 %v3558
    %5175 = vmatprep.subr.bf16.mxu0 %v3567
    %5176 = vmatpush1.bf16.msra.mxu0 %v3566
    %5177 = vmatprep.subr.bf16.mxu0 %v3575
    %5178 = vmatpush1.bf16.msra.mxu0 %v3574
    %5179 = vmatprep.subr.bf16.mxu0 %v3583
    %5180 = vmatpush1.bf16.msra.mxu0 %v3582
    %5181 = vmatprep.subr.bf16.mxu0 %v3591
    %5182 = vmatpush1.bf16.msra.mxu0 %v3590
    %5183 = vmatprep.subr.bf16.mxu0 %v3599
    %5184 = vmatpush1.bf16.msra.mxu0 %v3598
    %5185 = vmatprep.subr.bf16.mxu0 %v3607
    %5186 = vmatpush1.bf16.msra.mxu0 %v3606
    %5187 = vmatprep.subr.bf16.mxu0 %v3615
    %5188 = vmatpush1.bf16.msra.mxu0 %v3614
    %5189 = vmatprep.subr.bf16.mxu0 %v3623
    %5190 = vmatpush1.bf16.msra.mxu0 %v3622
    %5191 = vmatprep.subr.bf16.mxu0 %v3631
    %5192 = vmatpush1.bf16.msra.mxu0 %v3630
    %5193 = vmatprep.subr.bf16.mxu0 %v3639
    %5194 = vmatpush1.bf16.msra.mxu0 %v3638
    %5195 = vmatprep.subr.bf16.mxu0 %v3647
    %5196 = vmatpush1.bf16.msra.mxu0 %v3646
    %5197 = vmatprep.mubr.bf16.mxu0 %v817
    %5198 = vmatmul.mubr.bf16.gmra.mrb[0].mxu0 %v816
    %v5199 = vpop.f32.mrb[0].mxu0
    %v5200 = vadd.f32 %v5159, %v5199
    %v5201 = vpop.f32.mrb[0].mxu0
    %v5202 = vadd.f32 %v5161, %v5201
    %v5203 = vpop.f32.mrb[0].mxu0
    %v5204 = vpop.f32.mrb[0].mxu0
    %5205 = vdwg.mxu0
    %5206 = vmatprep.subr.bf16.mxu0 %v3655
    %5207 = vmatpush1.bf16.msra.mxu0 %v3654
    %5208 = vmatprep.subr.bf16.mxu0 %v3663
    %5209 = vmatpush1.bf16.msra.mxu0 %v3662
    %5210 = vmatprep.subr.bf16.mxu0 %v3671
    %5211 = vmatpush1.bf16.msra.mxu0 %v3670
    %5212 = vmatprep.subr.bf16.mxu0 %v3679
    %5213 = vmatpush1.bf16.msra.mxu0 %v3678
    %5214 = vmatprep.subr.bf16.mxu0 %v3687
    %5215 = vmatpush1.bf16.msra.mxu0 %v3686
    %5216 = vmatprep.subr.bf16.mxu0 %v3695
    %5217 = vmatpush1.bf16.msra.mxu0 %v3694
    %5218 = vmatprep.subr.bf16.mxu0 %v3703
    %5219 = vmatpush1.bf16.msra.mxu0 %v3702
    %5220 = vmatprep.subr.bf16.mxu0 %v3711
    %5221 = vmatpush1.bf16.msra.mxu0 %v3710
    %5222 = vmatprep.subr.bf16.mxu0 %v3719
    %5223 = vmatpush1.bf16.msra.mxu0 %v3718
    %5224 = vmatprep.subr.bf16.mxu0 %v3727
    %5225 = vmatpush1.bf16.msra.mxu0 %v3726
    %5226 = vmatprep.subr.bf16.mxu0 %v3735
    %5227 = vmatpush1.bf16.msra.mxu0 %v3734
    %5228 = vmatprep.subr.bf16.mxu0 %v3743
    %5229 = vmatpush1.bf16.msra.mxu0 %v3742
    %5230 = vmatprep.subr.bf16.mxu0 %v3751
    %5231 = vmatpush1.bf16.msra.mxu0 %v3750
    %5232 = vmatprep.subr.bf16.mxu0 %v3759
    %5233 = vmatpush1.bf16.msra.mxu0 %v3758
    %5234 = vmatprep.subr.bf16.mxu0 %v3767
    %5235 = vmatpush1.bf16.msra.mxu0 %v3766
    %5236 = vmatprep.subr.bf16.mxu0 %v3775
    %5237 = vmatpush1.bf16.msra.mxu0 %v3774
    %5238 = vmatprep.mubr.bf16.mxu0 %v819
    %5239 = vmatmul.mubr.bf16.gmra.mrb[0].mxu0 %v818
    %v5240 = vpop.f32.mrb[0].mxu0
    %v5241 = vadd.f32 %v5200, %v5240
    %v5242 = vpop.f32.mrb[0].mxu0
    %v5243 = vadd.f32 %v5202, %v5242
    %v5244 = vpop.f32.mrb[0].mxu0
    %v5245 = vpop.f32.mrb[0].mxu0
    %5246 = vdwg.mxu0
    %5247 = vmatprep.subr.bf16.mxu0 %v3783
    %5248 = vmatpush1.bf16.msra.mxu0 %v3782
    %5249 = vmatprep.subr.bf16.mxu0 %v3791
    %5250 = vmatpush1.bf16.msra.mxu0 %v3790
    %5251 = vmatprep.subr.bf16.mxu0 %v3799
    %5252 = vmatpush1.bf16.msra.mxu0 %v3798
    %5253 = vmatprep.subr.bf16.mxu0 %v3807
    %5254 = vmatpush1.bf16.msra.mxu0 %v3806
    %5255 = vmatprep.subr.bf16.mxu0 %v3815
    %5256 = vmatpush1.bf16.msra.mxu0 %v3814
    %5257 = vmatprep.subr.bf16.mxu0 %v3823
    %5258 = vmatpush1.bf16.msra.mxu0 %v3822
    %5259 = vmatprep.subr.bf16.mxu0 %v3831
    %5260 = vmatpush1.bf16.msra.mxu0 %v3830
    %5261 = vmatprep.subr.bf16.mxu0 %v3839
    %5262 = vmatpush1.bf16.msra.mxu0 %v3838
    %5263 = vmatprep.subr.bf16.mxu0 %v3847
    %5264 = vmatpush1.bf16.msra.mxu0 %v3846
    %5265 = vmatprep.subr.bf16.mxu0 %v3855
    %5266 = vmatpush1.bf16.msra.mxu0 %v3854
    %5267 = vmatprep.subr.bf16.mxu0 %v3863
    %5268 = vmatpush1.bf16.msra.mxu0 %v3862
    %5269 = vmatprep.subr.bf16.mxu0 0
    %5270 = vmatpush1.bf16.msra.mxu0 0
    %5271 = vmatprep.subr.bf16.mxu0 0
    %5272 = vmatpush1.bf16.msra.mxu0 0
    %5273 = vmatprep.subr.bf16.mxu0 0
    %5274 = vmatpush1.bf16.msra.mxu0 0
    %5275 = vmatprep.subr.bf16.mxu0 0
    %5276 = vmatpush1.bf16.msra.mxu0 0
    %5277 = vmatprep.subr.bf16.mxu0 0
    %5278 = vmatpush1.bf16.msra.mxu0 0
    %5279 = vmatprep.mubr.bf16.mxu0 %v4466
    %5280 = vmatmul.mubr.bf16.gmra.mrb[0].mxu0 %v820
    %v5281 = vpop.f32.mrb[0].mxu0
    %v5282 = vadd.f32 %v5241, %v5281
    %v5283 = vpop.f32.mrb[0].mxu0
    %v5284 = vadd.f32 %v5243, %v5283
    %v5285 = vpop.f32.mrb[0].mxu0
    %v5286 = vpop.f32.mrb[0].mxu0
    %5287 = vdwg.mxu0
    %v5288 = vxor.u32 %v4667, 2147483648
    %v5289 = vxor.u32 %v4669, 2147483648
    %v5290 = vxor.u32 %v4872, 2147483648
    %v5291 = vxor.u32 %v4874, 2147483648
    %v5292 = vxor.u32 %v5077, 2147483648
    %v5293 = vxor.u32 %v5079, 2147483648
    %v5294 = vxor.u32 %v5282, 2147483648
    %v5295 = vxor.u32 %v5284, 2147483648
    %v5296 = vmul.f32 %v5288, 1.442695
    %v5297 = vpow.pop %v5296
    %v5298 = vmul.f32 %v5289, 1.442695
    %v5299 = vpow.pop %v5298
    %v5300 = vmul.f32 %v5290, 1.442695
    %v5301 = vpow.pop %v5300
    %v5302 = vmul.f32 %v5291, 1.442695
    %v5303 = vpow.pop %v5302
    %v5304 = vmul.f32 %v5292, 1.442695
    %v5305 = vpow.pop %v5304
    %v5306 = vmul.f32 %v5293, 1.442695
    %v5307 = vpow.pop %v5306
    %v5308 = vmul.f32 %v5294, 1.442695
    %v5309 = vpow.pop %v5308
    %v5310 = vmul.f32 %v5295, 1.442695
    %v5311 = vpow.pop %v5310
    %v5312 = vadd.f32 %v5297, 1.0
    %v5313 = vadd.f32 %v5299, 1.0
    %v5314 = vadd.f32 %v5301, 1.0
    %v5315 = vadd.f32 %v5303, 1.0
    %v5316 = vadd.f32 %v5305, 1.0
    %v5317 = vadd.f32 %v5307, 1.0
    %v5318 = vadd.f32 %v5309, 1.0
    %v5319 = vadd.f32 %v5311, 1.0
    %v5320 = vrcp.pop %v5312
    %v5321 = vmul.f32 1.0, %v5320
    %v5322 = vrcp.pop %v5313
    %v5323 = vmul.f32 1.0, %v5322
    %v5324 = vrcp.pop %v5314
    %v5325 = vmul.f32 1.0, %v5324
    %v5326 = vrcp.pop %v5315
    %v5327 = vmul.f32 1.0, %v5326
    %v5328 = vrcp.pop %v5316
    %v5329 = vmul.f32 1.0, %v5328
    %v5330 = vrcp.pop %v5317
    %v5331 = vmul.f32 1.0, %v5330
    %v5332 = vrcp.pop %v5318
    %v5333 = vmul.f32 1.0, %v5332
    %v5334 = vrcp.pop %v5319
    %v5335 = vmul.f32 1.0, %v5334
    %v5336 = vpack.c.bf16 %v5321, %v5321
    %v5337 = vpack.c.bf16 %v5323, %v5323
    %v5338 = vpack.c.bf16 %v5325, %v5325
    %v5339 = vpack.c.bf16 %v5327, %v5327
    %v5340 = vpack.c.bf16 %v5329, %v5329
    %v5341 = vpack.c.bf16 %v5331, %v5331
    %v5342 = vpack.c.bf16 %v5333, %v5333
    %v5343 = vpack.c.bf16 %v5335, %v5335
    %v5344 = vld [vmem:[#allocation6] sm:$0xf]
    %v5345 = vld [vmem:[#allocation6 + $0x4] sm:$0xf]
    %v5346 = vld [vmem:[#allocation6 + $0x8] sm:$0xf]
    %v5347 = vld [vmem:[#allocation6 + $0xc] sm:$0xf]
    %v5348 = vld [vmem:[#allocation6 + $0x10] sm:$0xf]
    %v5349 = vld [vmem:[#allocation6 + $0x14] sm:$0xf]
    %v5350 = vld [vmem:[#allocation6 + $0x18] sm:$0xf]
    %v5351 = vld [vmem:[#allocation6 + $0x1c] sm:$0xf]
    %v5352 = vld [vmem:[#allocation6 + $0x20] sm:$0xf]
    %v5353 = vld [vmem:[#allocation6 + $0x24] sm:$0xf]
    %v5354 = vld [vmem:[#allocation6 + $0x28] sm:$0xf]
    %v5355 = vld [vmem:[#allocation6 + $0x2c] sm:$0xf]
    %v5356 = vld [vmem:[#allocation6 + $0x30] sm:$0xf]
    %v5357 = vld [vmem:[#allocation6 + $0x34] sm:$0xf]
    %v5358 = vld [vmem:[#allocation6 + $0x38] sm:$0xf]
    %v5359 = vld [vmem:[#allocation6 + $0x3c] sm:$0xf]
    %v5360 = vld [vmem:[#allocation6 + $0x40] sm:$0xf]
    %v5361 = vld [vmem:[#allocation6 + $0x44] sm:$0xf]
    %v5362 = vld [vmem:[#allocation6 + $0x48] sm:$0xf]
    %v5363 = vld [vmem:[#allocation6 + $0x4c] sm:$0xf]
    %v5364 = vld [vmem:[#allocation6 + $0x50] sm:$0xf]
    %v5365 = vld [vmem:[#allocation6 + $0x54] sm:$0xf]
    %v5366 = vld [vmem:[#allocation6 + $0x58] sm:$0xf]
    %v5367 = vld [vmem:[#allocation6 + $0x5c] sm:$0xf]
    %v5368 = vld [vmem:[#allocation6 + $0x60] sm:$0xf]
    %v5369 = vld [vmem:[#allocation6 + $0x64] sm:$0xf]
    %v5370 = vld [vmem:[#allocation6 + $0x68] sm:$0xf]
    %v5371 = vld [vmem:[#allocation6 + $0x6c] sm:$0xf]
    %v5372 = vld [vmem:[#allocation6 + $0x70] sm:$0xf]
    %v5373 = vld [vmem:[#allocation6 + $0x74] sm:$0xf]
    %v5374 = vld [vmem:[#allocation6 + $0x78] sm:$0xf]
    %v5375 = vld [vmem:[#allocation6 + $0x7c] sm:$0xf]
    %v5376 = vld [vmem:[#allocation6 + $0x80] sm:$0xf]
    %v5377 = vld [vmem:[#allocation6 + $0x84] sm:$0xf]
    %v5378 = vld [vmem:[#allocation6 + $0x88] sm:$0xf]
    %v5379 = vld [vmem:[#allocation6 + $0x8c] sm:$0xf]
    %v5380 = vld [vmem:[#allocation6 + $0x90] sm:$0xf]
    %v5381 = vld [vmem:[#allocation6 + $0x94] sm:$0xf]
    %v5382 = vld [vmem:[#allocation6 + $0x98] sm:$0xf]
    %v5383 = vld [vmem:[#allocation6 + $0x9c] sm:$0xf]
    %v5384 = vld [vmem:[#allocation6 + $0xa0] sm:$0xf]
    %v5385 = vld [vmem:[#allocation6 + $0xa4] sm:$0xf]
    %v5386 = vld [vmem:[#allocation6 + $0xa8] sm:$0xf]
    %v5387 = vld [vmem:[#allocation6 + $0xac] sm:$0xf]
    %v5388 = vld [vmem:[#allocation6 + $0xb0] sm:$0xf]
    %v5389 = vld [vmem:[#allocation6 + $0xb4] sm:$0xf]
    %v5390 = vld [vmem:[#allocation6 + $0xb8] sm:$0xf]
    %v5391 = vld [vmem:[#allocation6 + $0xbc] sm:$0xf]
    %v5392 = vld [vmem:[#allocation6 + $0xc0] sm:$0xf]
    %v5393 = vld [vmem:[#allocation6 + $0xc4] sm:$0xf]
    %v5394 = vld [vmem:[#allocation6 + $0xc8] sm:$0xf]
    %v5395 = vld [vmem:[#allocation6 + $0xcc] sm:$0xf]
    %v5396 = vld [vmem:[#allocation6 + $0xd0] sm:$0xf]
    %v5397 = vld [vmem:[#allocation6 + $0xd4] sm:$0xf]
    %v5398 = vld [vmem:[#allocation6 + $0xd8] sm:$0xf]
    %v5399 = vld [vmem:[#allocation6 + $0xdc] sm:$0xf]
    %v5400 = vld [vmem:[#allocation6 + $0xe0] sm:$0xf]
    %v5401 = vld [vmem:[#allocation6 + $0xe4] sm:$0xf]
    %v5402 = vld [vmem:[#allocation6 + $0xe8] sm:$0xf]
    %v5403 = vld [vmem:[#allocation6 + $0xec] sm:$0xf]
    %v5404 = vld [vmem:[#allocation6 + $0xf0] sm:$0xf]
    %v5405 = vld [vmem:[#allocation6 + $0xf4] sm:$0xf]
    %v5406 = vld [vmem:[#allocation6 + $0xf8] sm:$0xf]
    %v5407 = vld [vmem:[#allocation6 + $0xfc] sm:$0xf]
    %v5408 = vld [vmem:[#allocation6 + $0x100] sm:$0xf]
    %v5409 = vld [vmem:[#allocation6 + $0x104] sm:$0xf]
    %v5410 = vld [vmem:[#allocation6 + $0x108] sm:$0xf]
    %v5411 = vld [vmem:[#allocation6 + $0x10c] sm:$0xf]
    %v5412 = vld [vmem:[#allocation6 + $0x110] sm:$0xf]
    %v5413 = vld [vmem:[#allocation6 + $0x114] sm:$0xf]
    %v5414 = vld [vmem:[#allocation6 + $0x118] sm:$0xf]
    %v5415 = vld [vmem:[#allocation6 + $0x11c] sm:$0xf]
    %v5416 = vld [vmem:[#allocation6 + $0x120] sm:$0xf]
    %v5417 = vld [vmem:[#allocation6 + $0x124] sm:$0xf]
    %v5418 = vld [vmem:[#allocation6 + $0x128] sm:$0xf]
    %v5419 = vld [vmem:[#allocation6 + $0x12c] sm:$0xf]
    %v5420 = vld [vmem:[#allocation6 + $0x130] sm:$0xf]
    %v5421 = vld [vmem:[#allocation6 + $0x134] sm:$0xf]
    %v5422 = vld [vmem:[#allocation6 + $0x138] sm:$0xf]
    %v5423 = vld [vmem:[#allocation6 + $0x13c] sm:$0xf]
    %v5424 = vld [vmem:[#allocation6 + $0x140] sm:$0xf]
    %v5425 = vld [vmem:[#allocation6 + $0x144] sm:$0xf]
    %v5426 = vld [vmem:[#allocation6 + $0x148] sm:$0xf]
    %v5427 = vld [vmem:[#allocation6 + $0x14c] sm:$0xf]
    %v5428 = vld [vmem:[#allocation6 + $0x150] sm:$0xf]
    %v5429 = vld [vmem:[#allocation6 + $0x154] sm:$0xf]
    %v5430 = vld [vmem:[#allocation6 + $0x158] sm:$0xf]
    %v5431 = vld [vmem:[#allocation6 + $0x15c] sm:$0xf]
    %v5432 = vld [vmem:[#allocation6 + $0x160] sm:$0xf]
    %v5433 = vld [vmem:[#allocation6 + $0x164] sm:$0xf]
    %v5434 = vld [vmem:[#allocation6 + $0x168] sm:$0xf]
    %v5435 = vld [vmem:[#allocation6 + $0x16c] sm:$0xf]
    %v5436 = vld [vmem:[#allocation6 + $0x170] sm:$0xf]
    %v5437 = vld [vmem:[#allocation6 + $0x174] sm:$0xf]
    %v5438 = vld [vmem:[#allocation6 + $0x178] sm:$0xf]
    %v5439 = vld [vmem:[#allocation6 + $0x17c] sm:$0xf]
    %v5440 = vld [vmem:[#allocation6 + $0x180] sm:$0xf]
    %v5441 = vld [vmem:[#allocation6 + $0x184] sm:$0xf]
    %v5442 = vld [vmem:[#allocation6 + $0x188] sm:$0xf]
    %v5443 = vld [vmem:[#allocation6 + $0x18c] sm:$0xf]
    %v5444 = vld [vmem:[#allocation6 + $0x190] sm:$0xf]
    %v5445 = vld [vmem:[#allocation6 + $0x194] sm:$0xf]
    %v5446 = vld [vmem:[#allocation6 + $0x198] sm:$0xf]
    %v5447 = vld [vmem:[#allocation6 + $0x19c] sm:$0xf]
    %v5448 = vld [vmem:[#allocation6 + $0x1a0] sm:$0xf]
    %v5449 = vld [vmem:[#allocation6 + $0x1a4] sm:$0xf]
    %v5450 = vld [vmem:[#allocation6 + $0x1a8] sm:$0xf]
    %v5451 = vld [vmem:[#allocation6 + $0x1ac] sm:$0xf]
    %v5452 = vld [vmem:[#allocation6 + $0x1b0] sm:$0xf]
    %v5453 = vld [vmem:[#allocation6 + $0x1b4] sm:$0xf]
    %v5454 = vld [vmem:[#allocation6 + $0x1b8] sm:$0xf]
    %v5455 = vld [vmem:[#allocation6 + $0x1bc] sm:$0xf]
    %v5456 = vld [vmem:[#allocation6 + $0x1c0] sm:$0xf]
    %v5457 = vld [vmem:[#allocation6 + $0x1c4] sm:$0xf]
    %v5458 = vld [vmem:[#allocation6 + $0x1c8] sm:$0xf]
    %v5459 = vld [vmem:[#allocation6 + $0x1cc] sm:$0xf]
    %v5460 = vld [vmem:[#allocation6 + $0x1d0] sm:$0xf]
    %v5461 = vld [vmem:[#allocation6 + $0x1d4] sm:$0xf]
    %v5462 = vld [vmem:[#allocation6 + $0x1d8] sm:$0xf]
    %v5463 = vld [vmem:[#allocation6 + $0x1dc] sm:$0xf]
    %v5464 = vld [vmem:[#allocation6 + $0x1e0] sm:$0xf]
    %v5465 = vld [vmem:[#allocation6 + $0x1e4] sm:$0xf]
    %v5466 = vld [vmem:[#allocation6 + $0x1e8] sm:$0xf]
    %v5467 = vld [vmem:[#allocation6 + $0x1ec] sm:$0xf]
    %v5468 = vld [vmem:[#allocation6 + $0x1f0] sm:$0xf]
    %v5469 = vld [vmem:[#allocation6 + $0x1f4] sm:$0xf]
    %v5470 = vld [vmem:[#allocation6 + $0x1f8] sm:$0xf]
    %v5471 = vld [vmem:[#allocation6 + $0x1fc] sm:$0xf]
    %v5472 = vld [vmem:[#allocation7] sm:$0x1]
    %v5474 = vlaneseq
    %v5475 = vshrl.u32 %v5474, 7
    %v5476 = vsub.s32 0, %v5475
    %v5477 = vrot.slane %v5472, %v5476
    %v5607 = vunpack.c.l.b16 %v5344
    %v5608 = vunpack.c.l.b16 %v5345
    %v5609 = vunpack.c.l.b16 %v5346
    %v5610 = vunpack.c.l.b16 %v5347
    %v5611 = vunpack.c.l.b16 %v5348
    %v5612 = vunpack.c.l.b16 %v5349
    %v5613 = vunpack.c.l.b16 %v5350
    %v5614 = vunpack.c.l.b16 %v5351
    %v5615 = vunpack.c.l.b16 %v5352
    %v5616 = vunpack.c.l.b16 %v5353
    %v5617 = vunpack.c.l.b16 %v5354
    %v5618 = vunpack.c.l.b16 %v5355
    %v5619 = vunpack.c.l.b16 %v5356
    %v5620 = vunpack.c.l.b16 %v5357
    %v5621 = vunpack.c.l.b16 %v5358
    %v5622 = vunpack.c.l.b16 %v5359
    %v5623 = vunpack.c.l.b16 %v5360
    %v5624 = vunpack.c.l.b16 %v5361
    %v5625 = vunpack.c.l.b16 %v5362
    %v5626 = vunpack.c.l.b16 %v5363
    %v5627 = vunpack.c.l.b16 %v5364
    %v5628 = vunpack.c.l.b16 %v5365
    %v5629 = vunpack.c.l.b16 %v5366
    %v5630 = vunpack.c.l.b16 %v5367
    %v5631 = vunpack.c.l.b16 %v5368
    %v5632 = vunpack.c.l.b16 %v5369
    %v5633 = vunpack.c.l.b16 %v5370
    %v5634 = vunpack.c.l.b16 %v5371
    %v5635 = vunpack.c.l.b16 %v5372
    %v5636 = vunpack.c.l.b16 %v5373
    %v5637 = vunpack.c.l.b16 %v5374
    %v5638 = vunpack.c.l.b16 %v5375
    %v5639 = vunpack.c.l.b16 %v5376
    %v5640 = vunpack.c.l.b16 %v5377
    %v5641 = vunpack.c.l.b16 %v5378
    %v5642 = vunpack.c.l.b16 %v5379
    %v5643 = vunpack.c.l.b16 %v5380
    %v5644 = vunpack.c.l.b16 %v5381
    %v5645 = vunpack.c.l.b16 %v5382
    %v5646 = vunpack.c.l.b16 %v5383
    %v5647 = vunpack.c.l.b16 %v5384
    %v5648 = vunpack.c.l.b16 %v5385
    %v5649 = vunpack.c.l.b16 %v5386
    %v5650 = vunpack.c.l.b16 %v5387
    %v5651 = vunpack.c.l.b16 %v5388
    %v5652 = vunpack.c.l.b16 %v5389
    %v5653 = vunpack.c.l.b16 %v5390
    %v5654 = vunpack.c.l.b16 %v5391
    %v5655 = vunpack.c.l.b16 %v5392
    %v5656 = vunpack.c.l.b16 %v5393
    %v5657 = vunpack.c.l.b16 %v5394
    %v5658 = vunpack.c.l.b16 %v5395
    %v5659 = vunpack.c.l.b16 %v5396
    %v5660 = vunpack.c.l.b16 %v5397
    %v5661 = vunpack.c.l.b16 %v5398
    %v5662 = vunpack.c.l.b16 %v5399
    %v5663 = vunpack.c.l.b16 %v5400
    %v5664 = vunpack.c.l.b16 %v5401
    %v5665 = vunpack.c.l.b16 %v5402
    %v5666 = vunpack.c.l.b16 %v5403
    %v5667 = vunpack.c.l.b16 %v5404
    %v5668 = vunpack.c.l.b16 %v5405
    %v5669 = vunpack.c.l.b16 %v5406
    %v5670 = vunpack.c.l.b16 %v5407
    %v5671 = vunpack.c.l.b16 %v5408
    %v5672 = vunpack.c.l.b16 %v5409
    %v5673 = vunpack.c.l.b16 %v5410
    %v5674 = vunpack.c.l.b16 %v5411
    %v5675 = vunpack.c.l.b16 %v5412
    %v5676 = vunpack.c.l.b16 %v5413
    %v5677 = vunpack.c.l.b16 %v5414
    %v5678 = vunpack.c.l.b16 %v5415
    %v5679 = vunpack.c.l.b16 %v5416
    %v5680 = vunpack.c.l.b16 %v5417
    %v5681 = vunpack.c.l.b16 %v5418
    %v5682 = vunpack.c.l.b16 %v5419
    %v5683 = vunpack.c.l.b16 %v5420
    %v5684 = vunpack.c.l.b16 %v5421
    %v5685 = vunpack.c.l.b16 %v5422
    %v5686 = vunpack.c.l.b16 %v5423
    %v5687 = vunpack.c.l.b16 %v5424
    %v5688 = vunpack.c.l.b16 %v5425
    %v5689 = vunpack.c.l.b16 %v5426
    %v5690 = vunpack.c.l.b16 %v5427
    %v5691 = vunpack.c.l.b16 %v5428
    %v5692 = vunpack.c.l.b16 %v5429
    %v5693 = vunpack.c.l.b16 %v5430
    %v5694 = vunpack.c.l.b16 %v5431
    %v5695 = vunpack.c.l.b16 %v5432
    %v5696 = vunpack.c.l.b16 %v5433
    %v5697 = vunpack.c.l.b16 %v5434
    %v5698 = vunpack.c.l.b16 %v5435
    %v5699 = vunpack.c.l.b16 %v5436
    %v5700 = vunpack.c.l.b16 %v5437
    %v5701 = vunpack.c.l.b16 %v5438
    %v5702 = vunpack.c.l.b16 %v5439
    %v5703 = vunpack.c.l.b16 %v5440
    %v5704 = vunpack.c.l.b16 %v5441
    %v5705 = vunpack.c.l.b16 %v5442
    %v5706 = vunpack.c.l.b16 %v5443
    %v5707 = vunpack.c.l.b16 %v5444
    %v5708 = vunpack.c.l.b16 %v5445
    %v5709 = vunpack.c.l.b16 %v5446
    %v5710 = vunpack.c.l.b16 %v5447
    %v5711 = vunpack.c.l.b16 %v5448
    %v5712 = vunpack.c.l.b16 %v5449
    %v5713 = vunpack.c.l.b16 %v5450
    %v5714 = vunpack.c.l.b16 %v5451
    %v5715 = vunpack.c.l.b16 %v5452
    %v5716 = vunpack.c.l.b16 %v5453
    %v5717 = vunpack.c.l.b16 %v5454
    %v5718 = vunpack.c.l.b16 %v5455
    %v5719 = vunpack.c.l.b16 %v5456
    %v5720 = vunpack.c.l.b16 %v5457
    %v5721 = vunpack.c.l.b16 %v5458
    %v5722 = vunpack.c.l.b16 %v5459
    %v5723 = vunpack.c.l.b16 %v5460
    %v5724 = vunpack.c.l.b16 %v5461
    %v5725 = vunpack.c.l.b16 %v5462
    %v5726 = vunpack.c.l.b16 %v5463
    %v5727 = vunpack.c.l.b16 %v5464
    %v5728 = vunpack.c.l.b16 %v5465
    %v5729 = vunpack.c.l.b16 %v5466
    %v5730 = vunpack.c.l.b16 %v5467
    %v5731 = vunpack.c.l.b16 %v5468
    %v5732 = vunpack.c.l.b16 %v5469
    %v5733 = vunpack.c.l.b16 %v5470
    %v5734 = vunpack.c.l.b16 %v5471
    %v5735 = vpack.c.b16 %v5608, %v5607
    %v5736 = vpack.c.b16 %v5610, %v5609
    %v5737 = vpack.c.b16 %v5612, %v5611
    %v5738 = vpack.c.b16 %v5614, %v5613
    %v5739 = vpack.c.b16 %v5616, %v5615
    %v5740 = vpack.c.b16 %v5618, %v5617
    %v5741 = vpack.c.b16 %v5620, %v5619
    %v5742 = vpack.c.b16 %v5622, %v5621
    %v5743 = vpack.c.b16 %v5624, %v5623
    %v5744 = vpack.c.b16 %v5626, %v5625
    %v5745 = vpack.c.b16 %v5628, %v5627
    %v5746 = vpack.c.b16 %v5630, %v5629
    %v5747 = vpack.c.b16 %v5632, %v5631
    %v5748 = vpack.c.b16 %v5634, %v5633
    %v5749 = vpack.c.b16 %v5636, %v5635
    %v5750 = vpack.c.b16 %v5638, %v5637
    %v5751 = vpack.c.b16 %v5640, %v5639
    %v5752 = vpack.c.b16 %v5642, %v5641
    %v5753 = vpack.c.b16 %v5644, %v5643
    %v5754 = vpack.c.b16 %v5646, %v5645
    %v5755 = vpack.c.b16 %v5648, %v5647
    %v5756 = vpack.c.b16 %v5650, %v5649
    %v5757 = vpack.c.b16 %v5652, %v5651
    %v5758 = vpack.c.b16 %v5654, %v5653
    %v5759 = vpack.c.b16 %v5656, %v5655
    %v5760 = vpack.c.b16 %v5658, %v5657
    %v5761 = vpack.c.b16 %v5660, %v5659
    %v5762 = vpack.c.b16 %v5662, %v5661
    %v5763 = vpack.c.b16 %v5664, %v5663
    %v5764 = vpack.c.b16 %v5666, %v5665
    %v5765 = vpack.c.b16 %v5668, %v5667
    %v5766 = vpack.c.b16 %v5670, %v5669
    %v5767 = vpack.c.b16 %v5672, %v5671
    %v5768 = vpack.c.b16 %v5674, %v5673
    %v5769 = vpack.c.b16 %v5676, %v5675
    %v5770 = vpack.c.b16 %v5678, %v5677
    %v5771 = vpack.c.b16 %v5680, %v5679
    %v5772 = vpack.c.b16 %v5682, %v5681
    %v5773 = vpack.c.b16 %v5684, %v5683
    %v5774 = vpack.c.b16 %v5686, %v5685
    %v5775 = vpack.c.b16 %v5688, %v5687
    %v5776 = vpack.c.b16 %v5690, %v5689
    %v5777 = vpack.c.b16 %v5692, %v5691
    %v5778 = vpack.c.b16 %v5694, %v5693
    %v5779 = vpack.c.b16 %v5696, %v5695
    %v5780 = vpack.c.b16 %v5698, %v5697
    %v5781 = vpack.c.b16 %v5700, %v5699
    %v5782 = vpack.c.b16 %v5702, %v5701
    %v5783 = vpack.c.b16 %v5704, %v5703
    %v5784 = vpack.c.b16 %v5706, %v5705
    %v5785 = vpack.c.b16 %v5708, %v5707
    %v5786 = vpack.c.b16 %v5710, %v5709
    %v5787 = vpack.c.b16 %v5712, %v5711
    %v5788 = vpack.c.b16 %v5714, %v5713
    %v5789 = vpack.c.b16 %v5716, %v5715
    %v5790 = vpack.c.b16 %v5718, %v5717
    %v5791 = vpack.c.b16 %v5720, %v5719
    %v5792 = vpack.c.b16 %v5722, %v5721
    %v5793 = vpack.c.b16 %v5724, %v5723
    %v5794 = vpack.c.b16 %v5726, %v5725
    %v5795 = vpack.c.b16 %v5728, %v5727
    %v5796 = vpack.c.b16 %v5730, %v5729
    %v5797 = vpack.c.b16 %v5732, %v5731
    %v5798 = vpack.c.b16 %v5734, %v5733
    %5863 = vmatprep.subr.bf16.mxu0 0
    %5864 = vmatpush1.bf16.msra.mxu0 %v5735
    %5865 = vmatprep.subr.bf16.mxu0 0
    %5866 = vmatpush1.bf16.msra.mxu0 %v5736
    %5867 = vmatprep.subr.bf16.mxu0 0
    %5868 = vmatpush1.bf16.msra.mxu0 %v5737
    %5869 = vmatprep.subr.bf16.mxu0 0
    %5870 = vmatpush1.bf16.msra.mxu0 %v5738
    %5871 = vmatprep.subr.bf16.mxu0 0
    %5872 = vmatpush1.bf16.msra.mxu0 %v5739
    %5873 = vmatprep.subr.bf16.mxu0 0
    %5874 = vmatpush1.bf16.msra.mxu0 %v5740
    %5875 = vmatprep.subr.bf16.mxu0 0
    %5876 = vmatpush1.bf16.msra.mxu0 %v5741
    %5877 = vmatprep.subr.bf16.mxu0 0
    %5878 = vmatpush1.bf16.msra.mxu0 %v5742
    %5879 = vmatprep.subr.bf16.mxu0 0
    %5880 = vmatpush1.bf16.msra.mxu0 %v5743
    %5881 = vmatprep.subr.bf16.mxu0 0
    %5882 = vmatpush1.bf16.msra.mxu0 %v5744
    %5883 = vmatprep.subr.bf16.mxu0 0
    %5884 = vmatpush1.bf16.msra.mxu0 %v5745
    %5885 = vmatprep.subr.bf16.mxu0 0
    %5886 = vmatpush1.bf16.msra.mxu0 %v5746
    %5887 = vmatprep.subr.bf16.mxu0 0
    %5888 = vmatpush1.bf16.msra.mxu0 %v5747
    %5889 = vmatprep.subr.bf16.mxu0 0
    %5890 = vmatpush1.bf16.msra.mxu0 %v5748
    %5891 = vmatprep.subr.bf16.mxu0 0
    %5892 = vmatpush1.bf16.msra.mxu0 %v5749
    %5893 = vmatprep.subr.bf16.mxu0 0
    %5894 = vmatpush1.bf16.msra.mxu0 %v5750
    %5895 = vmatprep.mubr.bf16.mxu0 %v5337
    %5896 = vmatmul.mubr.bf16.gmra.mrb[0].mxu0 %v5336
    %v5897 = vpop.f32.mrb[0].mxu0
    %v5898 = vadd.f32 %v5477, %v5897
    %v5899 = vpop.f32.mrb[0].mxu0
    %v5900 = vpop.f32.mrb[0].mxu0
    %v5901 = vpop.f32.mrb[0].mxu0
    %5902 = vdwg.mxu0
    %5903 = vmatprep.subr.bf16.mxu0 0
    %5904 = vmatpush1.bf16.msra.mxu0 %v5751
    %5905 = vmatprep.subr.bf16.mxu0 0
    %5906 = vmatpush1.bf16.msra.mxu0 %v5752
    %5907 = vmatprep.subr.bf16.mxu0 0
    %5908 = vmatpush1.bf16.msra.mxu0 %v5753
    %5909 = vmatprep.subr.bf16.mxu0 0
    %5910 = vmatpush1.bf16.msra.mxu0 %v5754
    %5911 = vmatprep.subr.bf16.mxu0 0
    %5912 = vmatpush1.bf16.msra.mxu0 %v5755
    %5913 = vmatprep.subr.bf16.mxu0 0
    %5914 = vmatpush1.bf16.msra.mxu0 %v5756
    %5915 = vmatprep.subr.bf16.mxu0 0
    %5916 = vmatpush1.bf16.msra.mxu0 %v5757
    %5917 = vmatprep.subr.bf16.mxu0 0
    %5918 = vmatpush1.bf16.msra.mxu0 %v5758
    %5919 = vmatprep.subr.bf16.mxu0 0
    %5920 = vmatpush1.bf16.msra.mxu0 %v5759
    %5921 = vmatprep.subr.bf16.mxu0 0
    %5922 = vmatpush1.bf16.msra.mxu0 %v5760
    %5923 = vmatprep.subr.bf16.mxu0 0
    %5924 = vmatpush1.bf16.msra.mxu0 %v5761
    %5925 = vmatprep.subr.bf16.mxu0 0
    %5926 = vmatpush1.bf16.msra.mxu0 %v5762
    %5927 = vmatprep.subr.bf16.mxu0 0
    %5928 = vmatpush1.bf16.msra.mxu0 %v5763
    %5929 = vmatprep.subr.bf16.mxu0 0
    %5930 = vmatpush1.bf16.msra.mxu0 %v5764
    %5931 = vmatprep.subr.bf16.mxu0 0
    %5932 = vmatpush1.bf16.msra.mxu0 %v5765
    %5933 = vmatprep.subr.bf16.mxu0 0
    %5934 = vmatpush1.bf16.msra.mxu0 %v5766
    %5935 = vmatprep.mubr.bf16.mxu0 %v5339
    %5936 = vmatmul.mubr.bf16.gmra.mrb[0].mxu0 %v5338
    %v5937 = vpop.f32.mrb[0].mxu0
    %v5938 = vadd.f32 %v5898, %v5937
    %v5939 = vpop.f32.mrb[0].mxu0
    %v5940 = vpop.f32.mrb[0].mxu0
    %v5941 = vpop.f32.mrb[0].mxu0
    %5942 = vdwg.mxu0
    %5943 = vmatprep.subr.bf16.mxu0 0
    %5944 = vmatpush1.bf16.msra.mxu0 %v5767
    %5945 = vmatprep.subr.bf16.mxu0 0
    %5946 = vmatpush1.bf16.msra.mxu0 %v5768
    %5947 = vmatprep.subr.bf16.mxu0 0
    %5948 = vmatpush1.bf16.msra.mxu0 %v5769
    %5949 = vmatprep.subr.bf16.mxu0 0
    %5950 = vmatpush1.bf16.msra.mxu0 %v5770
    %5951 = vmatprep.subr.bf16.mxu0 0
    %5952 = vmatpush1.bf16.msra.mxu0 %v5771
    %5953 = vmatprep.subr.bf16.mxu0 0
    %5954 = vmatpush1.bf16.msra.mxu0 %v5772
    %5955 = vmatprep.subr.bf16.mxu0 0
    %5956 = vmatpush1.bf16.msra.mxu0 %v5773
    %5957 = vmatprep.subr.bf16.mxu0 0
    %5958 = vmatpush1.bf16.msra.mxu0 %v5774
    %5959 = vmatprep.subr.bf16.mxu0 0
    %5960 = vmatpush1.bf16.msra.mxu0 %v5775
    %5961 = vmatprep.subr.bf16.mxu0 0
    %5962 = vmatpush1.bf16.msra.mxu0 %v5776
    %5963 = vmatprep.subr.bf16.mxu0 0
    %5964 = vmatpush1.bf16.msra.mxu0 %v5777
    %5965 = vmatprep.subr.bf16.mxu0 0
    %5966 = vmatpush1.bf16.msra.mxu0 %v5778
    %5967 = vmatprep.subr.bf16.mxu0 0
    %5968 = vmatpush1.bf16.msra.mxu0 %v5779
    %5969 = vmatprep.subr.bf16.mxu0 0
    %5970 = vmatpush1.bf16.msra.mxu0 %v5780
    %5971 = vmatprep.subr.bf16.mxu0 0
    %5972 = vmatpush1.bf16.msra.mxu0 %v5781
    %5973 = vmatprep.subr.bf16.mxu0 0
    %5974 = vmatpush1.bf16.msra.mxu0 %v5782
    %5975 = vmatprep.mubr.bf16.mxu0 %v5341
    %5976 = vmatmul.mubr.bf16.gmra.mrb[0].mxu0 %v5340
    %v5977 = vpop.f32.mrb[0].mxu0
    %v5978 = vadd.f32 %v5938, %v5977
    %v5979 = vpop.f32.mrb[0].mxu0
    %v5980 = vpop.f32.mrb[0].mxu0
    %v5981 = vpop.f32.mrb[0].mxu0
    %5982 = vdwg.mxu0
    %5983 = vmatprep.subr.bf16.mxu0 0
    %5984 = vmatpush1.bf16.msra.mxu0 %v5783
    %5985 = vmatprep.subr.bf16.mxu0 0
    %5986 = vmatpush1.bf16.msra.mxu0 %v5784
    %5987 = vmatprep.subr.bf16.mxu0 0
    %5988 = vmatpush1.bf16.msra.mxu0 %v5785
    %5989 = vmatprep.subr.bf16.mxu0 0
    %5990 = vmatpush1.bf16.msra.mxu0 %v5786
    %5991 = vmatprep.subr.bf16.mxu0 0
    %5992 = vmatpush1.bf16.msra.mxu0 %v5787
    %5993 = vmatprep.subr.bf16.mxu0 0
    %5994 = vmatpush1.bf16.msra.mxu0 %v5788
    %5995 = vmatprep.subr.bf16.mxu0 0
    %5996 = vmatpush1.bf16.msra.mxu0 %v5789
    %5997 = vmatprep.subr.bf16.mxu0 0
    %5998 = vmatpush1.bf16.msra.mxu0 %v5790
    %5999 = vmatprep.subr.bf16.mxu0 0
    %6000 = vmatpush1.bf16.msra.mxu0 %v5791
    %6001 = vmatprep.subr.bf16.mxu0 0
    %6002 = vmatpush1.bf16.msra.mxu0 %v5792
    %6003 = vmatprep.subr.bf16.mxu0 0
    %6004 = vmatpush1.bf16.msra.mxu0 %v5793
    %6005 = vmatprep.subr.bf16.mxu0 0
    %6006 = vmatpush1.bf16.msra.mxu0 %v5794
    %6007 = vmatprep.subr.bf16.mxu0 0
    %6008 = vmatpush1.bf16.msra.mxu0 %v5795
    %6009 = vmatprep.subr.bf16.mxu0 0
    %6010 = vmatpush1.bf16.msra.mxu0 %v5796
    %6011 = vmatprep.subr.bf16.mxu0 0
    %6012 = vmatpush1.bf16.msra.mxu0 %v5797
    %6013 = vmatprep.subr.bf16.mxu0 0
    %6014 = vmatpush1.bf16.msra.mxu0 %v5798
    %6015 = vmatprep.mubr.bf16.mxu0 %v5343
    %6016 = vmatmul.mubr.bf16.gmra.mrb[0].mxu0 %v5342
    %v6017 = vpop.f32.mrb[0].mxu0
    %v6018 = vadd.f32 %v5978, %v6017
    %v6019 = vpop.f32.mrb[0].mxu0
    %v6020 = vpop.f32.mrb[0].mxu0
    %v6021 = vpop.f32.mrb[0].mxu0
    %6022 = vdwg.mxu0
    %v6023 = vxor.u32 %v6018, 2147483648
    %v6024 = vmul.f32 %v6023, 1.442695
    %v6025 = vpow.pop %v6024
    %v6026 = vadd.f32 %v6025, 1.0
    %v6027 = vrcp.pop %v6026
    %v6028 = vmul.f32 1.0, %v6027
    %v6029 = vpack.c.bf16 %v6028, %v6028
    %v6030 = vld [vmem:[#allocation9] sm:$0xf]
    %v6031 = vld [vmem:[#allocation9 + $0x4] sm:$0xf]
    %v6032 = vld [vmem:[#allocation9 + $0x8] sm:$0xf]
    %v6033 = vld [vmem:[#allocation9 + $0xc] sm:$0xf]
    %v6034 = vld [vmem:[#allocation9 + $0x10] sm:$0xf]
    %v6035 = vld [vmem:[#allocation9 + $0x14] sm:$0xf]
    %v6036 = vld [vmem:[#allocation9 + $0x18] sm:$0xf]
    %v6037 = vld [vmem:[#allocation9 + $0x1c] sm:$0xf]
    %v6038 = vld [vmem:[#allocation9 + $0x20] sm:$0xf]
    %v6039 = vld [vmem:[#allocation9 + $0x24] sm:$0xf]
    %v6040 = vld [vmem:[#allocation9 + $0x28] sm:$0xf]
    %v6041 = vld [vmem:[#allocation9 + $0x2c] sm:$0xf]
    %v6042 = vld [vmem:[#allocation9 + $0x30] sm:$0xf]
    %v6043 = vld [vmem:[#allocation9 + $0x34] sm:$0xf]
    %v6044 = vld [vmem:[#allocation9 + $0x38] sm:$0xf]
    %v6045 = vld [vmem:[#allocation9 + $0x3c] sm:$0xf]
    %v6046 = vld [vmem:[#allocation10] sm:$0xf]
    %v6047 = vld [vmem:[#allocation10 + $0x4] sm:$0xf]
    %v6048 = vld [vmem:[#allocation10 + $0x8] sm:$0xf]
    %v6049 = vld [vmem:[#allocation10 + $0xc] sm:$0xf]
    %v6050 = vld [vmem:[#allocation10 + $0x10] sm:$0xf]
    %v6051 = vld [vmem:[#allocation10 + $0x14] sm:$0xf]
    %v6052 = vld [vmem:[#allocation10 + $0x18] sm:$0xf]
    %v6053 = vld [vmem:[#allocation10 + $0x1c] sm:$0xf]
    %v6054 = vld [vmem:[#allocation10 + $0x20] sm:$0xf]
    %v6055 = vld [vmem:[#allocation10 + $0x24] sm:$0xf]
    %v6056 = vld [vmem:[#allocation10 + $0x28] sm:$0xf]
    %v6057 = vld [vmem:[#allocation10 + $0x2c] sm:$0xf]
    %v6058 = vld [vmem:[#allocation10 + $0x30] sm:$0xf]
    %v6059 = vld [vmem:[#allocation10 + $0x34] sm:$0xf]
    %v6060 = vld [vmem:[#allocation10 + $0x38] sm:$0xf]
    %v6061 = vld [vmem:[#allocation10 + $0x3c] sm:$0xf]
    %v6078 = vunpack.c.l.b16 %v6046
    %v6079 = vunpack.c.l.b16 %v6047
    %v6080 = vunpack.c.l.b16 %v6048
    %v6081 = vunpack.c.l.b16 %v6049
    %v6082 = vunpack.c.l.b16 %v6050
    %v6083 = vunpack.c.l.b16 %v6051
    %v6084 = vunpack.c.l.b16 %v6052
    %v6085 = vunpack.c.l.b16 %v6053
    %v6086 = vunpack.c.l.b16 %v6054
    %v6087 = vunpack.c.l.b16 %v6055
    %v6088 = vunpack.c.l.b16 %v6056
    %v6089 = vunpack.c.l.b16 %v6057
    %v6090 = vunpack.c.l.b16 %v6058
    %v6091 = vunpack.c.l.b16 %v6059
    %v6092 = vunpack.c.l.b16 %v6060
    %v6093 = vunpack.c.l.b16 %v6061
    %v6094 = vpack.c.b16 %v6079, %v6078
    %v6095 = vpack.c.b16 %v6081, %v6080
    %v6096 = vpack.c.b16 %v6083, %v6082
    %v6097 = vpack.c.b16 %v6085, %v6084
    %v6098 = vpack.c.b16 %v6087, %v6086
    %v6099 = vpack.c.b16 %v6089, %v6088
    %v6100 = vpack.c.b16 %v6091, %v6090
    %v6101 = vpack.c.b16 %v6093, %v6092
    %6110 = vmatprep.subr.bf16.mxu0 0
    %6111 = vmatpush1.bf16.msra.mxu0 %v6094
    %6112 = vmatprep.subr.bf16.mxu0 0
    %6113 = vmatpush1.bf16.msra.mxu0 %v6095
    %6114 = vmatprep.subr.bf16.mxu0 0
    %6115 = vmatpush1.bf16.msra.mxu0 %v6096
    %6116 = vmatprep.subr.bf16.mxu0 0
    %6117 = vmatpush1.bf16.msra.mxu0 %v6097
    %6118 = vmatprep.subr.bf16.mxu0 0
    %6119 = vmatpush1.bf16.msra.mxu0 %v6098
    %6120 = vmatprep.subr.bf16.mxu0 0
    %6121 = vmatpush1.bf16.msra.mxu0 %v6099
    %6122 = vmatprep.subr.bf16.mxu0 0
    %6123 = vmatpush1.bf16.msra.mxu0 %v6100
    %6124 = vmatprep.subr.bf16.mxu0 0
    %6125 = vmatpush1.bf16.msra.mxu0 %v6101
    %6126 = vmatprep.subr.bf16.mxu0 0
    %6127 = vmatpush1.bf16.msra.mxu0 0
    %6128 = vmatprep.subr.bf16.mxu0 0
    %6129 = vmatpush1.bf16.msra.mxu0 0
    %6130 = vmatprep.subr.bf16.mxu0 0
    %6131 = vmatpush1.bf16.msra.mxu0 0
    %6132 = vmatprep.subr.bf16.mxu0 0
    %6133 = vmatpush1.bf16.msra.mxu0 0
    %6134 = vmatprep.subr.bf16.mxu0 0
    %6135 = vmatpush1.bf16.msra.mxu0 0
    %6136 = vmatprep.subr.bf16.mxu0 0
    %6137 = vmatpush1.bf16.msra.mxu0 0
    %6138 = vmatprep.subr.bf16.mxu0 0
    %6139 = vmatpush1.bf16.msra.mxu0 0
    %6140 = vmatprep.subr.bf16.mxu0 0
    %6141 = vmatpush1.bf16.msra.mxu0 0
    %6142 = vmatprep.mubr.bf16.mxu0 0
    %6143 = vmatmul.mubr.bf16.gmra.mrb[0].mxu0 %v5336
    %v6144 = vpop.f32.mrb[0].mxu0
    %v6145 = vadd.f32 0.0, %v6144
    %v6146 = vpop.f32.mrb[0].mxu0
    %v6147 = vpop.f32.mrb[0].mxu0
    %v6148 = vpop.f32.mrb[0].mxu0
    %6149 = vdwg.mxu0
    %v6166 = vunpack.c.l.b16 %v6030
    %v6167 = vunpack.c.l.b16 %v6031
    %v6168 = vunpack.c.l.b16 %v6032
    %v6169 = vunpack.c.l.b16 %v6033
    %v6170 = vunpack.c.l.b16 %v6034
    %v6171 = vunpack.c.l.b16 %v6035
    %v6172 = vunpack.c.l.b16 %v6036
    %v6173 = vunpack.c.l.b16 %v6037
    %v6174 = vunpack.c.l.b16 %v6038
    %v6175 = vunpack.c.l.b16 %v6039
    %v6176 = vunpack.c.l.b16 %v6040
    %v6177 = vunpack.c.l.b16 %v6041
    %v6178 = vunpack.c.l.b16 %v6042
    %v6179 = vunpack.c.l.b16 %v6043
    %v6180 = vunpack.c.l.b16 %v6044
    %v6181 = vunpack.c.l.b16 %v6045
    %v6182 = vpack.c.b16 %v6167, %v6166
    %v6183 = vpack.c.b16 %v6169, %v6168
    %v6184 = vpack.c.b16 %v6171, %v6170
    %v6185 = vpack.c.b16 %v6173, %v6172
    %v6186 = vpack.c.b16 %v6175, %v6174
    %v6187 = vpack.c.b16 %v6177, %v6176
    %v6188 = vpack.c.b16 %v6179, %v6178
    %v6189 = vpack.c.b16 %v6181, %v6180
    %6198 = vmatprep.subr.bf16.mxu0 0
    %6199 = vmatpush1.bf16.msra.mxu0 %v6182
    %6200 = vmatprep.subr.bf16.mxu0 0
    %6201 = vmatpush1.bf16.msra.mxu0 %v6183
    %6202 = vmatprep.subr.bf16.mxu0 0
    %6203 = vmatpush1.bf16.msra.mxu0 %v6184
    %6204 = vmatprep.subr.bf16.mxu0 0
    %6205 = vmatpush1.bf16.msra.mxu0 %v6185
    %6206 = vmatprep.subr.bf16.mxu0 0
    %6207 = vmatpush1.bf16.msra.mxu0 %v6186
    %6208 = vmatprep.subr.bf16.mxu0 0
    %6209 = vmatpush1.bf16.msra.mxu0 %v6187
    %6210 = vmatprep.subr.bf16.mxu0 0
    %6211 = vmatpush1.bf16.msra.mxu0 %v6188
    %6212 = vmatprep.subr.bf16.mxu0 0
    %6213 = vmatpush1.bf16.msra.mxu0 %v6189
    %6214 = vmatprep.subr.bf16.mxu0 0
    %6215 = vmatpush1.bf16.msra.mxu0 0
    %6216 = vmatprep.subr.bf16.mxu0 0
    %6217 = vmatpush1.bf16.msra.mxu0 0
    %6218 = vmatprep.subr.bf16.mxu0 0
    %6219 = vmatpush1.bf16.msra.mxu0 0
    %6220 = vmatprep.subr.bf16.mxu0 0
    %6221 = vmatpush1.bf16.msra.mxu0 0
    %6222 = vmatprep.subr.bf16.mxu0 0
    %6223 = vmatpush1.bf16.msra.mxu0 0
    %6224 = vmatprep.subr.bf16.mxu0 0
    %6225 = vmatpush1.bf16.msra.mxu0 0
    %6226 = vmatprep.subr.bf16.mxu0 0
    %6227 = vmatpush1.bf16.msra.mxu0 0
    %6228 = vmatprep.subr.bf16.mxu0 0
    %6229 = vmatpush1.bf16.msra.mxu0 0
    %6230 = vmatprep.mubr.bf16.mxu0 0
    %6231 = vmatmul.mubr.bf16.gmra.mrb[0].mxu0 %v6029
    %v6232 = vpop.f32.mrb[0].mxu0
    %v6233 = vadd.f32 %v6145, %v6232
    %v6234 = vpop.f32.mrb[0].mxu0
    %v6235 = vpop.f32.mrb[0].mxu0
    %v6236 = vpop.f32.mrb[0].mxu0
    %6237 = vdwg.mxu0
    %v6238 = vld [vmem:[#allocation12] sm:$0x1]
    %v6240 = vlaneseq
    %v6241 = vshrl.u32 %v6240, 7
    %v6242 = vsub.s32 0, %v6241
    %v6243 = vrot.slane %v6238, %v6242
    %v6245 = vadd.f32 %v6233, %v6243
    %v6246 = vxor.u32 %v6245, 2147483648
    %v6247 = vmul.f32 %v6246, 1.442695
    %v6248 = vpow.pop %v6247
    %v6249 = vadd.f32 %v6248, 1.0
    %v6250 = vrcp.pop %v6249
    %v6251 = vmul.f32 1.0, %v6250
    %v6252 = vpack.c.bf16 %v6251, %v6251
    %v6253 = vld [vmem:[#allocation13] sm:$0xf]
    %v6254 = vld [vmem:[#allocation13 + $0x4] sm:$0xf]
    %v6255 = vld [vmem:[#allocation13 + $0x8] sm:$0xf]
    %v6256 = vld [vmem:[#allocation13 + $0xc] sm:$0xf]
    %v6257 = vld [vmem:[#allocation13 + $0x10] sm:$0xf]
    %v6258 = vld [vmem:[#allocation13 + $0x14] sm:$0xf]
    %v6259 = vld [vmem:[#allocation13 + $0x18] sm:$0xf]
    %v6260 = vld [vmem:[#allocation13 + $0x1c] sm:$0xf]
    %v6261 = vld [vmem:[#allocation13 + $0x20] sm:$0xf]
    %v6262 = vld [vmem:[#allocation13 + $0x24] sm:$0xf]
    %v6263 = vld [vmem:[#allocation13 + $0x28] sm:$0xf]
    %v6264 = vld [vmem:[#allocation13 + $0x2c] sm:$0xf]
    %v6265 = vld [vmem:[#allocation13 + $0x30] sm:$0xf]
    %v6266 = vld [vmem:[#allocation13 + $0x34] sm:$0xf]
    %v6267 = vld [vmem:[#allocation13 + $0x38] sm:$0xf]
    %v6268 = vld [vmem:[#allocation13 + $0x3c] sm:$0xf]
    %v6269 = vpack.c.bf16 %v756, %v756
    %v6270 = vld [vmem:[#allocation15] sm:$0xf]
    %v6271 = vld [vmem:[#allocation15 + $0x4] sm:$0xf]
    %v6272 = vld [vmem:[#allocation15 + $0x8] sm:$0xf]
    %v6273 = vld [vmem:[#allocation15 + $0xc] sm:$0xf]
    %v6274 = vld [vmem:[#allocation15 + $0x10] sm:$0xf]
    %v6275 = vld [vmem:[#allocation15 + $0x14] sm:$0xf]
    %v6276 = vld [vmem:[#allocation15 + $0x18] sm:$0xf]
    %v6277 = vld [vmem:[#allocation15 + $0x1c] sm:$0xf]
    %v6278 = vld [vmem:[#allocation15 + $0x20] sm:$0xf]
    %v6279 = vld [vmem:[#allocation15 + $0x24] sm:$0xf]
    %v6280 = vld [vmem:[#allocation15 + $0x28] sm:$0xf]
    %v6281 = vld [vmem:[#allocation15 + $0x2c] sm:$0xf]
    %v6282 = vld [vmem:[#allocation15 + $0x30] sm:$0xf]
    %v6283 = vld [vmem:[#allocation15 + $0x34] sm:$0xf]
    %v6284 = vld [vmem:[#allocation15 + $0x38] sm:$0xf]
    %v6285 = vld [vmem:[#allocation15 + $0x3c] sm:$0xf]
    %v6302 = vunpack.c.l.b16 %v6270
    %v6303 = vunpack.c.l.b16 %v6271
    %v6304 = vunpack.c.l.b16 %v6272
    %v6305 = vunpack.c.l.b16 %v6273
    %v6306 = vunpack.c.l.b16 %v6274
    %v6307 = vunpack.c.l.b16 %v6275
    %v6308 = vunpack.c.l.b16 %v6276
    %v6309 = vunpack.c.l.b16 %v6277
    %v6310 = vunpack.c.l.b16 %v6278
    %v6311 = vunpack.c.l.b16 %v6279
    %v6312 = vunpack.c.l.b16 %v6280
    %v6313 = vunpack.c.l.b16 %v6281
    %v6314 = vunpack.c.l.b16 %v6282
    %v6315 = vunpack.c.l.b16 %v6283
    %v6316 = vunpack.c.l.b16 %v6284
    %v6317 = vunpack.c.l.b16 %v6285
    %v6318 = vpack.c.b16 %v6303, %v6302
    %v6319 = vpack.c.b16 %v6305, %v6304
    %v6320 = vpack.c.b16 %v6307, %v6306
    %v6321 = vpack.c.b16 %v6309, %v6308
    %v6322 = vpack.c.b16 %v6311, %v6310
    %v6323 = vpack.c.b16 %v6313, %v6312
    %v6324 = vpack.c.b16 %v6315, %v6314
    %v6325 = vpack.c.b16 %v6317, %v6316
    %6334 = vmatprep.subr.bf16.mxu0 0
    %6335 = vmatpush1.bf16.msra.mxu0 %v6318
    %6336 = vmatprep.subr.bf16.mxu0 0
    %6337 = vmatpush1.bf16.msra.mxu0 %v6319
    %6338 = vmatprep.subr.bf16.mxu0 0
    %6339 = vmatpush1.bf16.msra.mxu0 %v6320
    %6340 = vmatprep.subr.bf16.mxu0 0
    %6341 = vmatpush1.bf16.msra.mxu0 %v6321
    %6342 = vmatprep.subr.bf16.mxu0 0
    %6343 = vmatpush1.bf16.msra.mxu0 %v6322
    %6344 = vmatprep.subr.bf16.mxu0 0
    %6345 = vmatpush1.bf16.msra.mxu0 %v6323
    %6346 = vmatprep.subr.bf16.mxu0 0
    %6347 = vmatpush1.bf16.msra.mxu0 %v6324
    %6348 = vmatprep.subr.bf16.mxu0 0
    %6349 = vmatpush1.bf16.msra.mxu0 %v6325
    %6350 = vmatprep.subr.bf16.mxu0 0
    %6351 = vmatpush1.bf16.msra.mxu0 0
    %6352 = vmatprep.subr.bf16.mxu0 0
    %6353 = vmatpush1.bf16.msra.mxu0 0
    %6354 = vmatprep.subr.bf16.mxu0 0
    %6355 = vmatpush1.bf16.msra.mxu0 0
    %6356 = vmatprep.subr.bf16.mxu0 0
    %6357 = vmatpush1.bf16.msra.mxu0 0
    %6358 = vmatprep.subr.bf16.mxu0 0
    %6359 = vmatpush1.bf16.msra.mxu0 0
    %6360 = vmatprep.subr.bf16.mxu0 0
    %6361 = vmatpush1.bf16.msra.mxu0 0
    %6362 = vmatprep.subr.bf16.mxu0 0
    %6363 = vmatpush1.bf16.msra.mxu0 0
    %6364 = vmatprep.subr.bf16.mxu0 0
    %6365 = vmatpush1.bf16.msra.mxu0 0
    %6366 = vmatprep.mubr.bf16.mxu0 0
    %6367 = vmatmul.mubr.bf16.gmra.mrb[0].mxu0 %v6269
    %v6368 = vpop.f32.mrb[0].mxu0
    %v6369 = vadd.f32 0.0, %v6368
    %v6370 = vpop.f32.mrb[0].mxu0
    %v6371 = vpop.f32.mrb[0].mxu0
    %v6372 = vpop.f32.mrb[0].mxu0
    %6373 = vdwg.mxu0
    %v6390 = vunpack.c.l.b16 %v6253
    %v6391 = vunpack.c.l.b16 %v6254
    %v6392 = vunpack.c.l.b16 %v6255
    %v6393 = vunpack.c.l.b16 %v6256
    %v6394 = vunpack.c.l.b16 %v6257
    %v6395 = vunpack.c.l.b16 %v6258
    %v6396 = vunpack.c.l.b16 %v6259
    %v6397 = vunpack.c.l.b16 %v6260
    %v6398 = vunpack.c.l.b16 %v6261
    %v6399 = vunpack.c.l.b16 %v6262
    %v6400 = vunpack.c.l.b16 %v6263
    %v6401 = vunpack.c.l.b16 %v6264
    %v6402 = vunpack.c.l.b16 %v6265
    %v6403 = vunpack.c.l.b16 %v6266
    %v6404 = vunpack.c.l.b16 %v6267
    %v6405 = vunpack.c.l.b16 %v6268
    %v6406 = vpack.c.b16 %v6391, %v6390
    %v6407 = vpack.c.b16 %v6393, %v6392
    %v6408 = vpack.c.b16 %v6395, %v6394
    %v6409 = vpack.c.b16 %v6397, %v6396
    %v6410 = vpack.c.b16 %v6399, %v6398
    %v6411 = vpack.c.b16 %v6401, %v6400
    %v6412 = vpack.c.b16 %v6403, %v6402
    %v6413 = vpack.c.b16 %v6405, %v6404
    %6422 = vmatprep.subr.bf16.mxu0 0
    %6423 = vmatpush1.bf16.msra.mxu0 %v6406
    %6424 = vmatprep.subr.bf16.mxu0 0
    %6425 = vmatpush1.bf16.msra.mxu0 %v6407
    %6426 = vmatprep.subr.bf16.mxu0 0
    %6427 = vmatpush1.bf16.msra.mxu0 %v6408
    %6428 = vmatprep.subr.bf16.mxu0 0
    %6429 = vmatpush1.bf16.msra.mxu0 %v6409
    %6430 = vmatprep.subr.bf16.mxu0 0
    %6431 = vmatpush1.bf16.msra.mxu0 %v6410
    %6432 = vmatprep.subr.bf16.mxu0 0
    %6433 = vmatpush1.bf16.msra.mxu0 %v6411
    %6434 = vmatprep.subr.bf16.mxu0 0
    %6435 = vmatpush1.bf16.msra.mxu0 %v6412
    %6436 = vmatprep.subr.bf16.mxu0 0
    %6437 = vmatpush1.bf16.msra.mxu0 %v6413
    %6438 = vmatprep.subr.bf16.mxu0 0
    %6439 = vmatpush1.bf16.msra.mxu0 0
    %6440 = vmatprep.subr.bf16.mxu0 0
    %6441 = vmatpush1.bf16.msra.mxu0 0
    %6442 = vmatprep.subr.bf16.mxu0 0
    %6443 = vmatpush1.bf16.msra.mxu0 0
    %6444 = vmatprep.subr.bf16.mxu0 0
    %6445 = vmatpush1.bf16.msra.mxu0 0
    %6446 = vmatprep.subr.bf16.mxu0 0
    %6447 = vmatpush1.bf16.msra.mxu0 0
    %6448 = vmatprep.subr.bf16.mxu0 0
    %6449 = vmatpush1.bf16.msra.mxu0 0
    %6450 = vmatprep.subr.bf16.mxu0 0
    %6451 = vmatpush1.bf16.msra.mxu0 0
    %6452 = vmatprep.subr.bf16.mxu0 0
    %6453 = vmatpush1.bf16.msra.mxu0 0
    %6454 = vmatprep.mubr.bf16.mxu0 0
    %6455 = vmatmul.mubr.bf16.gmra.mrb[0].mxu0 %v6252
    %v6456 = vpop.f32.mrb[0].mxu0
    %v6457 = vadd.f32 %v6369, %v6456
    %v6458 = vpop.f32.mrb[0].mxu0
    %v6459 = vpop.f32.mrb[0].mxu0
    %v6460 = vpop.f32.mrb[0].mxu0
    %6461 = vdwg.mxu0
    %v6462 = vld [vmem:[#allocation16] sm:$0x1]
    %v6464 = vlaneseq
    %v6465 = vshrl.u32 %v6464, 7
    %v6466 = vsub.s32 0, %v6465
    %v6467 = vrot.slane %v6462, %v6466
    %v6469 = vadd.f32 %v6457, %v6467
    %v6470 = vxor.u32 %v6469, 2147483648
    %v6471 = vmul.f32 %v6470, 1.442695
    %v6472 = vpow.pop %v6471
    %v6473 = vadd.f32 %v6472, 1.0
    %v6474 = vrcp.pop %v6473
    %v6475 = vmul.f32 1.0, %v6474
    %v6476 = vld [vmem:[%s5] sm:$0x3]
    %v6477 = vpack.c.bf16 %v6475, %v6475
    %v6478 = vld [vmem:[#allocation18] sm:$0xf]
    %v6479 = vld [vmem:[#allocation18 + $0x4] sm:$0xf]
    %v6480 = vld [vmem:[#allocation18 + $0x8] sm:$0xf]
    %v6481 = vld [vmem:[#allocation18 + $0xc] sm:$0xf]
    %v6482 = vld [vmem:[#allocation18 + $0x10] sm:$0xf]
    %v6483 = vld [vmem:[#allocation18 + $0x14] sm:$0xf]
    %v6484 = vld [vmem:[#allocation18 + $0x18] sm:$0xf]
    %v6485 = vld [vmem:[#allocation18 + $0x1c] sm:$0xf]
    %v6486 = vld [vmem:[#allocation18 + $0x20] sm:$0xf]
    %v6487 = vld [vmem:[#allocation18 + $0x24] sm:$0xf]
    %v6488 = vld [vmem:[#allocation18 + $0x28] sm:$0xf]
    %v6489 = vld [vmem:[#allocation18 + $0x2c] sm:$0xf]
    %v6490 = vld [vmem:[#allocation18 + $0x30] sm:$0xf]
    %v6491 = vld [vmem:[#allocation18 + $0x34] sm:$0xf]
    %v6492 = vld [vmem:[#allocation18 + $0x38] sm:$0xf]
    %v6493 = vld [vmem:[#allocation18 + $0x3c] sm:$0xf]
    %v6494 = vpack.c.bf16 %v6476, %v6476
    %v6495 = vld [vmem:[#allocation22] sm:$0xf]
    %v6496 = vld [vmem:[#allocation22 + $0x4] sm:$0xf]
    %v6497 = vld [vmem:[#allocation22 + $0x8] sm:$0xf]
    %v6498 = vld [vmem:[#allocation22 + $0xc] sm:$0xf]
    %v6499 = vld [vmem:[#allocation22 + $0x10] sm:$0xf]
    %v6500 = vld [vmem:[#allocation22 + $0x14] sm:$0xf]
    %v6501 = vld [vmem:[#allocation22 + $0x18] sm:$0xf]
    %v6502 = vld [vmem:[#allocation22 + $0x1c] sm:$0xf]
    %v6503 = vld [vmem:[#allocation22 + $0x20] sm:$0xf]
    %v6504 = vld [vmem:[#allocation22 + $0x24] sm:$0xf]
    %v6505 = vld [vmem:[#allocation22 + $0x28] sm:$0xf]
    %v6506 = vld [vmem:[#allocation22 + $0x2c] sm:$0xf]
    %v6507 = vld [vmem:[#allocation22 + $0x30] sm:$0xf]
    %v6508 = vld [vmem:[#allocation22 + $0x34] sm:$0xf]
    %v6509 = vld [vmem:[#allocation22 + $0x38] sm:$0xf]
    %v6510 = vld [vmem:[#allocation22 + $0x3c] sm:$0xf]
    %v6527 = vunpack.c.l.b16 %v6495
    %v6528 = vunpack.c.l.b16 %v6496
    %v6529 = vunpack.c.l.b16 %v6497
    %v6530 = vunpack.c.l.b16 %v6498
    %v6531 = vunpack.c.l.b16 %v6499
    %v6532 = vunpack.c.l.b16 %v6500
    %v6533 = vunpack.c.l.b16 %v6501
    %v6534 = vunpack.c.l.b16 %v6502
    %v6535 = vunpack.c.l.b16 %v6503
    %v6536 = vunpack.c.l.b16 %v6504
    %v6537 = vunpack.c.l.b16 %v6505
    %v6538 = vunpack.c.l.b16 %v6506
    %v6539 = vunpack.c.l.b16 %v6507
    %v6540 = vunpack.c.l.b16 %v6508
    %v6541 = vunpack.c.l.b16 %v6509
    %v6542 = vunpack.c.l.b16 %v6510
    %v6543 = vpack.c.b16 %v6528, %v6527
    %v6544 = vpack.c.b16 %v6530, %v6529
    %v6545 = vpack.c.b16 %v6532, %v6531
    %v6546 = vpack.c.b16 %v6534, %v6533
    %v6547 = vpack.c.b16 %v6536, %v6535
    %v6548 = vpack.c.b16 %v6538, %v6537
    %v6549 = vpack.c.b16 %v6540, %v6539
    %v6550 = vpack.c.b16 %v6542, %v6541
    %6559 = vmatprep.subr.bf16.mxu0 0
    %6560 = vmatpush1.bf16.msra.mxu0 %v6543
    %6561 = vmatprep.subr.bf16.mxu0 0
    %6562 = vmatpush1.bf16.msra.mxu0 %v6544
    %6563 = vmatprep.subr.bf16.mxu0 0
    %6564 = vmatpush1.bf16.msra.mxu0 %v6545
    %6565 = vmatprep.subr.bf16.mxu0 0
    %6566 = vmatpush1.bf16.msra.mxu0 %v6546
    %6567 = vmatprep.subr.bf16.mxu0 0
    %6568 = vmatpush1.bf16.msra.mxu0 %v6547
    %6569 = vmatprep.subr.bf16.mxu0 0
    %6570 = vmatpush1.bf16.msra.mxu0 %v6548
    %6571 = vmatprep.subr.bf16.mxu0 0
    %6572 = vmatpush1.bf16.msra.mxu0 %v6549
    %6573 = vmatprep.subr.bf16.mxu0 0
    %6574 = vmatpush1.bf16.msra.mxu0 %v6550
    %6575 = vmatprep.subr.bf16.mxu0 0
    %6576 = vmatpush1.bf16.msra.mxu0 0
    %6577 = vmatprep.subr.bf16.mxu0 0
    %6578 = vmatpush1.bf16.msra.mxu0 0
    %6579 = vmatprep.subr.bf16.mxu0 0
    %6580 = vmatpush1.bf16.msra.mxu0 0
    %6581 = vmatprep.subr.bf16.mxu0 0
    %6582 = vmatpush1.bf16.msra.mxu0 0
    %6583 = vmatprep.subr.bf16.mxu0 0
    %6584 = vmatpush1.bf16.msra.mxu0 0
    %6585 = vmatprep.subr.bf16.mxu0 0
    %6586 = vmatpush1.bf16.msra.mxu0 0
    %6587 = vmatprep.subr.bf16.mxu0 0
    %6588 = vmatpush1.bf16.msra.mxu0 0
    %6589 = vmatprep.subr.bf16.mxu0 0
    %6590 = vmatpush1.bf16.msra.mxu0 0
    %6591 = vmatprep.mubr.bf16.mxu0 0
    %6592 = vmatmul.mubr.bf16.gmra.mrb[0].mxu0 %v6494
    %v6593 = vpop.f32.mrb[0].mxu0
    %v6594 = vadd.f32 0.0, %v6593
    %v6595 = vpop.f32.mrb[0].mxu0
    %v6596 = vpop.f32.mrb[0].mxu0
    %v6597 = vpop.f32.mrb[0].mxu0
    %6598 = vdwg.mxu0
    %v6615 = vunpack.c.l.b16 %v6478
    %v6616 = vunpack.c.l.b16 %v6479
    %v6617 = vunpack.c.l.b16 %v6480
    %v6618 = vunpack.c.l.b16 %v6481
    %v6619 = vunpack.c.l.b16 %v6482
    %v6620 = vunpack.c.l.b16 %v6483
    %v6621 = vunpack.c.l.b16 %v6484
    %v6622 = vunpack.c.l.b16 %v6485
    %v6623 = vunpack.c.l.b16 %v6486
    %v6624 = vunpack.c.l.b16 %v6487
    %v6625 = vunpack.c.l.b16 %v6488
    %v6626 = vunpack.c.l.b16 %v6489
    %v6627 = vunpack.c.l.b16 %v6490
    %v6628 = vunpack.c.l.b16 %v6491
    %v6629 = vunpack.c.l.b16 %v6492
    %v6630 = vunpack.c.l.b16 %v6493
    %v6631 = vpack.c.b16 %v6616, %v6615
    %v6632 = vpack.c.b16 %v6618, %v6617
    %v6633 = vpack.c.b16 %v6620, %v6619
    %v6634 = vpack.c.b16 %v6622, %v6621
    %v6635 = vpack.c.b16 %v6624, %v6623
    %v6636 = vpack.c.b16 %v6626, %v6625
    %v6637 = vpack.c.b16 %v6628, %v6627
    %v6638 = vpack.c.b16 %v6630, %v6629
    %6647 = vmatprep.subr.bf16.mxu0 0
    %6648 = vmatpush1.bf16.msra.mxu0 %v6631
    %6649 = vmatprep.subr.bf16.mxu0 0
    %6650 = vmatpush1.bf16.msra.mxu0 %v6632
    %6651 = vmatprep.subr.bf16.mxu0 0
    %6652 = vmatpush1.bf16.msra.mxu0 %v6633
    %6653 = vmatprep.subr.bf16.mxu0 0
    %6654 = vmatpush1.bf16.msra.mxu0 %v6634
    %6655 = vmatprep.subr.bf16.mxu0 0
    %6656 = vmatpush1.bf16.msra.mxu0 %v6635
    %6657 = vmatprep.subr.bf16.mxu0 0
    %6658 = vmatpush1.bf16.msra.mxu0 %v6636
    %6659 = vmatprep.subr.bf16.mxu0 0
    %6660 = vmatpush1.bf16.msra.mxu0 %v6637
    %6661 = vmatprep.subr.bf16.mxu0 0
    %6662 = vmatpush1.bf16.msra.mxu0 %v6638
    %6663 = vmatprep.subr.bf16.mxu0 0
    %6664 = vmatpush1.bf16.msra.mxu0 0
    %6665 = vmatprep.subr.bf16.mxu0 0
    %6666 = vmatpush1.bf16.msra.mxu0 0
    %6667 = vmatprep.subr.bf16.mxu0 0
    %6668 = vmatpush1.bf16.msra.mxu0 0
    %6669 = vmatprep.subr.bf16.mxu0 0
    %6670 = vmatpush1.bf16.msra.mxu0 0
    %6671 = vmatprep.subr.bf16.mxu0 0
    %6672 = vmatpush1.bf16.msra.mxu0 0
    %6673 = vmatprep.subr.bf16.mxu0 0
    %6674 = vmatpush1.bf16.msra.mxu0 0
    %6675 = vmatprep.subr.bf16.mxu0 0
    %6676 = vmatpush1.bf16.msra.mxu0 0
    %6677 = vmatprep.subr.bf16.mxu0 0
    %6678 = vmatpush1.bf16.msra.mxu0 0
    %6679 = vmatprep.mubr.bf16.mxu0 0
    %6680 = vmatmul.mubr.bf16.gmra.mrb[0].mxu0 %v6477
    %v6681 = vpop.f32.mrb[0].mxu0
    %v6682 = vadd.f32 %v6594, %v6681
    %v6683 = vpop.f32.mrb[0].mxu0
    %v6684 = vpop.f32.mrb[0].mxu0
    %v6685 = vpop.f32.mrb[0].mxu0
    %6686 = vdwg.mxu0
    %v6687 = vld [vmem:[#allocation27] sm:$0x1]
    %v6689 = vlaneseq
    %v6690 = vshrl.u32 %v6689, 7
    %v6691 = vsub.s32 0, %v6690
    %v6692 = vrot.slane %v6687, %v6691
    %v6694 = vadd.f32 %v6682, %v6692
    %v6695 = vxor.u32 %v6694, 2147483648
    %v6696 = vmul.f32 %v6695, 1.442695
    %v6697 = vpow.pop %v6696
    %v6698 = vadd.f32 %v6697, 1.0
    %v6699 = vrcp.pop %v6698
    %v6700 = vmul.f32 1.0, %v6699
    %v6701 = vld [vmem:[#allocation19] sm:$0xf]
    %v6702 = vld [vmem:[#allocation19 + $0x4] sm:$0xf]
    %v6703 = vld [vmem:[#allocation19 + $0x8] sm:$0xf]
    %v6704 = vld [vmem:[#allocation19 + $0xc] sm:$0xf]
    %v6705 = vld [vmem:[#allocation19 + $0x10] sm:$0xf]
    %v6706 = vld [vmem:[#allocation19 + $0x14] sm:$0xf]
    %v6707 = vld [vmem:[#allocation19 + $0x18] sm:$0xf]
    %v6708 = vld [vmem:[#allocation19 + $0x1c] sm:$0xf]
    %v6709 = vld [vmem:[#allocation19 + $0x20] sm:$0xf]
    %v6710 = vld [vmem:[#allocation19 + $0x24] sm:$0xf]
    %v6711 = vld [vmem:[#allocation19 + $0x28] sm:$0xf]
    %v6712 = vld [vmem:[#allocation19 + $0x2c] sm:$0xf]
    %v6713 = vld [vmem:[#allocation19 + $0x30] sm:$0xf]
    %v6714 = vld [vmem:[#allocation19 + $0x34] sm:$0xf]
    %v6715 = vld [vmem:[#allocation19 + $0x38] sm:$0xf]
    %v6716 = vld [vmem:[#allocation19 + $0x3c] sm:$0xf]
    %v6717 = vld [vmem:[#allocation24] sm:$0xf]
    %v6718 = vld [vmem:[#allocation24 + $0x4] sm:$0xf]
    %v6719 = vld [vmem:[#allocation24 + $0x8] sm:$0xf]
    %v6720 = vld [vmem:[#allocation24 + $0xc] sm:$0xf]
    %v6721 = vld [vmem:[#allocation24 + $0x10] sm:$0xf]
    %v6722 = vld [vmem:[#allocation24 + $0x14] sm:$0xf]
    %v6723 = vld [vmem:[#allocation24 + $0x18] sm:$0xf]
    %v6724 = vld [vmem:[#allocation24 + $0x1c] sm:$0xf]
    %v6725 = vld [vmem:[#allocation24 + $0x20] sm:$0xf]
    %v6726 = vld [vmem:[#allocation24 + $0x24] sm:$0xf]
    %v6727 = vld [vmem:[#allocation24 + $0x28] sm:$0xf]
    %v6728 = vld [vmem:[#allocation24 + $0x2c] sm:$0xf]
    %v6729 = vld [vmem:[#allocation24 + $0x30] sm:$0xf]
    %v6730 = vld [vmem:[#allocation24 + $0x34] sm:$0xf]
    %v6731 = vld [vmem:[#allocation24 + $0x38] sm:$0xf]
    %v6732 = vld [vmem:[#allocation24 + $0x3c] sm:$0xf]
    %v6749 = vunpack.c.l.b16 %v6717
    %v6750 = vunpack.c.l.b16 %v6718
    %v6751 = vunpack.c.l.b16 %v6719
    %v6752 = vunpack.c.l.b16 %v6720
    %v6753 = vunpack.c.l.b16 %v6721
    %v6754 = vunpack.c.l.b16 %v6722
    %v6755 = vunpack.c.l.b16 %v6723
    %v6756 = vunpack.c.l.b16 %v6724
    %v6757 = vunpack.c.l.b16 %v6725
    %v6758 = vunpack.c.l.b16 %v6726
    %v6759 = vunpack.c.l.b16 %v6727
    %v6760 = vunpack.c.l.b16 %v6728
    %v6761 = vunpack.c.l.b16 %v6729
    %v6762 = vunpack.c.l.b16 %v6730
    %v6763 = vunpack.c.l.b16 %v6731
    %v6764 = vunpack.c.l.b16 %v6732
    %v6765 = vpack.c.b16 %v6750, %v6749
    %v6766 = vpack.c.b16 %v6752, %v6751
    %v6767 = vpack.c.b16 %v6754, %v6753
    %v6768 = vpack.c.b16 %v6756, %v6755
    %v6769 = vpack.c.b16 %v6758, %v6757
    %v6770 = vpack.c.b16 %v6760, %v6759
    %v6771 = vpack.c.b16 %v6762, %v6761
    %v6772 = vpack.c.b16 %v6764, %v6763
    %6781 = vmatprep.subr.bf16.mxu0 0
    %6782 = vmatpush1.bf16.msra.mxu0 %v6765
    %6783 = vmatprep.subr.bf16.mxu0 0
    %6784 = vmatpush1.bf16.msra.mxu0 %v6766
    %6785 = vmatprep.subr.bf16.mxu0 0
    %6786 = vmatpush1.bf16.msra.mxu0 %v6767
    %6787 = vmatprep.subr.bf16.mxu0 0
    %6788 = vmatpush1.bf16.msra.mxu0 %v6768
    %6789 = vmatprep.subr.bf16.mxu0 0
    %6790 = vmatpush1.bf16.msra.mxu0 %v6769
    %6791 = vmatprep.subr.bf16.mxu0 0
    %6792 = vmatpush1.bf16.msra.mxu0 %v6770
    %6793 = vmatprep.subr.bf16.mxu0 0
    %6794 = vmatpush1.bf16.msra.mxu0 %v6771
    %6795 = vmatprep.subr.bf16.mxu0 0
    %6796 = vmatpush1.bf16.msra.mxu0 %v6772
    %6797 = vmatprep.subr.bf16.mxu0 0
    %6798 = vmatpush1.bf16.msra.mxu0 0
    %6799 = vmatprep.subr.bf16.mxu0 0
    %6800 = vmatpush1.bf16.msra.mxu0 0
    %6801 = vmatprep.subr.bf16.mxu0 0
    %6802 = vmatpush1.bf16.msra.mxu0 0
    %6803 = vmatprep.subr.bf16.mxu0 0
    %6804 = vmatpush1.bf16.msra.mxu0 0
    %6805 = vmatprep.subr.bf16.mxu0 0
    %6806 = vmatpush1.bf16.msra.mxu0 0
    %6807 = vmatprep.subr.bf16.mxu0 0
    %6808 = vmatpush1.bf16.msra.mxu0 0
    %6809 = vmatprep.subr.bf16.mxu0 0
    %6810 = vmatpush1.bf16.msra.mxu0 0
    %6811 = vmatprep.subr.bf16.mxu0 0
    %6812 = vmatpush1.bf16.msra.mxu0 0
    %6813 = vmatprep.mubr.bf16.mxu0 0
    %6814 = vmatmul.mubr.bf16.gmra.mrb[0].mxu0 %v6494
    %v6815 = vpop.f32.mrb[0].mxu0
    %v6816 = vadd.f32 0.0, %v6815
    %v6817 = vpop.f32.mrb[0].mxu0
    %v6818 = vpop.f32.mrb[0].mxu0
    %v6819 = vpop.f32.mrb[0].mxu0
    %6820 = vdwg.mxu0
    %v6837 = vunpack.c.l.b16 %v6701
    %v6838 = vunpack.c.l.b16 %v6702
    %v6839 = vunpack.c.l.b16 %v6703
    %v6840 = vunpack.c.l.b16 %v6704
    %v6841 = vunpack.c.l.b16 %v6705
    %v6842 = vunpack.c.l.b16 %v6706
    %v6843 = vunpack.c.l.b16 %v6707
    %v6844 = vunpack.c.l.b16 %v6708
    %v6845 = vunpack.c.l.b16 %v6709
    %v6846 = vunpack.c.l.b16 %v6710
    %v6847 = vunpack.c.l.b16 %v6711
    %v6848 = vunpack.c.l.b16 %v6712
    %v6849 = vunpack.c.l.b16 %v6713
    %v6850 = vunpack.c.l.b16 %v6714
    %v6851 = vunpack.c.l.b16 %v6715
    %v6852 = vunpack.c.l.b16 %v6716
    %v6853 = vpack.c.b16 %v6838, %v6837
    %v6854 = vpack.c.b16 %v6840, %v6839
    %v6855 = vpack.c.b16 %v6842, %v6841
    %v6856 = vpack.c.b16 %v6844, %v6843
    %v6857 = vpack.c.b16 %v6846, %v6845
    %v6858 = vpack.c.b16 %v6848, %v6847
    %v6859 = vpack.c.b16 %v6850, %v6849
    %v6860 = vpack.c.b16 %v6852, %v6851
    %6869 = vmatprep.subr.bf16.mxu0 0
    %6870 = vmatpush1.bf16.msra.mxu0 %v6853
    %6871 = vmatprep.subr.bf16.mxu0 0
    %6872 = vmatpush1.bf16.msra.mxu0 %v6854
    %6873 = vmatprep.subr.bf16.mxu0 0
    %6874 = vmatpush1.bf16.msra.mxu0 %v6855
    %6875 = vmatprep.subr.bf16.mxu0 0
    %6876 = vmatpush1.bf16.msra.mxu0 %v6856
    %6877 = vmatprep.subr.bf16.mxu0 0
    %6878 = vmatpush1.bf16.msra.mxu0 %v6857
    %6879 = vmatprep.subr.bf16.mxu0 0
    %6880 = vmatpush1.bf16.msra.mxu0 %v6858
    %6881 = vmatprep.subr.bf16.mxu0 0
    %6882 = vmatpush1.bf16.msra.mxu0 %v6859
    %6883 = vmatprep.subr.bf16.mxu0 0
    %6884 = vmatpush1.bf16.msra.mxu0 %v6860
    %6885 = vmatprep.subr.bf16.mxu0 0
    %6886 = vmatpush1.bf16.msra.mxu0 0
    %6887 = vmatprep.subr.bf16.mxu0 0
    %6888 = vmatpush1.bf16.msra.mxu0 0
    %6889 = vmatprep.subr.bf16.mxu0 0
    %6890 = vmatpush1.bf16.msra.mxu0 0
    %6891 = vmatprep.subr.bf16.mxu0 0
    %6892 = vmatpush1.bf16.msra.mxu0 0
    %6893 = vmatprep.subr.bf16.mxu0 0
    %6894 = vmatpush1.bf16.msra.mxu0 0
    %6895 = vmatprep.subr.bf16.mxu0 0
    %6896 = vmatpush1.bf16.msra.mxu0 0
    %6897 = vmatprep.subr.bf16.mxu0 0
    %6898 = vmatpush1.bf16.msra.mxu0 0
    %6899 = vmatprep.subr.bf16.mxu0 0
    %6900 = vmatpush1.bf16.msra.mxu0 0
    %6901 = vmatprep.mubr.bf16.mxu0 0
    %6902 = vmatmul.mubr.bf16.gmra.mrb[0].mxu0 %v6477
    %v6903 = vpop.f32.mrb[0].mxu0
    %v6904 = vadd.f32 %v6816, %v6903
    %v6905 = vpop.f32.mrb[0].mxu0
    %v6906 = vpop.f32.mrb[0].mxu0
    %v6907 = vpop.f32.mrb[0].mxu0
    %6908 = vdwg.mxu0
    %v6909 = vld [vmem:[#allocation28] sm:$0x1]
    %v6911 = vlaneseq
    %v6912 = vshrl.u32 %v6911, 7
    %v6913 = vsub.s32 0, %v6912
    %v6914 = vrot.slane %v6909, %v6913
    %v6916 = vadd.f32 %v6904, %v6914
    %v6917 = vxor.u32 %v6916, 2147483648
    %v6918 = vmul.f32 %v6917, 1.442695
    %v6919 = vpow.pop %v6918
    %v6920 = vadd.f32 %v6919, 1.0
    %v6921 = vrcp.pop %v6920
    %v6922 = vmul.f32 1.0, %v6921
    %v6923 = vld [vmem:[#allocation21] sm:$0xf]
    %v6924 = vld [vmem:[#allocation21 + $0x4] sm:$0xf]
    %v6925 = vld [vmem:[#allocation21 + $0x8] sm:$0xf]
    %v6926 = vld [vmem:[#allocation21 + $0xc] sm:$0xf]
    %v6927 = vld [vmem:[#allocation21 + $0x10] sm:$0xf]
    %v6928 = vld [vmem:[#allocation21 + $0x14] sm:$0xf]
    %v6929 = vld [vmem:[#allocation21 + $0x18] sm:$0xf]
    %v6930 = vld [vmem:[#allocation21 + $0x1c] sm:$0xf]
    %v6931 = vld [vmem:[#allocation21 + $0x20] sm:$0xf]
    %v6932 = vld [vmem:[#allocation21 + $0x24] sm:$0xf]
    %v6933 = vld [vmem:[#allocation21 + $0x28] sm:$0xf]
    %v6934 = vld [vmem:[#allocation21 + $0x2c] sm:$0xf]
    %v6935 = vld [vmem:[#allocation21 + $0x30] sm:$0xf]
    %v6936 = vld [vmem:[#allocation21 + $0x34] sm:$0xf]
    %v6937 = vld [vmem:[#allocation21 + $0x38] sm:$0xf]
    %v6938 = vld [vmem:[#allocation21 + $0x3c] sm:$0xf]
    %v6939 = vld [vmem:[#allocation30] sm:$0x1]
    %v6941 = vlaneseq
    %v6942 = vshrl.u32 %v6941, 7
    %v6943 = vsub.s32 0, %v6942
    %v6944 = vrot.slane %v6939, %v6943
    %v6962 = vunpack.c.l.b16 %v6923
    %v6963 = vunpack.c.l.b16 %v6924
    %v6964 = vunpack.c.l.b16 %v6925
    %v6965 = vunpack.c.l.b16 %v6926
    %v6966 = vunpack.c.l.b16 %v6927
    %v6967 = vunpack.c.l.b16 %v6928
    %v6968 = vunpack.c.l.b16 %v6929
    %v6969 = vunpack.c.l.b16 %v6930
    %v6970 = vunpack.c.l.b16 %v6931
    %v6971 = vunpack.c.l.b16 %v6932
    %v6972 = vunpack.c.l.b16 %v6933
    %v6973 = vunpack.c.l.b16 %v6934
    %v6974 = vunpack.c.l.b16 %v6935
    %v6975 = vunpack.c.l.b16 %v6936
    %v6976 = vunpack.c.l.b16 %v6937
    %v6977 = vunpack.c.l.b16 %v6938
    %v6978 = vpack.c.b16 %v6963, %v6962
    %v6979 = vpack.c.b16 %v6965, %v6964
    %v6980 = vpack.c.b16 %v6967, %v6966
    %v6981 = vpack.c.b16 %v6969, %v6968
    %v6982 = vpack.c.b16 %v6971, %v6970
    %v6983 = vpack.c.b16 %v6973, %v6972
    %v6984 = vpack.c.b16 %v6975, %v6974
    %v6985 = vpack.c.b16 %v6977, %v6976
    %6994 = vmatprep.subr.bf16.mxu0 0
    %6995 = vmatpush1.bf16.msra.mxu0 %v6978
    %6996 = vmatprep.subr.bf16.mxu0 0
    %6997 = vmatpush1.bf16.msra.mxu0 %v6979
    %6998 = vmatprep.subr.bf16.mxu0 0
    %6999 = vmatpush1.bf16.msra.mxu0 %v6980
    %7000 = vmatprep.subr.bf16.mxu0 0
    %7001 = vmatpush1.bf16.msra.mxu0 %v6981
    %7002 = vmatprep.subr.bf16.mxu0 0
    %7003 = vmatpush1.bf16.msra.mxu0 %v6982
    %7004 = vmatprep.subr.bf16.mxu0 0
    %7005 = vmatpush1.bf16.msra.mxu0 %v6983
    %7006 = vmatprep.subr.bf16.mxu0 0
    %7007 = vmatpush1.bf16.msra.mxu0 %v6984
    %7008 = vmatprep.subr.bf16.mxu0 0
    %7009 = vmatpush1.bf16.msra.mxu0 %v6985
    %7010 = vmatprep.subr.bf16.mxu0 0
    %7011 = vmatpush1.bf16.msra.mxu0 0
    %7012 = vmatprep.subr.bf16.mxu0 0
    %7013 = vmatpush1.bf16.msra.mxu0 0
    %7014 = vmatprep.subr.bf16.mxu0 0
    %7015 = vmatpush1.bf16.msra.mxu0 0
    %7016 = vmatprep.subr.bf16.mxu0 0
    %7017 = vmatpush1.bf16.msra.mxu0 0
    %7018 = vmatprep.subr.bf16.mxu0 0
    %7019 = vmatpush1.bf16.msra.mxu0 0
    %7020 = vmatprep.subr.bf16.mxu0 0
    %7021 = vmatpush1.bf16.msra.mxu0 0
    %7022 = vmatprep.subr.bf16.mxu0 0
    %7023 = vmatpush1.bf16.msra.mxu0 0
    %7024 = vmatprep.subr.bf16.mxu0 0
    %7025 = vmatpush1.bf16.msra.mxu0 0
    %7026 = vmatprep.mubr.bf16.mxu0 0
    %7027 = vmatmul.mubr.bf16.gmra.mrb[0].mxu0 %v6477
    %v7028 = vpop.f32.mrb[0].mxu0
    %v7029 = vadd.f32 %v6944, %v7028
    %v7030 = vpop.f32.mrb[0].mxu0
    %v7031 = vpop.f32.mrb[0].mxu0
    %v7032 = vpop.f32.mrb[0].mxu0
    %7033 = vdwg.mxu0
    %v7034 = vld [vmem:[#allocation25] sm:$0xf]
    %v7035 = vld [vmem:[#allocation25 + $0x4] sm:$0xf]
    %v7036 = vld [vmem:[#allocation25 + $0x8] sm:$0xf]
    %v7037 = vld [vmem:[#allocation25 + $0xc] sm:$0xf]
    %v7038 = vld [vmem:[#allocation25 + $0x10] sm:$0xf]
    %v7039 = vld [vmem:[#allocation25 + $0x14] sm:$0xf]
    %v7040 = vld [vmem:[#allocation25 + $0x18] sm:$0xf]
    %v7041 = vld [vmem:[#allocation25 + $0x1c] sm:$0xf]
    %v7042 = vld [vmem:[#allocation25 + $0x20] sm:$0xf]
    %v7043 = vld [vmem:[#allocation25 + $0x24] sm:$0xf]
    %v7044 = vld [vmem:[#allocation25 + $0x28] sm:$0xf]
    %v7045 = vld [vmem:[#allocation25 + $0x2c] sm:$0xf]
    %v7046 = vld [vmem:[#allocation25 + $0x30] sm:$0xf]
    %v7047 = vld [vmem:[#allocation25 + $0x34] sm:$0xf]
    %v7048 = vld [vmem:[#allocation25 + $0x38] sm:$0xf]
    %v7049 = vld [vmem:[#allocation25 + $0x3c] sm:$0xf]
    %v7050 = vld [vmem:[#allocation31] sm:$0x1]
    %v7052 = vlaneseq
    %v7053 = vshrl.u32 %v7052, 7
    %v7054 = vsub.s32 0, %v7053
    %v7055 = vrot.slane %v7050, %v7054
    %v7073 = vunpack.c.l.b16 %v7034
    %v7074 = vunpack.c.l.b16 %v7035
    %v7075 = vunpack.c.l.b16 %v7036
    %v7076 = vunpack.c.l.b16 %v7037
    %v7077 = vunpack.c.l.b16 %v7038
    %v7078 = vunpack.c.l.b16 %v7039
    %v7079 = vunpack.c.l.b16 %v7040
    %v7080 = vunpack.c.l.b16 %v7041
    %v7081 = vunpack.c.l.b16 %v7042
    %v7082 = vunpack.c.l.b16 %v7043
    %v7083 = vunpack.c.l.b16 %v7044
    %v7084 = vunpack.c.l.b16 %v7045
    %v7085 = vunpack.c.l.b16 %v7046
    %v7086 = vunpack.c.l.b16 %v7047
    %v7087 = vunpack.c.l.b16 %v7048
    %v7088 = vunpack.c.l.b16 %v7049
    %v7089 = vpack.c.b16 %v7074, %v7073
    %v7090 = vpack.c.b16 %v7076, %v7075
    %v7091 = vpack.c.b16 %v7078, %v7077
    %v7092 = vpack.c.b16 %v7080, %v7079
    %v7093 = vpack.c.b16 %v7082, %v7081
    %v7094 = vpack.c.b16 %v7084, %v7083
    %v7095 = vpack.c.b16 %v7086, %v7085
    %v7096 = vpack.c.b16 %v7088, %v7087
    %7105 = vmatprep.subr.bf16.mxu0 0
    %7106 = vmatpush1.bf16.msra.mxu0 %v7089
    %7107 = vmatprep.subr.bf16.mxu0 0
    %7108 = vmatpush1.bf16.msra.mxu0 %v7090
    %7109 = vmatprep.subr.bf16.mxu0 0
    %7110 = vmatpush1.bf16.msra.mxu0 %v7091
    %7111 = vmatprep.subr.bf16.mxu0 0
    %7112 = vmatpush1.bf16.msra.mxu0 %v7092
    %7113 = vmatprep.subr.bf16.mxu0 0
    %7114 = vmatpush1.bf16.msra.mxu0 %v7093
    %7115 = vmatprep.subr.bf16.mxu0 0
    %7116 = vmatpush1.bf16.msra.mxu0 %v7094
    %7117 = vmatprep.subr.bf16.mxu0 0
    %7118 = vmatpush1.bf16.msra.mxu0 %v7095
    %7119 = vmatprep.subr.bf16.mxu0 0
    %7120 = vmatpush1.bf16.msra.mxu0 %v7096
    %7121 = vmatprep.subr.bf16.mxu0 0
    %7122 = vmatpush1.bf16.msra.mxu0 0
    %7123 = vmatprep.subr.bf16.mxu0 0
    %7124 = vmatpush1.bf16.msra.mxu0 0
    %7125 = vmatprep.subr.bf16.mxu0 0
    %7126 = vmatpush1.bf16.msra.mxu0 0
    %7127 = vmatprep.subr.bf16.mxu0 0
    %7128 = vmatpush1.bf16.msra.mxu0 0
    %7129 = vmatprep.subr.bf16.mxu0 0
    %7130 = vmatpush1.bf16.msra.mxu0 0
    %7131 = vmatprep.subr.bf16.mxu0 0
    %7132 = vmatpush1.bf16.msra.mxu0 0
    %7133 = vmatprep.subr.bf16.mxu0 0
    %7134 = vmatpush1.bf16.msra.mxu0 0
    %7135 = vmatprep.subr.bf16.mxu0 0
    %7136 = vmatpush1.bf16.msra.mxu0 0
    %7137 = vmatprep.mubr.bf16.mxu0 0
    %7138 = vmatmul.mubr.bf16.gmra.mrb[0].mxu0 %v6494
    %v7139 = vpop.f32.mrb[0].mxu0
    %v7140 = vadd.f32 %v7055, %v7139
    %v7141 = vpop.f32.mrb[0].mxu0
    %v7142 = vpop.f32.mrb[0].mxu0
    %v7143 = vpop.f32.mrb[0].mxu0
    %7144 = vdwg.mxu0
    %v7145 = vmul.f32 %v6700, %v7140
    %v7146 = vadd.f32 %v7029, %v7145
    %v7147 = vtanh.pop %v7146
    %v7148 = vsub.f32 1.0, %v6922
    %v7149 = vmul.f32 %v7148, %v7147
    %v7150 = vmul.f32 %v6922, %v6476
    %v7151 = vadd.f32 %v7149, %v7150
    %v7152 = vld [vmem:[%s7] sm:$0x3]
    %v7153 = vpack.c.bf16 %v7151, %v7151
    %v7154 = vld [vmem:[#allocation33] sm:$0xf]
    %v7155 = vld [vmem:[#allocation33 + $0x4] sm:$0xf]
    %v7156 = vld [vmem:[#allocation33 + $0x8] sm:$0xf]
    %v7157 = vld [vmem:[#allocation33 + $0xc] sm:$0xf]
    %v7158 = vld [vmem:[#allocation33 + $0x10] sm:$0xf]
    %v7159 = vld [vmem:[#allocation33 + $0x14] sm:$0xf]
    %v7160 = vld [vmem:[#allocation33 + $0x18] sm:$0xf]
    %v7161 = vld [vmem:[#allocation33 + $0x1c] sm:$0xf]
    %v7162 = vld [vmem:[#allocation33 + $0x20] sm:$0xf]
    %v7163 = vld [vmem:[#allocation33 + $0x24] sm:$0xf]
    %v7164 = vld [vmem:[#allocation33 + $0x28] sm:$0xf]
    %v7165 = vld [vmem:[#allocation33 + $0x2c] sm:$0xf]
    %v7166 = vld [vmem:[#allocation33 + $0x30] sm:$0xf]
    %v7167 = vld [vmem:[#allocation33 + $0x34] sm:$0xf]
    %v7168 = vld [vmem:[#allocation33 + $0x38] sm:$0xf]
    %v7169 = vld [vmem:[#allocation33 + $0x3c] sm:$0xf]
    %v7170 = vpack.c.bf16 %v7152, %v7152
    %v7171 = vld [vmem:[#allocation37] sm:$0xf]
    %v7172 = vld [vmem:[#allocation37 + $0x4] sm:$0xf]
    %v7173 = vld [vmem:[#allocation37 + $0x8] sm:$0xf]
    %v7174 = vld [vmem:[#allocation37 + $0xc] sm:$0xf]
    %v7175 = vld [vmem:[#allocation37 + $0x10] sm:$0xf]
    %v7176 = vld [vmem:[#allocation37 + $0x14] sm:$0xf]
    %v7177 = vld [vmem:[#allocation37 + $0x18] sm:$0xf]
    %v7178 = vld [vmem:[#allocation37 + $0x1c] sm:$0xf]
    %v7179 = vld [vmem:[#allocation37 + $0x20] sm:$0xf]
    %v7180 = vld [vmem:[#allocation37 + $0x24] sm:$0xf]
    %v7181 = vld [vmem:[#allocation37 + $0x28] sm:$0xf]
    %v7182 = vld [vmem:[#allocation37 + $0x2c] sm:$0xf]
    %v7183 = vld [vmem:[#allocation37 + $0x30] sm:$0xf]
    %v7184 = vld [vmem:[#allocation37 + $0x34] sm:$0xf]
    %v7185 = vld [vmem:[#allocation37 + $0x38] sm:$0xf]
    %v7186 = vld [vmem:[#allocation37 + $0x3c] sm:$0xf]
    %v7203 = vunpack.c.l.b16 %v7171
    %v7204 = vunpack.c.l.b16 %v7172
    %v7205 = vunpack.c.l.b16 %v7173
    %v7206 = vunpack.c.l.b16 %v7174
    %v7207 = vunpack.c.l.b16 %v7175
    %v7208 = vunpack.c.l.b16 %v7176
    %v7209 = vunpack.c.l.b16 %v7177
    %v7210 = vunpack.c.l.b16 %v7178
    %v7211 = vunpack.c.l.b16 %v7179
    %v7212 = vunpack.c.l.b16 %v7180
    %v7213 = vunpack.c.l.b16 %v7181
    %v7214 = vunpack.c.l.b16 %v7182
    %v7215 = vunpack.c.l.b16 %v7183
    %v7216 = vunpack.c.l.b16 %v7184
    %v7217 = vunpack.c.l.b16 %v7185
    %v7218 = vunpack.c.l.b16 %v7186
    %v7219 = vpack.c.b16 %v7204, %v7203
    %v7220 = vpack.c.b16 %v7206, %v7205
    %v7221 = vpack.c.b16 %v7208, %v7207
    %v7222 = vpack.c.b16 %v7210, %v7209
    %v7223 = vpack.c.b16 %v7212, %v7211
    %v7224 = vpack.c.b16 %v7214, %v7213
    %v7225 = vpack.c.b16 %v7216, %v7215
    %v7226 = vpack.c.b16 %v7218, %v7217
    %7235 = vmatprep.subr.bf16.mxu0 0
    %7236 = vmatpush1.bf16.msra.mxu0 %v7219
    %7237 = vmatprep.subr.bf16.mxu0 0
    %7238 = vmatpush1.bf16.msra.mxu0 %v7220
    %7239 = vmatprep.subr.bf16.mxu0 0
    %7240 = vmatpush1.bf16.msra.mxu0 %v7221
    %7241 = vmatprep.subr.bf16.mxu0 0
    %7242 = vmatpush1.bf16.msra.mxu0 %v7222
    %7243 = vmatprep.subr.bf16.mxu0 0
    %7244 = vmatpush1.bf16.msra.mxu0 %v7223
    %7245 = vmatprep.subr.bf16.mxu0 0
    %7246 = vmatpush1.bf16.msra.mxu0 %v7224
    %7247 = vmatprep.subr.bf16.mxu0 0
    %7248 = vmatpush1.bf16.msra.mxu0 %v7225
    %7249 = vmatprep.subr.bf16.mxu0 0
    %7250 = vmatpush1.bf16.msra.mxu0 %v7226
    %7251 = vmatprep.subr.bf16.mxu0 0
    %7252 = vmatpush1.bf16.msra.mxu0 0
    %7253 = vmatprep.subr.bf16.mxu0 0
    %7254 = vmatpush1.bf16.msra.mxu0 0
    %7255 = vmatprep.subr.bf16.mxu0 0
    %7256 = vmatpush1.bf16.msra.mxu0 0
    %7257 = vmatprep.subr.bf16.mxu0 0
    %7258 = vmatpush1.bf16.msra.mxu0 0
    %7259 = vmatprep.subr.bf16.mxu0 0
    %7260 = vmatpush1.bf16.msra.mxu0 0
    %7261 = vmatprep.subr.bf16.mxu0 0
    %7262 = vmatpush1.bf16.msra.mxu0 0
    %7263 = vmatprep.subr.bf16.mxu0 0
    %7264 = vmatpush1.bf16.msra.mxu0 0
    %7265 = vmatprep.subr.bf16.mxu0 0
    %7266 = vmatpush1.bf16.msra.mxu0 0
    %7267 = vmatprep.mubr.bf16.mxu0 0
    %7268 = vmatmul.mubr.bf16.gmra.mrb[0].mxu0 %v7170
    %v7269 = vpop.f32.mrb[0].mxu0
    %v7270 = vadd.f32 0.0, %v7269
    %v7271 = vpop.f32.mrb[0].mxu0
    %v7272 = vpop.f32.mrb[0].mxu0
    %v7273 = vpop.f32.mrb[0].mxu0
    %7274 = vdwg.mxu0
    %v7291 = vunpack.c.l.b16 %v7154
    %v7292 = vunpack.c.l.b16 %v7155
    %v7293 = vunpack.c.l.b16 %v7156
    %v7294 = vunpack.c.l.b16 %v7157
    %v7295 = vunpack.c.l.b16 %v7158
    %v7296 = vunpack.c.l.b16 %v7159
    %v7297 = vunpack.c.l.b16 %v7160
    %v7298 = vunpack.c.l.b16 %v7161
    %v7299 = vunpack.c.l.b16 %v7162
    %v7300 = vunpack.c.l.b16 %v7163
    %v7301 = vunpack.c.l.b16 %v7164
    %v7302 = vunpack.c.l.b16 %v7165
    %v7303 = vunpack.c.l.b16 %v7166
    %v7304 = vunpack.c.l.b16 %v7167
    %v7305 = vunpack.c.l.b16 %v7168
    %v7306 = vunpack.c.l.b16 %v7169
    %v7307 = vpack.c.b16 %v7292, %v7291
    %v7308 = vpack.c.b16 %v7294, %v7293
    %v7309 = vpack.c.b16 %v7296, %v7295
    %v7310 = vpack.c.b16 %v7298, %v7297
    %v7311 = vpack.c.b16 %v7300, %v7299
    %v7312 = vpack.c.b16 %v7302, %v7301
    %v7313 = vpack.c.b16 %v7304, %v7303
    %v7314 = vpack.c.b16 %v7306, %v7305
    %7323 = vmatprep.subr.bf16.mxu0 0
    %7324 = vmatpush1.bf16.msra.mxu0 %v7307
    %7325 = vmatprep.subr.bf16.mxu0 0
    %7326 = vmatpush1.bf16.msra.mxu0 %v7308
    %7327 = vmatprep.subr.bf16.mxu0 0
    %7328 = vmatpush1.bf16.msra.mxu0 %v7309
    %7329 = vmatprep.subr.bf16.mxu0 0
    %7330 = vmatpush1.bf16.msra.mxu0 %v7310
    %7331 = vmatprep.subr.bf16.mxu0 0
    %7332 = vmatpush1.bf16.msra.mxu0 %v7311
    %7333 = vmatprep.subr.bf16.mxu0 0
    %7334 = vmatpush1.bf16.msra.mxu0 %v7312
    %7335 = vmatprep.subr.bf16.mxu0 0
    %7336 = vmatpush1.bf16.msra.mxu0 %v7313
    %7337 = vmatprep.subr.bf16.mxu0 0
    %7338 = vmatpush1.bf16.msra.mxu0 %v7314
    %7339 = vmatprep.subr.bf16.mxu0 0
    %7340 = vmatpush1.bf16.msra.mxu0 0
    %7341 = vmatprep.subr.bf16.mxu0 0
    %7342 = vmatpush1.bf16.msra.mxu0 0
    %7343 = vmatprep.subr.bf16.mxu0 0
    %7344 = vmatpush1.bf16.msra.mxu0 0
    %7345 = vmatprep.subr.bf16.mxu0 0
    %7346 = vmatpush1.bf16.msra.mxu0 0
    %7347 = vmatprep.subr.bf16.mxu0 0
    %7348 = vmatpush1.bf16.msra.mxu0 0
    %7349 = vmatprep.subr.bf16.mxu0 0
    %7350 = vmatpush1.bf16.msra.mxu0 0
    %7351 = vmatprep.subr.bf16.mxu0 0
    %7352 = vmatpush1.bf16.msra.mxu0 0
    %7353 = vmatprep.subr.bf16.mxu0 0
    %7354 = vmatpush1.bf16.msra.mxu0 0
    %7355 = vmatprep.mubr.bf16.mxu0 0
    %7356 = vmatmul.mubr.bf16.gmra.mrb[0].mxu0 %v7153
    %v7357 = vpop.f32.mrb[0].mxu0
    %v7358 = vadd.f32 %v7270, %v7357
    %v7359 = vpop.f32.mrb[0].mxu0
    %v7360 = vpop.f32.mrb[0].mxu0
    %v7361 = vpop.f32.mrb[0].mxu0
    %7362 = vdwg.mxu0
    %v7363 = vld [vmem:[#allocation42] sm:$0x1]
    %v7365 = vlaneseq
    %v7366 = vshrl.u32 %v7365, 7
    %v7367 = vsub.s32 0, %v7366
    %v7368 = vrot.slane %v7363, %v7367
    %v7370 = vadd.f32 %v7358, %v7368
    %v7371 = vxor.u32 %v7370, 2147483648
    %v7372 = vmul.f32 %v7371, 1.442695
    %v7373 = vpow.pop %v7372
    %v7374 = vadd.f32 %v7373, 1.0
    %v7375 = vrcp.pop %v7374
    %v7376 = vmul.f32 1.0, %v7375
    %v7377 = vld [vmem:[#allocation34] sm:$0xf]
    %v7378 = vld [vmem:[#allocation34 + $0x4] sm:$0xf]
    %v7379 = vld [vmem:[#allocation34 + $0x8] sm:$0xf]
    %v7380 = vld [vmem:[#allocation34 + $0xc] sm:$0xf]
    %v7381 = vld [vmem:[#allocation34 + $0x10] sm:$0xf]
    %v7382 = vld [vmem:[#allocation34 + $0x14] sm:$0xf]
    %v7383 = vld [vmem:[#allocation34 + $0x18] sm:$0xf]
    %v7384 = vld [vmem:[#allocation34 + $0x1c] sm:$0xf]
    %v7385 = vld [vmem:[#allocation34 + $0x20] sm:$0xf]
    %v7386 = vld [vmem:[#allocation34 + $0x24] sm:$0xf]
    %v7387 = vld [vmem:[#allocation34 + $0x28] sm:$0xf]
    %v7388 = vld [vmem:[#allocation34 + $0x2c] sm:$0xf]
    %v7389 = vld [vmem:[#allocation34 + $0x30] sm:$0xf]
    %v7390 = vld [vmem:[#allocation34 + $0x34] sm:$0xf]
    %v7391 = vld [vmem:[#allocation34 + $0x38] sm:$0xf]
    %v7392 = vld [vmem:[#allocation34 + $0x3c] sm:$0xf]
    %v7393 = vld [vmem:[#allocation39] sm:$0xf]
    %v7394 = vld [vmem:[#allocation39 + $0x4] sm:$0xf]
    %v7395 = vld [vmem:[#allocation39 + $0x8] sm:$0xf]
    %v7396 = vld [vmem:[#allocation39 + $0xc] sm:$0xf]
    %v7397 = vld [vmem:[#allocation39 + $0x10] sm:$0xf]
    %v7398 = vld [vmem:[#allocation39 + $0x14] sm:$0xf]
    %v7399 = vld [vmem:[#allocation39 + $0x18] sm:$0xf]
    %v7400 = vld [vmem:[#allocation39 + $0x1c] sm:$0xf]
    %v7401 = vld [vmem:[#allocation39 + $0x20] sm:$0xf]
    %v7402 = vld [vmem:[#allocation39 + $0x24] sm:$0xf]
    %v7403 = vld [vmem:[#allocation39 + $0x28] sm:$0xf]
    %v7404 = vld [vmem:[#allocation39 + $0x2c] sm:$0xf]
    %v7405 = vld [vmem:[#allocation39 + $0x30] sm:$0xf]
    %v7406 = vld [vmem:[#allocation39 + $0x34] sm:$0xf]
    %v7407 = vld [vmem:[#allocation39 + $0x38] sm:$0xf]
    %v7408 = vld [vmem:[#allocation39 + $0x3c] sm:$0xf]
    %v7425 = vunpack.c.l.b16 %v7393
    %v7426 = vunpack.c.l.b16 %v7394
    %v7427 = vunpack.c.l.b16 %v7395
    %v7428 = vunpack.c.l.b16 %v7396
    %v7429 = vunpack.c.l.b16 %v7397
    %v7430 = vunpack.c.l.b16 %v7398
    %v7431 = vunpack.c.l.b16 %v7399
    %v7432 = vunpack.c.l.b16 %v7400
    %v7433 = vunpack.c.l.b16 %v7401
    %v7434 = vunpack.c.l.b16 %v7402
    %v7435 = vunpack.c.l.b16 %v7403
    %v7436 = vunpack.c.l.b16 %v7404
    %v7437 = vunpack.c.l.b16 %v7405
    %v7438 = vunpack.c.l.b16 %v7406
    %v7439 = vunpack.c.l.b16 %v7407
    %v7440 = vunpack.c.l.b16 %v7408
    %v7441 = vpack.c.b16 %v7426, %v7425
    %v7442 = vpack.c.b16 %v7428, %v7427
    %v7443 = vpack.c.b16 %v7430, %v7429
    %v7444 = vpack.c.b16 %v7432, %v7431
    %v7445 = vpack.c.b16 %v7434, %v7433
    %v7446 = vpack.c.b16 %v7436, %v7435
    %v7447 = vpack.c.b16 %v7438, %v7437
    %v7448 = vpack.c.b16 %v7440, %v7439
    %7457 = vmatprep.subr.bf16.mxu0 0
    %7458 = vmatpush1.bf16.msra.mxu0 %v7441
    %7459 = vmatprep.subr.bf16.mxu0 0
    %7460 = vmatpush1.bf16.msra.mxu0 %v7442
    %7461 = vmatprep.subr.bf16.mxu0 0
    %7462 = vmatpush1.bf16.msra.mxu0 %v7443
    %7463 = vmatprep.subr.bf16.mxu0 0
    %7464 = vmatpush1.bf16.msra.mxu0 %v7444
    %7465 = vmatprep.subr.bf16.mxu0 0
    %7466 = vmatpush1.bf16.msra.mxu0 %v7445
    %7467 = vmatprep.subr.bf16.mxu0 0
    %7468 = vmatpush1.bf16.msra.mxu0 %v7446
    %7469 = vmatprep.subr.bf16.mxu0 0
    %7470 = vmatpush1.bf16.msra.mxu0 %v7447
    %7471 = vmatprep.subr.bf16.mxu0 0
    %7472 = vmatpush1.bf16.msra.mxu0 %v7448
    %7473 = vmatprep.subr.bf16.mxu0 0
    %7474 = vmatpush1.bf16.msra.mxu0 0
    %7475 = vmatprep.subr.bf16.mxu0 0
    %7476 = vmatpush1.bf16.msra.mxu0 0
    %7477 = vmatprep.subr.bf16.mxu0 0
    %7478 = vmatpush1.bf16.msra.mxu0 0
    %7479 = vmatprep.subr.bf16.mxu0 0
    %7480 = vmatpush1.bf16.msra.mxu0 0
    %7481 = vmatprep.subr.bf16.mxu0 0
    %7482 = vmatpush1.bf16.msra.mxu0 0
    %7483 = vmatprep.subr.bf16.mxu0 0
    %7484 = vmatpush1.bf16.msra.mxu0 0
    %7485 = vmatprep.subr.bf16.mxu0 0
    %7486 = vmatpush1.bf16.msra.mxu0 0
    %7487 = vmatprep.subr.bf16.mxu0 0
    %7488 = vmatpush1.bf16.msra.mxu0 0
    %7489 = vmatprep.mubr.bf16.mxu0 0
    %7490 = vmatmul.mubr.bf16.gmra.mrb[0].mxu0 %v7170
    %v7491 = vpop.f32.mrb[0].mxu0
    %v7492 = vadd.f32 0.0, %v7491
    %v7493 = vpop.f32.mrb[0].mxu0
    %v7494 = vpop.f32.mrb[0].mxu0
    %v7495 = vpop.f32.mrb[0].mxu0
    %7496 = vdwg.mxu0
    %v7513 = vunpack.c.l.b16 %v7377
    %v7514 = vunpack.c.l.b16 %v7378
    %v7515 = vunpack.c.l.b16 %v7379
    %v7516 = vunpack.c.l.b16 %v7380
    %v7517 = vunpack.c.l.b16 %v7381
    %v7518 = vunpack.c.l.b16 %v7382
    %v7519 = vunpack.c.l.b16 %v7383
    %v7520 = vunpack.c.l.b16 %v7384
    %v7521 = vunpack.c.l.b16 %v7385
    %v7522 = vunpack.c.l.b16 %v7386
    %v7523 = vunpack.c.l.b16 %v7387
    %v7524 = vunpack.c.l.b16 %v7388
    %v7525 = vunpack.c.l.b16 %v7389
    %v7526 = vunpack.c.l.b16 %v7390
    %v7527 = vunpack.c.l.b16 %v7391
    %v7528 = vunpack.c.l.b16 %v7392
    %v7529 = vpack.c.b16 %v7514, %v7513
    %v7530 = vpack.c.b16 %v7516, %v7515
    %v7531 = vpack.c.b16 %v7518, %v7517
    %v7532 = vpack.c.b16 %v7520, %v7519
    %v7533 = vpack.c.b16 %v7522, %v7521
    %v7534 = vpack.c.b16 %v7524, %v7523
    %v7535 = vpack.c.b16 %v7526, %v7525
    %v7536 = vpack.c.b16 %v7528, %v7527
    %7545 = vmatprep.subr.bf16.mxu0 0
    %7546 = vmatpush1.bf16.msra.mxu0 %v7529
    %7547 = vmatprep.subr.bf16.mxu0 0
    %7548 = vmatpush1.bf16.msra.mxu0 %v7530
    %7549 = vmatprep.subr.bf16.mxu0 0
    %7550 = vmatpush1.bf16.msra.mxu0 %v7531
    %7551 = vmatprep.subr.bf16.mxu0 0
    %7552 = vmatpush1.bf16.msra.mxu0 %v7532
    %7553 = vmatprep.subr.bf16.mxu0 0
    %7554 = vmatpush1.bf16.msra.mxu0 %v7533
    %7555 = vmatprep.subr.bf16.mxu0 0
    %7556 = vmatpush1.bf16.msra.mxu0 %v7534
    %7557 = vmatprep.subr.bf16.mxu0 0
    %7558 = vmatpush1.bf16.msra.mxu0 %v7535
    %7559 = vmatprep.subr.bf16.mxu0 0
    %7560 = vmatpush1.bf16.msra.mxu0 %v7536
    %7561 = vmatprep.subr.bf16.mxu0 0
    %7562 = vmatpush1.bf16.msra.mxu0 0
    %7563 = vmatprep.subr.bf16.mxu0 0
    %7564 = vmatpush1.bf16.msra.mxu0 0
    %7565 = vmatprep.subr.bf16.mxu0 0
    %7566 = vmatpush1.bf16.msra.mxu0 0
    %7567 = vmatprep.subr.bf16.mxu0 0
    %7568 = vmatpush1.bf16.msra.mxu0 0
    %7569 = vmatprep.subr.bf16.mxu0 0
    %7570 = vmatpush1.bf16.msra.mxu0 0
    %7571 = vmatprep.subr.bf16.mxu0 0
    %7572 = vmatpush1.bf16.msra.mxu0 0
    %7573 = vmatprep.subr.bf16.mxu0 0
    %7574 = vmatpush1.bf16.msra.mxu0 0
    %7575 = vmatprep.subr.bf16.mxu0 0
    %7576 = vmatpush1.bf16.msra.mxu0 0
    %7577 = vmatprep.mubr.bf16.mxu0 0
    %7578 = vmatmul.mubr.bf16.gmra.mrb[0].mxu0 %v7153
    %v7579 = vpop.f32.mrb[0].mxu0
    %v7580 = vadd.f32 %v7492, %v7579
    %v7581 = vpop.f32.mrb[0].mxu0
    %v7582 = vpop.f32.mrb[0].mxu0
    %v7583 = vpop.f32.mrb[0].mxu0
    %7584 = vdwg.mxu0
    %v7585 = vld [vmem:[#allocation43] sm:$0x1]
    %v7587 = vlaneseq
    %v7588 = vshrl.u32 %v7587, 7
    %v7589 = vsub.s32 0, %v7588
    %v7590 = vrot.slane %v7585, %v7589
    %v7592 = vadd.f32 %v7580, %v7590
    %v7593 = vxor.u32 %v7592, 2147483648
    %v7594 = vmul.f32 %v7593, 1.442695
    %v7595 = vpow.pop %v7594
    %v7596 = vadd.f32 %v7595, 1.0
    %v7597 = vrcp.pop %v7596
    %v7598 = vmul.f32 1.0, %v7597
    %v7599 = vld [vmem:[#allocation36] sm:$0xf]
    %v7600 = vld [vmem:[#allocation36 + $0x4] sm:$0xf]
    %v7601 = vld [vmem:[#allocation36 + $0x8] sm:$0xf]
    %v7602 = vld [vmem:[#allocation36 + $0xc] sm:$0xf]
    %v7603 = vld [vmem:[#allocation36 + $0x10] sm:$0xf]
    %v7604 = vld [vmem:[#allocation36 + $0x14] sm:$0xf]
    %v7605 = vld [vmem:[#allocation36 + $0x18] sm:$0xf]
    %v7606 = vld [vmem:[#allocation36 + $0x1c] sm:$0xf]
    %v7607 = vld [vmem:[#allocation36 + $0x20] sm:$0xf]
    %v7608 = vld [vmem:[#allocation36 + $0x24] sm:$0xf]
    %v7609 = vld [vmem:[#allocation36 + $0x28] sm:$0xf]
    %v7610 = vld [vmem:[#allocation36 + $0x2c] sm:$0xf]
    %v7611 = vld [vmem:[#allocation36 + $0x30] sm:$0xf]
    %v7612 = vld [vmem:[#allocation36 + $0x34] sm:$0xf]
    %v7613 = vld [vmem:[#allocation36 + $0x38] sm:$0xf]
    %v7614 = vld [vmem:[#allocation36 + $0x3c] sm:$0xf]
    %v7615 = vld [vmem:[#allocation45] sm:$0x1]
    %v7617 = vlaneseq
    %v7618 = vshrl.u32 %v7617, 7
    %v7619 = vsub.s32 0, %v7618
    %v7620 = vrot.slane %v7615, %v7619
    %v7638 = vunpack.c.l.b16 %v7599
    %v7639 = vunpack.c.l.b16 %v7600
    %v7640 = vunpack.c.l.b16 %v7601
    %v7641 = vunpack.c.l.b16 %v7602
    %v7642 = vunpack.c.l.b16 %v7603
    %v7643 = vunpack.c.l.b16 %v7604
    %v7644 = vunpack.c.l.b16 %v7605
    %v7645 = vunpack.c.l.b16 %v7606
    %v7646 = vunpack.c.l.b16 %v7607
    %v7647 = vunpack.c.l.b16 %v7608
    %v7648 = vunpack.c.l.b16 %v7609
    %v7649 = vunpack.c.l.b16 %v7610
    %v7650 = vunpack.c.l.b16 %v7611
    %v7651 = vunpack.c.l.b16 %v7612
    %v7652 = vunpack.c.l.b16 %v7613
    %v7653 = vunpack.c.l.b16 %v7614
    %v7654 = vpack.c.b16 %v7639, %v7638
    %v7655 = vpack.c.b16 %v7641, %v7640
    %v7656 = vpack.c.b16 %v7643, %v7642
    %v7657 = vpack.c.b16 %v7645, %v7644
    %v7658 = vpack.c.b16 %v7647, %v7646
    %v7659 = vpack.c.b16 %v7649, %v7648
    %v7660 = vpack.c.b16 %v7651, %v7650
    %v7661 = vpack.c.b16 %v7653, %v7652
    %7670 = vmatprep.subr.bf16.mxu0 0
    %7671 = vmatpush1.bf16.msra.mxu0 %v7654
    %7672 = vmatprep.subr.bf16.mxu0 0
    %7673 = vmatpush1.bf16.msra.mxu0 %v7655
    %7674 = vmatprep.subr.bf16.mxu0 0
    %7675 = vmatpush1.bf16.msra.mxu0 %v7656
    %7676 = vmatprep.subr.bf16.mxu0 0
    %7677 = vmatpush1.bf16.msra.mxu0 %v7657
    %7678 = vmatprep.subr.bf16.mxu0 0
    %7679 = vmatpush1.bf16.msra.mxu0 %v7658
    %7680 = vmatprep.subr.bf16.mxu0 0
    %7681 = vmatpush1.bf16.msra.mxu0 %v7659
    %7682 = vmatprep.subr.bf16.mxu0 0
    %7683 = vmatpush1.bf16.msra.mxu0 %v7660
    %7684 = vmatprep.subr.bf16.mxu0 0
    %7685 = vmatpush1.bf16.msra.mxu0 %v7661
    %7686 = vmatprep.subr.bf16.mxu0 0
    %7687 = vmatpush1.bf16.msra.mxu0 0
    %7688 = vmatprep.subr.bf16.mxu0 0
    %7689 = vmatpush1.bf16.msra.mxu0 0
    %7690 = vmatprep.subr.bf16.mxu0 0
    %7691 = vmatpush1.bf16.msra.mxu0 0
    %7692 = vmatprep.subr.bf16.mxu0 0
    %7693 = vmatpush1.bf16.msra.mxu0 0
    %7694 = vmatprep.subr.bf16.mxu0 0
    %7695 = vmatpush1.bf16.msra.mxu0 0
    %7696 = vmatprep.subr.bf16.mxu0 0
    %7697 = vmatpush1.bf16.msra.mxu0 0
    %7698 = vmatprep.subr.bf16.mxu0 0
    %7699 = vmatpush1.bf16.msra.mxu0 0
    %7700 = vmatprep.subr.bf16.mxu0 0
    %7701 = vmatpush1.bf16.msra.mxu0 0
    %7702 = vmatprep.mubr.bf16.mxu0 0
    %7703 = vmatmul.mubr.bf16.gmra.mrb[0].mxu0 %v7153
    %v7704 = vpop.f32.mrb[0].mxu0
    %v7705 = vadd.f32 %v7620, %v7704
    %v7706 = vpop.f32.mrb[0].mxu0
    %v7707 = vpop.f32.mrb[0].mxu0
    %v7708 = vpop.f32.mrb[0].mxu0
    %7709 = vdwg.mxu0
    %v7710 = vld [vmem:[#allocation40] sm:$0xf]
    %v7711 = vld [vmem:[#allocation40 + $0x4] sm:$0xf]
    %v7712 = vld [vmem:[#allocation40 + $0x8] sm:$0xf]
    %v7713 = vld [vmem:[#allocation40 + $0xc] sm:$0xf]
    %v7714 = vld [vmem:[#allocation40 + $0x10] sm:$0xf]
    %v7715 = vld [vmem:[#allocation40 + $0x14] sm:$0xf]
    %v7716 = vld [vmem:[#allocation40 + $0x18] sm:$0xf]
    %v7717 = vld [vmem:[#allocation40 + $0x1c] sm:$0xf]
    %v7718 = vld [vmem:[#allocation40 + $0x20] sm:$0xf]
    %v7719 = vld [vmem:[#allocation40 + $0x24] sm:$0xf]
    %v7720 = vld [vmem:[#allocation40 + $0x28] sm:$0xf]
    %v7721 = vld [vmem:[#allocation40 + $0x2c] sm:$0xf]
    %v7722 = vld [vmem:[#allocation40 + $0x30] sm:$0xf]
    %v7723 = vld [vmem:[#allocation40 + $0x34] sm:$0xf]
    %v7724 = vld [vmem:[#allocation40 + $0x38] sm:$0xf]
    %v7725 = vld [vmem:[#allocation40 + $0x3c] sm:$0xf]
    %v7726 = vld [vmem:[#allocation46] sm:$0x1]
    %v7728 = vlaneseq
    %v7729 = vshrl.u32 %v7728, 7
    %v7730 = vsub.s32 0, %v7729
    %v7731 = vrot.slane %v7726, %v7730
    %v7749 = vunpack.c.l.b16 %v7710
    %v7750 = vunpack.c.l.b16 %v7711
    %v7751 = vunpack.c.l.b16 %v7712
    %v7752 = vunpack.c.l.b16 %v7713
    %v7753 = vunpack.c.l.b16 %v7714
    %v7754 = vunpack.c.l.b16 %v7715
    %v7755 = vunpack.c.l.b16 %v7716
    %v7756 = vunpack.c.l.b16 %v7717
    %v7757 = vunpack.c.l.b16 %v7718
    %v7758 = vunpack.c.l.b16 %v7719
    %v7759 = vunpack.c.l.b16 %v7720
    %v7760 = vunpack.c.l.b16 %v7721
    %v7761 = vunpack.c.l.b16 %v7722
    %v7762 = vunpack.c.l.b16 %v7723
    %v7763 = vunpack.c.l.b16 %v7724
    %v7764 = vunpack.c.l.b16 %v7725
    %v7765 = vpack.c.b16 %v7750, %v7749
    %v7766 = vpack.c.b16 %v7752, %v7751
    %v7767 = vpack.c.b16 %v7754, %v7753
    %v7768 = vpack.c.b16 %v7756, %v7755
    %v7769 = vpack.c.b16 %v7758, %v7757
    %v7770 = vpack.c.b16 %v7760, %v7759
    %v7771 = vpack.c.b16 %v7762, %v7761
    %v7772 = vpack.c.b16 %v7764, %v7763
    %7781 = vmatprep.subr.bf16.mxu0 0
    %7782 = vmatpush1.bf16.msra.mxu0 %v7765
    %7783 = vmatprep.subr.bf16.mxu0 0
    %7784 = vmatpush1.bf16.msra.mxu0 %v7766
    %7785 = vmatprep.subr.bf16.mxu0 0
    %7786 = vmatpush1.bf16.msra.mxu0 %v7767
    %7787 = vmatprep.subr.bf16.mxu0 0
    %7788 = vmatpush1.bf16.msra.mxu0 %v7768
    %7789 = vmatprep.subr.bf16.mxu0 0
    %7790 = vmatpush1.bf16.msra.mxu0 %v7769
    %7791 = vmatprep.subr.bf16.mxu0 0
    %7792 = vmatpush1.bf16.msra.mxu0 %v7770
    %7793 = vmatprep.subr.bf16.mxu0 0
    %7794 = vmatpush1.bf16.msra.mxu0 %v7771
    %7795 = vmatprep.subr.bf16.mxu0 0
    %7796 = vmatpush1.bf16.msra.mxu0 %v7772
    %7797 = vmatprep.subr.bf16.mxu0 0
    %7798 = vmatpush1.bf16.msra.mxu0 0
    %7799 = vmatprep.subr.bf16.mxu0 0
    %7800 = vmatpush1.bf16.msra.mxu0 0
    %7801 = vmatprep.subr.bf16.mxu0 0
    %7802 = vmatpush1.bf16.msra.mxu0 0
    %7803 = vmatprep.subr.bf16.mxu0 0
    %7804 = vmatpush1.bf16.msra.mxu0 0
    %7805 = vmatprep.subr.bf16.mxu0 0
    %7806 = vmatpush1.bf16.msra.mxu0 0
    %7807 = vmatprep.subr.bf16.mxu0 0
    %7808 = vmatpush1.bf16.msra.mxu0 0
    %7809 = vmatprep.subr.bf16.mxu0 0
    %7810 = vmatpush1.bf16.msra.mxu0 0
    %7811 = vmatprep.subr.bf16.mxu0 0
    %7812 = vmatpush1.bf16.msra.mxu0 0
    %7813 = vmatprep.mubr.bf16.mxu0 0
    %7814 = vmatmul.mubr.bf16.gmra.mrb[0].mxu0 %v7170
    %v7815 = vpop.f32.mrb[0].mxu0
    %v7816 = vadd.f32 %v7731, %v7815
    %v7817 = vpop.f32.mrb[0].mxu0
    %v7818 = vpop.f32.mrb[0].mxu0
    %v7819 = vpop.f32.mrb[0].mxu0
    %7820 = vdwg.mxu0
    %v7821 = vmul.f32 %v7376, %v7816
    %v7822 = vadd.f32 %v7705, %v7821
    %v7823 = vtanh.pop %v7822
    %v7824 = vsub.f32 1.0, %v7598
    %v7825 = vmul.f32 %v7824, %v7823
    %v7826 = vmul.f32 %v7598, %v7152
    %v7827 = vadd.f32 %v7825, %v7826
    %v7828 = vld [vmem:[%s9] sm:$0x3]
    %v7829 = vpack.c.bf16 %v7827, %v7827
    %v7830 = vld [vmem:[#allocation48] sm:$0xf]
    %v7831 = vld [vmem:[#allocation48 + $0x4] sm:$0xf]
    %v7832 = vld [vmem:[#allocation48 + $0x8] sm:$0xf]
    %v7833 = vld [vmem:[#allocation48 + $0xc] sm:$0xf]
    %v7834 = vld [vmem:[#allocation48 + $0x10] sm:$0xf]
    %v7835 = vld [vmem:[#allocation48 + $0x14] sm:$0xf]
    %v7836 = vld [vmem:[#allocation48 + $0x18] sm:$0xf]
    %v7837 = vld [vmem:[#allocation48 + $0x1c] sm:$0xf]
    %v7838 = vld [vmem:[#allocation48 + $0x20] sm:$0xf]
    %v7839 = vld [vmem:[#allocation48 + $0x24] sm:$0xf]
    %v7840 = vld [vmem:[#allocation48 + $0x28] sm:$0xf]
    %v7841 = vld [vmem:[#allocation48 + $0x2c] sm:$0xf]
    %v7842 = vld [vmem:[#allocation48 + $0x30] sm:$0xf]
    %v7843 = vld [vmem:[#allocation48 + $0x34] sm:$0xf]
    %v7844 = vld [vmem:[#allocation48 + $0x38] sm:$0xf]
    %v7845 = vld [vmem:[#allocation48 + $0x3c] sm:$0xf]
    %v7846 = vpack.c.bf16 %v7828, %v7828
    %v7847 = vld [vmem:[#allocation52] sm:$0xf]
    %v7848 = vld [vmem:[#allocation52 + $0x4] sm:$0xf]
    %v7849 = vld [vmem:[#allocation52 + $0x8] sm:$0xf]
    %v7850 = vld [vmem:[#allocation52 + $0xc] sm:$0xf]
    %v7851 = vld [vmem:[#allocation52 + $0x10] sm:$0xf]
    %v7852 = vld [vmem:[#allocation52 + $0x14] sm:$0xf]
    %v7853 = vld [vmem:[#allocation52 + $0x18] sm:$0xf]
    %v7854 = vld [vmem:[#allocation52 + $0x1c] sm:$0xf]
    %v7855 = vld [vmem:[#allocation52 + $0x20] sm:$0xf]
    %v7856 = vld [vmem:[#allocation52 + $0x24] sm:$0xf]
    %v7857 = vld [vmem:[#allocation52 + $0x28] sm:$0xf]
    %v7858 = vld [vmem:[#allocation52 + $0x2c] sm:$0xf]
    %v7859 = vld [vmem:[#allocation52 + $0x30] sm:$0xf]
    %v7860 = vld [vmem:[#allocation52 + $0x34] sm:$0xf]
    %v7861 = vld [vmem:[#allocation52 + $0x38] sm:$0xf]
    %v7862 = vld [vmem:[#allocation52 + $0x3c] sm:$0xf]
    %v7879 = vunpack.c.l.b16 %v7847
    %v7880 = vunpack.c.l.b16 %v7848
    %v7881 = vunpack.c.l.b16 %v7849
    %v7882 = vunpack.c.l.b16 %v7850
    %v7883 = vunpack.c.l.b16 %v7851
    %v7884 = vunpack.c.l.b16 %v7852
    %v7885 = vunpack.c.l.b16 %v7853
    %v7886 = vunpack.c.l.b16 %v7854
    %v7887 = vunpack.c.l.b16 %v7855
    %v7888 = vunpack.c.l.b16 %v7856
    %v7889 = vunpack.c.l.b16 %v7857
    %v7890 = vunpack.c.l.b16 %v7858
    %v7891 = vunpack.c.l.b16 %v7859
    %v7892 = vunpack.c.l.b16 %v7860
    %v7893 = vunpack.c.l.b16 %v7861
    %v7894 = vunpack.c.l.b16 %v7862
    %v7895 = vpack.c.b16 %v7880, %v7879
    %v7896 = vpack.c.b16 %v7882, %v7881
    %v7897 = vpack.c.b16 %v7884, %v7883
    %v7898 = vpack.c.b16 %v7886, %v7885
    %v7899 = vpack.c.b16 %v7888, %v7887
    %v7900 = vpack.c.b16 %v7890, %v7889
    %v7901 = vpack.c.b16 %v7892, %v7891
    %v7902 = vpack.c.b16 %v7894, %v7893
    %7911 = vmatprep.subr.bf16.mxu0 0
    %7912 = vmatpush1.bf16.msra.mxu0 %v7895
    %7913 = vmatprep.subr.bf16.mxu0 0
    %7914 = vmatpush1.bf16.msra.mxu0 %v7896
    %7915 = vmatprep.subr.bf16.mxu0 0
    %7916 = vmatpush1.bf16.msra.mxu0 %v7897
    %7917 = vmatprep.subr.bf16.mxu0 0
    %7918 = vmatpush1.bf16.msra.mxu0 %v7898
    %7919 = vmatprep.subr.bf16.mxu0 0
    %7920 = vmatpush1.bf16.msra.mxu0 %v7899
    %7921 = vmatprep.subr.bf16.mxu0 0
    %7922 = vmatpush1.bf16.msra.mxu0 %v7900
    %7923 = vmatprep.subr.bf16.mxu0 0
    %7924 = vmatpush1.bf16.msra.mxu0 %v7901
    %7925 = vmatprep.subr.bf16.mxu0 0
    %7926 = vmatpush1.bf16.msra.mxu0 %v7902
    %7927 = vmatprep.subr.bf16.mxu0 0
    %7928 = vmatpush1.bf16.msra.mxu0 0
    %7929 = vmatprep.subr.bf16.mxu0 0
    %7930 = vmatpush1.bf16.msra.mxu0 0
    %7931 = vmatprep.subr.bf16.mxu0 0
    %7932 = vmatpush1.bf16.msra.mxu0 0
    %7933 = vmatprep.subr.bf16.mxu0 0
    %7934 = vmatpush1.bf16.msra.mxu0 0
    %7935 = vmatprep.subr.bf16.mxu0 0
    %7936 = vmatpush1.bf16.msra.mxu0 0
    %7937 = vmatprep.subr.bf16.mxu0 0
    %7938 = vmatpush1.bf16.msra.mxu0 0
    %7939 = vmatprep.subr.bf16.mxu0 0
    %7940 = vmatpush1.bf16.msra.mxu0 0
    %7941 = vmatprep.subr.bf16.mxu0 0
    %7942 = vmatpush1.bf16.msra.mxu0 0
    %7943 = vmatprep.mubr.bf16.mxu0 0
    %7944 = vmatmul.mubr.bf16.gmra.mrb[0].mxu0 %v7846
    %v7945 = vpop.f32.mrb[0].mxu0
    %v7946 = vadd.f32 0.0, %v7945
    %v7947 = vpop.f32.mrb[0].mxu0
    %v7948 = vpop.f32.mrb[0].mxu0
    %v7949 = vpop.f32.mrb[0].mxu0
    %7950 = vdwg.mxu0
    %v7967 = vunpack.c.l.b16 %v7830
    %v7968 = vunpack.c.l.b16 %v7831
    %v7969 = vunpack.c.l.b16 %v7832
    %v7970 = vunpack.c.l.b16 %v7833
    %v7971 = vunpack.c.l.b16 %v7834
    %v7972 = vunpack.c.l.b16 %v7835
    %v7973 = vunpack.c.l.b16 %v7836
    %v7974 = vunpack.c.l.b16 %v7837
    %v7975 = vunpack.c.l.b16 %v7838
    %v7976 = vunpack.c.l.b16 %v7839
    %v7977 = vunpack.c.l.b16 %v7840
    %v7978 = vunpack.c.l.b16 %v7841
    %v7979 = vunpack.c.l.b16 %v7842
    %v7980 = vunpack.c.l.b16 %v7843
    %v7981 = vunpack.c.l.b16 %v7844
    %v7982 = vunpack.c.l.b16 %v7845
    %v7983 = vpack.c.b16 %v7968, %v7967
    %v7984 = vpack.c.b16 %v7970, %v7969
    %v7985 = vpack.c.b16 %v7972, %v7971
    %v7986 = vpack.c.b16 %v7974, %v7973
    %v7987 = vpack.c.b16 %v7976, %v7975
    %v7988 = vpack.c.b16 %v7978, %v7977
    %v7989 = vpack.c.b16 %v7980, %v7979
    %v7990 = vpack.c.b16 %v7982, %v7981
    %7999 = vmatprep.subr.bf16.mxu0 0
    %8000 = vmatpush1.bf16.msra.mxu0 %v7983
    %8001 = vmatprep.subr.bf16.mxu0 0
    %8002 = vmatpush1.bf16.msra.mxu0 %v7984
    %8003 = vmatprep.subr.bf16.mxu0 0
    %8004 = vmatpush1.bf16.msra.mxu0 %v7985
    %8005 = vmatprep.subr.bf16.mxu0 0
    %8006 = vmatpush1.bf16.msra.mxu0 %v7986
    %8007 = vmatprep.subr.bf16.mxu0 0
    %8008 = vmatpush1.bf16.msra.mxu0 %v7987
    %8009 = vmatprep.subr.bf16.mxu0 0
    %8010 = vmatpush1.bf16.msra.mxu0 %v7988
    %8011 = vmatprep.subr.bf16.mxu0 0
    %8012 = vmatpush1.bf16.msra.mxu0 %v7989
    %8013 = vmatprep.subr.bf16.mxu0 0
    %8014 = vmatpush1.bf16.msra.mxu0 %v7990
    %8015 = vmatprep.subr.bf16.mxu0 0
    %8016 = vmatpush1.bf16.msra.mxu0 0
    %8017 = vmatprep.subr.bf16.mxu0 0
    %8018 = vmatpush1.bf16.msra.mxu0 0
    %8019 = vmatprep.subr.bf16.mxu0 0
    %8020 = vmatpush1.bf16.msra.mxu0 0
    %8021 = vmatprep.subr.bf16.mxu0 0
    %8022 = vmatpush1.bf16.msra.mxu0 0
    %8023 = vmatprep.subr.bf16.mxu0 0
    %8024 = vmatpush1.bf16.msra.mxu0 0
    %8025 = vmatprep.subr.bf16.mxu0 0
    %8026 = vmatpush1.bf16.msra.mxu0 0
    %8027 = vmatprep.subr.bf16.mxu0 0
    %8028 = vmatpush1.bf16.msra.mxu0 0
    %8029 = vmatprep.subr.bf16.mxu0 0
    %8030 = vmatpush1.bf16.msra.mxu0 0
    %8031 = vmatprep.mubr.bf16.mxu0 0
    %8032 = vmatmul.mubr.bf16.gmra.mrb[0].mxu0 %v7829
    %v8033 = vpop.f32.mrb[0].mxu0
    %v8034 = vadd.f32 %v7946, %v8033
    %v8035 = vpop.f32.mrb[0].mxu0
    %v8036 = vpop.f32.mrb[0].mxu0
    %v8037 = vpop.f32.mrb[0].mxu0
    %8038 = vdwg.mxu0
    %v8039 = vld [vmem:[#allocation57] sm:$0x1]
    %v8041 = vlaneseq
    %v8042 = vshrl.u32 %v8041, 7
    %v8043 = vsub.s32 0, %v8042
    %v8044 = vrot.slane %v8039, %v8043
    %v8046 = vadd.f32 %v8034, %v8044
    %v8047 = vxor.u32 %v8046, 2147483648
    %v8048 = vmul.f32 %v8047, 1.442695
    %v8049 = vpow.pop %v8048
    %v8050 = vadd.f32 %v8049, 1.0
    %v8051 = vrcp.pop %v8050
    %v8052 = vmul.f32 1.0, %v8051
    %v8053 = vld [vmem:[#allocation49] sm:$0xf]
    %v8054 = vld [vmem:[#allocation49 + $0x4] sm:$0xf]
    %v8055 = vld [vmem:[#allocation49 + $0x8] sm:$0xf]
    %v8056 = vld [vmem:[#allocation49 + $0xc] sm:$0xf]
    %v8057 = vld [vmem:[#allocation49 + $0x10] sm:$0xf]
    %v8058 = vld [vmem:[#allocation49 + $0x14] sm:$0xf]
    %v8059 = vld [vmem:[#allocation49 + $0x18] sm:$0xf]
    %v8060 = vld [vmem:[#allocation49 + $0x1c] sm:$0xf]
    %v8061 = vld [vmem:[#allocation49 + $0x20] sm:$0xf]
    %v8062 = vld [vmem:[#allocation49 + $0x24] sm:$0xf]
    %v8063 = vld [vmem:[#allocation49 + $0x28] sm:$0xf]
    %v8064 = vld [vmem:[#allocation49 + $0x2c] sm:$0xf]
    %v8065 = vld [vmem:[#allocation49 + $0x30] sm:$0xf]
    %v8066 = vld [vmem:[#allocation49 + $0x34] sm:$0xf]
    %v8067 = vld [vmem:[#allocation49 + $0x38] sm:$0xf]
    %v8068 = vld [vmem:[#allocation49 + $0x3c] sm:$0xf]
    %v8069 = vld [vmem:[#allocation54] sm:$0xf]
    %v8070 = vld [vmem:[#allocation54 + $0x4] sm:$0xf]
    %v8071 = vld [vmem:[#allocation54 + $0x8] sm:$0xf]
    %v8072 = vld [vmem:[#allocation54 + $0xc] sm:$0xf]
    %v8073 = vld [vmem:[#allocation54 + $0x10] sm:$0xf]
    %v8074 = vld [vmem:[#allocation54 + $0x14] sm:$0xf]
    %v8075 = vld [vmem:[#allocation54 + $0x18] sm:$0xf]
    %v8076 = vld [vmem:[#allocation54 + $0x1c] sm:$0xf]
    %v8077 = vld [vmem:[#allocation54 + $0x20] sm:$0xf]
    %v8078 = vld [vmem:[#allocation54 + $0x24] sm:$0xf]
    %v8079 = vld [vmem:[#allocation54 + $0x28] sm:$0xf]
    %v8080 = vld [vmem:[#allocation54 + $0x2c] sm:$0xf]
    %v8081 = vld [vmem:[#allocation54 + $0x30] sm:$0xf]
    %v8082 = vld [vmem:[#allocation54 + $0x34] sm:$0xf]
    %v8083 = vld [vmem:[#allocation54 + $0x38] sm:$0xf]
    %v8084 = vld [vmem:[#allocation54 + $0x3c] sm:$0xf]
    %v8101 = vunpack.c.l.b16 %v8069
    %v8102 = vunpack.c.l.b16 %v8070
    %v8103 = vunpack.c.l.b16 %v8071
    %v8104 = vunpack.c.l.b16 %v8072
    %v8105 = vunpack.c.l.b16 %v8073
    %v8106 = vunpack.c.l.b16 %v8074
    %v8107 = vunpack.c.l.b16 %v8075
    %v8108 = vunpack.c.l.b16 %v8076
    %v8109 = vunpack.c.l.b16 %v8077
    %v8110 = vunpack.c.l.b16 %v8078
    %v8111 = vunpack.c.l.b16 %v8079
    %v8112 = vunpack.c.l.b16 %v8080
    %v8113 = vunpack.c.l.b16 %v8081
    %v8114 = vunpack.c.l.b16 %v8082
    %v8115 = vunpack.c.l.b16 %v8083
    %v8116 = vunpack.c.l.b16 %v8084
    %v8117 = vpack.c.b16 %v8102, %v8101
    %v8118 = vpack.c.b16 %v8104, %v8103
    %v8119 = vpack.c.b16 %v8106, %v8105
    %v8120 = vpack.c.b16 %v8108, %v8107
    %v8121 = vpack.c.b16 %v8110, %v8109
    %v8122 = vpack.c.b16 %v8112, %v8111
    %v8123 = vpack.c.b16 %v8114, %v8113
    %v8124 = vpack.c.b16 %v8116, %v8115
    %8133 = vmatprep.subr.bf16.mxu0 0
    %8134 = vmatpush1.bf16.msra.mxu0 %v8117
    %8135 = vmatprep.subr.bf16.mxu0 0
    %8136 = vmatpush1.bf16.msra.mxu0 %v8118
    %8137 = vmatprep.subr.bf16.mxu0 0
    %8138 = vmatpush1.bf16.msra.mxu0 %v8119
    %8139 = vmatprep.subr.bf16.mxu0 0
    %8140 = vmatpush1.bf16.msra.mxu0 %v8120
    %8141 = vmatprep.subr.bf16.mxu0 0
    %8142 = vmatpush1.bf16.msra.mxu0 %v8121
    %8143 = vmatprep.subr.bf16.mxu0 0
    %8144 = vmatpush1.bf16.msra.mxu0 %v8122
    %8145 = vmatprep.subr.bf16.mxu0 0
    %8146 = vmatpush1.bf16.msra.mxu0 %v8123
    %8147 = vmatprep.subr.bf16.mxu0 0
    %8148 = vmatpush1.bf16.msra.mxu0 %v8124
    %8149 = vmatprep.subr.bf16.mxu0 0
    %8150 = vmatpush1.bf16.msra.mxu0 0
    %8151 = vmatprep.subr.bf16.mxu0 0
    %8152 = vmatpush1.bf16.msra.mxu0 0
    %8153 = vmatprep.subr.bf16.mxu0 0
    %8154 = vmatpush1.bf16.msra.mxu0 0
    %8155 = vmatprep.subr.bf16.mxu0 0
    %8156 = vmatpush1.bf16.msra.mxu0 0
    %8157 = vmatprep.subr.bf16.mxu0 0
    %8158 = vmatpush1.bf16.msra.mxu0 0
    %8159 = vmatprep.subr.bf16.mxu0 0
    %8160 = vmatpush1.bf16.msra.mxu0 0
    %8161 = vmatprep.subr.bf16.mxu0 0
    %8162 = vmatpush1.bf16.msra.mxu0 0
    %8163 = vmatprep.subr.bf16.mxu0 0
    %8164 = vmatpush1.bf16.msra.mxu0 0
    %8165 = vmatprep.mubr.bf16.mxu0 0
    %8166 = vmatmul.mubr.bf16.gmra.mrb[0].mxu0 %v7846
    %v8167 = vpop.f32.mrb[0].mxu0
    %v8168 = vadd.f32 0.0, %v8167
    %v8169 = vpop.f32.mrb[0].mxu0
    %v8170 = vpop.f32.mrb[0].mxu0
    %v8171 = vpop.f32.mrb[0].mxu0
    %8172 = vdwg.mxu0
    %v8189 = vunpack.c.l.b16 %v8053
    %v8190 = vunpack.c.l.b16 %v8054
    %v8191 = vunpack.c.l.b16 %v8055
    %v8192 = vunpack.c.l.b16 %v8056
    %v8193 = vunpack.c.l.b16 %v8057
    %v8194 = vunpack.c.l.b16 %v8058
    %v8195 = vunpack.c.l.b16 %v8059
    %v8196 = vunpack.c.l.b16 %v8060
    %v8197 = vunpack.c.l.b16 %v8061
    %v8198 = vunpack.c.l.b16 %v8062
    %v8199 = vunpack.c.l.b16 %v8063
    %v8200 = vunpack.c.l.b16 %v8064
    %v8201 = vunpack.c.l.b16 %v8065
    %v8202 = vunpack.c.l.b16 %v8066
    %v8203 = vunpack.c.l.b16 %v8067
    %v8204 = vunpack.c.l.b16 %v8068
    %v8205 = vpack.c.b16 %v8190, %v8189
    %v8206 = vpack.c.b16 %v8192, %v8191
    %v8207 = vpack.c.b16 %v8194, %v8193
    %v8208 = vpack.c.b16 %v8196, %v8195
    %v8209 = vpack.c.b16 %v8198, %v8197
    %v8210 = vpack.c.b16 %v8200, %v8199
    %v8211 = vpack.c.b16 %v8202, %v8201
    %v8212 = vpack.c.b16 %v8204, %v8203
    %8221 = vmatprep.subr.bf16.mxu0 0
    %8222 = vmatpush1.bf16.msra.mxu0 %v8205
    %8223 = vmatprep.subr.bf16.mxu0 0
    %8224 = vmatpush1.bf16.msra.mxu0 %v8206
    %8225 = vmatprep.subr.bf16.mxu0 0
    %8226 = vmatpush1.bf16.msra.mxu0 %v8207
    %8227 = vmatprep.subr.bf16.mxu0 0
    %8228 = vmatpush1.bf16.msra.mxu0 %v8208
    %8229 = vmatprep.subr.bf16.mxu0 0
    %8230 = vmatpush1.bf16.msra.mxu0 %v8209
    %8231 = vmatprep.subr.bf16.mxu0 0
    %8232 = vmatpush1.bf16.msra.mxu0 %v8210
    %8233 = vmatprep.subr.bf16.mxu0 0
    %8234 = vmatpush1.bf16.msra.mxu0 %v8211
    %8235 = vmatprep.subr.bf16.mxu0 0
    %8236 = vmatpush1.bf16.msra.mxu0 %v8212
    %8237 = vmatprep.subr.bf16.mxu0 0
    %8238 = vmatpush1.bf16.msra.mxu0 0
    %8239 = vmatprep.subr.bf16.mxu0 0
    %8240 = vmatpush1.bf16.msra.mxu0 0
    %8241 = vmatprep.subr.bf16.mxu0 0
    %8242 = vmatpush1.bf16.msra.mxu0 0
    %8243 = vmatprep.subr.bf16.mxu0 0
    %8244 = vmatpush1.bf16.msra.mxu0 0
    %8245 = vmatprep.subr.bf16.mxu0 0
    %8246 = vmatpush1.bf16.msra.mxu0 0
    %8247 = vmatprep.subr.bf16.mxu0 0
    %8248 = vmatpush1.bf16.msra.mxu0 0
    %8249 = vmatprep.subr.bf16.mxu0 0
    %8250 = vmatpush1.bf16.msra.mxu0 0
    %8251 = vmatprep.subr.bf16.mxu0 0
    %8252 = vmatpush1.bf16.msra.mxu0 0
    %8253 = vmatprep.mubr.bf16.mxu0 0
    %8254 = vmatmul.mubr.bf16.gmra.mrb[0].mxu0 %v7829
    %v8255 = vpop.f32.mrb[0].mxu0
    %v8256 = vadd.f32 %v8168, %v8255
    %v8257 = vpop.f32.mrb[0].mxu0
    %v8258 = vpop.f32.mrb[0].mxu0
    %v8259 = vpop.f32.mrb[0].mxu0
    %8260 = vdwg.mxu0
    %v8261 = vld [vmem:[#allocation58] sm:$0x1]
    %v8263 = vlaneseq
    %v8264 = vshrl.u32 %v8263, 7
    %v8265 = vsub.s32 0, %v8264
    %v8266 = vrot.slane %v8261, %v8265
    %v8268 = vadd.f32 %v8256, %v8266
    %v8269 = vxor.u32 %v8268, 2147483648
    %v8270 = vmul.f32 %v8269, 1.442695
    %v8271 = vpow.pop %v8270
    %v8272 = vadd.f32 %v8271, 1.0
    %v8273 = vrcp.pop %v8272
    %v8274 = vmul.f32 1.0, %v8273
    %v8275 = vld [vmem:[#allocation51] sm:$0xf]
    %v8276 = vld [vmem:[#allocation51 + $0x4] sm:$0xf]
    %v8277 = vld [vmem:[#allocation51 + $0x8] sm:$0xf]
    %v8278 = vld [vmem:[#allocation51 + $0xc] sm:$0xf]
    %v8279 = vld [vmem:[#allocation51 + $0x10] sm:$0xf]
    %v8280 = vld [vmem:[#allocation51 + $0x14] sm:$0xf]
    %v8281 = vld [vmem:[#allocation51 + $0x18] sm:$0xf]
    %v8282 = vld [vmem:[#allocation51 + $0x1c] sm:$0xf]
    %v8283 = vld [vmem:[#allocation51 + $0x20] sm:$0xf]
    %v8284 = vld [vmem:[#allocation51 + $0x24] sm:$0xf]
    %v8285 = vld [vmem:[#allocation51 + $0x28] sm:$0xf]
    %v8286 = vld [vmem:[#allocation51 + $0x2c] sm:$0xf]
    %v8287 = vld [vmem:[#allocation51 + $0x30] sm:$0xf]
    %v8288 = vld [vmem:[#allocation51 + $0x34] sm:$0xf]
    %v8289 = vld [vmem:[#allocation51 + $0x38] sm:$0xf]
    %v8290 = vld [vmem:[#allocation51 + $0x3c] sm:$0xf]
    %v8291 = vld [vmem:[#allocation60] sm:$0x1]
    %v8293 = vlaneseq
    %v8294 = vshrl.u32 %v8293, 7
    %v8295 = vsub.s32 0, %v8294
    %v8296 = vrot.slane %v8291, %v8295
    %v8314 = vunpack.c.l.b16 %v8275
    %v8315 = vunpack.c.l.b16 %v8276
    %v8316 = vunpack.c.l.b16 %v8277
    %v8317 = vunpack.c.l.b16 %v8278
    %v8318 = vunpack.c.l.b16 %v8279
    %v8319 = vunpack.c.l.b16 %v8280
    %v8320 = vunpack.c.l.b16 %v8281
    %v8321 = vunpack.c.l.b16 %v8282
    %v8322 = vunpack.c.l.b16 %v8283
    %v8323 = vunpack.c.l.b16 %v8284
    %v8324 = vunpack.c.l.b16 %v8285
    %v8325 = vunpack.c.l.b16 %v8286
    %v8326 = vunpack.c.l.b16 %v8287
    %v8327 = vunpack.c.l.b16 %v8288
    %v8328 = vunpack.c.l.b16 %v8289
    %v8329 = vunpack.c.l.b16 %v8290
    %v8330 = vpack.c.b16 %v8315, %v8314
    %v8331 = vpack.c.b16 %v8317, %v8316
    %v8332 = vpack.c.b16 %v8319, %v8318
    %v8333 = vpack.c.b16 %v8321, %v8320
    %v8334 = vpack.c.b16 %v8323, %v8322
    %v8335 = vpack.c.b16 %v8325, %v8324
    %v8336 = vpack.c.b16 %v8327, %v8326
    %v8337 = vpack.c.b16 %v8329, %v8328
    %8346 = vmatprep.subr.bf16.mxu0 0
    %8347 = vmatpush1.bf16.msra.mxu0 %v8330
    %8348 = vmatprep.subr.bf16.mxu0 0
    %8349 = vmatpush1.bf16.msra.mxu0 %v8331
    %8350 = vmatprep.subr.bf16.mxu0 0
    %8351 = vmatpush1.bf16.msra.mxu0 %v8332
    %8352 = vmatprep.subr.bf16.mxu0 0
    %8353 = vmatpush1.bf16.msra.mxu0 %v8333
    %8354 = vmatprep.subr.bf16.mxu0 0
    %8355 = vmatpush1.bf16.msra.mxu0 %v8334
    %8356 = vmatprep.subr.bf16.mxu0 0
    %8357 = vmatpush1.bf16.msra.mxu0 %v8335
    %8358 = vmatprep.subr.bf16.mxu0 0
    %8359 = vmatpush1.bf16.msra.mxu0 %v8336
    %8360 = vmatprep.subr.bf16.mxu0 0
    %8361 = vmatpush1.bf16.msra.mxu0 %v8337
    %8362 = vmatprep.subr.bf16.mxu0 0
    %8363 = vmatpush1.bf16.msra.mxu0 0
    %8364 = vmatprep.subr.bf16.mxu0 0
    %8365 = vmatpush1.bf16.msra.mxu0 0
    %8366 = vmatprep.subr.bf16.mxu0 0
    %8367 = vmatpush1.bf16.msra.mxu0 0
    %8368 = vmatprep.subr.bf16.mxu0 0
    %8369 = vmatpush1.bf16.msra.mxu0 0
    %8370 = vmatprep.subr.bf16.mxu0 0
    %8371 = vmatpush1.bf16.msra.mxu0 0
    %8372 = vmatprep.subr.bf16.mxu0 0
    %8373 = vmatpush1.bf16.msra.mxu0 0
    %8374 = vmatprep.subr.bf16.mxu0 0
    %8375 = vmatpush1.bf16.msra.mxu0 0
    %8376 = vmatprep.subr.bf16.mxu0 0
    %8377 = vmatpush1.bf16.msra.mxu0 0
    %8378 = vmatprep.mubr.bf16.mxu0 0
    %8379 = vmatmul.mubr.bf16.gmra.mrb[0].mxu0 %v7829
    %v8380 = vpop.f32.mrb[0].mxu0
    %v8381 = vadd.f32 %v8296, %v8380
    %v8382 = vpop.f32.mrb[0].mxu0
    %v8383 = vpop.f32.mrb[0].mxu0
    %v8384 = vpop.f32.mrb[0].mxu0
    %8385 = vdwg.mxu0
    %v8386 = vld [vmem:[#allocation55] sm:$0xf]
    %v8387 = vld [vmem:[#allocation55 + $0x4] sm:$0xf]
    %v8388 = vld [vmem:[#allocation55 + $0x8] sm:$0xf]
    %v8389 = vld [vmem:[#allocation55 + $0xc] sm:$0xf]
    %v8390 = vld [vmem:[#allocation55 + $0x10] sm:$0xf]
    %v8391 = vld [vmem:[#allocation55 + $0x14] sm:$0xf]
    %v8392 = vld [vmem:[#allocation55 + $0x18] sm:$0xf]
    %v8393 = vld [vmem:[#allocation55 + $0x1c] sm:$0xf]
    %v8394 = vld [vmem:[#allocation55 + $0x20] sm:$0xf]
    %v8395 = vld [vmem:[#allocation55 + $0x24] sm:$0xf]
    %v8396 = vld [vmem:[#allocation55 + $0x28] sm:$0xf]
    %v8397 = vld [vmem:[#allocation55 + $0x2c] sm:$0xf]
    %v8398 = vld [vmem:[#allocation55 + $0x30] sm:$0xf]
    %v8399 = vld [vmem:[#allocation55 + $0x34] sm:$0xf]
    %v8400 = vld [vmem:[#allocation55 + $0x38] sm:$0xf]
    %v8401 = vld [vmem:[#allocation55 + $0x3c] sm:$0xf]
    %v8402 = vld [vmem:[#allocation61] sm:$0x1]
    %v8404 = vlaneseq
    %v8405 = vshrl.u32 %v8404, 7
    %v8406 = vsub.s32 0, %v8405
    %v8407 = vrot.slane %v8402, %v8406
    %v8425 = vunpack.c.l.b16 %v8386
    %v8426 = vunpack.c.l.b16 %v8387
    %v8427 = vunpack.c.l.b16 %v8388
    %v8428 = vunpack.c.l.b16 %v8389
    %v8429 = vunpack.c.l.b16 %v8390
    %v8430 = vunpack.c.l.b16 %v8391
    %v8431 = vunpack.c.l.b16 %v8392
    %v8432 = vunpack.c.l.b16 %v8393
    %v8433 = vunpack.c.l.b16 %v8394
    %v8434 = vunpack.c.l.b16 %v8395
    %v8435 = vunpack.c.l.b16 %v8396
    %v8436 = vunpack.c.l.b16 %v8397
    %v8437 = vunpack.c.l.b16 %v8398
    %v8438 = vunpack.c.l.b16 %v8399
    %v8439 = vunpack.c.l.b16 %v8400
    %v8440 = vunpack.c.l.b16 %v8401
    %v8441 = vpack.c.b16 %v8426, %v8425
    %v8442 = vpack.c.b16 %v8428, %v8427
    %v8443 = vpack.c.b16 %v8430, %v8429
    %v8444 = vpack.c.b16 %v8432, %v8431
    %v8445 = vpack.c.b16 %v8434, %v8433
    %v8446 = vpack.c.b16 %v8436, %v8435
    %v8447 = vpack.c.b16 %v8438, %v8437
    %v8448 = vpack.c.b16 %v8440, %v8439
    %8457 = vmatprep.subr.bf16.mxu0 0
    %8458 = vmatpush1.bf16.msra.mxu0 %v8441
    %8459 = vmatprep.subr.bf16.mxu0 0
    %8460 = vmatpush1.bf16.msra.mxu0 %v8442
    %8461 = vmatprep.subr.bf16.mxu0 0
    %8462 = vmatpush1.bf16.msra.mxu0 %v8443
    %8463 = vmatprep.subr.bf16.mxu0 0
    %8464 = vmatpush1.bf16.msra.mxu0 %v8444
    %8465 = vmatprep.subr.bf16.mxu0 0
    %8466 = vmatpush1.bf16.msra.mxu0 %v8445
    %8467 = vmatprep.subr.bf16.mxu0 0
    %8468 = vmatpush1.bf16.msra.mxu0 %v8446
    %8469 = vmatprep.subr.bf16.mxu0 0
    %8470 = vmatpush1.bf16.msra.mxu0 %v8447
    %8471 = vmatprep.subr.bf16.mxu0 0
    %8472 = vmatpush1.bf16.msra.mxu0 %v8448
    %8473 = vmatprep.subr.bf16.mxu0 0
    %8474 = vmatpush1.bf16.msra.mxu0 0
    %8475 = vmatprep.subr.bf16.mxu0 0
    %8476 = vmatpush1.bf16.msra.mxu0 0
    %8477 = vmatprep.subr.bf16.mxu0 0
    %8478 = vmatpush1.bf16.msra.mxu0 0
    %8479 = vmatprep.subr.bf16.mxu0 0
    %8480 = vmatpush1.bf16.msra.mxu0 0
    %8481 = vmatprep.subr.bf16.mxu0 0
    %8482 = vmatpush1.bf16.msra.mxu0 0
    %8483 = vmatprep.subr.bf16.mxu0 0
    %8484 = vmatpush1.bf16.msra.mxu0 0
    %8485 = vmatprep.subr.bf16.mxu0 0
    %8486 = vmatpush1.bf16.msra.mxu0 0
    %8487 = vmatprep.subr.bf16.mxu0 0
    %8488 = vmatpush1.bf16.msra.mxu0 0
    %8489 = vmatprep.mubr.bf16.mxu0 0
    %8490 = vmatmul.mubr.bf16.gmra.mrb[0].mxu0 %v7846
    %v8491 = vpop.f32.mrb[0].mxu0
    %v8492 = vadd.f32 %v8407, %v8491
    %v8493 = vpop.f32.mrb[0].mxu0
    %v8494 = vpop.f32.mrb[0].mxu0
    %v8495 = vpop.f32.mrb[0].mxu0
    %8496 = vdwg.mxu0
    %v8497 = vmul.f32 %v8052, %v8492
    %v8498 = vadd.f32 %v8381, %v8497
    %v8499 = vtanh.pop %v8498
    %v8500 = vsub.f32 1.0, %v8274
    %v8501 = vmul.f32 %v8500, %v8499
    %v8502 = vmul.f32 %v8274, %v7828
    %v8503 = vadd.f32 %v8501, %v8502
    %v8504 = vpack.c.bf16 %v8503, %v8503
    %v8505 = vld [vmem:[#allocation63] sm:$0xf]
    %v8506 = vld [vmem:[#allocation63 + $0x4] sm:$0xf]
    %v8507 = vld [vmem:[#allocation63 + $0x8] sm:$0xf]
    %v8508 = vld [vmem:[#allocation63 + $0xc] sm:$0xf]
    %v8509 = vld [vmem:[#allocation63 + $0x10] sm:$0xf]
    %v8510 = vld [vmem:[#allocation63 + $0x14] sm:$0xf]
    %v8511 = vld [vmem:[#allocation63 + $0x18] sm:$0xf]
    %v8512 = vld [vmem:[#allocation63 + $0x1c] sm:$0xf]
    %v8513 = vld [vmem:[#allocation63 + $0x20] sm:$0xf]
    %v8514 = vld [vmem:[#allocation63 + $0x24] sm:$0xf]
    %v8515 = vld [vmem:[#allocation63 + $0x28] sm:$0xf]
    %v8516 = vld [vmem:[#allocation63 + $0x2c] sm:$0xf]
    %v8517 = vld [vmem:[#allocation63 + $0x30] sm:$0xf]
    %v8518 = vld [vmem:[#allocation63 + $0x34] sm:$0xf]
    %v8519 = vld [vmem:[#allocation63 + $0x38] sm:$0xf]
    %v8520 = vld [vmem:[#allocation63 + $0x3c] sm:$0xf]
    %v8521 = vld [vmem:[#allocation64] sm:$0xf]
    %v8522 = vld [vmem:[#allocation64 + $0x4] sm:$0xf]
    %v8523 = vld [vmem:[#allocation64 + $0x8] sm:$0xf]
    %v8524 = vld [vmem:[#allocation64 + $0xc] sm:$0xf]
    %v8525 = vld [vmem:[#allocation64 + $0x10] sm:$0xf]
    %v8526 = vld [vmem:[#allocation64 + $0x14] sm:$0xf]
    %v8527 = vld [vmem:[#allocation64 + $0x18] sm:$0xf]
    %v8528 = vld [vmem:[#allocation64 + $0x1c] sm:$0xf]
    %v8529 = vld [vmem:[#allocation64 + $0x20] sm:$0xf]
    %v8530 = vld [vmem:[#allocation64 + $0x24] sm:$0xf]
    %v8531 = vld [vmem:[#allocation64 + $0x28] sm:$0xf]
    %v8532 = vld [vmem:[#allocation64 + $0x2c] sm:$0xf]
    %v8533 = vld [vmem:[#allocation64 + $0x30] sm:$0xf]
    %v8534 = vld [vmem:[#allocation64 + $0x34] sm:$0xf]
    %v8535 = vld [vmem:[#allocation64 + $0x38] sm:$0xf]
    %v8536 = vld [vmem:[#allocation64 + $0x3c] sm:$0xf]
    %v8553 = vunpack.c.l.b16 %v8521
    %v8554 = vunpack.c.l.b16 %v8522
    %v8555 = vunpack.c.l.b16 %v8523
    %v8556 = vunpack.c.l.b16 %v8524
    %v8557 = vunpack.c.l.b16 %v8525
    %v8558 = vunpack.c.l.b16 %v8526
    %v8559 = vunpack.c.l.b16 %v8527
    %v8560 = vunpack.c.l.b16 %v8528
    %v8561 = vunpack.c.l.b16 %v8529
    %v8562 = vunpack.c.l.b16 %v8530
    %v8563 = vunpack.c.l.b16 %v8531
    %v8564 = vunpack.c.l.b16 %v8532
    %v8565 = vunpack.c.l.b16 %v8533
    %v8566 = vunpack.c.l.b16 %v8534
    %v8567 = vunpack.c.l.b16 %v8535
    %v8568 = vunpack.c.l.b16 %v8536
    %v8569 = vpack.c.b16 %v8554, %v8553
    %v8570 = vpack.c.b16 %v8556, %v8555
    %v8571 = vpack.c.b16 %v8558, %v8557
    %v8572 = vpack.c.b16 %v8560, %v8559
    %v8573 = vpack.c.b16 %v8562, %v8561
    %v8574 = vpack.c.b16 %v8564, %v8563
    %v8575 = vpack.c.b16 %v8566, %v8565
    %v8576 = vpack.c.b16 %v8568, %v8567
    %8585 = vmatprep.subr.bf16.mxu0 0
    %8586 = vmatpush1.bf16.msra.mxu0 %v8569
    %8587 = vmatprep.subr.bf16.mxu0 0
    %8588 = vmatpush1.bf16.msra.mxu0 %v8570
    %8589 = vmatprep.subr.bf16.mxu0 0
    %8590 = vmatpush1.bf16.msra.mxu0 %v8571
    %8591 = vmatprep.subr.bf16.mxu0 0
    %8592 = vmatpush1.bf16.msra.mxu0 %v8572
    %8593 = vmatprep.subr.bf16.mxu0 0
    %8594 = vmatpush1.bf16.msra.mxu0 %v8573
    %8595 = vmatprep.subr.bf16.mxu0 0
    %8596 = vmatpush1.bf16.msra.mxu0 %v8574
    %8597 = vmatprep.subr.bf16.mxu0 0
    %8598 = vmatpush1.bf16.msra.mxu0 %v8575
    %8599 = vmatprep.subr.bf16.mxu0 0
    %8600 = vmatpush1.bf16.msra.mxu0 %v8576
    %8601 = vmatprep.subr.bf16.mxu0 0
    %8602 = vmatpush1.bf16.msra.mxu0 0
    %8603 = vmatprep.subr.bf16.mxu0 0
    %8604 = vmatpush1.bf16.msra.mxu0 0
    %8605 = vmatprep.subr.bf16.mxu0 0
    %8606 = vmatpush1.bf16.msra.mxu0 0
    %8607 = vmatprep.subr.bf16.mxu0 0
    %8608 = vmatpush1.bf16.msra.mxu0 0
    %8609 = vmatprep.subr.bf16.mxu0 0
    %8610 = vmatpush1.bf16.msra.mxu0 0
    %8611 = vmatprep.subr.bf16.mxu0 0
    %8612 = vmatpush1.bf16.msra.mxu0 0
    %8613 = vmatprep.subr.bf16.mxu0 0
    %8614 = vmatpush1.bf16.msra.mxu0 0
    %8615 = vmatprep.subr.bf16.mxu0 0
    %8616 = vmatpush1.bf16.msra.mxu0 0
    %8617 = vmatprep.mubr.bf16.mxu0 0
    %8618 = vmatmul.mubr.bf16.gmra.mrb[0].mxu0 %v6477
    %v8619 = vpop.f32.mrb[0].mxu0
    %v8620 = vadd.f32 0.0, %v8619
    %v8621 = vpop.f32.mrb[0].mxu0
    %v8622 = vpop.f32.mrb[0].mxu0
    %v8623 = vpop.f32.mrb[0].mxu0
    %8624 = vdwg.mxu0
    %v8641 = vunpack.c.l.b16 %v8505
    %v8642 = vunpack.c.l.b16 %v8506
    %v8643 = vunpack.c.l.b16 %v8507
    %v8644 = vunpack.c.l.b16 %v8508
    %v8645 = vunpack.c.l.b16 %v8509
    %v8646 = vunpack.c.l.b16 %v8510
    %v8647 = vunpack.c.l.b16 %v8511
    %v8648 = vunpack.c.l.b16 %v8512
    %v8649 = vunpack.c.l.b16 %v8513
    %v8650 = vunpack.c.l.b16 %v8514
    %v8651 = vunpack.c.l.b16 %v8515
    %v8652 = vunpack.c.l.b16 %v8516
    %v8653 = vunpack.c.l.b16 %v8517
    %v8654 = vunpack.c.l.b16 %v8518
    %v8655 = vunpack.c.l.b16 %v8519
    %v8656 = vunpack.c.l.b16 %v8520
    %v8657 = vpack.c.b16 %v8642, %v8641
    %v8658 = vpack.c.b16 %v8644, %v8643
    %v8659 = vpack.c.b16 %v8646, %v8645
    %v8660 = vpack.c.b16 %v8648, %v8647
    %v8661 = vpack.c.b16 %v8650, %v8649
    %v8662 = vpack.c.b16 %v8652, %v8651
    %v8663 = vpack.c.b16 %v8654, %v8653
    %v8664 = vpack.c.b16 %v8656, %v8655
    %8673 = vmatprep.subr.bf16.mxu0 0
    %8674 = vmatpush1.bf16.msra.mxu0 %v8657
    %8675 = vmatprep.subr.bf16.mxu0 0
    %8676 = vmatpush1.bf16.msra.mxu0 %v8658
    %8677 = vmatprep.subr.bf16.mxu0 0
    %8678 = vmatpush1.bf16.msra.mxu0 %v8659
    %8679 = vmatprep.subr.bf16.mxu0 0
    %8680 = vmatpush1.bf16.msra.mxu0 %v8660
    %8681 = vmatprep.subr.bf16.mxu0 0
    %8682 = vmatpush1.bf16.msra.mxu0 %v8661
    %8683 = vmatprep.subr.bf16.mxu0 0
    %8684 = vmatpush1.bf16.msra.mxu0 %v8662
    %8685 = vmatprep.subr.bf16.mxu0 0
    %8686 = vmatpush1.bf16.msra.mxu0 %v8663
    %8687 = vmatprep.subr.bf16.mxu0 0
    %8688 = vmatpush1.bf16.msra.mxu0 %v8664
    %8689 = vmatprep.subr.bf16.mxu0 0
    %8690 = vmatpush1.bf16.msra.mxu0 0
    %8691 = vmatprep.subr.bf16.mxu0 0
    %8692 = vmatpush1.bf16.msra.mxu0 0
    %8693 = vmatprep.subr.bf16.mxu0 0
    %8694 = vmatpush1.bf16.msra.mxu0 0
    %8695 = vmatprep.subr.bf16.mxu0 0
    %8696 = vmatpush1.bf16.msra.mxu0 0
    %8697 = vmatprep.subr.bf16.mxu0 0
    %8698 = vmatpush1.bf16.msra.mxu0 0
    %8699 = vmatprep.subr.bf16.mxu0 0
    %8700 = vmatpush1.bf16.msra.mxu0 0
    %8701 = vmatprep.subr.bf16.mxu0 0
    %8702 = vmatpush1.bf16.msra.mxu0 0
    %8703 = vmatprep.subr.bf16.mxu0 0
    %8704 = vmatpush1.bf16.msra.mxu0 0
    %8705 = vmatprep.mubr.bf16.mxu0 0
    %8706 = vmatmul.mubr.bf16.gmra.mrb[0].mxu0 %v8504
    %v8707 = vpop.f32.mrb[0].mxu0
    %v8708 = vadd.f32 %v8620, %v8707
    %v8709 = vpop.f32.mrb[0].mxu0
    %v8710 = vpop.f32.mrb[0].mxu0
    %v8711 = vpop.f32.mrb[0].mxu0
    %8712 = vdwg.mxu0
    %v8713 = vld [vmem:[#allocation66] sm:$0x1]
    %v8715 = vlaneseq
    %v8716 = vshrl.u32 %v8715, 7
    %v8717 = vsub.s32 0, %v8716
    %v8718 = vrot.slane %v8713, %v8717
    %v8720 = vadd.f32 %v8708, %v8718
    %v8721 = vtanh.pop %v8720
    %v8722 = vmul.f32 %v756, 1.442695
    %v8723 = vpow.pop %v8722
    %v8724 = vlaneseq
    %v8725 = vand.u32 %v8724, 127
    %vm8726 = vcmp.lt.s32.totalorder %v8725, 2
    %8728 = vset.pattern.permute.xlu0 2
    %8729 = vperm.xlu0 %8728, %v8723
    %v8730 = vpop.permute.xlu0 %8729
    %v8732 = vsel %vm8726, %v8730, 1.0
    %v8733 = vmul.f32 %v8732, %v8721
    %v8734 = vadd.f32 %v756, %v8733
    %8735 = vst [vmem:[%s97] sm:$0x3] %v8734
    %8736 = vst [vmem:[%s99] sm:$0x3] %v7151
    %8737 = vst [vmem:[%s101] sm:$0x3] %v7827
    %8738 = vst [vmem:[%s103] sm:$0x3] %v8503
    // Predicated region
    $region366: #{neuralnet_forward.1} parent=1 // pred_check
      _
    $region367: #{neuralnet_forward.1} parent=1 // pred_check_branch
      %8740 = sbr.rel (0) target = $region369
    $region368: #{neuralnet_forward.1} parent=1 // pred_region
      _
    $region369: #{neuralnet_forward.1} parent=1 // pred_fallthru
      _
    // Predicated region
    $region370: #{neuralnet_forward.1} parent=1 // pred_check
      _
    $region371: #{neuralnet_forward.1} parent=1 // pred_check_branch
      %8742 = sbr.rel (0) target = $region373
    $region372: #{neuralnet_forward.1} parent=1 // pred_region
      _
    $region373: #{neuralnet_forward.1} parent=1 // pred_fallthru
      _
    // Predicated region
    $region374: #{neuralnet_forward.1} parent=1 // pred_check
      _
    $region375: #{neuralnet_forward.1} parent=1 // pred_check_branch
      %8744 = sbr.rel (0) target = $region377
    $region376: #{neuralnet_forward.1} parent=1 // pred_region
      _
    $region377: #{neuralnet_forward.1} parent=1 // pred_fallthru
      _
    // Predicated region
    $region378: #{neuralnet_forward.1} parent=1 // pred_check
      _
    $region379: #{neuralnet_forward.1} parent=1 // pred_check_branch
      %8746 = sbr.rel (0) target = $region381
    $region380: #{neuralnet_forward.1} parent=1 // pred_region
      _
    $region381: #{neuralnet_forward.1} parent=1 // pred_fallthru
      _
    // Predicated region
    $region382: #{neuralnet_forward.1} parent=1 // pred_check
      _
    $region383: #{neuralnet_forward.1} parent=1 // pred_check_branch
      %8748 = sbr.rel (0) target = $region385
    $region384: #{neuralnet_forward.1} parent=1 // pred_region
      _
    $region385: #{neuralnet_forward.1} parent=1 // pred_fallthru
      _
    // Predicated region
    $region386: #{neuralnet_forward.1} parent=1 // pred_check
      _
    $region387: #{neuralnet_forward.1} parent=1 // pred_check_branch
      %8750 = sbr.rel (0) target = $region389
    $region388: #{neuralnet_forward.1} parent=1 // pred_region
      _
    $region389: #{neuralnet_forward.1} parent=1 // pred_fallthru
      _
    // Predicated region
    $region390: #{neuralnet_forward.1} parent=1 // pred_check
      _
    $region391: #{neuralnet_forward.1} parent=1 // pred_check_branch
      %8752 = sbr.rel (0) target = $region393
    $region392: #{neuralnet_forward.1} parent=1 // pred_region
      _
    $region393: #{neuralnet_forward.1} parent=1 // pred_fallthru
      _
    // Predicated region
    $region394: #{neuralnet_forward.1} parent=1 // pred_check
      _
    $region395: #{neuralnet_forward.1} parent=1 // pred_check_branch
      %8754 = sbr.rel (0) target = $region397
    $region396: #{neuralnet_forward.1} parent=1 // pred_region
      _
    $region397: #{neuralnet_forward.1} parent=1 // pred_fallthru
      _
    %8755 = vsyncpa [#allocation3], 1
    %8756 = vsyncpa [#allocation5], 1
    %8757 = vsyncpa [#allocation8], 1
    %8758 = vsyncpa [#allocation11], 1
    %8759 = vsyncpa [#allocation14], 1
    %8760 = vsyncpa [#allocation17], 1
    %8761 = vsyncpa [#allocation20], 1
    %8762 = vsyncpa [#allocation23], 1
    %8763 = vsyncpa [#allocation26], 1
    %8764 = vsyncpa [#allocation29], 1
    %8765 = vsyncpa [#allocation32], 1
    %8766 = vsyncpa [#allocation35], 1
    %8767 = vsyncpa [#allocation38], 1
    %8768 = vsyncpa [#allocation41], 1
    %8769 = vsyncpa [#allocation44], 1
    %8770 = vsyncpa [#allocation47], 1
    %8771 = vsyncpa [#allocation50], 1
    %8772 = vsyncpa [#allocation53], 1
    %8773 = vsyncpa [#allocation56], 1
    %8774 = vsyncpa [#allocation59], 1
    %8775 = vsyncpa [#allocation62], 1
    %8776 = vsyncpa [#allocation65], 1

</llo_original>
